<compile_context>
chip_gen: v7x
topology: tpu7x:2x2x1
jax: 0.10.0
libtpu: 0.0.40
codegen_flags: <defaults>
</compile_context>

<pallas_src>
import functools

import jax
import jax.numpy as jnp
import numpy as np
from jax.experimental import pallas as pl
from jax.experimental.pallas import tpu as pltpu


# ---------------------------------------------------------------------------
# The single fused kernel
# ---------------------------------------------------------------------------
def _decoder_block_kernel(x_ref, wup_ref, bup_ref, sk_ref,
                          w1_ref, g1_ref, be1_ref,
                          w2_ref, g2_ref, be2_ref,
                          o_ref,
                          cat_p_ref, h1_p_ref, *, eps):
    n, hp, wp, c_cat = cat_p_ref.shape
    ho, wo = hp - 2, wp - 2
    h, w = ho // 2, wo // 2
    c_sk = sk_ref.shape[3]
    c_up = c_cat - c_sk
    c_mid = h1_p_ref.shape[3]
    m = n * ho * wo
    inv_m = 1.0 / float(m)

    # ---- ConvTranspose2d(k=2, s=2): one MXU matmul. Columns ordered (di, dj, oc). ----
    u = jnp.dot(x_ref[...], wup_ref[...], preferred_element_type=jnp.float32) + bup_ref[...]
    u4 = u.reshape(n, h, w, 4 * c_up)                          # (N, H, W, 4*c_up)

    # ---- 2x2 pixel shuffle entirely in VMEM: NN-expand + per-parity lane select. ----
    e = u4.reshape(n, h, 1, w, 1, 4 * c_up)
    e = jnp.broadcast_to(e, (n, h, 2, w, 2, 4 * c_up)).reshape(n, ho, wo, 4 * c_up)
    yi = jax.lax.broadcasted_iota(jnp.int32, (n, ho, wo, c_up), 1)
    xi = jax.lax.broadcasted_iota(jnp.int32, (n, ho, wo, c_up), 2)
    tap_id = (yi % 2) * 2 + (xi % 2)
    up_full = jnp.zeros((n, ho, wo, c_up), jnp.float32)
    for tap in range(4):
        up_full = jnp.where(tap_id == tap, e[..., tap * c_up:(tap + 1) * c_up], up_full)

    # ---- concat([up, skip], channel) + zero halo, built in a VMEM scratch (never in HBM).
    cat_p_ref[...] = jnp.zeros_like(cat_p_ref)
    cat_p_ref[:, 1:ho + 1, 1:wo + 1, :] = jnp.concatenate(
        [up_full, sk_ref[...].astype(jnp.float32)], axis=-1)
    cat_pv = cat_p_ref[...]

    # ---- Conv1 (3x3, pad 1): single K=9*c_cat matmul on a VMEM im2col slab (bias-free:
    #      train-mode BN absorbs it). One bf16 cast on the dense slab.
    slab1 = jnp.concatenate(
        [cat_pv[:, ki:ki + ho, kj:kj + wo, :] for ki in range(3) for kj in range(3)],
        axis=-1).reshape(m, 9 * c_cat).astype(jnp.bfloat16)
    acc1 = jnp.dot(slab1, w1_ref[...], preferred_element_type=jnp.float32)   # (M, c_mid)

    # ---- BatchNorm (training statistics, biased variance, two-pass) + ReLU, all f32. ----
    mean1 = jnp.sum(acc1, axis=0, keepdims=True) * inv_m
    var1 = jnp.sum((acc1 - mean1) ** 2, axis=0, keepdims=True) * inv_m
    scale1 = g1_ref[...] * jax.lax.rsqrt(var1 + eps)
    shift1 = be1_ref[...] - mean1 * scale1
    h1 = jnp.maximum(acc1 * scale1 + shift1, 0.0)

    # ---- Conv2 (3x3, pad 1): halo in VMEM, single K=9*c_mid matmul. ----
    h1_p_ref[...] = jnp.zeros_like(h1_p_ref)
    h1_p_ref[:, 1:ho + 1, 1:wo + 1, :] = h1.reshape(n, ho, wo, c_mid)
    h1_pv = h1_p_ref[...]
    slab2 = jnp.concatenate(
        [h1_pv[:, ki:ki + ho, kj:kj + wo, :] for ki in range(3) for kj in range(3)],
        axis=-1).reshape(m, 9 * c_mid).astype(jnp.bfloat16)
    acc2 = jnp.dot(slab2, w2_ref[...], preferred_element_type=jnp.float32)   # (M, c_out)

    mean2 = jnp.sum(acc2, axis=0, keepdims=True) * inv_m
    var2 = jnp.sum((acc2 - mean2) ** 2, axis=0, keepdims=True) * inv_m
    scale2 = g2_ref[...] * jax.lax.rsqrt(var2 + eps)
    shift2 = be2_ref[...] - mean2 * scale2
    o_ref[...] = jnp.maximum(acc2 * scale2 + shift2, 0.0)


def decoder_block_fused(x2, wup, bup, sk, w1, g1, be1, w2, g2, be2,
                        *, n, ho, wo, c_up, c_mid, c_out, eps):
    hp, wp = ho + 2, wo + 2
    m = n * ho * wo
    c_sk = sk.shape[3]
    c_cat = c_up + c_sk
    min_, c_in = x2.shape

    def spec(shape):
        zeros = (0,) * len(shape)
        return pl.BlockSpec(shape, lambda i, z=zeros: z)

    return pl.pallas_call(
        functools.partial(_decoder_block_kernel, eps=eps),
        out_shape=jax.ShapeDtypeStruct((m, c_out), jnp.float32),
        grid_spec=pltpu.PrefetchScalarGridSpec(
            num_scalar_prefetch=0,
            grid=(1,),
            in_specs=[
                spec((min_, c_in)),          # x (N*H*W, c_in)        bf16
                spec((c_in, 4 * c_up)),      # upconv weight          bf16
                spec((1, 4 * c_up)),         # upconv bias            f32
                spec((n, ho, wo, c_sk)),     # skip NHWC              bf16
                spec((9 * c_cat, c_mid)),    # conv1 weight (9Cin,Co) bf16
                spec((1, c_mid)),            # gamma1
                spec((1, c_mid)),            # beta1
                spec((9 * c_mid, c_out)),    # conv2 weight           bf16
                spec((1, c_out)),            # gamma2
                spec((1, c_out)),            # beta2
            ],
            out_specs=spec((m, c_out)),
            scratch_shapes=[
                pltpu.VMEM((n, hp, wp, c_cat), jnp.float32),   # concat([up, skip]) + halo
                pltpu.VMEM((n, hp, wp, c_mid), jnp.float32),   # hidden activation + halo
            ],
        ),
        compiler_params=pltpu.CompilerParams(dimension_semantics=("arbitrary",)),
    )(x2, wup, bup, sk, w1, g1, be1, w2, g2, be2)


# ---------------------------------------------------------------------------
# DecoderBlock forward (PyTorch NCHW convention at the boundary)
# ---------------------------------------------------------------------------
def decoder_block_forward(params, x_nchw, skip_nchw, eps=1e-5):
    N, c_in, H, W = x_nchw.shape
    c_up = params["up_b"].shape[0]
    c_sk = skip_nchw.shape[1]
    c_mid = params["g1"].shape[0]
    c_out = params["g2"].shape[0]
    Ho, Wo = 2 * H, 2 * W

    # TODO(synk): F.interpolate(mode='bilinear', align_corners=True) resize branch is not
    # implemented; inputs must already satisfy upconv(x) spatial size == skip spatial size.
    assert skip_nchw.shape[2] == Ho and skip_nchw.shape[3] == Wo

    # Upconv operands: x as (N*H*W, c_in) bf16; weight columns ordered (di, dj, oc) so the
    # in-kernel pixel shuffle is a pure lane slice.
    x2 = jnp.transpose(x_nchw, (0, 2, 3, 1)).reshape(N * H * W, c_in).astype(jnp.bfloat16)
    wup = jnp.transpose(params["up_w"], (0, 2, 3, 1)).reshape(c_in, 4 * c_up).astype(jnp.bfloat16)
    bup = jnp.tile(params["up_b"].astype(jnp.float32), 4).reshape(1, 4 * c_up)

    # Skip in NHWC bf16 (the cast fuses into the unavoidable NCHW->NHWC transpose pass).
    sk = jnp.transpose(skip_nchw, (0, 2, 3, 1)).astype(jnp.bfloat16)

    # Conv weights as (9*Cin, Cout), rows ordered (ki, kj, cin).  b1/b2 intentionally
    # dropped: train-mode BatchNorm subtracts the per-channel mean, absorbing them exactly.
    c_cat = c_up + c_sk
    w1 = jnp.transpose(params["w1"], (2, 3, 1, 0)).reshape(9 * c_cat, c_mid).astype(jnp.bfloat16)
    w2 = jnp.transpose(params["w2"], (2, 3, 1, 0)).reshape(9 * c_mid, c_out).astype(jnp.bfloat16)

    g1 = params["g1"].reshape(1, c_mid).astype(jnp.float32)
    be1 = params["be1"].reshape(1, c_mid).astype(jnp.float32)
    g2 = params["g2"].reshape(1, c_out).astype(jnp.float32)
    be2 = params["be2"].reshape(1, c_out).astype(jnp.float32)

    out2d = decoder_block_fused(
        x2, wup, bup, sk, w1, g1, be1, w2, g2, be2,
        n=N, ho=Ho, wo=Wo, c_up=c_up, c_mid=c_mid, c_out=c_out, eps=eps)

    out = out2d.reshape(N, Ho, Wo, c_out)
    return jnp.transpose(out, (0, 3, 1, 2))          # back to NCHW


# ---------------------------------------------------------------------------
# Pure-JAX f32 reference (correctness check)
# ---------------------------------------------------------------------------
def ref_conv_block(x_nchw, w, b, gamma, beta, eps=1e-5):
    y = jax.lax.conv_general_dilated(
        x_nchw, w, window_strides=(1, 1), padding=((1, 1), (1, 1)),
        dimension_numbers=("NCHW", "OIHW", "NCHW"),
    ) + b[None, :, None, None]
    mean = jnp.mean(y, axis=(0, 2, 3), keepdims=True)
    var = jnp.mean((y - mean) ** 2, axis=(0, 2, 3), keepdims=True)
    y = (y - mean) * jax.lax.rsqrt(var + eps)
    y = y * gamma[None, :, None, None] + beta[None, :, None, None]
    return jnp.maximum(y, 0.0)


def ref_forward(params, x, skip):
    N, Cin, H, W = x.shape
    Cout = params["up_b"].shape[0]
    y = jnp.einsum("nchw,codk->nohdwk", x, params["up_w"])
    y = y.reshape(N, Cout, 2 * H, 2 * W) + params["up_b"][None, :, None, None]
    z = jnp.concatenate([y, skip], axis=1)
    z = ref_conv_block(z, params["w1"], params["b1"], params["g1"], params["be1"])
    z = ref_conv_block(z, params["w2"], params["b2"], params["g2"], params["be2"])
    return z


# ---------------------------------------------------------------------------
# Main
# ---------------------------------------------------------------------------
if __name__ == "__main__":
    key = jax.random.PRNGKey(0)
    keys = jax.random.split(key, 12)

    N = 2
    in_channels = 8      # channels of x (and of the concat fed to the first ConvBlock)
    out_channels = 4
    skip_channels = in_channels - out_channels
    H = W = 8            # x spatial; skip is 2H x 2W so the interpolate branch is not taken

    params = {
        # ConvTranspose2d(in, out, k=2, s=2): weight (Cin, Cout, 2, 2)
        "up_w": 0.2 * jax.random.normal(keys[0], (in_channels, out_channels, 2, 2), jnp.float32),
        "up_b": 0.1 * jax.random.normal(keys[1], (out_channels,), jnp.float32),
        # ConvBlock(in_channels, out_channels)
        "w1": 0.2 * jax.random.normal(keys[2], (out_channels, in_channels, 3, 3), jnp.float32),
        "b1": 0.1 * jax.random.normal(keys[3], (out_channels,), jnp.float32),
        "g1": 1.0 + 0.1 * jax.random.normal(keys[4], (out_channels,), jnp.float32),
        "be1": 0.1 * jax.random.normal(keys[5], (out_channels,), jnp.float32),
        # ConvBlock(out_channels, out_channels)
        "w2": 0.2 * jax.random.normal(keys[6], (out_channels, out_channels, 3, 3), jnp.float32),
        "b2": 0.1 * jax.random.normal(keys[7], (out_channels,), jnp.float32),
        "g2": 1.0 + 0.1 * jax.random.normal(keys[8], (out_channels,), jnp.float32),
        "be2": 0.1 * jax.random.normal(keys[9], (out_channels,), jnp.float32),
    }

    x = jax.random.normal(keys[10], (N, in_channels, H, W), jnp.float32)
    skip = jax.random.normal(keys[11], (N, skip_channels, 2 * H, 2 * W), jnp.float32)

    fwd = jax.jit(decoder_block_forward)
    out = jax.block_until_ready(fwd(params, x, skip))

    ref = jax.block_until_ready(ref_forward(params, x, skip))
    assert out.shape == (N, out_channels, 2 * H, 2 * W), out.shape
    # bf16 MXU operands in the kernel vs. f32 reference -> slightly looser tolerance.
    np.testing.assert_allclose(np.asarray(out), np.asarray(ref), atol=3e-2, rtol=3e-2)

    print("KERNEL_OK")
</pallas_src>

<mosaic_0001>
module attributes {stable_mosaic.version = 11 : i64} {
  func.func @_decoder_block_kernel(%arg0: i32, %arg1: memref<128x8xbf16, #tpu.memory_space<vmem>>, %arg2: memref<8x16xbf16, #tpu.memory_space<vmem>>, %arg3: memref<1x16xf32, #tpu.memory_space<vmem>>, %arg4: memref<2x16x16x4xbf16, #tpu.memory_space<vmem>>, %arg5: memref<72x4xbf16, #tpu.memory_space<vmem>>, %arg6: memref<1x4xf32, #tpu.memory_space<vmem>>, %arg7: memref<1x4xf32, #tpu.memory_space<vmem>>, %arg8: memref<36x4xbf16, #tpu.memory_space<vmem>>, %arg9: memref<1x4xf32, #tpu.memory_space<vmem>>, %arg10: memref<1x4xf32, #tpu.memory_space<vmem>>, %arg11: memref<512x4xf32, #tpu.memory_space<vmem>>, %arg12: memref<2x18x18x8xf32, #tpu.memory_space<vmem>>, %arg13: memref<2x18x18x4xf32, #tpu.memory_space<vmem>>) attributes {dimension_semantics = [#tpu.dimension_semantics<arbitrary>], iteration_bounds = array<i64: 1>, scalar_prefetch = 0 : i64, scratch_operands = 2 : i64, tpu.core_type = #tpu.core_type<tc>, window_params = [{pipeline_mode = #tpu.pipeline_mode<synchronous>, transform_indices = @transform_0, window_bounds = array<i64: 128, 8>}, {pipeline_mode = #tpu.pipeline_mode<synchronous>, transform_indices = @transform_1, window_bounds = array<i64: 8, 16>}, {pipeline_mode = #tpu.pipeline_mode<synchronous>, transform_indices = @transform_2, window_bounds = array<i64: 1, 16>}, {pipeline_mode = #tpu.pipeline_mode<synchronous>, transform_indices = @transform_3, window_bounds = array<i64: 2, 16, 16, 4>}, {pipeline_mode = #tpu.pipeline_mode<synchronous>, transform_indices = @transform_4, window_bounds = array<i64: 72, 4>}, {pipeline_mode = #tpu.pipeline_mode<synchronous>, transform_indices = @transform_5, window_bounds = array<i64: 1, 4>}, {pipeline_mode = #tpu.pipeline_mode<synchronous>, transform_indices = @transform_6, window_bounds = array<i64: 1, 4>}, {pipeline_mode = #tpu.pipeline_mode<synchronous>, transform_indices = @transform_7, window_bounds = array<i64: 36, 4>}, {pipeline_mode = #tpu.pipeline_mode<synchronous>, transform_indices = @transform_8, window_bounds = array<i64: 1, 4>}, {pipeline_mode = #tpu.pipeline_mode<synchronous>, transform_indices = @transform_9, window_bounds = array<i64: 1, 4>}, {pipeline_mode = #tpu.pipeline_mode<synchronous>, transform_indices = @transform_10, window_bounds = array<i64: 512, 4>}]} {
    %c0 = arith.constant 0 : index
    %c0_0 = arith.constant 0 : index
    %0 = vector.load %arg1[%c0, %c0_0] : memref<128x8xbf16, #tpu.memory_space<vmem>>, vector<128x8xbf16>
    %c0_1 = arith.constant 0 : index
    %c0_2 = arith.constant 0 : index
    %1 = vector.load %arg2[%c0_1, %c0_2] : memref<8x16xbf16, #tpu.memory_space<vmem>>, vector<8x16xbf16>
    %cst = arith.constant dense<0.000000e+00> : vector<128x16xf32>
    %2 = tpu.matmul %0, %1, %cst {dimension_numbers = #tpu.dot_dimension_numbers<[1], [0], [0], [1], [0, 0, 1, 1], [], []>} : vector<128x8xbf16>, vector<8x16xbf16>, vector<128x16xf32> -> vector<128x16xf32>
    %c0_3 = arith.constant 0 : index
    %c0_4 = arith.constant 0 : index
    %3 = vector.load %arg3[%c0_3, %c0_4] : memref<1x16xf32, #tpu.memory_space<vmem>>, vector<1x16xf32>
    %4 = vector.broadcast %3 : vector<1x16xf32> to vector<128x16xf32>
    %5 = arith.addf %2, %4 : vector<128x16xf32>
    %6 = vector.shape_cast %5 : vector<128x16xf32> to vector<2x8x8x16xf32>
    %7 = vector.shape_cast %6 : vector<2x8x8x16xf32> to vector<2x8x1x8x1x16xf32>
    %8 = vector.shape_cast %7 : vector<2x8x1x8x1x16xf32> to vector<2x8x1x8x1x16xf32>
    %9 = vector.broadcast %8 : vector<2x8x1x8x1x16xf32> to vector<2x8x2x8x2x16xf32>
    %10 = vector.shape_cast %9 : vector<2x8x2x8x2x16xf32> to vector<2x16x16x16xf32>
    %11 = tpu.iota {dimensions = array<i32: 1>} : vector<2x16x16x4xi32>
    %12 = tpu.iota {dimensions = array<i32: 2>} : vector<2x16x16x4xi32>
    %c2_i32 = arith.constant 2 : i32
    %c0_i32 = arith.constant 0 : i32
    %13 = arith.cmpi eq, %c2_i32, %c0_i32 : i32
    %c1_i32 = arith.constant 1 : i32
    %14 = arith.select %13, %c1_i32, %c2_i32 : i32
    %15 = vector.broadcast %14 : i32 to vector<2x16x16x4xi32>
    %16 = arith.remsi %11, %15 : vector<2x16x16x4xi32>
    %c0_i32_5 = arith.constant 0 : i32
    %17 = vector.broadcast %c0_i32_5 : i32 to vector<2x16x16x4xi32>
    %18 = arith.cmpi ne, %16, %17 : vector<2x16x16x4xi32>
    %c0_i32_6 = arith.constant 0 : i32
    %19 = vector.broadcast %c0_i32_6 : i32 to vector<2x16x16x4xi32>
    %20 = arith.cmpi slt, %16, %19 : vector<2x16x16x4xi32>
    %c0_i32_7 = arith.constant 0 : i32
    %21 = arith.cmpi slt, %14, %c0_i32_7 : i32
    %22 = vector.broadcast %21 : i1 to vector<2x16x16x4xi1>
    %23 = vector.broadcast %22 : vector<2x16x16x4xi1> to vector<2x16x16x4xi1>
    %24 = arith.xori %20, %23 : vector<2x16x16x4xi1>
    %25 = arith.andi %24, %18 : vector<2x16x16x4xi1>
    %26 = vector.broadcast %14 : i32 to vector<2x16x16x4xi32>
    %27 = arith.addi %16, %26 : vector<2x16x16x4xi32>
    %28 = arith.select %25, %27, %16 : vector<2x16x16x4xi1>, vector<2x16x16x4xi32>
    %c2_i32_8 = arith.constant 2 : i32
    %29 = vector.broadcast %c2_i32_8 : i32 to vector<2x16x16x4xi32>
    %30 = arith.muli %28, %29 : vector<2x16x16x4xi32>
    %c2_i32_9 = arith.constant 2 : i32
    %c0_i32_10 = arith.constant 0 : i32
    %31 = arith.cmpi eq, %c2_i32_9, %c0_i32_10 : i32
    %c1_i32_11 = arith.constant 1 : i32
    %32 = arith.select %31, %c1_i32_11, %c2_i32_9 : i32
    %33 = vector.broadcast %32 : i32 to vector<2x16x16x4xi32>
    %34 = arith.remsi %12, %33 : vector<2x16x16x4xi32>
    %c0_i32_12 = arith.constant 0 : i32
    %35 = vector.broadcast %c0_i32_12 : i32 to vector<2x16x16x4xi32>
    %36 = arith.cmpi ne, %34, %35 : vector<2x16x16x4xi32>
    %c0_i32_13 = arith.constant 0 : i32
    %37 = vector.broadcast %c0_i32_13 : i32 to vector<2x16x16x4xi32>
    %38 = arith.cmpi slt, %34, %37 : vector<2x16x16x4xi32>
    %c0_i32_14 = arith.constant 0 : i32
    %39 = arith.cmpi slt, %32, %c0_i32_14 : i32
    %40 = vector.broadcast %39 : i1 to vector<2x16x16x4xi1>
    %41 = vector.broadcast %40 : vector<2x16x16x4xi1> to vector<2x16x16x4xi1>
    %42 = arith.xori %38, %41 : vector<2x16x16x4xi1>
    %43 = arith.andi %42, %36 : vector<2x16x16x4xi1>
    %44 = vector.broadcast %32 : i32 to vector<2x16x16x4xi32>
    %45 = arith.addi %34, %44 : vector<2x16x16x4xi32>
    %46 = arith.select %43, %45, %34 : vector<2x16x16x4xi1>, vector<2x16x16x4xi32>
    %47 = arith.addi %30, %46 : vector<2x16x16x4xi32>
    %cst_15 = arith.constant 0.000000e+00 : f32
    %48 = vector.broadcast %cst_15 : f32 to vector<2x16x16x4xf32>
    %c0_i32_16 = arith.constant 0 : i32
    %49 = vector.broadcast %c0_i32_16 : i32 to vector<2x16x16x4xi32>
    %50 = arith.cmpi eq, %47, %49 : vector<2x16x16x4xi32>
    %51 = vector.extract_strided_slice %10 {offsets = [0, 0, 0, 0], sizes = [2, 16, 16, 4], strides = [1, 1, 1, 1]} : vector<2x16x16x16xf32> to vector<2x16x16x4xf32>
    %52 = arith.select %50, %51, %48 : vector<2x16x16x4xi1>, vector<2x16x16x4xf32>
    %c1_i32_17 = arith.constant 1 : i32
    %53 = vector.broadcast %c1_i32_17 : i32 to vector<2x16x16x4xi32>
    %54 = arith.cmpi eq, %47, %53 : vector<2x16x16x4xi32>
    %55 = vector.extract_strided_slice %10 {offsets = [0, 0, 0, 4], sizes = [2, 16, 16, 4], strides = [1, 1, 1, 1]} : vector<2x16x16x16xf32> to vector<2x16x16x4xf32>
    %56 = arith.select %54, %55, %52 : vector<2x16x16x4xi1>, vector<2x16x16x4xf32>
    %c2_i32_18 = arith.constant 2 : i32
    %57 = vector.broadcast %c2_i32_18 : i32 to vector<2x16x16x4xi32>
    %58 = arith.cmpi eq, %47, %57 : vector<2x16x16x4xi32>
    %59 = vector.extract_strided_slice %10 {offsets = [0, 0, 0, 8], sizes = [2, 16, 16, 4], strides = [1, 1, 1, 1]} : vector<2x16x16x16xf32> to vector<2x16x16x4xf32>
    %60 = arith.select %58, %59, %56 : vector<2x16x16x4xi1>, vector<2x16x16x4xf32>
    %c3_i32 = arith.constant 3 : i32
    %61 = vector.broadcast %c3_i32 : i32 to vector<2x16x16x4xi32>
    %62 = arith.cmpi eq, %47, %61 : vector<2x16x16x4xi32>
    %63 = vector.extract_strided_slice %10 {offsets = [0, 0, 0, 12], sizes = [2, 16, 16, 4], strides = [1, 1, 1, 1]} : vector<2x16x16x16xf32> to vector<2x16x16x4xf32>
    %64 = arith.select %62, %63, %60 : vector<2x16x16x4xi1>, vector<2x16x16x4xf32>
    %cst_19 = arith.constant 0.000000e+00 : f32
    %65 = vector.broadcast %cst_19 : f32 to vector<2x18x18x8xf32>
    %c0_20 = arith.constant 0 : index
    %c0_21 = arith.constant 0 : index
    %c0_22 = arith.constant 0 : index
    %c0_23 = arith.constant 0 : index
    %66 = vector.load %arg12[%c0_20, %c0_21, %c0_22, %c0_23] : memref<2x18x18x8xf32, #tpu.memory_space<vmem>>, vector<2x18x18x8xf32>
    tpu.vector_store %arg12[%c0_20, %c0_21, %c0_22, %c0_23], %65 {strides = array<i32>} : memref<2x18x18x8xf32, #tpu.memory_space<vmem>>, vector<2x18x18x8xf32>,
    %c0_24 = arith.constant 0 : index
    %c0_25 = arith.constant 0 : index
    %c0_26 = arith.constant 0 : index
    %c0_27 = arith.constant 0 : index
    %67 = vector.load %arg4[%c0_24, %c0_25, %c0_26, %c0_27] : memref<2x16x16x4xbf16, #tpu.memory_space<vmem>>, vector<2x16x16x4xbf16>
    %68 = arith.extf %67 : vector<2x16x16x4xbf16> to vector<2x16x16x4xf32>
    %69 = tpu.concatenate %64, %68 in 3 : vector<2x16x16x4xf32>, vector<2x16x16x4xf32> -> vector<2x16x16x8xf32>
    %c0_28 = arith.constant 0 : index
    %c1 = arith.constant 1 : index
    %c1_29 = arith.constant 1 : index
    %c0_30 = arith.constant 0 : index
    %70 = vector.load %arg12[%c0_28, %c1, %c1_29, %c0_30] : memref<2x18x18x8xf32, #tpu.memory_space<vmem>>, vector<2x16x16x8xf32>
    tpu.vector_store %arg12[%c0_28, %c1, %c1_29, %c0_30], %69 {strides = array<i32>} : memref<2x18x18x8xf32, #tpu.memory_space<vmem>>, vector<2x16x16x8xf32>,
    %c0_31 = arith.constant 0 : index
    %c0_32 = arith.constant 0 : index
    %c0_33 = arith.constant 0 : index
    %c0_34 = arith.constant 0 : index
    %71 = vector.load %arg12[%c0_31, %c0_32, %c0_33, %c0_34] : memref<2x18x18x8xf32, #tpu.memory_space<vmem>>, vector<2x18x18x8xf32>
    %72 = vector.extract_strided_slice %71 {offsets = [0, 0, 0, 0], sizes = [2, 16, 16, 8], strides = [1, 1, 1, 1]} : vector<2x18x18x8xf32> to vector<2x16x16x8xf32>
    %73 = vector.extract_strided_slice %71 {offsets = [0, 0, 1, 0], sizes = [2, 16, 16, 8], strides = [1, 1, 1, 1]} : vector<2x18x18x8xf32> to vector<2x16x16x8xf32>
    %74 = vector.extract_strided_slice %71 {offsets = [0, 0, 2, 0], sizes = [2, 16, 16, 8], strides = [1, 1, 1, 1]} : vector<2x18x18x8xf32> to vector<2x16x16x8xf32>
    %75 = vector.extract_strided_slice %71 {offsets = [0, 1, 0, 0], sizes = [2, 16, 16, 8], strides = [1, 1, 1, 1]} : vector<2x18x18x8xf32> to vector<2x16x16x8xf32>
    %76 = vector.extract_strided_slice %71 {offsets = [0, 1, 1, 0], sizes = [2, 16, 16, 8], strides = [1, 1, 1, 1]} : vector<2x18x18x8xf32> to vector<2x16x16x8xf32>
    %77 = vector.extract_strided_slice %71 {offsets = [0, 1, 2, 0], sizes = [2, 16, 16, 8], strides = [1, 1, 1, 1]} : vector<2x18x18x8xf32> to vector<2x16x16x8xf32>
    %78 = vector.extract_strided_slice %71 {offsets = [0, 2, 0, 0], sizes = [2, 16, 16, 8], strides = [1, 1, 1, 1]} : vector<2x18x18x8xf32> to vector<2x16x16x8xf32>
    %79 = vector.extract_strided_slice %71 {offsets = [0, 2, 1, 0], sizes = [2, 16, 16, 8], strides = [1, 1, 1, 1]} : vector<2x18x18x8xf32> to vector<2x16x16x8xf32>
    %80 = vector.extract_strided_slice %71 {offsets = [0, 2, 2, 0], sizes = [2, 16, 16, 8], strides = [1, 1, 1, 1]} : vector<2x18x18x8xf32> to vector<2x16x16x8xf32>
    %81 = tpu.concatenate %72, %73, %74, %75, %76, %77, %78, %79, %80 in 3 : vector<2x16x16x8xf32>, vector<2x16x16x8xf32>, vector<2x16x16x8xf32>, vector<2x16x16x8xf32>, vector<2x16x16x8xf32>, vector<2x16x16x8xf32>, vector<2x16x16x8xf32>, vector<2x16x16x8xf32>, vector<2x16x16x8xf32> -> vector<2x16x16x72xf32>
    %82 = vector.shape_cast %81 : vector<2x16x16x72xf32> to vector<512x72xf32>
    %83 = arith.truncf %82 : vector<512x72xf32> to vector<512x72xbf16>
    %c0_35 = arith.constant 0 : index
    %c0_36 = arith.constant 0 : index
    %84 = vector.load %arg5[%c0_35, %c0_36] : memref<72x4xbf16, #tpu.memory_space<vmem>>, vector<72x4xbf16>
    %cst_37 = arith.constant dense<0.000000e+00> : vector<512x4xf32>
    %85 = tpu.matmul %83, %84, %cst_37 {dimension_numbers = #tpu.dot_dimension_numbers<[1], [0], [0], [1], [0, 0, 1, 1], [], []>} : vector<512x72xbf16>, vector<72x4xbf16>, vector<512x4xf32> -> vector<512x4xf32>
    %cst_38 = arith.constant dense<0.000000e+00> : vector<4xf32>
    %86 = vector.multi_reduction <add>, %85, %cst_38 [0] : vector<512x4xf32> to vector<4xf32>
    %87 = vector.shape_cast %86 : vector<4xf32> to vector<1x4xf32>
    %cst_39 = arith.constant 0.001953125 : f32
    %88 = vector.broadcast %cst_39 : f32 to vector<1x4xf32>
    %89 = arith.mulf %87, %88 : vector<1x4xf32>
    %90 = vector.broadcast %89 : vector<1x4xf32> to vector<512x4xf32>
    %91 = arith.subf %85, %90 : vector<512x4xf32>
    %92 = arith.mulf %91, %91 : vector<512x4xf32>
    %cst_40 = arith.constant dense<0.000000e+00> : vector<4xf32>
    %93 = vector.multi_reduction <add>, %92, %cst_40 [0] : vector<512x4xf32> to vector<4xf32>
    %94 = vector.shape_cast %93 : vector<4xf32> to vector<1x4xf32>
    %cst_41 = arith.constant 0.001953125 : f32
    %95 = vector.broadcast %cst_41 : f32 to vector<1x4xf32>
    %96 = arith.mulf %94, %95 : vector<1x4xf32>
    %c0_42 = arith.constant 0 : index
    %c0_43 = arith.constant 0 : index
    %97 = vector.load %arg6[%c0_42, %c0_43] : memref<1x4xf32, #tpu.memory_space<vmem>>, vector<1x4xf32>
    %cst_44 = arith.constant 9.99999974E-6 : f32
    %98 = vector.broadcast %cst_44 : f32 to vector<1x4xf32>
    %99 = arith.addf %96, %98 : vector<1x4xf32>
    %100 = math.rsqrt %99 : vector<1x4xf32>
    %101 = arith.mulf %97, %100 : vector<1x4xf32>
    %c0_45 = arith.constant 0 : index
    %c0_46 = arith.constant 0 : index
    %102 = vector.load %arg7[%c0_45, %c0_46] : memref<1x4xf32, #tpu.memory_space<vmem>>, vector<1x4xf32>
    %103 = arith.mulf %89, %101 : vector<1x4xf32>
    %104 = arith.subf %102, %103 : vector<1x4xf32>
    %105 = vector.broadcast %101 : vector<1x4xf32> to vector<512x4xf32>
    %106 = arith.mulf %85, %105 : vector<512x4xf32>
    %107 = vector.broadcast %104 : vector<1x4xf32> to vector<512x4xf32>
    %108 = arith.addf %106, %107 : vector<512x4xf32>
    %cst_47 = arith.constant 0.000000e+00 : f32
    %109 = vector.broadcast %cst_47 : f32 to vector<512x4xf32>
    %110 = arith.maximumf %108, %109 : vector<512x4xf32>
    %cst_48 = arith.constant 0.000000e+00 : f32
    %111 = vector.broadcast %cst_48 : f32 to vector<2x18x18x4xf32>
    %c0_49 = arith.constant 0 : index
    %c0_50 = arith.constant 0 : index
    %c0_51 = arith.constant 0 : index
    %c0_52 = arith.constant 0 : index
    %112 = vector.load %arg13[%c0_49, %c0_50, %c0_51, %c0_52] : memref<2x18x18x4xf32, #tpu.memory_space<vmem>>, vector<2x18x18x4xf32>
    tpu.vector_store %arg13[%c0_49, %c0_50, %c0_51, %c0_52], %111 {strides = array<i32>} : memref<2x18x18x4xf32, #tpu.memory_space<vmem>>, vector<2x18x18x4xf32>,
    %113 = vector.shape_cast %110 : vector<512x4xf32> to vector<2x16x16x4xf32>
    %c0_53 = arith.constant 0 : index
    %c1_54 = arith.constant 1 : index
    %c1_55 = arith.constant 1 : index
    %c0_56 = arith.constant 0 : index
    %114 = vector.load %arg13[%c0_53, %c1_54, %c1_55, %c0_56] : memref<2x18x18x4xf32, #tpu.memory_space<vmem>>, vector<2x16x16x4xf32>
    tpu.vector_store %arg13[%c0_53, %c1_54, %c1_55, %c0_56], %113 {strides = array<i32>} : memref<2x18x18x4xf32, #tpu.memory_space<vmem>>, vector<2x16x16x4xf32>,
    %c0_57 = arith.constant 0 : index
    %c0_58 = arith.constant 0 : index
    %c0_59 = arith.constant 0 : index
    %c0_60 = arith.constant 0 : index
    %115 = vector.load %arg13[%c0_57, %c0_58, %c0_59, %c0_60] : memref<2x18x18x4xf32, #tpu.memory_space<vmem>>, vector<2x18x18x4xf32>
    %116 = vector.extract_strided_slice %115 {offsets = [0, 0, 0, 0], sizes = [2, 16, 16, 4], strides = [1, 1, 1, 1]} : vector<2x18x18x4xf32> to vector<2x16x16x4xf32>
    %117 = vector.extract_strided_slice %115 {offsets = [0, 0, 1, 0], sizes = [2, 16, 16, 4], strides = [1, 1, 1, 1]} : vector<2x18x18x4xf32> to vector<2x16x16x4xf32>
    %118 = vector.extract_strided_slice %115 {offsets = [0, 0, 2, 0], sizes = [2, 16, 16, 4], strides = [1, 1, 1, 1]} : vector<2x18x18x4xf32> to vector<2x16x16x4xf32>
    %119 = vector.extract_strided_slice %115 {offsets = [0, 1, 0, 0], sizes = [2, 16, 16, 4], strides = [1, 1, 1, 1]} : vector<2x18x18x4xf32> to vector<2x16x16x4xf32>
    %120 = vector.extract_strided_slice %115 {offsets = [0, 1, 1, 0], sizes = [2, 16, 16, 4], strides = [1, 1, 1, 1]} : vector<2x18x18x4xf32> to vector<2x16x16x4xf32>
    %121 = vector.extract_strided_slice %115 {offsets = [0, 1, 2, 0], sizes = [2, 16, 16, 4], strides = [1, 1, 1, 1]} : vector<2x18x18x4xf32> to vector<2x16x16x4xf32>
    %122 = vector.extract_strided_slice %115 {offsets = [0, 2, 0, 0], sizes = [2, 16, 16, 4], strides = [1, 1, 1, 1]} : vector<2x18x18x4xf32> to vector<2x16x16x4xf32>
    %123 = vector.extract_strided_slice %115 {offsets = [0, 2, 1, 0], sizes = [2, 16, 16, 4], strides = [1, 1, 1, 1]} : vector<2x18x18x4xf32> to vector<2x16x16x4xf32>
    %124 = vector.extract_strided_slice %115 {offsets = [0, 2, 2, 0], sizes = [2, 16, 16, 4], strides = [1, 1, 1, 1]} : vector<2x18x18x4xf32> to vector<2x16x16x4xf32>
    %125 = tpu.concatenate %116, %117, %118, %119, %120, %121, %122, %123, %124 in 3 : vector<2x16x16x4xf32>, vector<2x16x16x4xf32>, vector<2x16x16x4xf32>, vector<2x16x16x4xf32>, vector<2x16x16x4xf32>, vector<2x16x16x4xf32>, vector<2x16x16x4xf32>, vector<2x16x16x4xf32>, vector<2x16x16x4xf32> -> vector<2x16x16x36xf32>
    %126 = vector.shape_cast %125 : vector<2x16x16x36xf32> to vector<512x36xf32>
    %127 = arith.truncf %126 : vector<512x36xf32> to vector<512x36xbf16>
    %c0_61 = arith.constant 0 : index
    %c0_62 = arith.constant 0 : index
    %128 = vector.load %arg8[%c0_61, %c0_62] : memref<36x4xbf16, #tpu.memory_space<vmem>>, vector<36x4xbf16>
    %cst_63 = arith.constant dense<0.000000e+00> : vector<512x4xf32>
    %129 = tpu.matmul %127, %128, %cst_63 {dimension_numbers = #tpu.dot_dimension_numbers<[1], [0], [0], [1], [0, 0, 1, 1], [], []>} : vector<512x36xbf16>, vector<36x4xbf16>, vector<512x4xf32> -> vector<512x4xf32>
    %cst_64 = arith.constant dense<0.000000e+00> : vector<4xf32>
    %130 = vector.multi_reduction <add>, %129, %cst_64 [0] : vector<512x4xf32> to vector<4xf32>
    %131 = vector.shape_cast %130 : vector<4xf32> to vector<1x4xf32>
    %cst_65 = arith.constant 0.001953125 : f32
    %132 = vector.broadcast %cst_65 : f32 to vector<1x4xf32>
    %133 = arith.mulf %131, %132 : vector<1x4xf32>
    %134 = vector.broadcast %133 : vector<1x4xf32> to vector<512x4xf32>
    %135 = arith.subf %129, %134 : vector<512x4xf32>
    %136 = arith.mulf %135, %135 : vector<512x4xf32>
    %cst_66 = arith.constant dense<0.000000e+00> : vector<4xf32>
    %137 = vector.multi_reduction <add>, %136, %cst_66 [0] : vector<512x4xf32> to vector<4xf32>
    %138 = vector.shape_cast %137 : vector<4xf32> to vector<1x4xf32>
    %cst_67 = arith.constant 0.001953125 : f32
    %139 = vector.broadcast %cst_67 : f32 to vector<1x4xf32>
    %140 = arith.mulf %138, %139 : vector<1x4xf32>
    %c0_68 = arith.constant 0 : index
    %c0_69 = arith.constant 0 : index
    %141 = vector.load %arg9[%c0_68, %c0_69] : memref<1x4xf32, #tpu.memory_space<vmem>>, vector<1x4xf32>
    %cst_70 = arith.constant 9.99999974E-6 : f32
    %142 = vector.broadcast %cst_70 : f32 to vector<1x4xf32>
    %143 = arith.addf %140, %142 : vector<1x4xf32>
    %144 = math.rsqrt %143 : vector<1x4xf32>
    %145 = arith.mulf %141, %144 : vector<1x4xf32>
    %c0_71 = arith.constant 0 : index
    %c0_72 = arith.constant 0 : index
    %146 = vector.load %arg10[%c0_71, %c0_72] : memref<1x4xf32, #tpu.memory_space<vmem>>, vector<1x4xf32>
    %147 = arith.mulf %133, %145 : vector<1x4xf32>
    %148 = arith.subf %146, %147 : vector<1x4xf32>
    %149 = vector.broadcast %145 : vector<1x4xf32> to vector<512x4xf32>
    %150 = arith.mulf %129, %149 : vector<512x4xf32>
    %151 = vector.broadcast %148 : vector<1x4xf32> to vector<512x4xf32>
    %152 = arith.addf %150, %151 : vector<512x4xf32>
    %cst_73 = arith.constant 0.000000e+00 : f32
    %153 = vector.broadcast %cst_73 : f32 to vector<512x4xf32>
    %154 = arith.maximumf %152, %153 : vector<512x4xf32>
    %c0_74 = arith.constant 0 : index
    %c0_75 = arith.constant 0 : index
    %155 = vector.load %arg11[%c0_74, %c0_75] : memref<512x4xf32, #tpu.memory_space<vmem>>, vector<512x4xf32>
    tpu.vector_store %arg11[%c0_74, %c0_75], %154 {strides = array<i32>} : memref<512x4xf32, #tpu.memory_space<vmem>>, vector<512x4xf32>,
    return
  }
  func.func @transform_0(%arg0: i32) -> (i32, i32) {
    %c0_i32 = arith.constant 0 : i32
    %c0_i32_0 = arith.constant 0 : i32
    %c0_i32_1 = arith.constant 0 : i32
    return %c0_i32, %c0_i32_0 : i32, i32
  }
  func.func @transform_1(%arg0: i32) -> (i32, i32) {
    %c0_i32 = arith.constant 0 : i32
    %c0_i32_0 = arith.constant 0 : i32
    %c0_i32_1 = arith.constant 0 : i32
    return %c0_i32, %c0_i32_0 : i32, i32
  }
  func.func @transform_2(%arg0: i32) -> (i32, i32) {
    %c0_i32 = arith.constant 0 : i32
    %c0_i32_0 = arith.constant 0 : i32
    %c0_i32_1 = arith.constant 0 : i32
    return %c0_i32, %c0_i32_0 : i32, i32
  }
  func.func @transform_3(%arg0: i32) -> (i32, i32, i32, i32) {
    %c0_i32 = arith.constant 0 : i32
    %c0_i32_0 = arith.constant 0 : i32
    %c0_i32_1 = arith.constant 0 : i32
    %c0_i32_2 = arith.constant 0 : i32
    %c0_i32_3 = arith.constant 0 : i32
    return %c0_i32, %c0_i32_0, %c0_i32_1, %c0_i32_2 : i32, i32, i32, i32
  }
  func.func @transform_4(%arg0: i32) -> (i32, i32) {
    %c0_i32 = arith.constant 0 : i32
    %c0_i32_0 = arith.constant 0 : i32
    %c0_i32_1 = arith.constant 0 : i32
    return %c0_i32, %c0_i32_0 : i32, i32
  }
  func.func @transform_5(%arg0: i32) -> (i32, i32) {
    %c0_i32 = arith.constant 0 : i32
    %c0_i32_0 = arith.constant 0 : i32
    %c0_i32_1 = arith.constant 0 : i32
    return %c0_i32, %c0_i32_0 : i32, i32
  }
  func.func @transform_6(%arg0: i32) -> (i32, i32) {
    %c0_i32 = arith.constant 0 : i32
    %c0_i32_0 = arith.constant 0 : i32
    %c0_i32_1 = arith.constant 0 : i32
    return %c0_i32, %c0_i32_0 : i32, i32
  }
  func.func @transform_7(%arg0: i32) -> (i32, i32) {
    %c0_i32 = arith.constant 0 : i32
    %c0_i32_0 = arith.constant 0 : i32
    %c0_i32_1 = arith.constant 0 : i32
    return %c0_i32, %c0_i32_0 : i32, i32
  }
  func.func @transform_8(%arg0: i32) -> (i32, i32) {
    %c0_i32 = arith.constant 0 : i32
    %c0_i32_0 = arith.constant 0 : i32
    %c0_i32_1 = arith.constant 0 : i32
    return %c0_i32, %c0_i32_0 : i32, i32
  }
  func.func @transform_9(%arg0: i32) -> (i32, i32) {
    %c0_i32 = arith.constant 0 : i32
    %c0_i32_0 = arith.constant 0 : i32
    %c0_i32_1 = arith.constant 0 : i32
    return %c0_i32, %c0_i32_0 : i32, i32
  }
  func.func @transform_10(%arg0: i32) -> (i32, i32) {
    %c0_i32 = arith.constant 0 : i32
    %c0_i32_0 = arith.constant 0 : i32
    %c0_i32_1 = arith.constant 0 : i32
    return %c0_i32, %c0_i32_0 : i32, i32
  }
}

</mosaic_0001>

<llo_original>
// kernel: tile.8
$region0: #{tile.8}
  #allocation0 [shape = 's32[1]{0}', space=sflag, size = 0x4, scoped, tag = 'scoped memory for tile.8']
  %s0 = inlined_call_operand.vmem [shape: f32[4], index: 0, kind: input, shape index: {}]
  %s1 = inlined_call_operand.vmem [shape: f32[4,4], index: 1, kind: output, shape index: {}]
  // Predicated region
  $region2: #{tile.8} parent=0 // pred_check
    _
  $region3: #{tile.8} parent=0 // pred_check_branch
    %3 = sbr.rel (0) target = $region5
  $region4: #{tile.8} parent=0 // pred_region
    _
  $region5: #{tile.8} parent=0 // pred_fallthru
    _
  %v4 = vld [vmem:[%s0] ss:$0 sm:$0xff]
  %5 = vst [vmem:[%s1] sm:$0xf] %v4

// kernel: tile.9
$region0: #{tile.9}
  %s0 = inlined_call_operand.vmem [shape: f32[4,4], index: 0, kind: input, shape index: {}]
  %s1 = inlined_call_operand.vmem [shape: f32[1,16], index: 1, kind: output, shape index: {}]
  $region1: #{tile.9} parent=0
    #allocation0 [shape = 'u8[4096]{0}', space=vmem, size = 0x1000, scoped, tag = 'scoped mem for output reshape']
    #allocation1 [shape = 'u8[4096]{0}', space=vmem, size = 0x1000, scoped, tag = 'scoped mem for input reshape']
    %s3 = sshllo.u32 0, 4
    %v4 = vld [vmem:[%s0] sm:%s3]
    %5 = vst [vmem:[#allocation1] sm:%s3] %v4
    %v6 = vld [vmem:[#allocation1] sm:$0x1]
    %vm7 = vcmask 31744
    %8 = vst.msk [vmem:[#allocation0] sm:$0x1] %vm7, %v6
    %s9 = scalar_lea.vmem [#allocation1], 3
    %v10 = vld [vmem:[%s9] sm:$0x1]
    %11 = vrot.lane.b32.xlu0 %v10, 12
    %v12 = vpop.permute.xlu0 %11
    %vm13 = vcmask 130144
    %14 = vst.msk [vmem:[#allocation0] sm:$0x1] %vm13, %v12
    %s15 = scalar_lea.vmem [#allocation1], 2
    %v16 = vld [vmem:[%s15] sm:$0x1]
    %17 = vrot.lane.b32.xlu0 %v16, 8
    %v18 = vpop.permute.xlu0 %17
    %vm19 = vcmask 97344
    %20 = vst.msk [vmem:[#allocation0] sm:$0x1] %vm19, %v18
    %s21 = scalar_lea.vmem [#allocation1], 1
    %v22 = vld [vmem:[%s21] sm:$0x1]
    %23 = vrot.lane.b32.xlu0 %v22, 4
    %v24 = vpop.permute.xlu0 %23
    %vm25 = vcmask 64544
    %26 = vst.msk [vmem:[#allocation0] sm:$0x1] %vm25, %v24
    %s28 = sshllo.u32 0, 1
    %v30 = vld [vmem:[#allocation0] sm:%s28]
    %s31 = sshllo.u32 0, 1
    %32 = vst [vmem:[%s1] sm:%s31] %v30

// kernel: decoder_block_forward.1
$region0: #{decoder_block_forward.1}
  #allocation0 [shape = 'u32[]', space=smem, size = 0x4, offset = 0x4, fixed_abs, tag = 'smem constant byte address 0x4 - core index']
  #allocation1 [shape = 'u32[144,128]{1,0:T(1,128)}', space=vmem, size = 0x12000, scoped, tag = 'internal scratch']
  #allocation2 [shape = 'f32[2,18,18,8]{3,2,1,0:T(8,128)}', space=vmem, size = 0x6c000, scoped, tag = 'scratch operand']
  #allocation3 [shape = 'f32[2,18,18,4]{3,2,1,0:T(8,128)}', space=vmem, size = 0x6c000, scoped, tag = 'scratch operand']
  %s0 = inlined_call_operand.vmem [shape: bf16[128,8], index: 0, kind: input, shape index: {}]
  %s1 = inlined_call_operand.vmem [shape: bf16[8,16], index: 1, kind: input, shape index: {}]
  %s2 = inlined_call_operand.vmem [shape: f32[1,16], index: 2, kind: input, shape index: {}]
  %s3 = inlined_call_operand.vmem [shape: bf16[2,16,16,4], index: 3, kind: input, shape index: {}]
  %s4 = inlined_call_operand.vmem [shape: bf16[72,4], index: 4, kind: input, shape index: {}]
  %s5 = inlined_call_operand.vmem [shape: f32[1,4], index: 5, kind: input, shape index: {}]
  %s6 = inlined_call_operand.vmem [shape: f32[1,4], index: 6, kind: input, shape index: {}]
  %s7 = inlined_call_operand.vmem [shape: bf16[36,4], index: 7, kind: input, shape index: {}]
  %s8 = inlined_call_operand.vmem [shape: f32[1,4], index: 8, kind: input, shape index: {}]
  %s9 = inlined_call_operand.vmem [shape: f32[1,4], index: 9, kind: input, shape index: {}]
  %s10 = inlined_call_operand.vmem [shape: f32[512,4], index: 10, kind: output, shape index: {}]
  %s11 = sld [smem:[#allocation0]]
  $region50: #{decoder_block_forward.1} parent=0
    _
  %s13 = ssub.s32 1, %s11
  %s14 = scalar_select 0, %s13, %s11
  // Predicated region
  $region2: #{decoder_block_forward.1} parent=0 // pred_check
    _
  $region3: #{decoder_block_forward.1} parent=0 // pred_check_branch
    %16 = sbr.rel (0) target = $region5
  $region4: #{decoder_block_forward.1} parent=0 // pred_region
    _
  $region5: #{decoder_block_forward.1} parent=0 // pred_fallthru
    _
  // Predicated region
  $region6: #{decoder_block_forward.1} parent=0 // pred_check
    _
  $region7: #{decoder_block_forward.1} parent=0 // pred_check_branch
    %18 = sbr.rel (0) target = $region9
  $region8: #{decoder_block_forward.1} parent=0 // pred_region
    _
  $region9: #{decoder_block_forward.1} parent=0 // pred_fallthru
    _
  // Predicated region
  $region10: #{decoder_block_forward.1} parent=0 // pred_check
    _
  $region11: #{decoder_block_forward.1} parent=0 // pred_check_branch
    %20 = sbr.rel (0) target = $region13
  $region12: #{decoder_block_forward.1} parent=0 // pred_region
    _
  $region13: #{decoder_block_forward.1} parent=0 // pred_fallthru
    _
  // Predicated region
  $region14: #{decoder_block_forward.1} parent=0 // pred_check
    _
  $region15: #{decoder_block_forward.1} parent=0 // pred_check_branch
    %22 = sbr.rel (0) target = $region17
  $region16: #{decoder_block_forward.1} parent=0 // pred_region
    _
  $region17: #{decoder_block_forward.1} parent=0 // pred_fallthru
    _
  // Predicated region
  $region18: #{decoder_block_forward.1} parent=0 // pred_check
    _
  $region19: #{decoder_block_forward.1} parent=0 // pred_check_branch
    %24 = sbr.rel (0) target = $region21
  $region20: #{decoder_block_forward.1} parent=0 // pred_region
    _
  $region21: #{decoder_block_forward.1} parent=0 // pred_fallthru
    _
  // Predicated region
  $region22: #{decoder_block_forward.1} parent=0 // pred_check
    _
  $region23: #{decoder_block_forward.1} parent=0 // pred_check_branch
    %26 = sbr.rel (0) target = $region25
  $region24: #{decoder_block_forward.1} parent=0 // pred_region
    _
  $region25: #{decoder_block_forward.1} parent=0 // pred_fallthru
    _
  // Predicated region
  $region26: #{decoder_block_forward.1} parent=0 // pred_check
    _
  $region27: #{decoder_block_forward.1} parent=0 // pred_check_branch
    %28 = sbr.rel (0) target = $region29
  $region28: #{decoder_block_forward.1} parent=0 // pred_region
    _
  $region29: #{decoder_block_forward.1} parent=0 // pred_fallthru
    _
  // Predicated region
  $region30: #{decoder_block_forward.1} parent=0 // pred_check
    _
  $region31: #{decoder_block_forward.1} parent=0 // pred_check_branch
    %30 = sbr.rel (0) target = $region33
  $region32: #{decoder_block_forward.1} parent=0 // pred_region
    _
  $region33: #{decoder_block_forward.1} parent=0 // pred_fallthru
    _
  // Predicated region
  $region34: #{decoder_block_forward.1} parent=0 // pred_check
    _
  $region35: #{decoder_block_forward.1} parent=0 // pred_check_branch
    %32 = sbr.rel (0) target = $region37
  $region36: #{decoder_block_forward.1} parent=0 // pred_region
    _
  $region37: #{decoder_block_forward.1} parent=0 // pred_fallthru
    _
  // Predicated region
  $region38: #{decoder_block_forward.1} parent=0 // pred_check
    _
  $region39: #{decoder_block_forward.1} parent=0 // pred_check_branch
    %34 = sbr.rel (0) target = $region41
  $region40: #{decoder_block_forward.1} parent=0 // pred_region
    _
  $region41: #{decoder_block_forward.1} parent=0 // pred_fallthru
    _
  %v36 = vld [vmem:[%s0] sm:$0xf]
  %v37 = vld [vmem:[%s0 + $0x4] sm:$0xf]
  %v38 = vld [vmem:[%s0 + $0x8] sm:$0xf]
  %v39 = vld [vmem:[%s0 + $0xc] sm:$0xf]
  %v40 = vld [vmem:[%s0 + $0x10] sm:$0xf]
  %v41 = vld [vmem:[%s0 + $0x14] sm:$0xf]
  %v42 = vld [vmem:[%s0 + $0x18] sm:$0xf]
  %v43 = vld [vmem:[%s0 + $0x1c] sm:$0xf]
  %v44 = vld [vmem:[%s0 + $0x20] sm:$0xf]
  %v45 = vld [vmem:[%s0 + $0x24] sm:$0xf]
  %v46 = vld [vmem:[%s0 + $0x28] sm:$0xf]
  %v47 = vld [vmem:[%s0 + $0x2c] sm:$0xf]
  %v48 = vld [vmem:[%s0 + $0x30] sm:$0xf]
  %v49 = vld [vmem:[%s0 + $0x34] sm:$0xf]
  %v50 = vld [vmem:[%s0 + $0x38] sm:$0xf]
  %v51 = vld [vmem:[%s0 + $0x3c] sm:$0xf]
  %v52 = vld [vmem:[%s1] sm:$0xf]
  %v53 = vld [vmem:[%s2] sm:$0x1]
  %v55 = vlaneseq
  %v56 = vshrl.u32 %v55, 7
  %v57 = vsub.s32 0, %v56
  %v58 = vrot.slane %v53, %v57
  %v76 = vunpack.c.l.b16 %v36
  %v77 = vunpack.c.l.b16 %v37
  %v78 = vunpack.c.l.b16 %v38
  %v79 = vunpack.c.l.b16 %v39
  %v80 = vunpack.c.l.b16 %v40
  %v81 = vunpack.c.l.b16 %v41
  %v82 = vunpack.c.l.b16 %v42
  %v83 = vunpack.c.l.b16 %v43
  %v84 = vunpack.c.l.b16 %v44
  %v85 = vunpack.c.l.b16 %v45
  %v86 = vunpack.c.l.b16 %v46
  %v87 = vunpack.c.l.b16 %v47
  %v88 = vunpack.c.l.b16 %v48
  %v89 = vunpack.c.l.b16 %v49
  %v90 = vunpack.c.l.b16 %v50
  %v91 = vunpack.c.l.b16 %v51
  %v92 = vpack.c.b16 %v77, %v76
  %v93 = vpack.c.b16 %v79, %v78
  %v94 = vpack.c.b16 %v81, %v80
  %v95 = vpack.c.b16 %v83, %v82
  %v96 = vpack.c.b16 %v85, %v84
  %v97 = vpack.c.b16 %v87, %v86
  %v98 = vpack.c.b16 %v89, %v88
  %v99 = vpack.c.b16 %v91, %v90
  %vm100 = vcmask 64512
  %v102 = vsel %vm100, %v92, 0
  %v105 = vsel %vm100, %v93, 0
  %v108 = vsel %vm100, %v94, 0
  %v111 = vsel %vm100, %v95, 0
  %v114 = vsel %vm100, %v96, 0
  %v117 = vsel %vm100, %v97, 0
  %v120 = vsel %vm100, %v98, 0
  %v123 = vsel %vm100, %v99, 0
  %vm125 = vcmask 1043456
  %v127 = vsel %vm125, %v52, 0
  %129 = vmatprep.subr.bf16.mxu0 0
  %130 = vmatpush1.bf16.msra.mxu0 %v127
  %131 = vmatprep.subr.bf16.mxu0 0
  %132 = vmatpush1.bf16.msra.mxu0 0
  %133 = vmatprep.subr.bf16.mxu0 0
  %134 = vmatpush1.bf16.msra.mxu0 0
  %135 = vmatprep.subr.bf16.mxu0 0
  %136 = vmatpush1.bf16.msra.mxu0 0
  %137 = vmatprep.subr.bf16.mxu0 0
  %138 = vmatpush1.bf16.msra.mxu0 0
  %139 = vmatprep.subr.bf16.mxu0 0
  %140 = vmatpush1.bf16.msra.mxu0 0
  %141 = vmatprep.subr.bf16.mxu0 0
  %142 = vmatpush1.bf16.msra.mxu0 0
  %143 = vmatprep.subr.bf16.mxu0 0
  %144 = vmatpush1.bf16.msra.mxu0 0
  %145 = vmatprep.subr.bf16.mxu0 0
  %146 = vmatpush1.bf16.msra.mxu0 0
  %147 = vmatprep.subr.bf16.mxu0 0
  %148 = vmatpush1.bf16.msra.mxu0 0
  %149 = vmatprep.subr.bf16.mxu0 0
  %150 = vmatpush1.bf16.msra.mxu0 0
  %151 = vmatprep.subr.bf16.mxu0 0
  %152 = vmatpush1.bf16.msra.mxu0 0
  %153 = vmatprep.subr.bf16.mxu0 0
  %154 = vmatpush1.bf16.msra.mxu0 0
  %155 = vmatprep.subr.bf16.mxu0 0
  %156 = vmatpush1.bf16.msra.mxu0 0
  %157 = vmatprep.subr.bf16.mxu0 0
  %158 = vmatpush1.bf16.msra.mxu0 0
  %159 = vmatprep.subr.bf16.mxu0 0
  %160 = vmatpush1.bf16.msra.mxu0 0
  %161 = vmatprep.mubr.bf16.mxu0 0
  %162 = vmatmul.mubr.bf16.gmra.mrb[0].mxu0 %v102
  %v163 = vpop.f32.mrb[0].mxu0
  %v164 = vadd.f32 %v58, %v163
  %v165 = vpop.f32.mrb[0].mxu0
  %v166 = vpop.f32.mrb[0].mxu0
  %v167 = vadd.f32 %v58, %v166
  %v168 = vpop.f32.mrb[0].mxu0
  %169 = vmatprep.mubr.bf16.mxu0 0
  %170 = vmatmul.mubr.bf16.gmra.mrb[0].mxu0 %v105
  %v171 = vpop.f32.mrb[0].mxu0
  %v172 = vadd.f32 %v58, %v171
  %v173 = vpop.f32.mrb[0].mxu0
  %v174 = vpop.f32.mrb[0].mxu0
  %v175 = vadd.f32 %v58, %v174
  %v176 = vpop.f32.mrb[0].mxu0
  %177 = vmatprep.mubr.bf16.mxu0 0
  %178 = vmatmul.mubr.bf16.gmra.mrb[0].mxu0 %v108
  %v179 = vpop.f32.mrb[0].mxu0
  %v180 = vadd.f32 %v58, %v179
  %v181 = vpop.f32.mrb[0].mxu0
  %v182 = vpop.f32.mrb[0].mxu0
  %v183 = vadd.f32 %v58, %v182
  %v184 = vpop.f32.mrb[0].mxu0
  %185 = vmatprep.mubr.bf16.mxu0 0
  %186 = vmatmul.mubr.bf16.gmra.mrb[0].mxu0 %v111
  %v187 = vpop.f32.mrb[0].mxu0
  %v188 = vadd.f32 %v58, %v187
  %v189 = vpop.f32.mrb[0].mxu0
  %v190 = vpop.f32.mrb[0].mxu0
  %v191 = vadd.f32 %v58, %v190
  %v192 = vpop.f32.mrb[0].mxu0
  %193 = vmatprep.mubr.bf16.mxu0 0
  %194 = vmatmul.mubr.bf16.gmra.mrb[0].mxu0 %v114
  %v195 = vpop.f32.mrb[0].mxu0
  %v196 = vadd.f32 %v58, %v195
  %v197 = vpop.f32.mrb[0].mxu0
  %v198 = vpop.f32.mrb[0].mxu0
  %v199 = vadd.f32 %v58, %v198
  %v200 = vpop.f32.mrb[0].mxu0
  %201 = vmatprep.mubr.bf16.mxu0 0
  %202 = vmatmul.mubr.bf16.gmra.mrb[0].mxu0 %v117
  %v203 = vpop.f32.mrb[0].mxu0
  %v204 = vadd.f32 %v58, %v203
  %v205 = vpop.f32.mrb[0].mxu0
  %v206 = vpop.f32.mrb[0].mxu0
  %v207 = vadd.f32 %v58, %v206
  %v208 = vpop.f32.mrb[0].mxu0
  %209 = vmatprep.mubr.bf16.mxu0 0
  %210 = vmatmul.mubr.bf16.gmra.mrb[0].mxu0 %v120
  %v211 = vpop.f32.mrb[0].mxu0
  %v212 = vadd.f32 %v58, %v211
  %v213 = vpop.f32.mrb[0].mxu0
  %v214 = vpop.f32.mrb[0].mxu0
  %v215 = vadd.f32 %v58, %v214
  %v216 = vpop.f32.mrb[0].mxu0
  %217 = vmatprep.mubr.bf16.mxu0 0
  %218 = vmatmul.mubr.bf16.gmra.mrb[0].mxu0 %v123
  %v219 = vpop.f32.mrb[0].mxu0
  %v220 = vadd.f32 %v58, %v219
  %v221 = vpop.f32.mrb[0].mxu0
  %v222 = vpop.f32.mrb[0].mxu0
  %v223 = vadd.f32 %v58, %v222
  %v224 = vpop.f32.mrb[0].mxu0
  %225 = vdwg.mxu0
  %v242 = vcombine.high %v164, %v164
  %v244 = vunpack.c.l.s4 1966171168
  %v245 = vunpack.c.0.s8 %v244
  %v246 = vlaneseq
  %v247 = vshrl.u32 %v246, 7
  %v248 = vsub.s32 %v245, %v247
  %v249 = vrot.slane %v164, %v248
  %v251 = vunpack.c.l.s4 1966171168
  %v252 = vunpack.c.0.s8 %v251
  %v253 = vlaneseq
  %v254 = vshrl.u32 %v253, 7
  %v255 = vsub.s32 %v252, %v254
  %v256 = vrot.slane %v242, %v255
  %v257 = vcombine.high %v249, %v249
  %v258 = vcombine.high %v256, %v256
  %v260 = vunpack.c.l.s4 1966171168
  %v261 = vunpack.c.0.s8 %v260
  %v262 = vlaneseq
  %v263 = vshrl.u32 %v262, 7
  %v264 = vsub.s32 %v261, %v263
  %v265 = vrot.slane %v249, %v264
  %v267 = vunpack.c.l.s4 1966171168
  %v268 = vunpack.c.0.s8 %v267
  %v269 = vlaneseq
  %v270 = vshrl.u32 %v269, 7
  %v271 = vsub.s32 %v268, %v270
  %v272 = vrot.slane %v256, %v271
  %v274 = vunpack.c.l.s4 1966171168
  %v275 = vunpack.c.0.s8 %v274
  %v276 = vlaneseq
  %v277 = vshrl.u32 %v276, 7
  %v278 = vsub.s32 %v275, %v277
  %v279 = vrot.slane %v257, %v278
  %v281 = vunpack.c.l.s4 1966171168
  %v282 = vunpack.c.0.s8 %v281
  %v283 = vlaneseq
  %v284 = vshrl.u32 %v283, 7
  %v285 = vsub.s32 %v282, %v284
  %v286 = vrot.slane %v258, %v285
  %v287 = vcombine.high %v265, %v265
  %v288 = vcombine.high %v272, %v272
  %v289 = vcombine.high %v279, %v279
  %v290 = vcombine.high %v286, %v286
  %v291 = vcombine.high %v167, %v167
  %v293 = vunpack.c.l.s4 1966171168
  %v294 = vunpack.c.0.s8 %v293
  %v295 = vlaneseq
  %v296 = vshrl.u32 %v295, 7
  %v297 = vsub.s32 %v294, %v296
  %v298 = vrot.slane %v167, %v297
  %v300 = vunpack.c.l.s4 1966171168
  %v301 = vunpack.c.0.s8 %v300
  %v302 = vlaneseq
  %v303 = vshrl.u32 %v302, 7
  %v304 = vsub.s32 %v301, %v303
  %v305 = vrot.slane %v291, %v304
  %v306 = vcombine.high %v298, %v298
  %v307 = vcombine.high %v305, %v305
  %v309 = vunpack.c.l.s4 1966171168
  %v310 = vunpack.c.0.s8 %v309
  %v311 = vlaneseq
  %v312 = vshrl.u32 %v311, 7
  %v313 = vsub.s32 %v310, %v312
  %v314 = vrot.slane %v298, %v313
  %v316 = vunpack.c.l.s4 1966171168
  %v317 = vunpack.c.0.s8 %v316
  %v318 = vlaneseq
  %v319 = vshrl.u32 %v318, 7
  %v320 = vsub.s32 %v317, %v319
  %v321 = vrot.slane %v305, %v320
  %v323 = vunpack.c.l.s4 1966171168
  %v324 = vunpack.c.0.s8 %v323
  %v325 = vlaneseq
  %v326 = vshrl.u32 %v325, 7
  %v327 = vsub.s32 %v324, %v326
  %v328 = vrot.slane %v306, %v327
  %v330 = vunpack.c.l.s4 1966171168
  %v331 = vunpack.c.0.s8 %v330
  %v332 = vlaneseq
  %v333 = vshrl.u32 %v332, 7
  %v334 = vsub.s32 %v331, %v333
  %v335 = vrot.slane %v307, %v334
  %v336 = vcombine.high %v314, %v314
  %v337 = vcombine.high %v321, %v321
  %v338 = vcombine.high %v328, %v328
  %v339 = vcombine.high %v335, %v335
  %v340 = vcombine.high %v172, %v172
  %v342 = vunpack.c.l.s4 1966171168
  %v343 = vunpack.c.0.s8 %v342
  %v344 = vlaneseq
  %v345 = vshrl.u32 %v344, 7
  %v346 = vsub.s32 %v343, %v345
  %v347 = vrot.slane %v172, %v346
  %v349 = vunpack.c.l.s4 1966171168
  %v350 = vunpack.c.0.s8 %v349
  %v351 = vlaneseq
  %v352 = vshrl.u32 %v351, 7
  %v353 = vsub.s32 %v350, %v352
  %v354 = vrot.slane %v340, %v353
  %v355 = vcombine.high %v347, %v347
  %v356 = vcombine.high %v354, %v354
  %v358 = vunpack.c.l.s4 1966171168
  %v359 = vunpack.c.0.s8 %v358
  %v360 = vlaneseq
  %v361 = vshrl.u32 %v360, 7
  %v362 = vsub.s32 %v359, %v361
  %v363 = vrot.slane %v347, %v362
  %v365 = vunpack.c.l.s4 1966171168
  %v366 = vunpack.c.0.s8 %v365
  %v367 = vlaneseq
  %v368 = vshrl.u32 %v367, 7
  %v369 = vsub.s32 %v366, %v368
  %v370 = vrot.slane %v354, %v369
  %v372 = vunpack.c.l.s4 1966171168
  %v373 = vunpack.c.0.s8 %v372
  %v374 = vlaneseq
  %v375 = vshrl.u32 %v374, 7
  %v376 = vsub.s32 %v373, %v375
  %v377 = vrot.slane %v355, %v376
  %v379 = vunpack.c.l.s4 1966171168
  %v380 = vunpack.c.0.s8 %v379
  %v381 = vlaneseq
  %v382 = vshrl.u32 %v381, 7
  %v383 = vsub.s32 %v380, %v382
  %v384 = vrot.slane %v356, %v383
  %v385 = vcombine.high %v363, %v363
  %v386 = vcombine.high %v370, %v370
  %v387 = vcombine.high %v377, %v377
  %v388 = vcombine.high %v384, %v384
  %v389 = vcombine.high %v175, %v175
  %v391 = vunpack.c.l.s4 1966171168
  %v392 = vunpack.c.0.s8 %v391
  %v393 = vlaneseq
  %v394 = vshrl.u32 %v393, 7
  %v395 = vsub.s32 %v392, %v394
  %v396 = vrot.slane %v175, %v395
  %v398 = vunpack.c.l.s4 1966171168
  %v399 = vunpack.c.0.s8 %v398
  %v400 = vlaneseq
  %v401 = vshrl.u32 %v400, 7
  %v402 = vsub.s32 %v399, %v401
  %v403 = vrot.slane %v389, %v402
  %v404 = vcombine.high %v396, %v396
  %v405 = vcombine.high %v403, %v403
  %v407 = vunpack.c.l.s4 1966171168
  %v408 = vunpack.c.0.s8 %v407
  %v409 = vlaneseq
  %v410 = vshrl.u32 %v409, 7
  %v411 = vsub.s32 %v408, %v410
  %v412 = vrot.slane %v396, %v411
  %v414 = vunpack.c.l.s4 1966171168
  %v415 = vunpack.c.0.s8 %v414
  %v416 = vlaneseq
  %v417 = vshrl.u32 %v416, 7
  %v418 = vsub.s32 %v415, %v417
  %v419 = vrot.slane %v403, %v418
  %v421 = vunpack.c.l.s4 1966171168
  %v422 = vunpack.c.0.s8 %v421
  %v423 = vlaneseq
  %v424 = vshrl.u32 %v423, 7
  %v425 = vsub.s32 %v422, %v424
  %v426 = vrot.slane %v404, %v425
  %v428 = vunpack.c.l.s4 1966171168
  %v429 = vunpack.c.0.s8 %v428
  %v430 = vlaneseq
  %v431 = vshrl.u32 %v430, 7
  %v432 = vsub.s32 %v429, %v431
  %v433 = vrot.slane %v405, %v432
  %v434 = vcombine.high %v412, %v412
  %v435 = vcombine.high %v419, %v419
  %v436 = vcombine.high %v426, %v426
  %v437 = vcombine.high %v433, %v433
  %v438 = vcombine.high %v180, %v180
  %v440 = vunpack.c.l.s4 1966171168
  %v441 = vunpack.c.0.s8 %v440
  %v442 = vlaneseq
  %v443 = vshrl.u32 %v442, 7
  %v444 = vsub.s32 %v441, %v443
  %v445 = vrot.slane %v180, %v444
  %v447 = vunpack.c.l.s4 1966171168
  %v448 = vunpack.c.0.s8 %v447
  %v449 = vlaneseq
  %v450 = vshrl.u32 %v449, 7
  %v451 = vsub.s32 %v448, %v450
  %v452 = vrot.slane %v438, %v451
  %v453 = vcombine.high %v445, %v445
  %v454 = vcombine.high %v452, %v452
  %v456 = vunpack.c.l.s4 1966171168
  %v457 = vunpack.c.0.s8 %v456
  %v458 = vlaneseq
  %v459 = vshrl.u32 %v458, 7
  %v460 = vsub.s32 %v457, %v459
  %v461 = vrot.slane %v445, %v460
  %v463 = vunpack.c.l.s4 1966171168
  %v464 = vunpack.c.0.s8 %v463
  %v465 = vlaneseq
  %v466 = vshrl.u32 %v465, 7
  %v467 = vsub.s32 %v464, %v466
  %v468 = vrot.slane %v452, %v467
  %v470 = vunpack.c.l.s4 1966171168
  %v471 = vunpack.c.0.s8 %v470
  %v472 = vlaneseq
  %v473 = vshrl.u32 %v472, 7
  %v474 = vsub.s32 %v471, %v473
  %v475 = vrot.slane %v453, %v474
  %v477 = vunpack.c.l.s4 1966171168
  %v478 = vunpack.c.0.s8 %v477
  %v479 = vlaneseq
  %v480 = vshrl.u32 %v479, 7
  %v481 = vsub.s32 %v478, %v480
  %v482 = vrot.slane %v454, %v481
  %v483 = vcombine.high %v461, %v461
  %v484 = vcombine.high %v468, %v468
  %v485 = vcombine.high %v475, %v475
  %v486 = vcombine.high %v482, %v482
  %v487 = vcombine.high %v183, %v183
  %v489 = vunpack.c.l.s4 1966171168
  %v490 = vunpack.c.0.s8 %v489
  %v491 = vlaneseq
  %v492 = vshrl.u32 %v491, 7
  %v493 = vsub.s32 %v490, %v492
  %v494 = vrot.slane %v183, %v493
  %v496 = vunpack.c.l.s4 1966171168
  %v497 = vunpack.c.0.s8 %v496
  %v498 = vlaneseq
  %v499 = vshrl.u32 %v498, 7
  %v500 = vsub.s32 %v497, %v499
  %v501 = vrot.slane %v487, %v500
  %v502 = vcombine.high %v494, %v494
  %v503 = vcombine.high %v501, %v501
  %v505 = vunpack.c.l.s4 1966171168
  %v506 = vunpack.c.0.s8 %v505
  %v507 = vlaneseq
  %v508 = vshrl.u32 %v507, 7
  %v509 = vsub.s32 %v506, %v508
  %v510 = vrot.slane %v494, %v509
  %v512 = vunpack.c.l.s4 1966171168
  %v513 = vunpack.c.0.s8 %v512
  %v514 = vlaneseq
  %v515 = vshrl.u32 %v514, 7
  %v516 = vsub.s32 %v513, %v515
  %v517 = vrot.slane %v501, %v516
  %v519 = vunpack.c.l.s4 1966171168
  %v520 = vunpack.c.0.s8 %v519
  %v521 = vlaneseq
  %v522 = vshrl.u32 %v521, 7
  %v523 = vsub.s32 %v520, %v522
  %v524 = vrot.slane %v502, %v523
  %v526 = vunpack.c.l.s4 1966171168
  %v527 = vunpack.c.0.s8 %v526
  %v528 = vlaneseq
  %v529 = vshrl.u32 %v528, 7
  %v530 = vsub.s32 %v527, %v529
  %v531 = vrot.slane %v503, %v530
  %v532 = vcombine.high %v510, %v510
  %v533 = vcombine.high %v517, %v517
  %v534 = vcombine.high %v524, %v524
  %v535 = vcombine.high %v531, %v531
  %v536 = vcombine.high %v188, %v188
  %v538 = vunpack.c.l.s4 1966171168
  %v539 = vunpack.c.0.s8 %v538
  %v540 = vlaneseq
  %v541 = vshrl.u32 %v540, 7
  %v542 = vsub.s32 %v539, %v541
  %v543 = vrot.slane %v188, %v542
  %v545 = vunpack.c.l.s4 1966171168
  %v546 = vunpack.c.0.s8 %v545
  %v547 = vlaneseq
  %v548 = vshrl.u32 %v547, 7
  %v549 = vsub.s32 %v546, %v548
  %v550 = vrot.slane %v536, %v549
  %v551 = vcombine.high %v543, %v543
  %v552 = vcombine.high %v550, %v550
  %v554 = vunpack.c.l.s4 1966171168
  %v555 = vunpack.c.0.s8 %v554
  %v556 = vlaneseq
  %v557 = vshrl.u32 %v556, 7
  %v558 = vsub.s32 %v555, %v557
  %v559 = vrot.slane %v543, %v558
  %v561 = vunpack.c.l.s4 1966171168
  %v562 = vunpack.c.0.s8 %v561
  %v563 = vlaneseq
  %v564 = vshrl.u32 %v563, 7
  %v565 = vsub.s32 %v562, %v564
  %v566 = vrot.slane %v550, %v565
  %v568 = vunpack.c.l.s4 1966171168
  %v569 = vunpack.c.0.s8 %v568
  %v570 = vlaneseq
  %v571 = vshrl.u32 %v570, 7
  %v572 = vsub.s32 %v569, %v571
  %v573 = vrot.slane %v551, %v572
  %v575 = vunpack.c.l.s4 1966171168
  %v576 = vunpack.c.0.s8 %v575
  %v577 = vlaneseq
  %v578 = vshrl.u32 %v577, 7
  %v579 = vsub.s32 %v576, %v578
  %v580 = vrot.slane %v552, %v579
  %v581 = vcombine.high %v559, %v559
  %v582 = vcombine.high %v566, %v566
  %v583 = vcombine.high %v573, %v573
  %v584 = vcombine.high %v580, %v580
  %v585 = vcombine.high %v191, %v191
  %v587 = vunpack.c.l.s4 1966171168
  %v588 = vunpack.c.0.s8 %v587
  %v589 = vlaneseq
  %v590 = vshrl.u32 %v589, 7
  %v591 = vsub.s32 %v588, %v590
  %v592 = vrot.slane %v191, %v591
  %v594 = vunpack.c.l.s4 1966171168
  %v595 = vunpack.c.0.s8 %v594
  %v596 = vlaneseq
  %v597 = vshrl.u32 %v596, 7
  %v598 = vsub.s32 %v595, %v597
  %v599 = vrot.slane %v585, %v598
  %v600 = vcombine.high %v592, %v592
  %v601 = vcombine.high %v599, %v599
  %v603 = vunpack.c.l.s4 1966171168
  %v604 = vunpack.c.0.s8 %v603
  %v605 = vlaneseq
  %v606 = vshrl.u32 %v605, 7
  %v607 = vsub.s32 %v604, %v606
  %v608 = vrot.slane %v592, %v607
  %v610 = vunpack.c.l.s4 1966171168
  %v611 = vunpack.c.0.s8 %v610
  %v612 = vlaneseq
  %v613 = vshrl.u32 %v612, 7
  %v614 = vsub.s32 %v611, %v613
  %v615 = vrot.slane %v599, %v614
  %v617 = vunpack.c.l.s4 1966171168
  %v618 = vunpack.c.0.s8 %v617
  %v619 = vlaneseq
  %v620 = vshrl.u32 %v619, 7
  %v621 = vsub.s32 %v618, %v620
  %v622 = vrot.slane %v600, %v621
  %v624 = vunpack.c.l.s4 1966171168
  %v625 = vunpack.c.0.s8 %v624
  %v626 = vlaneseq
  %v627 = vshrl.u32 %v626, 7
  %v628 = vsub.s32 %v625, %v627
  %v629 = vrot.slane %v601, %v628
  %v630 = vcombine.high %v608, %v608
  %v631 = vcombine.high %v615, %v615
  %v632 = vcombine.high %v622, %v622
  %v633 = vcombine.high %v629, %v629
  %v634 = vcombine.high %v196, %v196
  %v636 = vunpack.c.l.s4 1966171168
  %v637 = vunpack.c.0.s8 %v636
  %v638 = vlaneseq
  %v639 = vshrl.u32 %v638, 7
  %v640 = vsub.s32 %v637, %v639
  %v641 = vrot.slane %v196, %v640
  %v643 = vunpack.c.l.s4 1966171168
  %v644 = vunpack.c.0.s8 %v643
  %v645 = vlaneseq
  %v646 = vshrl.u32 %v645, 7
  %v647 = vsub.s32 %v644, %v646
  %v648 = vrot.slane %v634, %v647
  %v649 = vcombine.high %v641, %v641
  %v650 = vcombine.high %v648, %v648
  %v652 = vunpack.c.l.s4 1966171168
  %v653 = vunpack.c.0.s8 %v652
  %v654 = vlaneseq
  %v655 = vshrl.u32 %v654, 7
  %v656 = vsub.s32 %v653, %v655
  %v657 = vrot.slane %v641, %v656
  %v659 = vunpack.c.l.s4 1966171168
  %v660 = vunpack.c.0.s8 %v659
  %v661 = vlaneseq
  %v662 = vshrl.u32 %v661, 7
  %v663 = vsub.s32 %v660, %v662
  %v664 = vrot.slane %v648, %v663
  %v666 = vunpack.c.l.s4 1966171168
  %v667 = vunpack.c.0.s8 %v666
  %v668 = vlaneseq
  %v669 = vshrl.u32 %v668, 7
  %v670 = vsub.s32 %v667, %v669
  %v671 = vrot.slane %v649, %v670
  %v673 = vunpack.c.l.s4 1966171168
  %v674 = vunpack.c.0.s8 %v673
  %v675 = vlaneseq
  %v676 = vshrl.u32 %v675, 7
  %v677 = vsub.s32 %v674, %v676
  %v678 = vrot.slane %v650, %v677
  %v679 = vcombine.high %v657, %v657
  %v680 = vcombine.high %v664, %v664
  %v681 = vcombine.high %v671, %v671
  %v682 = vcombine.high %v678, %v678
  %v683 = vcombine.high %v199, %v199
  %v685 = vunpack.c.l.s4 1966171168
  %v686 = vunpack.c.0.s8 %v685
  %v687 = vlaneseq
  %v688 = vshrl.u32 %v687, 7
  %v689 = vsub.s32 %v686, %v688
  %v690 = vrot.slane %v199, %v689
  %v692 = vunpack.c.l.s4 1966171168
  %v693 = vunpack.c.0.s8 %v692
  %v694 = vlaneseq
  %v695 = vshrl.u32 %v694, 7
  %v696 = vsub.s32 %v693, %v695
  %v697 = vrot.slane %v683, %v696
  %v698 = vcombine.high %v690, %v690
  %v699 = vcombine.high %v697, %v697
  %v701 = vunpack.c.l.s4 1966171168
  %v702 = vunpack.c.0.s8 %v701
  %v703 = vlaneseq
  %v704 = vshrl.u32 %v703, 7
  %v705 = vsub.s32 %v702, %v704
  %v706 = vrot.slane %v690, %v705
  %v708 = vunpack.c.l.s4 1966171168
  %v709 = vunpack.c.0.s8 %v708
  %v710 = vlaneseq
  %v711 = vshrl.u32 %v710, 7
  %v712 = vsub.s32 %v709, %v711
  %v713 = vrot.slane %v697, %v712
  %v715 = vunpack.c.l.s4 1966171168
  %v716 = vunpack.c.0.s8 %v715
  %v717 = vlaneseq
  %v718 = vshrl.u32 %v717, 7
  %v719 = vsub.s32 %v716, %v718
  %v720 = vrot.slane %v698, %v719
  %v722 = vunpack.c.l.s4 1966171168
  %v723 = vunpack.c.0.s8 %v722
  %v724 = vlaneseq
  %v725 = vshrl.u32 %v724, 7
  %v726 = vsub.s32 %v723, %v725
  %v727 = vrot.slane %v699, %v726
  %v728 = vcombine.high %v706, %v706
  %v729 = vcombine.high %v713, %v713
  %v730 = vcombine.high %v720, %v720
  %v731 = vcombine.high %v727, %v727
  %v732 = vcombine.high %v204, %v204
  %v734 = vunpack.c.l.s4 1966171168
  %v735 = vunpack.c.0.s8 %v734
  %v736 = vlaneseq
  %v737 = vshrl.u32 %v736, 7
  %v738 = vsub.s32 %v735, %v737
  %v739 = vrot.slane %v204, %v738
  %v741 = vunpack.c.l.s4 1966171168
  %v742 = vunpack.c.0.s8 %v741
  %v743 = vlaneseq
  %v744 = vshrl.u32 %v743, 7
  %v745 = vsub.s32 %v742, %v744
  %v746 = vrot.slane %v732, %v745
  %v747 = vcombine.high %v739, %v739
  %v748 = vcombine.high %v746, %v746
  %v750 = vunpack.c.l.s4 1966171168
  %v751 = vunpack.c.0.s8 %v750
  %v752 = vlaneseq
  %v753 = vshrl.u32 %v752, 7
  %v754 = vsub.s32 %v751, %v753
  %v755 = vrot.slane %v739, %v754
  %v757 = vunpack.c.l.s4 1966171168
  %v758 = vunpack.c.0.s8 %v757
  %v759 = vlaneseq
  %v760 = vshrl.u32 %v759, 7
  %v761 = vsub.s32 %v758, %v760
  %v762 = vrot.slane %v746, %v761
  %v764 = vunpack.c.l.s4 1966171168
  %v765 = vunpack.c.0.s8 %v764
  %v766 = vlaneseq
  %v767 = vshrl.u32 %v766, 7
  %v768 = vsub.s32 %v765, %v767
  %v769 = vrot.slane %v747, %v768
  %v771 = vunpack.c.l.s4 1966171168
  %v772 = vunpack.c.0.s8 %v771
  %v773 = vlaneseq
  %v774 = vshrl.u32 %v773, 7
  %v775 = vsub.s32 %v772, %v774
  %v776 = vrot.slane %v748, %v775
  %v777 = vcombine.high %v755, %v755
  %v778 = vcombine.high %v762, %v762
  %v779 = vcombine.high %v769, %v769
  %v780 = vcombine.high %v776, %v776
  %v781 = vcombine.high %v207, %v207
  %v783 = vunpack.c.l.s4 1966171168
  %v784 = vunpack.c.0.s8 %v783
  %v785 = vlaneseq
  %v786 = vshrl.u32 %v785, 7
  %v787 = vsub.s32 %v784, %v786
  %v788 = vrot.slane %v207, %v787
  %v790 = vunpack.c.l.s4 1966171168
  %v791 = vunpack.c.0.s8 %v790
  %v792 = vlaneseq
  %v793 = vshrl.u32 %v792, 7
  %v794 = vsub.s32 %v791, %v793
  %v795 = vrot.slane %v781, %v794
  %v796 = vcombine.high %v788, %v788
  %v797 = vcombine.high %v795, %v795
  %v799 = vunpack.c.l.s4 1966171168
  %v800 = vunpack.c.0.s8 %v799
  %v801 = vlaneseq
  %v802 = vshrl.u32 %v801, 7
  %v803 = vsub.s32 %v800, %v802
  %v804 = vrot.slane %v788, %v803
  %v806 = vunpack.c.l.s4 1966171168
  %v807 = vunpack.c.0.s8 %v806
  %v808 = vlaneseq
  %v809 = vshrl.u32 %v808, 7
  %v810 = vsub.s32 %v807, %v809
  %v811 = vrot.slane %v795, %v810
  %v813 = vunpack.c.l.s4 1966171168
  %v814 = vunpack.c.0.s8 %v813
  %v815 = vlaneseq
  %v816 = vshrl.u32 %v815, 7
  %v817 = vsub.s32 %v814, %v816
  %v818 = vrot.slane %v796, %v817
  %v820 = vunpack.c.l.s4 1966171168
  %v821 = vunpack.c.0.s8 %v820
  %v822 = vlaneseq
  %v823 = vshrl.u32 %v822, 7
  %v824 = vsub.s32 %v821, %v823
  %v825 = vrot.slane %v797, %v824
  %v826 = vcombine.high %v804, %v804
  %v827 = vcombine.high %v811, %v811
  %v828 = vcombine.high %v818, %v818
  %v829 = vcombine.high %v825, %v825
  %v830 = vcombine.high %v212, %v212
  %v832 = vunpack.c.l.s4 1966171168
  %v833 = vunpack.c.0.s8 %v832
  %v834 = vlaneseq
  %v835 = vshrl.u32 %v834, 7
  %v836 = vsub.s32 %v833, %v835
  %v837 = vrot.slane %v212, %v836
  %v839 = vunpack.c.l.s4 1966171168
  %v840 = vunpack.c.0.s8 %v839
  %v841 = vlaneseq
  %v842 = vshrl.u32 %v841, 7
  %v843 = vsub.s32 %v840, %v842
  %v844 = vrot.slane %v830, %v843
  %v845 = vcombine.high %v837, %v837
  %v846 = vcombine.high %v844, %v844
  %v848 = vunpack.c.l.s4 1966171168
  %v849 = vunpack.c.0.s8 %v848
  %v850 = vlaneseq
  %v851 = vshrl.u32 %v850, 7
  %v852 = vsub.s32 %v849, %v851
  %v853 = vrot.slane %v837, %v852
  %v855 = vunpack.c.l.s4 1966171168
  %v856 = vunpack.c.0.s8 %v855
  %v857 = vlaneseq
  %v858 = vshrl.u32 %v857, 7
  %v859 = vsub.s32 %v856, %v858
  %v860 = vrot.slane %v844, %v859
  %v862 = vunpack.c.l.s4 1966171168
  %v863 = vunpack.c.0.s8 %v862
  %v864 = vlaneseq
  %v865 = vshrl.u32 %v864, 7
  %v866 = vsub.s32 %v863, %v865
  %v867 = vrot.slane %v845, %v866
  %v869 = vunpack.c.l.s4 1966171168
  %v870 = vunpack.c.0.s8 %v869
  %v871 = vlaneseq
  %v872 = vshrl.u32 %v871, 7
  %v873 = vsub.s32 %v870, %v872
  %v874 = vrot.slane %v846, %v873
  %v875 = vcombine.high %v853, %v853
  %v876 = vcombine.high %v860, %v860
  %v877 = vcombine.high %v867, %v867
  %v878 = vcombine.high %v874, %v874
  %v879 = vcombine.high %v215, %v215
  %v881 = vunpack.c.l.s4 1966171168
  %v882 = vunpack.c.0.s8 %v881
  %v883 = vlaneseq
  %v884 = vshrl.u32 %v883, 7
  %v885 = vsub.s32 %v882, %v884
  %v886 = vrot.slane %v215, %v885
  %v888 = vunpack.c.l.s4 1966171168
  %v889 = vunpack.c.0.s8 %v888
  %v890 = vlaneseq
  %v891 = vshrl.u32 %v890, 7
  %v892 = vsub.s32 %v889, %v891
  %v893 = vrot.slane %v879, %v892
  %v894 = vcombine.high %v886, %v886
  %v895 = vcombine.high %v893, %v893
  %v897 = vunpack.c.l.s4 1966171168
  %v898 = vunpack.c.0.s8 %v897
  %v899 = vlaneseq
  %v900 = vshrl.u32 %v899, 7
  %v901 = vsub.s32 %v898, %v900
  %v902 = vrot.slane %v886, %v901
  %v904 = vunpack.c.l.s4 1966171168
  %v905 = vunpack.c.0.s8 %v904
  %v906 = vlaneseq
  %v907 = vshrl.u32 %v906, 7
  %v908 = vsub.s32 %v905, %v907
  %v909 = vrot.slane %v893, %v908
  %v911 = vunpack.c.l.s4 1966171168
  %v912 = vunpack.c.0.s8 %v911
  %v913 = vlaneseq
  %v914 = vshrl.u32 %v913, 7
  %v915 = vsub.s32 %v912, %v914
  %v916 = vrot.slane %v894, %v915
  %v918 = vunpack.c.l.s4 1966171168
  %v919 = vunpack.c.0.s8 %v918
  %v920 = vlaneseq
  %v921 = vshrl.u32 %v920, 7
  %v922 = vsub.s32 %v919, %v921
  %v923 = vrot.slane %v895, %v922
  %v924 = vcombine.high %v902, %v902
  %v925 = vcombine.high %v909, %v909
  %v926 = vcombine.high %v916, %v916
  %v927 = vcombine.high %v923, %v923
  %v928 = vcombine.high %v220, %v220
  %v930 = vunpack.c.l.s4 1966171168
  %v931 = vunpack.c.0.s8 %v930
  %v932 = vlaneseq
  %v933 = vshrl.u32 %v932, 7
  %v934 = vsub.s32 %v931, %v933
  %v935 = vrot.slane %v220, %v934
  %v937 = vunpack.c.l.s4 1966171168
  %v938 = vunpack.c.0.s8 %v937
  %v939 = vlaneseq
  %v940 = vshrl.u32 %v939, 7
  %v941 = vsub.s32 %v938, %v940
  %v942 = vrot.slane %v928, %v941
  %v943 = vcombine.high %v935, %v935
  %v944 = vcombine.high %v942, %v942
  %v946 = vunpack.c.l.s4 1966171168
  %v947 = vunpack.c.0.s8 %v946
  %v948 = vlaneseq
  %v949 = vshrl.u32 %v948, 7
  %v950 = vsub.s32 %v947, %v949
  %v951 = vrot.slane %v935, %v950
  %v953 = vunpack.c.l.s4 1966171168
  %v954 = vunpack.c.0.s8 %v953
  %v955 = vlaneseq
  %v956 = vshrl.u32 %v955, 7
  %v957 = vsub.s32 %v954, %v956
  %v958 = vrot.slane %v942, %v957
  %v960 = vunpack.c.l.s4 1966171168
  %v961 = vunpack.c.0.s8 %v960
  %v962 = vlaneseq
  %v963 = vshrl.u32 %v962, 7
  %v964 = vsub.s32 %v961, %v963
  %v965 = vrot.slane %v943, %v964
  %v967 = vunpack.c.l.s4 1966171168
  %v968 = vunpack.c.0.s8 %v967
  %v969 = vlaneseq
  %v970 = vshrl.u32 %v969, 7
  %v971 = vsub.s32 %v968, %v970
  %v972 = vrot.slane %v944, %v971
  %v973 = vcombine.high %v951, %v951
  %v974 = vcombine.high %v958, %v958
  %v975 = vcombine.high %v965, %v965
  %v976 = vcombine.high %v972, %v972
  %v977 = vcombine.high %v223, %v223
  %v979 = vunpack.c.l.s4 1966171168
  %v980 = vunpack.c.0.s8 %v979
  %v981 = vlaneseq
  %v982 = vshrl.u32 %v981, 7
  %v983 = vsub.s32 %v980, %v982
  %v984 = vrot.slane %v223, %v983
  %v986 = vunpack.c.l.s4 1966171168
  %v987 = vunpack.c.0.s8 %v986
  %v988 = vlaneseq
  %v989 = vshrl.u32 %v988, 7
  %v990 = vsub.s32 %v987, %v989
  %v991 = vrot.slane %v977, %v990
  %v992 = vcombine.high %v984, %v984
  %v993 = vcombine.high %v991, %v991
  %v995 = vunpack.c.l.s4 1966171168
  %v996 = vunpack.c.0.s8 %v995
  %v997 = vlaneseq
  %v998 = vshrl.u32 %v997, 7
  %v999 = vsub.s32 %v996, %v998
  %v1000 = vrot.slane %v984, %v999
  %v1002 = vunpack.c.l.s4 1966171168
  %v1003 = vunpack.c.0.s8 %v1002
  %v1004 = vlaneseq
  %v1005 = vshrl.u32 %v1004, 7
  %v1006 = vsub.s32 %v1003, %v1005
  %v1007 = vrot.slane %v991, %v1006
  %v1009 = vunpack.c.l.s4 1966171168
  %v1010 = vunpack.c.0.s8 %v1009
  %v1011 = vlaneseq
  %v1012 = vshrl.u32 %v1011, 7
  %v1013 = vsub.s32 %v1010, %v1012
  %v1014 = vrot.slane %v992, %v1013
  %v1016 = vunpack.c.l.s4 1966171168
  %v1017 = vunpack.c.0.s8 %v1016
  %v1018 = vlaneseq
  %v1019 = vshrl.u32 %v1018, 7
  %v1020 = vsub.s32 %v1017, %v1019
  %v1021 = vrot.slane %v993, %v1020
  %v1022 = vcombine.high %v1000, %v1000
  %v1023 = vcombine.high %v1007, %v1007
  %v1024 = vcombine.high %v1014, %v1014
  %v1025 = vcombine.high %v1021, %v1021
  %v1026 = vlaneseq
  %v1027 = vshrl.u32 %v1026, 7
  %v1028 = vsub.s32 0, %v1027
  %v1029 = vrot.slane %v265, %v1028
  %v1030 = vlaneseq
  %v1031 = vshrl.u32 %v1030, 7
  %v1032 = vsub.s32 0, %v1031
  %v1033 = vrot.slane %v279, %v1032
  %v1034 = vlaneseq
  %v1035 = vshrl.u32 %v1034, 7
  %v1036 = vsub.s32 0, %v1035
  %v1037 = vrot.slane %v287, %v1036
  %v1038 = vlaneseq
  %v1039 = vshrl.u32 %v1038, 7
  %v1040 = vsub.s32 0, %v1039
  %v1041 = vrot.slane %v289, %v1040
  %v1042 = vlaneseq
  %v1043 = vshrl.u32 %v1042, 7
  %v1044 = vsub.s32 0, %v1043
  %v1045 = vrot.slane %v272, %v1044
  %v1046 = vlaneseq
  %v1047 = vshrl.u32 %v1046, 7
  %v1048 = vsub.s32 0, %v1047
  %v1049 = vrot.slane %v286, %v1048
  %v1050 = vlaneseq
  %v1051 = vshrl.u32 %v1050, 7
  %v1052 = vsub.s32 0, %v1051
  %v1053 = vrot.slane %v288, %v1052
  %v1054 = vlaneseq
  %v1055 = vshrl.u32 %v1054, 7
  %v1056 = vsub.s32 0, %v1055
  %v1057 = vrot.slane %v290, %v1056
  %v1058 = vlaneseq
  %v1059 = vshrl.u32 %v1058, 7
  %v1060 = vsub.s32 0, %v1059
  %v1061 = vrot.slane %v314, %v1060
  %v1062 = vlaneseq
  %v1063 = vshrl.u32 %v1062, 7
  %v1064 = vsub.s32 0, %v1063
  %v1065 = vrot.slane %v328, %v1064
  %v1066 = vlaneseq
  %v1067 = vshrl.u32 %v1066, 7
  %v1068 = vsub.s32 0, %v1067
  %v1069 = vrot.slane %v336, %v1068
  %v1070 = vlaneseq
  %v1071 = vshrl.u32 %v1070, 7
  %v1072 = vsub.s32 0, %v1071
  %v1073 = vrot.slane %v338, %v1072
  %v1074 = vlaneseq
  %v1075 = vshrl.u32 %v1074, 7
  %v1076 = vsub.s32 0, %v1075
  %v1077 = vrot.slane %v321, %v1076
  %v1078 = vlaneseq
  %v1079 = vshrl.u32 %v1078, 7
  %v1080 = vsub.s32 0, %v1079
  %v1081 = vrot.slane %v335, %v1080
  %v1082 = vlaneseq
  %v1083 = vshrl.u32 %v1082, 7
  %v1084 = vsub.s32 0, %v1083
  %v1085 = vrot.slane %v337, %v1084
  %v1086 = vlaneseq
  %v1087 = vshrl.u32 %v1086, 7
  %v1088 = vsub.s32 0, %v1087
  %v1089 = vrot.slane %v339, %v1088
  %v1090 = vlaneseq
  %v1091 = vshrl.u32 %v1090, 7
  %v1092 = vsub.s32 0, %v1091
  %v1093 = vrot.slane %v363, %v1092
  %v1094 = vlaneseq
  %v1095 = vshrl.u32 %v1094, 7
  %v1096 = vsub.s32 0, %v1095
  %v1097 = vrot.slane %v377, %v1096
  %v1098 = vlaneseq
  %v1099 = vshrl.u32 %v1098, 7
  %v1100 = vsub.s32 0, %v1099
  %v1101 = vrot.slane %v385, %v1100
  %v1102 = vlaneseq
  %v1103 = vshrl.u32 %v1102, 7
  %v1104 = vsub.s32 0, %v1103
  %v1105 = vrot.slane %v387, %v1104
  %v1106 = vlaneseq
  %v1107 = vshrl.u32 %v1106, 7
  %v1108 = vsub.s32 0, %v1107
  %v1109 = vrot.slane %v370, %v1108
  %v1110 = vlaneseq
  %v1111 = vshrl.u32 %v1110, 7
  %v1112 = vsub.s32 0, %v1111
  %v1113 = vrot.slane %v384, %v1112
  %v1114 = vlaneseq
  %v1115 = vshrl.u32 %v1114, 7
  %v1116 = vsub.s32 0, %v1115
  %v1117 = vrot.slane %v386, %v1116
  %v1118 = vlaneseq
  %v1119 = vshrl.u32 %v1118, 7
  %v1120 = vsub.s32 0, %v1119
  %v1121 = vrot.slane %v388, %v1120
  %v1122 = vlaneseq
  %v1123 = vshrl.u32 %v1122, 7
  %v1124 = vsub.s32 0, %v1123
  %v1125 = vrot.slane %v412, %v1124
  %v1126 = vlaneseq
  %v1127 = vshrl.u32 %v1126, 7
  %v1128 = vsub.s32 0, %v1127
  %v1129 = vrot.slane %v426, %v1128
  %v1130 = vlaneseq
  %v1131 = vshrl.u32 %v1130, 7
  %v1132 = vsub.s32 0, %v1131
  %v1133 = vrot.slane %v434, %v1132
  %v1134 = vlaneseq
  %v1135 = vshrl.u32 %v1134, 7
  %v1136 = vsub.s32 0, %v1135
  %v1137 = vrot.slane %v436, %v1136
  %v1138 = vlaneseq
  %v1139 = vshrl.u32 %v1138, 7
  %v1140 = vsub.s32 0, %v1139
  %v1141 = vrot.slane %v419, %v1140
  %v1142 = vlaneseq
  %v1143 = vshrl.u32 %v1142, 7
  %v1144 = vsub.s32 0, %v1143
  %v1145 = vrot.slane %v433, %v1144
  %v1146 = vlaneseq
  %v1147 = vshrl.u32 %v1146, 7
  %v1148 = vsub.s32 0, %v1147
  %v1149 = vrot.slane %v435, %v1148
  %v1150 = vlaneseq
  %v1151 = vshrl.u32 %v1150, 7
  %v1152 = vsub.s32 0, %v1151
  %v1153 = vrot.slane %v437, %v1152
  %v1154 = vlaneseq
  %v1155 = vshrl.u32 %v1154, 7
  %v1156 = vsub.s32 0, %v1155
  %v1157 = vrot.slane %v461, %v1156
  %v1158 = vlaneseq
  %v1159 = vshrl.u32 %v1158, 7
  %v1160 = vsub.s32 0, %v1159
  %v1161 = vrot.slane %v475, %v1160
  %v1162 = vlaneseq
  %v1163 = vshrl.u32 %v1162, 7
  %v1164 = vsub.s32 0, %v1163
  %v1165 = vrot.slane %v483, %v1164
  %v1166 = vlaneseq
  %v1167 = vshrl.u32 %v1166, 7
  %v1168 = vsub.s32 0, %v1167
  %v1169 = vrot.slane %v485, %v1168
  %v1170 = vlaneseq
  %v1171 = vshrl.u32 %v1170, 7
  %v1172 = vsub.s32 0, %v1171
  %v1173 = vrot.slane %v468, %v1172
  %v1174 = vlaneseq
  %v1175 = vshrl.u32 %v1174, 7
  %v1176 = vsub.s32 0, %v1175
  %v1177 = vrot.slane %v482, %v1176
  %v1178 = vlaneseq
  %v1179 = vshrl.u32 %v1178, 7
  %v1180 = vsub.s32 0, %v1179
  %v1181 = vrot.slane %v484, %v1180
  %v1182 = vlaneseq
  %v1183 = vshrl.u32 %v1182, 7
  %v1184 = vsub.s32 0, %v1183
  %v1185 = vrot.slane %v486, %v1184
  %v1186 = vlaneseq
  %v1187 = vshrl.u32 %v1186, 7
  %v1188 = vsub.s32 0, %v1187
  %v1189 = vrot.slane %v510, %v1188
  %v1190 = vlaneseq
  %v1191 = vshrl.u32 %v1190, 7
  %v1192 = vsub.s32 0, %v1191
  %v1193 = vrot.slane %v524, %v1192
  %v1194 = vlaneseq
  %v1195 = vshrl.u32 %v1194, 7
  %v1196 = vsub.s32 0, %v1195
  %v1197 = vrot.slane %v532, %v1196
  %v1198 = vlaneseq
  %v1199 = vshrl.u32 %v1198, 7
  %v1200 = vsub.s32 0, %v1199
  %v1201 = vrot.slane %v534, %v1200
  %v1202 = vlaneseq
  %v1203 = vshrl.u32 %v1202, 7
  %v1204 = vsub.s32 0, %v1203
  %v1205 = vrot.slane %v517, %v1204
  %v1206 = vlaneseq
  %v1207 = vshrl.u32 %v1206, 7
  %v1208 = vsub.s32 0, %v1207
  %v1209 = vrot.slane %v531, %v1208
  %v1210 = vlaneseq
  %v1211 = vshrl.u32 %v1210, 7
  %v1212 = vsub.s32 0, %v1211
  %v1213 = vrot.slane %v533, %v1212
  %v1214 = vlaneseq
  %v1215 = vshrl.u32 %v1214, 7
  %v1216 = vsub.s32 0, %v1215
  %v1217 = vrot.slane %v535, %v1216
  %v1218 = vlaneseq
  %v1219 = vshrl.u32 %v1218, 7
  %v1220 = vsub.s32 0, %v1219
  %v1221 = vrot.slane %v559, %v1220
  %v1222 = vlaneseq
  %v1223 = vshrl.u32 %v1222, 7
  %v1224 = vsub.s32 0, %v1223
  %v1225 = vrot.slane %v573, %v1224
  %v1226 = vlaneseq
  %v1227 = vshrl.u32 %v1226, 7
  %v1228 = vsub.s32 0, %v1227
  %v1229 = vrot.slane %v581, %v1228
  %v1230 = vlaneseq
  %v1231 = vshrl.u32 %v1230, 7
  %v1232 = vsub.s32 0, %v1231
  %v1233 = vrot.slane %v583, %v1232
  %v1234 = vlaneseq
  %v1235 = vshrl.u32 %v1234, 7
  %v1236 = vsub.s32 0, %v1235
  %v1237 = vrot.slane %v566, %v1236
  %v1238 = vlaneseq
  %v1239 = vshrl.u32 %v1238, 7
  %v1240 = vsub.s32 0, %v1239
  %v1241 = vrot.slane %v580, %v1240
  %v1242 = vlaneseq
  %v1243 = vshrl.u32 %v1242, 7
  %v1244 = vsub.s32 0, %v1243
  %v1245 = vrot.slane %v582, %v1244
  %v1246 = vlaneseq
  %v1247 = vshrl.u32 %v1246, 7
  %v1248 = vsub.s32 0, %v1247
  %v1249 = vrot.slane %v584, %v1248
  %v1250 = vlaneseq
  %v1251 = vshrl.u32 %v1250, 7
  %v1252 = vsub.s32 0, %v1251
  %v1253 = vrot.slane %v608, %v1252
  %v1254 = vlaneseq
  %v1255 = vshrl.u32 %v1254, 7
  %v1256 = vsub.s32 0, %v1255
  %v1257 = vrot.slane %v622, %v1256
  %v1258 = vlaneseq
  %v1259 = vshrl.u32 %v1258, 7
  %v1260 = vsub.s32 0, %v1259
  %v1261 = vrot.slane %v630, %v1260
  %v1262 = vlaneseq
  %v1263 = vshrl.u32 %v1262, 7
  %v1264 = vsub.s32 0, %v1263
  %v1265 = vrot.slane %v632, %v1264
  %v1266 = vlaneseq
  %v1267 = vshrl.u32 %v1266, 7
  %v1268 = vsub.s32 0, %v1267
  %v1269 = vrot.slane %v615, %v1268
  %v1270 = vlaneseq
  %v1271 = vshrl.u32 %v1270, 7
  %v1272 = vsub.s32 0, %v1271
  %v1273 = vrot.slane %v629, %v1272
  %v1274 = vlaneseq
  %v1275 = vshrl.u32 %v1274, 7
  %v1276 = vsub.s32 0, %v1275
  %v1277 = vrot.slane %v631, %v1276
  %v1278 = vlaneseq
  %v1279 = vshrl.u32 %v1278, 7
  %v1280 = vsub.s32 0, %v1279
  %v1281 = vrot.slane %v633, %v1280
  %v1282 = vlaneseq
  %v1283 = vshrl.u32 %v1282, 7
  %v1284 = vsub.s32 0, %v1283
  %v1285 = vrot.slane %v657, %v1284
  %v1286 = vlaneseq
  %v1287 = vshrl.u32 %v1286, 7
  %v1288 = vsub.s32 0, %v1287
  %v1289 = vrot.slane %v671, %v1288
  %v1290 = vlaneseq
  %v1291 = vshrl.u32 %v1290, 7
  %v1292 = vsub.s32 0, %v1291
  %v1293 = vrot.slane %v679, %v1292
  %v1294 = vlaneseq
  %v1295 = vshrl.u32 %v1294, 7
  %v1296 = vsub.s32 0, %v1295
  %v1297 = vrot.slane %v681, %v1296
  %v1298 = vlaneseq
  %v1299 = vshrl.u32 %v1298, 7
  %v1300 = vsub.s32 0, %v1299
  %v1301 = vrot.slane %v664, %v1300
  %v1302 = vlaneseq
  %v1303 = vshrl.u32 %v1302, 7
  %v1304 = vsub.s32 0, %v1303
  %v1305 = vrot.slane %v678, %v1304
  %v1306 = vlaneseq
  %v1307 = vshrl.u32 %v1306, 7
  %v1308 = vsub.s32 0, %v1307
  %v1309 = vrot.slane %v680, %v1308
  %v1310 = vlaneseq
  %v1311 = vshrl.u32 %v1310, 7
  %v1312 = vsub.s32 0, %v1311
  %v1313 = vrot.slane %v682, %v1312
  %v1314 = vlaneseq
  %v1315 = vshrl.u32 %v1314, 7
  %v1316 = vsub.s32 0, %v1315
  %v1317 = vrot.slane %v706, %v1316
  %v1318 = vlaneseq
  %v1319 = vshrl.u32 %v1318, 7
  %v1320 = vsub.s32 0, %v1319
  %v1321 = vrot.slane %v720, %v1320
  %v1322 = vlaneseq
  %v1323 = vshrl.u32 %v1322, 7
  %v1324 = vsub.s32 0, %v1323
  %v1325 = vrot.slane %v728, %v1324
  %v1326 = vlaneseq
  %v1327 = vshrl.u32 %v1326, 7
  %v1328 = vsub.s32 0, %v1327
  %v1329 = vrot.slane %v730, %v1328
  %v1330 = vlaneseq
  %v1331 = vshrl.u32 %v1330, 7
  %v1332 = vsub.s32 0, %v1331
  %v1333 = vrot.slane %v713, %v1332
  %v1334 = vlaneseq
  %v1335 = vshrl.u32 %v1334, 7
  %v1336 = vsub.s32 0, %v1335
  %v1337 = vrot.slane %v727, %v1336
  %v1338 = vlaneseq
  %v1339 = vshrl.u32 %v1338, 7
  %v1340 = vsub.s32 0, %v1339
  %v1341 = vrot.slane %v729, %v1340
  %v1342 = vlaneseq
  %v1343 = vshrl.u32 %v1342, 7
  %v1344 = vsub.s32 0, %v1343
  %v1345 = vrot.slane %v731, %v1344
  %v1346 = vlaneseq
  %v1347 = vshrl.u32 %v1346, 7
  %v1348 = vsub.s32 0, %v1347
  %v1349 = vrot.slane %v755, %v1348
  %v1350 = vlaneseq
  %v1351 = vshrl.u32 %v1350, 7
  %v1352 = vsub.s32 0, %v1351
  %v1353 = vrot.slane %v769, %v1352
  %v1354 = vlaneseq
  %v1355 = vshrl.u32 %v1354, 7
  %v1356 = vsub.s32 0, %v1355
  %v1357 = vrot.slane %v777, %v1356
  %v1358 = vlaneseq
  %v1359 = vshrl.u32 %v1358, 7
  %v1360 = vsub.s32 0, %v1359
  %v1361 = vrot.slane %v779, %v1360
  %v1362 = vlaneseq
  %v1363 = vshrl.u32 %v1362, 7
  %v1364 = vsub.s32 0, %v1363
  %v1365 = vrot.slane %v762, %v1364
  %v1366 = vlaneseq
  %v1367 = vshrl.u32 %v1366, 7
  %v1368 = vsub.s32 0, %v1367
  %v1369 = vrot.slane %v776, %v1368
  %v1370 = vlaneseq
  %v1371 = vshrl.u32 %v1370, 7
  %v1372 = vsub.s32 0, %v1371
  %v1373 = vrot.slane %v778, %v1372
  %v1374 = vlaneseq
  %v1375 = vshrl.u32 %v1374, 7
  %v1376 = vsub.s32 0, %v1375
  %v1377 = vrot.slane %v780, %v1376
  %v1378 = vlaneseq
  %v1379 = vshrl.u32 %v1378, 7
  %v1380 = vsub.s32 0, %v1379
  %v1381 = vrot.slane %v804, %v1380
  %v1382 = vlaneseq
  %v1383 = vshrl.u32 %v1382, 7
  %v1384 = vsub.s32 0, %v1383
  %v1385 = vrot.slane %v818, %v1384
  %v1386 = vlaneseq
  %v1387 = vshrl.u32 %v1386, 7
  %v1388 = vsub.s32 0, %v1387
  %v1389 = vrot.slane %v826, %v1388
  %v1390 = vlaneseq
  %v1391 = vshrl.u32 %v1390, 7
  %v1392 = vsub.s32 0, %v1391
  %v1393 = vrot.slane %v828, %v1392
  %v1394 = vlaneseq
  %v1395 = vshrl.u32 %v1394, 7
  %v1396 = vsub.s32 0, %v1395
  %v1397 = vrot.slane %v811, %v1396
  %v1398 = vlaneseq
  %v1399 = vshrl.u32 %v1398, 7
  %v1400 = vsub.s32 0, %v1399
  %v1401 = vrot.slane %v825, %v1400
  %v1402 = vlaneseq
  %v1403 = vshrl.u32 %v1402, 7
  %v1404 = vsub.s32 0, %v1403
  %v1405 = vrot.slane %v827, %v1404
  %v1406 = vlaneseq
  %v1407 = vshrl.u32 %v1406, 7
  %v1408 = vsub.s32 0, %v1407
  %v1409 = vrot.slane %v829, %v1408
  %v1410 = vlaneseq
  %v1411 = vshrl.u32 %v1410, 7
  %v1412 = vsub.s32 0, %v1411
  %v1413 = vrot.slane %v853, %v1412
  %v1414 = vlaneseq
  %v1415 = vshrl.u32 %v1414, 7
  %v1416 = vsub.s32 0, %v1415
  %v1417 = vrot.slane %v867, %v1416
  %v1418 = vlaneseq
  %v1419 = vshrl.u32 %v1418, 7
  %v1420 = vsub.s32 0, %v1419
  %v1421 = vrot.slane %v875, %v1420
  %v1422 = vlaneseq
  %v1423 = vshrl.u32 %v1422, 7
  %v1424 = vsub.s32 0, %v1423
  %v1425 = vrot.slane %v877, %v1424
  %v1426 = vlaneseq
  %v1427 = vshrl.u32 %v1426, 7
  %v1428 = vsub.s32 0, %v1427
  %v1429 = vrot.slane %v860, %v1428
  %v1430 = vlaneseq
  %v1431 = vshrl.u32 %v1430, 7
  %v1432 = vsub.s32 0, %v1431
  %v1433 = vrot.slane %v874, %v1432
  %v1434 = vlaneseq
  %v1435 = vshrl.u32 %v1434, 7
  %v1436 = vsub.s32 0, %v1435
  %v1437 = vrot.slane %v876, %v1436
  %v1438 = vlaneseq
  %v1439 = vshrl.u32 %v1438, 7
  %v1440 = vsub.s32 0, %v1439
  %v1441 = vrot.slane %v878, %v1440
  %v1442 = vlaneseq
  %v1443 = vshrl.u32 %v1442, 7
  %v1444 = vsub.s32 0, %v1443
  %v1445 = vrot.slane %v902, %v1444
  %v1446 = vlaneseq
  %v1447 = vshrl.u32 %v1446, 7
  %v1448 = vsub.s32 0, %v1447
  %v1449 = vrot.slane %v916, %v1448
  %v1450 = vlaneseq
  %v1451 = vshrl.u32 %v1450, 7
  %v1452 = vsub.s32 0, %v1451
  %v1453 = vrot.slane %v924, %v1452
  %v1454 = vlaneseq
  %v1455 = vshrl.u32 %v1454, 7
  %v1456 = vsub.s32 0, %v1455
  %v1457 = vrot.slane %v926, %v1456
  %v1458 = vlaneseq
  %v1459 = vshrl.u32 %v1458, 7
  %v1460 = vsub.s32 0, %v1459
  %v1461 = vrot.slane %v909, %v1460
  %v1462 = vlaneseq
  %v1463 = vshrl.u32 %v1462, 7
  %v1464 = vsub.s32 0, %v1463
  %v1465 = vrot.slane %v923, %v1464
  %v1466 = vlaneseq
  %v1467 = vshrl.u32 %v1466, 7
  %v1468 = vsub.s32 0, %v1467
  %v1469 = vrot.slane %v925, %v1468
  %v1470 = vlaneseq
  %v1471 = vshrl.u32 %v1470, 7
  %v1472 = vsub.s32 0, %v1471
  %v1473 = vrot.slane %v927, %v1472
  %v1474 = vlaneseq
  %v1475 = vshrl.u32 %v1474, 7
  %v1476 = vsub.s32 0, %v1475
  %v1477 = vrot.slane %v951, %v1476
  %v1478 = vlaneseq
  %v1479 = vshrl.u32 %v1478, 7
  %v1480 = vsub.s32 0, %v1479
  %v1481 = vrot.slane %v965, %v1480
  %v1482 = vlaneseq
  %v1483 = vshrl.u32 %v1482, 7
  %v1484 = vsub.s32 0, %v1483
  %v1485 = vrot.slane %v973, %v1484
  %v1486 = vlaneseq
  %v1487 = vshrl.u32 %v1486, 7
  %v1488 = vsub.s32 0, %v1487
  %v1489 = vrot.slane %v975, %v1488
  %v1490 = vlaneseq
  %v1491 = vshrl.u32 %v1490, 7
  %v1492 = vsub.s32 0, %v1491
  %v1493 = vrot.slane %v958, %v1492
  %v1494 = vlaneseq
  %v1495 = vshrl.u32 %v1494, 7
  %v1496 = vsub.s32 0, %v1495
  %v1497 = vrot.slane %v972, %v1496
  %v1498 = vlaneseq
  %v1499 = vshrl.u32 %v1498, 7
  %v1500 = vsub.s32 0, %v1499
  %v1501 = vrot.slane %v974, %v1500
  %v1502 = vlaneseq
  %v1503 = vshrl.u32 %v1502, 7
  %v1504 = vsub.s32 0, %v1503
  %v1505 = vrot.slane %v976, %v1504
  %v1506 = vlaneseq
  %v1507 = vshrl.u32 %v1506, 7
  %v1508 = vsub.s32 0, %v1507
  %v1509 = vrot.slane %v1000, %v1508
  %v1510 = vlaneseq
  %v1511 = vshrl.u32 %v1510, 7
  %v1512 = vsub.s32 0, %v1511
  %v1513 = vrot.slane %v1014, %v1512
  %v1514 = vlaneseq
  %v1515 = vshrl.u32 %v1514, 7
  %v1516 = vsub.s32 0, %v1515
  %v1517 = vrot.slane %v1022, %v1516
  %v1518 = vlaneseq
  %v1519 = vshrl.u32 %v1518, 7
  %v1520 = vsub.s32 0, %v1519
  %v1521 = vrot.slane %v1024, %v1520
  %v1522 = vlaneseq
  %v1523 = vshrl.u32 %v1522, 7
  %v1524 = vsub.s32 0, %v1523
  %v1525 = vrot.slane %v1007, %v1524
  %v1526 = vlaneseq
  %v1527 = vshrl.u32 %v1526, 7
  %v1528 = vsub.s32 0, %v1527
  %v1529 = vrot.slane %v1021, %v1528
  %v1530 = vlaneseq
  %v1531 = vshrl.u32 %v1530, 7
  %v1532 = vsub.s32 0, %v1531
  %v1533 = vrot.slane %v1023, %v1532
  %v1534 = vlaneseq
  %v1535 = vshrl.u32 %v1534, 7
  %v1536 = vsub.s32 0, %v1535
  %v1537 = vrot.slane %v1025, %v1536
  %v1538 = vlaneseq
  %v1539 = vshrl.u32 %v1538, 7
  %v1540 = vadd.s32 %v1539, 8
  %vm1541 = vcmp.lt.s32.totalorder %v1539, 0
  %v1542 = vsub.s32 0, %v1539
  %v1543 = vsel %vm1541, %v1542, %v1539
  %v1544 = vshrl.u32 %v1543, 1
  %v1545 = vand.u32 %v1543, 1
  %v1546 = vsub.s32 0, %v1545
  %v1547 = vsel %vm1541, %v1546, %v1545
  %vm1548 = vcmp.lt.s32.totalorder %v1540, 0
  %v1549 = vsub.s32 0, %v1540
  %v1550 = vsel %vm1548, %v1549, %v1540
  %v1551 = vshrl.u32 %v1550, 1
  %v1552 = vand.u32 %v1550, 1
  %v1553 = vsub.s32 0, %v1552
  %v1554 = vsel %vm1548, %v1553, %v1552
  %vm1555 = vcmp.ne.s32.totalorder %v1547, 0
  %vm1556 = vcmp.ne.s32.totalorder %v1554, 0
  %vm1557 = vcmp.lt.s32.totalorder %v1547, 0
  %vm1558 = vcmp.lt.s32.totalorder %v1554, 0
  %vm1559 = vmand %vm1557, %vm1555
  %vm1560 = vmand %vm1558, %vm1556
  %v1561 = vadd.s32 %v1547, 2
  %v1562 = vadd.s32 %v1554, 2
  %v1563 = vsel %vm1559, %v1561, %v1547
  %v1564 = vsel %vm1560, %v1562, %v1554
  %v1565 = vadd.s32 %v1563, 2
  %v1566 = vadd.s32 %v1564, 2
  %vm1567 = vcmp.eq.s32.totalorder %v1563, 0
  %vm1568 = vcmp.eq.s32.totalorder %v1564, 0
  %vm1569 = vcmp.eq.s32.totalorder %v1565, 0
  %vm1570 = vcmp.eq.s32.totalorder %v1566, 0
  %v1571 = vcombine.low %v1029, %v1033
  %v1572 = vcombine.low %v1037, %v1041
  %v1574 = vunpack.c.l.s4 1983009808
  %v1575 = vunpack.c.0.s8 %v1574
  %v1576 = vlaneseq
  %v1577 = vshrl.u32 %v1576, 7
  %v1578 = vsub.s32 %v1575, %v1577
  %v1579 = vrot.slane %v1571, %v1578
  %v1581 = vunpack.c.l.s4 1983009808
  %v1582 = vunpack.c.0.s8 %v1581
  %v1583 = vlaneseq
  %v1584 = vshrl.u32 %v1583, 7
  %v1585 = vsub.s32 %v1582, %v1584
  %v1586 = vrot.slane %v1572, %v1585
  %v1587 = vcombine.low %v1579, %v1586
  %v1588 = vcombine.low %v1045, %v1049
  %v1589 = vcombine.low %v1053, %v1057
  %v1591 = vunpack.c.l.s4 1983009808
  %v1592 = vunpack.c.0.s8 %v1591
  %v1593 = vlaneseq
  %v1594 = vshrl.u32 %v1593, 7
  %v1595 = vsub.s32 %v1592, %v1594
  %v1596 = vrot.slane %v1588, %v1595
  %v1598 = vunpack.c.l.s4 1983009808
  %v1599 = vunpack.c.0.s8 %v1598
  %v1600 = vlaneseq
  %v1601 = vshrl.u32 %v1600, 7
  %v1602 = vsub.s32 %v1599, %v1601
  %v1603 = vrot.slane %v1589, %v1602
  %v1604 = vcombine.low %v1596, %v1603
  %v1605 = vcombine.low %v1061, %v1065
  %v1606 = vcombine.low %v1069, %v1073
  %v1608 = vunpack.c.l.s4 1983009808
  %v1609 = vunpack.c.0.s8 %v1608
  %v1610 = vlaneseq
  %v1611 = vshrl.u32 %v1610, 7
  %v1612 = vsub.s32 %v1609, %v1611
  %v1613 = vrot.slane %v1605, %v1612
  %v1615 = vunpack.c.l.s4 1983009808
  %v1616 = vunpack.c.0.s8 %v1615
  %v1617 = vlaneseq
  %v1618 = vshrl.u32 %v1617, 7
  %v1619 = vsub.s32 %v1616, %v1618
  %v1620 = vrot.slane %v1606, %v1619
  %v1621 = vcombine.low %v1613, %v1620
  %v1622 = vcombine.low %v1077, %v1081
  %v1623 = vcombine.low %v1085, %v1089
  %v1625 = vunpack.c.l.s4 1983009808
  %v1626 = vunpack.c.0.s8 %v1625
  %v1627 = vlaneseq
  %v1628 = vshrl.u32 %v1627, 7
  %v1629 = vsub.s32 %v1626, %v1628
  %v1630 = vrot.slane %v1622, %v1629
  %v1632 = vunpack.c.l.s4 1983009808
  %v1633 = vunpack.c.0.s8 %v1632
  %v1634 = vlaneseq
  %v1635 = vshrl.u32 %v1634, 7
  %v1636 = vsub.s32 %v1633, %v1635
  %v1637 = vrot.slane %v1623, %v1636
  %v1638 = vcombine.low %v1630, %v1637
  %v1639 = vcombine.low %v1093, %v1097
  %v1640 = vcombine.low %v1101, %v1105
  %v1642 = vunpack.c.l.s4 1983009808
  %v1643 = vunpack.c.0.s8 %v1642
  %v1644 = vlaneseq
  %v1645 = vshrl.u32 %v1644, 7
  %v1646 = vsub.s32 %v1643, %v1645
  %v1647 = vrot.slane %v1639, %v1646
  %v1649 = vunpack.c.l.s4 1983009808
  %v1650 = vunpack.c.0.s8 %v1649
  %v1651 = vlaneseq
  %v1652 = vshrl.u32 %v1651, 7
  %v1653 = vsub.s32 %v1650, %v1652
  %v1654 = vrot.slane %v1640, %v1653
  %v1655 = vcombine.low %v1647, %v1654
  %v1656 = vcombine.low %v1109, %v1113
  %v1657 = vcombine.low %v1117, %v1121
  %v1659 = vunpack.c.l.s4 1983009808
  %v1660 = vunpack.c.0.s8 %v1659
  %v1661 = vlaneseq
  %v1662 = vshrl.u32 %v1661, 7
  %v1663 = vsub.s32 %v1660, %v1662
  %v1664 = vrot.slane %v1656, %v1663
  %v1666 = vunpack.c.l.s4 1983009808
  %v1667 = vunpack.c.0.s8 %v1666
  %v1668 = vlaneseq
  %v1669 = vshrl.u32 %v1668, 7
  %v1670 = vsub.s32 %v1667, %v1669
  %v1671 = vrot.slane %v1657, %v1670
  %v1672 = vcombine.low %v1664, %v1671
  %v1673 = vcombine.low %v1125, %v1129
  %v1674 = vcombine.low %v1133, %v1137
  %v1676 = vunpack.c.l.s4 1983009808
  %v1677 = vunpack.c.0.s8 %v1676
  %v1678 = vlaneseq
  %v1679 = vshrl.u32 %v1678, 7
  %v1680 = vsub.s32 %v1677, %v1679
  %v1681 = vrot.slane %v1673, %v1680
  %v1683 = vunpack.c.l.s4 1983009808
  %v1684 = vunpack.c.0.s8 %v1683
  %v1685 = vlaneseq
  %v1686 = vshrl.u32 %v1685, 7
  %v1687 = vsub.s32 %v1684, %v1686
  %v1688 = vrot.slane %v1674, %v1687
  %v1689 = vcombine.low %v1681, %v1688
  %v1690 = vcombine.low %v1141, %v1145
  %v1691 = vcombine.low %v1149, %v1153
  %v1693 = vunpack.c.l.s4 1983009808
  %v1694 = vunpack.c.0.s8 %v1693
  %v1695 = vlaneseq
  %v1696 = vshrl.u32 %v1695, 7
  %v1697 = vsub.s32 %v1694, %v1696
  %v1698 = vrot.slane %v1690, %v1697
  %v1700 = vunpack.c.l.s4 1983009808
  %v1701 = vunpack.c.0.s8 %v1700
  %v1702 = vlaneseq
  %v1703 = vshrl.u32 %v1702, 7
  %v1704 = vsub.s32 %v1701, %v1703
  %v1705 = vrot.slane %v1691, %v1704
  %v1706 = vcombine.low %v1698, %v1705
  %v1707 = vcombine.low %v1157, %v1161
  %v1708 = vcombine.low %v1165, %v1169
  %v1710 = vunpack.c.l.s4 1983009808
  %v1711 = vunpack.c.0.s8 %v1710
  %v1712 = vlaneseq
  %v1713 = vshrl.u32 %v1712, 7
  %v1714 = vsub.s32 %v1711, %v1713
  %v1715 = vrot.slane %v1707, %v1714
  %v1717 = vunpack.c.l.s4 1983009808
  %v1718 = vunpack.c.0.s8 %v1717
  %v1719 = vlaneseq
  %v1720 = vshrl.u32 %v1719, 7
  %v1721 = vsub.s32 %v1718, %v1720
  %v1722 = vrot.slane %v1708, %v1721
  %v1723 = vcombine.low %v1715, %v1722
  %v1724 = vcombine.low %v1173, %v1177
  %v1725 = vcombine.low %v1181, %v1185
  %v1727 = vunpack.c.l.s4 1983009808
  %v1728 = vunpack.c.0.s8 %v1727
  %v1729 = vlaneseq
  %v1730 = vshrl.u32 %v1729, 7
  %v1731 = vsub.s32 %v1728, %v1730
  %v1732 = vrot.slane %v1724, %v1731
  %v1734 = vunpack.c.l.s4 1983009808
  %v1735 = vunpack.c.0.s8 %v1734
  %v1736 = vlaneseq
  %v1737 = vshrl.u32 %v1736, 7
  %v1738 = vsub.s32 %v1735, %v1737
  %v1739 = vrot.slane %v1725, %v1738
  %v1740 = vcombine.low %v1732, %v1739
  %v1741 = vcombine.low %v1189, %v1193
  %v1742 = vcombine.low %v1197, %v1201
  %v1744 = vunpack.c.l.s4 1983009808
  %v1745 = vunpack.c.0.s8 %v1744
  %v1746 = vlaneseq
  %v1747 = vshrl.u32 %v1746, 7
  %v1748 = vsub.s32 %v1745, %v1747
  %v1749 = vrot.slane %v1741, %v1748
  %v1751 = vunpack.c.l.s4 1983009808
  %v1752 = vunpack.c.0.s8 %v1751
  %v1753 = vlaneseq
  %v1754 = vshrl.u32 %v1753, 7
  %v1755 = vsub.s32 %v1752, %v1754
  %v1756 = vrot.slane %v1742, %v1755
  %v1757 = vcombine.low %v1749, %v1756
  %v1758 = vcombine.low %v1205, %v1209
  %v1759 = vcombine.low %v1213, %v1217
  %v1761 = vunpack.c.l.s4 1983009808
  %v1762 = vunpack.c.0.s8 %v1761
  %v1763 = vlaneseq
  %v1764 = vshrl.u32 %v1763, 7
  %v1765 = vsub.s32 %v1762, %v1764
  %v1766 = vrot.slane %v1758, %v1765
  %v1768 = vunpack.c.l.s4 1983009808
  %v1769 = vunpack.c.0.s8 %v1768
  %v1770 = vlaneseq
  %v1771 = vshrl.u32 %v1770, 7
  %v1772 = vsub.s32 %v1769, %v1771
  %v1773 = vrot.slane %v1759, %v1772
  %v1774 = vcombine.low %v1766, %v1773
  %v1775 = vcombine.low %v1221, %v1225
  %v1776 = vcombine.low %v1229, %v1233
  %v1778 = vunpack.c.l.s4 1983009808
  %v1779 = vunpack.c.0.s8 %v1778
  %v1780 = vlaneseq
  %v1781 = vshrl.u32 %v1780, 7
  %v1782 = vsub.s32 %v1779, %v1781
  %v1783 = vrot.slane %v1775, %v1782
  %v1785 = vunpack.c.l.s4 1983009808
  %v1786 = vunpack.c.0.s8 %v1785
  %v1787 = vlaneseq
  %v1788 = vshrl.u32 %v1787, 7
  %v1789 = vsub.s32 %v1786, %v1788
  %v1790 = vrot.slane %v1776, %v1789
  %v1791 = vcombine.low %v1783, %v1790
  %v1792 = vcombine.low %v1237, %v1241
  %v1793 = vcombine.low %v1245, %v1249
  %v1795 = vunpack.c.l.s4 1983009808
  %v1796 = vunpack.c.0.s8 %v1795
  %v1797 = vlaneseq
  %v1798 = vshrl.u32 %v1797, 7
  %v1799 = vsub.s32 %v1796, %v1798
  %v1800 = vrot.slane %v1792, %v1799
  %v1802 = vunpack.c.l.s4 1983009808
  %v1803 = vunpack.c.0.s8 %v1802
  %v1804 = vlaneseq
  %v1805 = vshrl.u32 %v1804, 7
  %v1806 = vsub.s32 %v1803, %v1805
  %v1807 = vrot.slane %v1793, %v1806
  %v1808 = vcombine.low %v1800, %v1807
  %v1809 = vcombine.low %v1253, %v1257
  %v1810 = vcombine.low %v1261, %v1265
  %v1812 = vunpack.c.l.s4 1983009808
  %v1813 = vunpack.c.0.s8 %v1812
  %v1814 = vlaneseq
  %v1815 = vshrl.u32 %v1814, 7
  %v1816 = vsub.s32 %v1813, %v1815
  %v1817 = vrot.slane %v1809, %v1816
  %v1819 = vunpack.c.l.s4 1983009808
  %v1820 = vunpack.c.0.s8 %v1819
  %v1821 = vlaneseq
  %v1822 = vshrl.u32 %v1821, 7
  %v1823 = vsub.s32 %v1820, %v1822
  %v1824 = vrot.slane %v1810, %v1823
  %v1825 = vcombine.low %v1817, %v1824
  %v1826 = vcombine.low %v1269, %v1273
  %v1827 = vcombine.low %v1277, %v1281
  %v1829 = vunpack.c.l.s4 1983009808
  %v1830 = vunpack.c.0.s8 %v1829
  %v1831 = vlaneseq
  %v1832 = vshrl.u32 %v1831, 7
  %v1833 = vsub.s32 %v1830, %v1832
  %v1834 = vrot.slane %v1826, %v1833
  %v1836 = vunpack.c.l.s4 1983009808
  %v1837 = vunpack.c.0.s8 %v1836
  %v1838 = vlaneseq
  %v1839 = vshrl.u32 %v1838, 7
  %v1840 = vsub.s32 %v1837, %v1839
  %v1841 = vrot.slane %v1827, %v1840
  %v1842 = vcombine.low %v1834, %v1841
  %v1843 = vcombine.low %v1285, %v1289
  %v1844 = vcombine.low %v1293, %v1297
  %v1846 = vunpack.c.l.s4 1983009808
  %v1847 = vunpack.c.0.s8 %v1846
  %v1848 = vlaneseq
  %v1849 = vshrl.u32 %v1848, 7
  %v1850 = vsub.s32 %v1847, %v1849
  %v1851 = vrot.slane %v1843, %v1850
  %v1853 = vunpack.c.l.s4 1983009808
  %v1854 = vunpack.c.0.s8 %v1853
  %v1855 = vlaneseq
  %v1856 = vshrl.u32 %v1855, 7
  %v1857 = vsub.s32 %v1854, %v1856
  %v1858 = vrot.slane %v1844, %v1857
  %v1859 = vcombine.low %v1851, %v1858
  %v1860 = vcombine.low %v1301, %v1305
  %v1861 = vcombine.low %v1309, %v1313
  %v1863 = vunpack.c.l.s4 1983009808
  %v1864 = vunpack.c.0.s8 %v1863
  %v1865 = vlaneseq
  %v1866 = vshrl.u32 %v1865, 7
  %v1867 = vsub.s32 %v1864, %v1866
  %v1868 = vrot.slane %v1860, %v1867
  %v1870 = vunpack.c.l.s4 1983009808
  %v1871 = vunpack.c.0.s8 %v1870
  %v1872 = vlaneseq
  %v1873 = vshrl.u32 %v1872, 7
  %v1874 = vsub.s32 %v1871, %v1873
  %v1875 = vrot.slane %v1861, %v1874
  %v1876 = vcombine.low %v1868, %v1875
  %v1877 = vcombine.low %v1317, %v1321
  %v1878 = vcombine.low %v1325, %v1329
  %v1880 = vunpack.c.l.s4 1983009808
  %v1881 = vunpack.c.0.s8 %v1880
  %v1882 = vlaneseq
  %v1883 = vshrl.u32 %v1882, 7
  %v1884 = vsub.s32 %v1881, %v1883
  %v1885 = vrot.slane %v1877, %v1884
  %v1887 = vunpack.c.l.s4 1983009808
  %v1888 = vunpack.c.0.s8 %v1887
  %v1889 = vlaneseq
  %v1890 = vshrl.u32 %v1889, 7
  %v1891 = vsub.s32 %v1888, %v1890
  %v1892 = vrot.slane %v1878, %v1891
  %v1893 = vcombine.low %v1885, %v1892
  %v1894 = vcombine.low %v1333, %v1337
  %v1895 = vcombine.low %v1341, %v1345
  %v1897 = vunpack.c.l.s4 1983009808
  %v1898 = vunpack.c.0.s8 %v1897
  %v1899 = vlaneseq
  %v1900 = vshrl.u32 %v1899, 7
  %v1901 = vsub.s32 %v1898, %v1900
  %v1902 = vrot.slane %v1894, %v1901
  %v1904 = vunpack.c.l.s4 1983009808
  %v1905 = vunpack.c.0.s8 %v1904
  %v1906 = vlaneseq
  %v1907 = vshrl.u32 %v1906, 7
  %v1908 = vsub.s32 %v1905, %v1907
  %v1909 = vrot.slane %v1895, %v1908
  %v1910 = vcombine.low %v1902, %v1909
  %v1911 = vcombine.low %v1349, %v1353
  %v1912 = vcombine.low %v1357, %v1361
  %v1914 = vunpack.c.l.s4 1983009808
  %v1915 = vunpack.c.0.s8 %v1914
  %v1916 = vlaneseq
  %v1917 = vshrl.u32 %v1916, 7
  %v1918 = vsub.s32 %v1915, %v1917
  %v1919 = vrot.slane %v1911, %v1918
  %v1921 = vunpack.c.l.s4 1983009808
  %v1922 = vunpack.c.0.s8 %v1921
  %v1923 = vlaneseq
  %v1924 = vshrl.u32 %v1923, 7
  %v1925 = vsub.s32 %v1922, %v1924
  %v1926 = vrot.slane %v1912, %v1925
  %v1927 = vcombine.low %v1919, %v1926
  %v1928 = vcombine.low %v1365, %v1369
  %v1929 = vcombine.low %v1373, %v1377
  %v1931 = vunpack.c.l.s4 1983009808
  %v1932 = vunpack.c.0.s8 %v1931
  %v1933 = vlaneseq
  %v1934 = vshrl.u32 %v1933, 7
  %v1935 = vsub.s32 %v1932, %v1934
  %v1936 = vrot.slane %v1928, %v1935
  %v1938 = vunpack.c.l.s4 1983009808
  %v1939 = vunpack.c.0.s8 %v1938
  %v1940 = vlaneseq
  %v1941 = vshrl.u32 %v1940, 7
  %v1942 = vsub.s32 %v1939, %v1941
  %v1943 = vrot.slane %v1929, %v1942
  %v1944 = vcombine.low %v1936, %v1943
  %v1945 = vcombine.low %v1381, %v1385
  %v1946 = vcombine.low %v1389, %v1393
  %v1948 = vunpack.c.l.s4 1983009808
  %v1949 = vunpack.c.0.s8 %v1948
  %v1950 = vlaneseq
  %v1951 = vshrl.u32 %v1950, 7
  %v1952 = vsub.s32 %v1949, %v1951
  %v1953 = vrot.slane %v1945, %v1952
  %v1955 = vunpack.c.l.s4 1983009808
  %v1956 = vunpack.c.0.s8 %v1955
  %v1957 = vlaneseq
  %v1958 = vshrl.u32 %v1957, 7
  %v1959 = vsub.s32 %v1956, %v1958
  %v1960 = vrot.slane %v1946, %v1959
  %v1961 = vcombine.low %v1953, %v1960
  %v1962 = vcombine.low %v1397, %v1401
  %v1963 = vcombine.low %v1405, %v1409
  %v1965 = vunpack.c.l.s4 1983009808
  %v1966 = vunpack.c.0.s8 %v1965
  %v1967 = vlaneseq
  %v1968 = vshrl.u32 %v1967, 7
  %v1969 = vsub.s32 %v1966, %v1968
  %v1970 = vrot.slane %v1962, %v1969
  %v1972 = vunpack.c.l.s4 1983009808
  %v1973 = vunpack.c.0.s8 %v1972
  %v1974 = vlaneseq
  %v1975 = vshrl.u32 %v1974, 7
  %v1976 = vsub.s32 %v1973, %v1975
  %v1977 = vrot.slane %v1963, %v1976
  %v1978 = vcombine.low %v1970, %v1977
  %v1979 = vcombine.low %v1413, %v1417
  %v1980 = vcombine.low %v1421, %v1425
  %v1982 = vunpack.c.l.s4 1983009808
  %v1983 = vunpack.c.0.s8 %v1982
  %v1984 = vlaneseq
  %v1985 = vshrl.u32 %v1984, 7
  %v1986 = vsub.s32 %v1983, %v1985
  %v1987 = vrot.slane %v1979, %v1986
  %v1989 = vunpack.c.l.s4 1983009808
  %v1990 = vunpack.c.0.s8 %v1989
  %v1991 = vlaneseq
  %v1992 = vshrl.u32 %v1991, 7
  %v1993 = vsub.s32 %v1990, %v1992
  %v1994 = vrot.slane %v1980, %v1993
  %v1995 = vcombine.low %v1987, %v1994
  %v1996 = vcombine.low %v1429, %v1433
  %v1997 = vcombine.low %v1437, %v1441
  %v1999 = vunpack.c.l.s4 1983009808
  %v2000 = vunpack.c.0.s8 %v1999
  %v2001 = vlaneseq
  %v2002 = vshrl.u32 %v2001, 7
  %v2003 = vsub.s32 %v2000, %v2002
  %v2004 = vrot.slane %v1996, %v2003
  %v2006 = vunpack.c.l.s4 1983009808
  %v2007 = vunpack.c.0.s8 %v2006
  %v2008 = vlaneseq
  %v2009 = vshrl.u32 %v2008, 7
  %v2010 = vsub.s32 %v2007, %v2009
  %v2011 = vrot.slane %v1997, %v2010
  %v2012 = vcombine.low %v2004, %v2011
  %v2013 = vcombine.low %v1445, %v1449
  %v2014 = vcombine.low %v1453, %v1457
  %v2016 = vunpack.c.l.s4 1983009808
  %v2017 = vunpack.c.0.s8 %v2016
  %v2018 = vlaneseq
  %v2019 = vshrl.u32 %v2018, 7
  %v2020 = vsub.s32 %v2017, %v2019
  %v2021 = vrot.slane %v2013, %v2020
  %v2023 = vunpack.c.l.s4 1983009808
  %v2024 = vunpack.c.0.s8 %v2023
  %v2025 = vlaneseq
  %v2026 = vshrl.u32 %v2025, 7
  %v2027 = vsub.s32 %v2024, %v2026
  %v2028 = vrot.slane %v2014, %v2027
  %v2029 = vcombine.low %v2021, %v2028
  %v2030 = vcombine.low %v1461, %v1465
  %v2031 = vcombine.low %v1469, %v1473
  %v2033 = vunpack.c.l.s4 1983009808
  %v2034 = vunpack.c.0.s8 %v2033
  %v2035 = vlaneseq
  %v2036 = vshrl.u32 %v2035, 7
  %v2037 = vsub.s32 %v2034, %v2036
  %v2038 = vrot.slane %v2030, %v2037
  %v2040 = vunpack.c.l.s4 1983009808
  %v2041 = vunpack.c.0.s8 %v2040
  %v2042 = vlaneseq
  %v2043 = vshrl.u32 %v2042, 7
  %v2044 = vsub.s32 %v2041, %v2043
  %v2045 = vrot.slane %v2031, %v2044
  %v2046 = vcombine.low %v2038, %v2045
  %v2047 = vcombine.low %v1477, %v1481
  %v2048 = vcombine.low %v1485, %v1489
  %v2050 = vunpack.c.l.s4 1983009808
  %v2051 = vunpack.c.0.s8 %v2050
  %v2052 = vlaneseq
  %v2053 = vshrl.u32 %v2052, 7
  %v2054 = vsub.s32 %v2051, %v2053
  %v2055 = vrot.slane %v2047, %v2054
  %v2057 = vunpack.c.l.s4 1983009808
  %v2058 = vunpack.c.0.s8 %v2057
  %v2059 = vlaneseq
  %v2060 = vshrl.u32 %v2059, 7
  %v2061 = vsub.s32 %v2058, %v2060
  %v2062 = vrot.slane %v2048, %v2061
  %v2063 = vcombine.low %v2055, %v2062
  %v2064 = vcombine.low %v1493, %v1497
  %v2065 = vcombine.low %v1501, %v1505
  %v2067 = vunpack.c.l.s4 1983009808
  %v2068 = vunpack.c.0.s8 %v2067
  %v2069 = vlaneseq
  %v2070 = vshrl.u32 %v2069, 7
  %v2071 = vsub.s32 %v2068, %v2070
  %v2072 = vrot.slane %v2064, %v2071
  %v2074 = vunpack.c.l.s4 1983009808
  %v2075 = vunpack.c.0.s8 %v2074
  %v2076 = vlaneseq
  %v2077 = vshrl.u32 %v2076, 7
  %v2078 = vsub.s32 %v2075, %v2077
  %v2079 = vrot.slane %v2065, %v2078
  %v2080 = vcombine.low %v2072, %v2079
  %v2081 = vcombine.low %v1509, %v1513
  %v2082 = vcombine.low %v1517, %v1521
  %v2084 = vunpack.c.l.s4 1983009808
  %v2085 = vunpack.c.0.s8 %v2084
  %v2086 = vlaneseq
  %v2087 = vshrl.u32 %v2086, 7
  %v2088 = vsub.s32 %v2085, %v2087
  %v2089 = vrot.slane %v2081, %v2088
  %v2091 = vunpack.c.l.s4 1983009808
  %v2092 = vunpack.c.0.s8 %v2091
  %v2093 = vlaneseq
  %v2094 = vshrl.u32 %v2093, 7
  %v2095 = vsub.s32 %v2092, %v2094
  %v2096 = vrot.slane %v2082, %v2095
  %v2097 = vcombine.low %v2089, %v2096
  %v2098 = vcombine.low %v1525, %v1529
  %v2099 = vcombine.low %v1533, %v1537
  %v2101 = vunpack.c.l.s4 1983009808
  %v2102 = vunpack.c.0.s8 %v2101
  %v2103 = vlaneseq
  %v2104 = vshrl.u32 %v2103, 7
  %v2105 = vsub.s32 %v2102, %v2104
  %v2106 = vrot.slane %v2098, %v2105
  %v2108 = vunpack.c.l.s4 1983009808
  %v2109 = vunpack.c.0.s8 %v2108
  %v2110 = vlaneseq
  %v2111 = vshrl.u32 %v2110, 7
  %v2112 = vsub.s32 %v2109, %v2111
  %v2113 = vrot.slane %v2099, %v2112
  %v2114 = vcombine.low %v2106, %v2113
  %v2147 = vsel %vm1567, %v1587, 0.0
  %v2148 = vsel %vm1568, %v1604, 0.0
  %v2149 = vsel %vm1569, %v1587, 0.0
  %v2150 = vsel %vm1570, %v1604, 0.0
  %v2151 = vsel %vm1567, %v1621, 0.0
  %v2152 = vsel %vm1568, %v1638, 0.0
  %v2153 = vsel %vm1569, %v1621, 0.0
  %v2154 = vsel %vm1570, %v1638, 0.0
  %v2155 = vsel %vm1567, %v1655, 0.0
  %v2156 = vsel %vm1568, %v1672, 0.0
  %v2157 = vsel %vm1569, %v1655, 0.0
  %v2158 = vsel %vm1570, %v1672, 0.0
  %v2159 = vsel %vm1567, %v1689, 0.0
  %v2160 = vsel %vm1568, %v1706, 0.0
  %v2161 = vsel %vm1569, %v1689, 0.0
  %v2162 = vsel %vm1570, %v1706, 0.0
  %v2163 = vsel %vm1567, %v1723, 0.0
  %v2164 = vsel %vm1568, %v1740, 0.0
  %v2165 = vsel %vm1569, %v1723, 0.0
  %v2166 = vsel %vm1570, %v1740, 0.0
  %v2167 = vsel %vm1567, %v1757, 0.0
  %v2168 = vsel %vm1568, %v1774, 0.0
  %v2169 = vsel %vm1569, %v1757, 0.0
  %v2170 = vsel %vm1570, %v1774, 0.0
  %v2171 = vsel %vm1567, %v1791, 0.0
  %v2172 = vsel %vm1568, %v1808, 0.0
  %v2173 = vsel %vm1569, %v1791, 0.0
  %v2174 = vsel %vm1570, %v1808, 0.0
  %v2175 = vsel %vm1567, %v1825, 0.0
  %v2176 = vsel %vm1568, %v1842, 0.0
  %v2177 = vsel %vm1569, %v1825, 0.0
  %v2178 = vsel %vm1570, %v1842, 0.0
  %v2179 = vsel %vm1567, %v1859, 0.0
  %v2180 = vsel %vm1568, %v1876, 0.0
  %v2181 = vsel %vm1569, %v1859, 0.0
  %v2182 = vsel %vm1570, %v1876, 0.0
  %v2183 = vsel %vm1567, %v1893, 0.0
  %v2184 = vsel %vm1568, %v1910, 0.0
  %v2185 = vsel %vm1569, %v1893, 0.0
  %v2186 = vsel %vm1570, %v1910, 0.0
  %v2187 = vsel %vm1567, %v1927, 0.0
  %v2188 = vsel %vm1568, %v1944, 0.0
  %v2189 = vsel %vm1569, %v1927, 0.0
  %v2190 = vsel %vm1570, %v1944, 0.0
  %v2191 = vsel %vm1567, %v1961, 0.0
  %v2192 = vsel %vm1568, %v1978, 0.0
  %v2193 = vsel %vm1569, %v1961, 0.0
  %v2194 = vsel %vm1570, %v1978, 0.0
  %v2195 = vsel %vm1567, %v1995, 0.0
  %v2196 = vsel %vm1568, %v2012, 0.0
  %v2197 = vsel %vm1569, %v1995, 0.0
  %v2198 = vsel %vm1570, %v2012, 0.0
  %v2199 = vsel %vm1567, %v2029, 0.0
  %v2200 = vsel %vm1568, %v2046, 0.0
  %v2201 = vsel %vm1569, %v2029, 0.0
  %v2202 = vsel %vm1570, %v2046, 0.0
  %v2203 = vsel %vm1567, %v2063, 0.0
  %v2204 = vsel %vm1568, %v2080, 0.0
  %v2205 = vsel %vm1569, %v2063, 0.0
  %v2206 = vsel %vm1570, %v2080, 0.0
  %v2207 = vsel %vm1567, %v2097, 0.0
  %v2208 = vsel %vm1568, %v2114, 0.0
  %v2209 = vsel %vm1569, %v2097, 0.0
  %v2210 = vsel %vm1570, %v2114, 0.0
  %vm2211 = vcmp.eq.s32.totalorder %v1563, 1
  %vm2212 = vcmp.eq.s32.totalorder %v1564, 1
  %vm2213 = vcmp.eq.s32.totalorder %v1565, 1
  %vm2214 = vcmp.eq.s32.totalorder %v1566, 1
  %2215 = vrot.lane.b32.xlu0 %v1587, 124
  %v2216 = vpop.permute.xlu0 %2215
  %2217 = vrot.lane.b32.xlu0 %v1604, 124
  %v2218 = vpop.permute.xlu0 %2217
  %2219 = vrot.lane.b32.xlu0 %v1621, 124
  %v2220 = vpop.permute.xlu0 %2219
  %2221 = vrot.lane.b32.xlu0 %v1638, 124
  %v2222 = vpop.permute.xlu0 %2221
  %2223 = vrot.lane.b32.xlu0 %v1655, 124
  %v2224 = vpop.permute.xlu0 %2223
  %2225 = vrot.lane.b32.xlu0 %v1672, 124
  %v2226 = vpop.permute.xlu0 %2225
  %2227 = vrot.lane.b32.xlu0 %v1689, 124
  %v2228 = vpop.permute.xlu0 %2227
  %2229 = vrot.lane.b32.xlu0 %v1706, 124
  %v2230 = vpop.permute.xlu0 %2229
  %2231 = vrot.lane.b32.xlu0 %v1723, 124
  %v2232 = vpop.permute.xlu0 %2231
  %2233 = vrot.lane.b32.xlu0 %v1740, 124
  %v2234 = vpop.permute.xlu0 %2233
  %2235 = vrot.lane.b32.xlu0 %v1757, 124
  %v2236 = vpop.permute.xlu0 %2235
  %2237 = vrot.lane.b32.xlu0 %v1774, 124
  %v2238 = vpop.permute.xlu0 %2237
  %2239 = vrot.lane.b32.xlu0 %v1791, 124
  %v2240 = vpop.permute.xlu0 %2239
  %2241 = vrot.lane.b32.xlu0 %v1808, 124
  %v2242 = vpop.permute.xlu0 %2241
  %2243 = vrot.lane.b32.xlu0 %v1825, 124
  %v2244 = vpop.permute.xlu0 %2243
  %2245 = vrot.lane.b32.xlu0 %v1842, 124
  %v2246 = vpop.permute.xlu0 %2245
  %2247 = vrot.lane.b32.xlu0 %v1859, 124
  %v2248 = vpop.permute.xlu0 %2247
  %2249 = vrot.lane.b32.xlu0 %v1876, 124
  %v2250 = vpop.permute.xlu0 %2249
  %2251 = vrot.lane.b32.xlu0 %v1893, 124
  %v2252 = vpop.permute.xlu0 %2251
  %2253 = vrot.lane.b32.xlu0 %v1910, 124
  %v2254 = vpop.permute.xlu0 %2253
  %2255 = vrot.lane.b32.xlu0 %v1927, 124
  %v2256 = vpop.permute.xlu0 %2255
  %2257 = vrot.lane.b32.xlu0 %v1944, 124
  %v2258 = vpop.permute.xlu0 %2257
  %2259 = vrot.lane.b32.xlu0 %v1961, 124
  %v2260 = vpop.permute.xlu0 %2259
  %2261 = vrot.lane.b32.xlu0 %v1978, 124
  %v2262 = vpop.permute.xlu0 %2261
  %2263 = vrot.lane.b32.xlu0 %v1995, 124
  %v2264 = vpop.permute.xlu0 %2263
  %2265 = vrot.lane.b32.xlu0 %v2012, 124
  %v2266 = vpop.permute.xlu0 %2265
  %2267 = vrot.lane.b32.xlu0 %v2029, 124
  %v2268 = vpop.permute.xlu0 %2267
  %2269 = vrot.lane.b32.xlu0 %v2046, 124
  %v2270 = vpop.permute.xlu0 %2269
  %2271 = vrot.lane.b32.xlu0 %v2063, 124
  %v2272 = vpop.permute.xlu0 %2271
  %2273 = vrot.lane.b32.xlu0 %v2080, 124
  %v2274 = vpop.permute.xlu0 %2273
  %2275 = vrot.lane.b32.xlu0 %v2097, 124
  %v2276 = vpop.permute.xlu0 %2275
  %2277 = vrot.lane.b32.xlu0 %v2114, 124
  %v2278 = vpop.permute.xlu0 %2277
  %v2311 = vsel %vm2211, %v2216, %v2147
  %v2312 = vsel %vm2212, %v2218, %v2148
  %v2313 = vsel %vm2213, %v2216, %v2149
  %v2314 = vsel %vm2214, %v2218, %v2150
  %v2315 = vsel %vm2211, %v2220, %v2151
  %v2316 = vsel %vm2212, %v2222, %v2152
  %v2317 = vsel %vm2213, %v2220, %v2153
  %v2318 = vsel %vm2214, %v2222, %v2154
  %v2319 = vsel %vm2211, %v2224, %v2155
  %v2320 = vsel %vm2212, %v2226, %v2156
  %v2321 = vsel %vm2213, %v2224, %v2157
  %v2322 = vsel %vm2214, %v2226, %v2158
  %v2323 = vsel %vm2211, %v2228, %v2159
  %v2324 = vsel %vm2212, %v2230, %v2160
  %v2325 = vsel %vm2213, %v2228, %v2161
  %v2326 = vsel %vm2214, %v2230, %v2162
  %v2327 = vsel %vm2211, %v2232, %v2163
  %v2328 = vsel %vm2212, %v2234, %v2164
  %v2329 = vsel %vm2213, %v2232, %v2165
  %v2330 = vsel %vm2214, %v2234, %v2166
  %v2331 = vsel %vm2211, %v2236, %v2167
  %v2332 = vsel %vm2212, %v2238, %v2168
  %v2333 = vsel %vm2213, %v2236, %v2169
  %v2334 = vsel %vm2214, %v2238, %v2170
  %v2335 = vsel %vm2211, %v2240, %v2171
  %v2336 = vsel %vm2212, %v2242, %v2172
  %v2337 = vsel %vm2213, %v2240, %v2173
  %v2338 = vsel %vm2214, %v2242, %v2174
  %v2339 = vsel %vm2211, %v2244, %v2175
  %v2340 = vsel %vm2212, %v2246, %v2176
  %v2341 = vsel %vm2213, %v2244, %v2177
  %v2342 = vsel %vm2214, %v2246, %v2178
  %v2343 = vsel %vm2211, %v2248, %v2179
  %v2344 = vsel %vm2212, %v2250, %v2180
  %v2345 = vsel %vm2213, %v2248, %v2181
  %v2346 = vsel %vm2214, %v2250, %v2182
  %v2347 = vsel %vm2211, %v2252, %v2183
  %v2348 = vsel %vm2212, %v2254, %v2184
  %v2349 = vsel %vm2213, %v2252, %v2185
  %v2350 = vsel %vm2214, %v2254, %v2186
  %v2351 = vsel %vm2211, %v2256, %v2187
  %v2352 = vsel %vm2212, %v2258, %v2188
  %v2353 = vsel %vm2213, %v2256, %v2189
  %v2354 = vsel %vm2214, %v2258, %v2190
  %v2355 = vsel %vm2211, %v2260, %v2191
  %v2356 = vsel %vm2212, %v2262, %v2192
  %v2357 = vsel %vm2213, %v2260, %v2193
  %v2358 = vsel %vm2214, %v2262, %v2194
  %v2359 = vsel %vm2211, %v2264, %v2195
  %v2360 = vsel %vm2212, %v2266, %v2196
  %v2361 = vsel %vm2213, %v2264, %v2197
  %v2362 = vsel %vm2214, %v2266, %v2198
  %v2363 = vsel %vm2211, %v2268, %v2199
  %v2364 = vsel %vm2212, %v2270, %v2200
  %v2365 = vsel %vm2213, %v2268, %v2201
  %v2366 = vsel %vm2214, %v2270, %v2202
  %v2367 = vsel %vm2211, %v2272, %v2203
  %v2368 = vsel %vm2212, %v2274, %v2204
  %v2369 = vsel %vm2213, %v2272, %v2205
  %v2370 = vsel %vm2214, %v2274, %v2206
  %v2371 = vsel %vm2211, %v2276, %v2207
  %v2372 = vsel %vm2212, %v2278, %v2208
  %v2373 = vsel %vm2213, %v2276, %v2209
  %v2374 = vsel %vm2214, %v2278, %v2210
  %vm2375 = vcmp.eq.s32.totalorder %v1563, 2
  %vm2376 = vcmp.eq.s32.totalorder %v1564, 2
  %vm2377 = vcmp.eq.s32.totalorder %v1565, 2
  %vm2378 = vcmp.eq.s32.totalorder %v1566, 2
  %2379 = vrot.lane.b32.xlu0 %v1587, 120
  %v2380 = vpop.permute.xlu0 %2379
  %2381 = vrot.lane.b32.xlu0 %v1604, 120
  %v2382 = vpop.permute.xlu0 %2381
  %2383 = vrot.lane.b32.xlu0 %v1621, 120
  %v2384 = vpop.permute.xlu0 %2383
  %2385 = vrot.lane.b32.xlu0 %v1638, 120
  %v2386 = vpop.permute.xlu0 %2385
  %2387 = vrot.lane.b32.xlu0 %v1655, 120
  %v2388 = vpop.permute.xlu0 %2387
  %2389 = vrot.lane.b32.xlu0 %v1672, 120
  %v2390 = vpop.permute.xlu0 %2389
  %2391 = vrot.lane.b32.xlu0 %v1689, 120
  %v2392 = vpop.permute.xlu0 %2391
  %2393 = vrot.lane.b32.xlu0 %v1706, 120
  %v2394 = vpop.permute.xlu0 %2393
  %2395 = vrot.lane.b32.xlu0 %v1723, 120
  %v2396 = vpop.permute.xlu0 %2395
  %2397 = vrot.lane.b32.xlu0 %v1740, 120
  %v2398 = vpop.permute.xlu0 %2397
  %2399 = vrot.lane.b32.xlu0 %v1757, 120
  %v2400 = vpop.permute.xlu0 %2399
  %2401 = vrot.lane.b32.xlu0 %v1774, 120
  %v2402 = vpop.permute.xlu0 %2401
  %2403 = vrot.lane.b32.xlu0 %v1791, 120
  %v2404 = vpop.permute.xlu0 %2403
  %2405 = vrot.lane.b32.xlu0 %v1808, 120
  %v2406 = vpop.permute.xlu0 %2405
  %2407 = vrot.lane.b32.xlu0 %v1825, 120
  %v2408 = vpop.permute.xlu0 %2407
  %2409 = vrot.lane.b32.xlu0 %v1842, 120
  %v2410 = vpop.permute.xlu0 %2409
  %2411 = vrot.lane.b32.xlu0 %v1859, 120
  %v2412 = vpop.permute.xlu0 %2411
  %2413 = vrot.lane.b32.xlu0 %v1876, 120
  %v2414 = vpop.permute.xlu0 %2413
  %2415 = vrot.lane.b32.xlu0 %v1893, 120
  %v2416 = vpop.permute.xlu0 %2415
  %2417 = vrot.lane.b32.xlu0 %v1910, 120
  %v2418 = vpop.permute.xlu0 %2417
  %2419 = vrot.lane.b32.xlu0 %v1927, 120
  %v2420 = vpop.permute.xlu0 %2419
  %2421 = vrot.lane.b32.xlu0 %v1944, 120
  %v2422 = vpop.permute.xlu0 %2421
  %2423 = vrot.lane.b32.xlu0 %v1961, 120
  %v2424 = vpop.permute.xlu0 %2423
  %2425 = vrot.lane.b32.xlu0 %v1978, 120
  %v2426 = vpop.permute.xlu0 %2425
  %2427 = vrot.lane.b32.xlu0 %v1995, 120
  %v2428 = vpop.permute.xlu0 %2427
  %2429 = vrot.lane.b32.xlu0 %v2012, 120
  %v2430 = vpop.permute.xlu0 %2429
  %2431 = vrot.lane.b32.xlu0 %v2029, 120
  %v2432 = vpop.permute.xlu0 %2431
  %2433 = vrot.lane.b32.xlu0 %v2046, 120
  %v2434 = vpop.permute.xlu0 %2433
  %2435 = vrot.lane.b32.xlu0 %v2063, 120
  %v2436 = vpop.permute.xlu0 %2435
  %2437 = vrot.lane.b32.xlu0 %v2080, 120
  %v2438 = vpop.permute.xlu0 %2437
  %2439 = vrot.lane.b32.xlu0 %v2097, 120
  %v2440 = vpop.permute.xlu0 %2439
  %2441 = vrot.lane.b32.xlu0 %v2114, 120
  %v2442 = vpop.permute.xlu0 %2441
  %v2475 = vsel %vm2375, %v2380, %v2311
  %v2476 = vsel %vm2376, %v2382, %v2312
  %v2477 = vsel %vm2377, %v2380, %v2313
  %v2478 = vsel %vm2378, %v2382, %v2314
  %v2479 = vsel %vm2375, %v2384, %v2315
  %v2480 = vsel %vm2376, %v2386, %v2316
  %v2481 = vsel %vm2377, %v2384, %v2317
  %v2482 = vsel %vm2378, %v2386, %v2318
  %v2483 = vsel %vm2375, %v2388, %v2319
  %v2484 = vsel %vm2376, %v2390, %v2320
  %v2485 = vsel %vm2377, %v2388, %v2321
  %v2486 = vsel %vm2378, %v2390, %v2322
  %v2487 = vsel %vm2375, %v2392, %v2323
  %v2488 = vsel %vm2376, %v2394, %v2324
  %v2489 = vsel %vm2377, %v2392, %v2325
  %v2490 = vsel %vm2378, %v2394, %v2326
  %v2491 = vsel %vm2375, %v2396, %v2327
  %v2492 = vsel %vm2376, %v2398, %v2328
  %v2493 = vsel %vm2377, %v2396, %v2329
  %v2494 = vsel %vm2378, %v2398, %v2330
  %v2495 = vsel %vm2375, %v2400, %v2331
  %v2496 = vsel %vm2376, %v2402, %v2332
  %v2497 = vsel %vm2377, %v2400, %v2333
  %v2498 = vsel %vm2378, %v2402, %v2334
  %v2499 = vsel %vm2375, %v2404, %v2335
  %v2500 = vsel %vm2376, %v2406, %v2336
  %v2501 = vsel %vm2377, %v2404, %v2337
  %v2502 = vsel %vm2378, %v2406, %v2338
  %v2503 = vsel %vm2375, %v2408, %v2339
  %v2504 = vsel %vm2376, %v2410, %v2340
  %v2505 = vsel %vm2377, %v2408, %v2341
  %v2506 = vsel %vm2378, %v2410, %v2342
  %v2507 = vsel %vm2375, %v2412, %v2343
  %v2508 = vsel %vm2376, %v2414, %v2344
  %v2509 = vsel %vm2377, %v2412, %v2345
  %v2510 = vsel %vm2378, %v2414, %v2346
  %v2511 = vsel %vm2375, %v2416, %v2347
  %v2512 = vsel %vm2376, %v2418, %v2348
  %v2513 = vsel %vm2377, %v2416, %v2349
  %v2514 = vsel %vm2378, %v2418, %v2350
  %v2515 = vsel %vm2375, %v2420, %v2351
  %v2516 = vsel %vm2376, %v2422, %v2352
  %v2517 = vsel %vm2377, %v2420, %v2353
  %v2518 = vsel %vm2378, %v2422, %v2354
  %v2519 = vsel %vm2375, %v2424, %v2355
  %v2520 = vsel %vm2376, %v2426, %v2356
  %v2521 = vsel %vm2377, %v2424, %v2357
  %v2522 = vsel %vm2378, %v2426, %v2358
  %v2523 = vsel %vm2375, %v2428, %v2359
  %v2524 = vsel %vm2376, %v2430, %v2360
  %v2525 = vsel %vm2377, %v2428, %v2361
  %v2526 = vsel %vm2378, %v2430, %v2362
  %v2527 = vsel %vm2375, %v2432, %v2363
  %v2528 = vsel %vm2376, %v2434, %v2364
  %v2529 = vsel %vm2377, %v2432, %v2365
  %v2530 = vsel %vm2378, %v2434, %v2366
  %v2531 = vsel %vm2375, %v2436, %v2367
  %v2532 = vsel %vm2376, %v2438, %v2368
  %v2533 = vsel %vm2377, %v2436, %v2369
  %v2534 = vsel %vm2378, %v2438, %v2370
  %v2535 = vsel %vm2375, %v2440, %v2371
  %v2536 = vsel %vm2376, %v2442, %v2372
  %v2537 = vsel %vm2377, %v2440, %v2373
  %v2538 = vsel %vm2378, %v2442, %v2374
  %vm2539 = vcmp.eq.s32.totalorder %v1563, 3
  %vm2540 = vcmp.eq.s32.totalorder %v1564, 3
  %vm2541 = vcmp.eq.s32.totalorder %v1565, 3
  %vm2542 = vcmp.eq.s32.totalorder %v1566, 3
  %2543 = vrot.lane.b32.xlu0 %v1587, 116
  %v2544 = vpop.permute.xlu0 %2543
  %2545 = vrot.lane.b32.xlu0 %v1604, 116
  %v2546 = vpop.permute.xlu0 %2545
  %2547 = vrot.lane.b32.xlu0 %v1621, 116
  %v2548 = vpop.permute.xlu0 %2547
  %2549 = vrot.lane.b32.xlu0 %v1638, 116
  %v2550 = vpop.permute.xlu0 %2549
  %2551 = vrot.lane.b32.xlu0 %v1655, 116
  %v2552 = vpop.permute.xlu0 %2551
  %2553 = vrot.lane.b32.xlu0 %v1672, 116
  %v2554 = vpop.permute.xlu0 %2553
  %2555 = vrot.lane.b32.xlu0 %v1689, 116
  %v2556 = vpop.permute.xlu0 %2555
  %2557 = vrot.lane.b32.xlu0 %v1706, 116
  %v2558 = vpop.permute.xlu0 %2557
  %2559 = vrot.lane.b32.xlu0 %v1723, 116
  %v2560 = vpop.permute.xlu0 %2559
  %2561 = vrot.lane.b32.xlu0 %v1740, 116
  %v2562 = vpop.permute.xlu0 %2561
  %2563 = vrot.lane.b32.xlu0 %v1757, 116
  %v2564 = vpop.permute.xlu0 %2563
  %2565 = vrot.lane.b32.xlu0 %v1774, 116
  %v2566 = vpop.permute.xlu0 %2565
  %2567 = vrot.lane.b32.xlu0 %v1791, 116
  %v2568 = vpop.permute.xlu0 %2567
  %2569 = vrot.lane.b32.xlu0 %v1808, 116
  %v2570 = vpop.permute.xlu0 %2569
  %2571 = vrot.lane.b32.xlu0 %v1825, 116
  %v2572 = vpop.permute.xlu0 %2571
  %2573 = vrot.lane.b32.xlu0 %v1842, 116
  %v2574 = vpop.permute.xlu0 %2573
  %2575 = vrot.lane.b32.xlu0 %v1859, 116
  %v2576 = vpop.permute.xlu0 %2575
  %2577 = vrot.lane.b32.xlu0 %v1876, 116
  %v2578 = vpop.permute.xlu0 %2577
  %2579 = vrot.lane.b32.xlu0 %v1893, 116
  %v2580 = vpop.permute.xlu0 %2579
  %2581 = vrot.lane.b32.xlu0 %v1910, 116
  %v2582 = vpop.permute.xlu0 %2581
  %2583 = vrot.lane.b32.xlu0 %v1927, 116
  %v2584 = vpop.permute.xlu0 %2583
  %2585 = vrot.lane.b32.xlu0 %v1944, 116
  %v2586 = vpop.permute.xlu0 %2585
  %2587 = vrot.lane.b32.xlu0 %v1961, 116
  %v2588 = vpop.permute.xlu0 %2587
  %2589 = vrot.lane.b32.xlu0 %v1978, 116
  %v2590 = vpop.permute.xlu0 %2589
  %2591 = vrot.lane.b32.xlu0 %v1995, 116
  %v2592 = vpop.permute.xlu0 %2591
  %2593 = vrot.lane.b32.xlu0 %v2012, 116
  %v2594 = vpop.permute.xlu0 %2593
  %2595 = vrot.lane.b32.xlu0 %v2029, 116
  %v2596 = vpop.permute.xlu0 %2595
  %2597 = vrot.lane.b32.xlu0 %v2046, 116
  %v2598 = vpop.permute.xlu0 %2597
  %2599 = vrot.lane.b32.xlu0 %v2063, 116
  %v2600 = vpop.permute.xlu0 %2599
  %2601 = vrot.lane.b32.xlu0 %v2080, 116
  %v2602 = vpop.permute.xlu0 %2601
  %2603 = vrot.lane.b32.xlu0 %v2097, 116
  %v2604 = vpop.permute.xlu0 %2603
  %2605 = vrot.lane.b32.xlu0 %v2114, 116
  %v2606 = vpop.permute.xlu0 %2605
  %v2639 = vsel %vm2539, %v2544, %v2475
  %v2640 = vsel %vm2540, %v2546, %v2476
  %v2641 = vsel %vm2541, %v2544, %v2477
  %v2642 = vsel %vm2542, %v2546, %v2478
  %v2643 = vsel %vm2539, %v2548, %v2479
  %v2644 = vsel %vm2540, %v2550, %v2480
  %v2645 = vsel %vm2541, %v2548, %v2481
  %v2646 = vsel %vm2542, %v2550, %v2482
  %v2647 = vsel %vm2539, %v2552, %v2483
  %v2648 = vsel %vm2540, %v2554, %v2484
  %v2649 = vsel %vm2541, %v2552, %v2485
  %v2650 = vsel %vm2542, %v2554, %v2486
  %v2651 = vsel %vm2539, %v2556, %v2487
  %v2652 = vsel %vm2540, %v2558, %v2488
  %v2653 = vsel %vm2541, %v2556, %v2489
  %v2654 = vsel %vm2542, %v2558, %v2490
  %v2655 = vsel %vm2539, %v2560, %v2491
  %v2656 = vsel %vm2540, %v2562, %v2492
  %v2657 = vsel %vm2541, %v2560, %v2493
  %v2658 = vsel %vm2542, %v2562, %v2494
  %v2659 = vsel %vm2539, %v2564, %v2495
  %v2660 = vsel %vm2540, %v2566, %v2496
  %v2661 = vsel %vm2541, %v2564, %v2497
  %v2662 = vsel %vm2542, %v2566, %v2498
  %v2663 = vsel %vm2539, %v2568, %v2499
  %v2664 = vsel %vm2540, %v2570, %v2500
  %v2665 = vsel %vm2541, %v2568, %v2501
  %v2666 = vsel %vm2542, %v2570, %v2502
  %v2667 = vsel %vm2539, %v2572, %v2503
  %v2668 = vsel %vm2540, %v2574, %v2504
  %v2669 = vsel %vm2541, %v2572, %v2505
  %v2670 = vsel %vm2542, %v2574, %v2506
  %v2671 = vsel %vm2539, %v2576, %v2507
  %v2672 = vsel %vm2540, %v2578, %v2508
  %v2673 = vsel %vm2541, %v2576, %v2509
  %v2674 = vsel %vm2542, %v2578, %v2510
  %v2675 = vsel %vm2539, %v2580, %v2511
  %v2676 = vsel %vm2540, %v2582, %v2512
  %v2677 = vsel %vm2541, %v2580, %v2513
  %v2678 = vsel %vm2542, %v2582, %v2514
  %v2679 = vsel %vm2539, %v2584, %v2515
  %v2680 = vsel %vm2540, %v2586, %v2516
  %v2681 = vsel %vm2541, %v2584, %v2517
  %v2682 = vsel %vm2542, %v2586, %v2518
  %v2683 = vsel %vm2539, %v2588, %v2519
  %v2684 = vsel %vm2540, %v2590, %v2520
  %v2685 = vsel %vm2541, %v2588, %v2521
  %v2686 = vsel %vm2542, %v2590, %v2522
  %v2687 = vsel %vm2539, %v2592, %v2523
  %v2688 = vsel %vm2540, %v2594, %v2524
  %v2689 = vsel %vm2541, %v2592, %v2525
  %v2690 = vsel %vm2542, %v2594, %v2526
  %v2691 = vsel %vm2539, %v2596, %v2527
  %v2692 = vsel %vm2540, %v2598, %v2528
  %v2693 = vsel %vm2541, %v2596, %v2529
  %v2694 = vsel %vm2542, %v2598, %v2530
  %v2695 = vsel %vm2539, %v2600, %v2531
  %v2696 = vsel %vm2540, %v2602, %v2532
  %v2697 = vsel %vm2541, %v2600, %v2533
  %v2698 = vsel %vm2542, %v2602, %v2534
  %v2699 = vsel %vm2539, %v2604, %v2535
  %v2700 = vsel %vm2540, %v2606, %v2536
  %v2701 = vsel %vm2541, %v2604, %v2537
  %v2702 = vsel %vm2542, %v2606, %v2538
  %2703 = vst.msk [vmem:[#allocation2] sm:$0xff] %vm100, 0.0
  %2704 = vst.msk [vmem:[#allocation2 + $0x8] sm:$0xff] %vm100, 0.0
  %vm2705 = vcmask 58368
  %2706 = vst.msk [vmem:[#allocation2 + $0x10] sm:$0x3] %vm2705, 0.0
  %2707 = vst.msk [vmem:[#allocation2 + $0x18] sm:$0xff] %vm100, 0.0
  %2708 = vst.msk [vmem:[#allocation2 + $0x20] sm:$0xff] %vm100, 0.0
  %2709 = vst.msk [vmem:[#allocation2 + $0x28] sm:$0x3] %vm2705, 0.0
  %2710 = vst.msk [vmem:[#allocation2 + $0x30] sm:$0xff] %vm100, 0.0
  %2711 = vst.msk [vmem:[#allocation2 + $0x38] sm:$0xff] %vm100, 0.0
  %2712 = vst.msk [vmem:[#allocation2 + $0x40] sm:$0x3] %vm2705, 0.0
  %2713 = vst.msk [vmem:[#allocation2 + $0x48] sm:$0xff] %vm100, 0.0
  %2714 = vst.msk [vmem:[#allocation2 + $0x50] sm:$0xff] %vm100, 0.0
  %2715 = vst.msk [vmem:[#allocation2 + $0x58] sm:$0x3] %vm2705, 0.0
  %2716 = vst.msk [vmem:[#allocation2 + $0x60] sm:$0xff] %vm100, 0.0
  %2717 = vst.msk [vmem:[#allocation2 + $0x68] sm:$0xff] %vm100, 0.0
  %2718 = vst.msk [vmem:[#allocation2 + $0x70] sm:$0x3] %vm2705, 0.0
  %2719 = vst.msk [vmem:[#allocation2 + $0x78] sm:$0xff] %vm100, 0.0
  %2720 = vst.msk [vmem:[#allocation2 + $0x80] sm:$0xff] %vm100, 0.0
  %2721 = vst.msk [vmem:[#allocation2 + $0x88] sm:$0x3] %vm2705, 0.0
  %2722 = vst.msk [vmem:[#allocation2 + $0x90] sm:$0xff] %vm100, 0.0
  %2723 = vst.msk [vmem:[#allocation2 + $0x98] sm:$0xff] %vm100, 0.0
  %2724 = vst.msk [vmem:[#allocation2 + $0xa0] sm:$0x3] %vm2705, 0.0
  %2725 = vst.msk [vmem:[#allocation2 + $0xa8] sm:$0xff] %vm100, 0.0
  %2726 = vst.msk [vmem:[#allocation2 + $0xb0] sm:$0xff] %vm100, 0.0
  %2727 = vst.msk [vmem:[#allocation2 + $0xb8] sm:$0x3] %vm2705, 0.0
  %2728 = vst.msk [vmem:[#allocation2 + $0xc0] sm:$0xff] %vm100, 0.0
  %2729 = vst.msk [vmem:[#allocation2 + $0xc8] sm:$0xff] %vm100, 0.0
  %2730 = vst.msk [vmem:[#allocation2 + $0xd0] sm:$0x3] %vm2705, 0.0
  %2731 = vst.msk [vmem:[#allocation2 + $0xd8] sm:$0xff] %vm100, 0.0
  %2732 = vst.msk [vmem:[#allocation2 + $0xe0] sm:$0xff] %vm100, 0.0
  %2733 = vst.msk [vmem:[#allocation2 + $0xe8] sm:$0x3] %vm2705, 0.0
  %2734 = vst.msk [vmem:[#allocation2 + $0xf0] sm:$0xff] %vm100, 0.0
  %2735 = vst.msk [vmem:[#allocation2 + $0xf8] sm:$0xff] %vm100, 0.0
  %2736 = vst.msk [vmem:[#allocation2 + $0x100] sm:$0x3] %vm2705, 0.0
  %2737 = vst.msk [vmem:[#allocation2 + $0x108] sm:$0xff] %vm100, 0.0
  %2738 = vst.msk [vmem:[#allocation2 + $0x110] sm:$0xff] %vm100, 0.0
  %2739 = vst.msk [vmem:[#allocation2 + $0x118] sm:$0x3] %vm2705, 0.0
  %2740 = vst.msk [vmem:[#allocation2 + $0x120] sm:$0xff] %vm100, 0.0
  %2741 = vst.msk [vmem:[#allocation2 + $0x128] sm:$0xff] %vm100, 0.0
  %2742 = vst.msk [vmem:[#allocation2 + $0x130] sm:$0x3] %vm2705, 0.0
  %2743 = vst.msk [vmem:[#allocation2 + $0x138] sm:$0xff] %vm100, 0.0
  %2744 = vst.msk [vmem:[#allocation2 + $0x140] sm:$0xff] %vm100, 0.0
  %2745 = vst.msk [vmem:[#allocation2 + $0x148] sm:$0x3] %vm2705, 0.0
  %2746 = vst.msk [vmem:[#allocation2 + $0x150] sm:$0xff] %vm100, 0.0
  %2747 = vst.msk [vmem:[#allocation2 + $0x158] sm:$0xff] %vm100, 0.0
  %2748 = vst.msk [vmem:[#allocation2 + $0x160] sm:$0x3] %vm2705, 0.0
  %2749 = vst.msk [vmem:[#allocation2 + $0x168] sm:$0xff] %vm100, 0.0
  %2750 = vst.msk [vmem:[#allocation2 + $0x170] sm:$0xff] %vm100, 0.0
  %2751 = vst.msk [vmem:[#allocation2 + $0x178] sm:$0x3] %vm2705, 0.0
  %2752 = vst.msk [vmem:[#allocation2 + $0x180] sm:$0xff] %vm100, 0.0
  %2753 = vst.msk [vmem:[#allocation2 + $0x188] sm:$0xff] %vm100, 0.0
  %2754 = vst.msk [vmem:[#allocation2 + $0x190] sm:$0x3] %vm2705, 0.0
  %2755 = vst.msk [vmem:[#allocation2 + $0x198] sm:$0xff] %vm100, 0.0
  %2756 = vst.msk [vmem:[#allocation2 + $0x1a0] sm:$0xff] %vm100, 0.0
  %2757 = vst.msk [vmem:[#allocation2 + $0x1a8] sm:$0x3] %vm2705, 0.0
  %2758 = vst.msk [vmem:[#allocation2 + $0x1b0] sm:$0xff] %vm100, 0.0
  %2759 = vst.msk [vmem:[#allocation2 + $0x1b8] sm:$0xff] %vm100, 0.0
  %2760 = vst.msk [vmem:[#allocation2 + $0x1c0] sm:$0x3] %vm2705, 0.0
  %2761 = vst.msk [vmem:[#allocation2 + $0x1c8] sm:$0xff] %vm100, 0.0
  %2762 = vst.msk [vmem:[#allocation2 + $0x1d0] sm:$0xff] %vm100, 0.0
  %2763 = vst.msk [vmem:[#allocation2 + $0x1d8] sm:$0x3] %vm2705, 0.0
  %2764 = vst.msk [vmem:[#allocation2 + $0x1e0] sm:$0xff] %vm100, 0.0
  %2765 = vst.msk [vmem:[#allocation2 + $0x1e8] sm:$0xff] %vm100, 0.0
  %2766 = vst.msk [vmem:[#allocation2 + $0x1f0] sm:$0x3] %vm2705, 0.0
  %2767 = vst.msk [vmem:[#allocation2 + $0x1f8] sm:$0xff] %vm100, 0.0
  %2768 = vst.msk [vmem:[#allocation2 + $0x200] sm:$0xff] %vm100, 0.0
  %2769 = vst.msk [vmem:[#allocation2 + $0x208] sm:$0x3] %vm2705, 0.0
  %2770 = vst.msk [vmem:[#allocation2 + $0x210] sm:$0xff] %vm100, 0.0
  %2771 = vst.msk [vmem:[#allocation2 + $0x218] sm:$0xff] %vm100, 0.0
  %2772 = vst.msk [vmem:[#allocation2 + $0x220] sm:$0x3] %vm2705, 0.0
  %2773 = vst.msk [vmem:[#allocation2 + $0x228] sm:$0xff] %vm100, 0.0
  %2774 = vst.msk [vmem:[#allocation2 + $0x230] sm:$0xff] %vm100, 0.0
  %2775 = vst.msk [vmem:[#allocation2 + $0x238] sm:$0x3] %vm2705, 0.0
  %2776 = vst.msk [vmem:[#allocation2 + $0x240] sm:$0xff] %vm100, 0.0
  %2777 = vst.msk [vmem:[#allocation2 + $0x248] sm:$0xff] %vm100, 0.0
  %2778 = vst.msk [vmem:[#allocation2 + $0x250] sm:$0x3] %vm2705, 0.0
  %2779 = vst.msk [vmem:[#allocation2 + $0x258] sm:$0xff] %vm100, 0.0
  %2780 = vst.msk [vmem:[#allocation2 + $0x260] sm:$0xff] %vm100, 0.0
  %2781 = vst.msk [vmem:[#allocation2 + $0x268] sm:$0x3] %vm2705, 0.0
  %2782 = vst.msk [vmem:[#allocation2 + $0x270] sm:$0xff] %vm100, 0.0
  %2783 = vst.msk [vmem:[#allocation2 + $0x278] sm:$0xff] %vm100, 0.0
  %2784 = vst.msk [vmem:[#allocation2 + $0x280] sm:$0x3] %vm2705, 0.0
  %2785 = vst.msk [vmem:[#allocation2 + $0x288] sm:$0xff] %vm100, 0.0
  %2786 = vst.msk [vmem:[#allocation2 + $0x290] sm:$0xff] %vm100, 0.0
  %2787 = vst.msk [vmem:[#allocation2 + $0x298] sm:$0x3] %vm2705, 0.0
  %2788 = vst.msk [vmem:[#allocation2 + $0x2a0] sm:$0xff] %vm100, 0.0
  %2789 = vst.msk [vmem:[#allocation2 + $0x2a8] sm:$0xff] %vm100, 0.0
  %2790 = vst.msk [vmem:[#allocation2 + $0x2b0] sm:$0x3] %vm2705, 0.0
  %2791 = vst.msk [vmem:[#allocation2 + $0x2b8] sm:$0xff] %vm100, 0.0
  %2792 = vst.msk [vmem:[#allocation2 + $0x2c0] sm:$0xff] %vm100, 0.0
  %2793 = vst.msk [vmem:[#allocation2 + $0x2c8] sm:$0x3] %vm2705, 0.0
  %2794 = vst.msk [vmem:[#allocation2 + $0x2d0] sm:$0xff] %vm100, 0.0
  %2795 = vst.msk [vmem:[#allocation2 + $0x2d8] sm:$0xff] %vm100, 0.0
  %2796 = vst.msk [vmem:[#allocation2 + $0x2e0] sm:$0x3] %vm2705, 0.0
  %2797 = vst.msk [vmem:[#allocation2 + $0x2e8] sm:$0xff] %vm100, 0.0
  %2798 = vst.msk [vmem:[#allocation2 + $0x2f0] sm:$0xff] %vm100, 0.0
  %2799 = vst.msk [vmem:[#allocation2 + $0x2f8] sm:$0x3] %vm2705, 0.0
  %2800 = vst.msk [vmem:[#allocation2 + $0x300] sm:$0xff] %vm100, 0.0
  %2801 = vst.msk [vmem:[#allocation2 + $0x308] sm:$0xff] %vm100, 0.0
  %2802 = vst.msk [vmem:[#allocation2 + $0x310] sm:$0x3] %vm2705, 0.0
  %2803 = vst.msk [vmem:[#allocation2 + $0x318] sm:$0xff] %vm100, 0.0
  %2804 = vst.msk [vmem:[#allocation2 + $0x320] sm:$0xff] %vm100, 0.0
  %2805 = vst.msk [vmem:[#allocation2 + $0x328] sm:$0x3] %vm2705, 0.0
  %2806 = vst.msk [vmem:[#allocation2 + $0x330] sm:$0xff] %vm100, 0.0
  %2807 = vst.msk [vmem:[#allocation2 + $0x338] sm:$0xff] %vm100, 0.0
  %2808 = vst.msk [vmem:[#allocation2 + $0x340] sm:$0x3] %vm2705, 0.0
  %2809 = vst.msk [vmem:[#allocation2 + $0x348] sm:$0xff] %vm100, 0.0
  %2810 = vst.msk [vmem:[#allocation2 + $0x350] sm:$0xff] %vm100, 0.0
  %2811 = vst.msk [vmem:[#allocation2 + $0x358] sm:$0x3] %vm2705, 0.0
  %v2812 = vld [vmem:[%s3] sm:$0xf]
  %v2813 = vld [vmem:[%s3 + $0x4] sm:$0xf]
  %v2814 = vld [vmem:[%s3 + $0x8] sm:$0xf]
  %v2815 = vld [vmem:[%s3 + $0xc] sm:$0xf]
  %v2816 = vld [vmem:[%s3 + $0x10] sm:$0xf]
  %v2817 = vld [vmem:[%s3 + $0x14] sm:$0xf]
  %v2818 = vld [vmem:[%s3 + $0x18] sm:$0xf]
  %v2819 = vld [vmem:[%s3 + $0x1c] sm:$0xf]
  %v2820 = vld [vmem:[%s3 + $0x20] sm:$0xf]
  %v2821 = vld [vmem:[%s3 + $0x24] sm:$0xf]
  %v2822 = vld [vmem:[%s3 + $0x28] sm:$0xf]
  %v2823 = vld [vmem:[%s3 + $0x2c] sm:$0xf]
  %v2824 = vld [vmem:[%s3 + $0x30] sm:$0xf]
  %v2825 = vld [vmem:[%s3 + $0x34] sm:$0xf]
  %v2826 = vld [vmem:[%s3 + $0x38] sm:$0xf]
  %v2827 = vld [vmem:[%s3 + $0x3c] sm:$0xf]
  %v2828 = vld [vmem:[%s3 + $0x40] sm:$0xf]
  %v2829 = vld [vmem:[%s3 + $0x44] sm:$0xf]
  %v2830 = vld [vmem:[%s3 + $0x48] sm:$0xf]
  %v2831 = vld [vmem:[%s3 + $0x4c] sm:$0xf]
  %v2832 = vld [vmem:[%s3 + $0x50] sm:$0xf]
  %v2833 = vld [vmem:[%s3 + $0x54] sm:$0xf]
  %v2834 = vld [vmem:[%s3 + $0x58] sm:$0xf]
  %v2835 = vld [vmem:[%s3 + $0x5c] sm:$0xf]
  %v2836 = vld [vmem:[%s3 + $0x60] sm:$0xf]
  %v2837 = vld [vmem:[%s3 + $0x64] sm:$0xf]
  %v2838 = vld [vmem:[%s3 + $0x68] sm:$0xf]
  %v2839 = vld [vmem:[%s3 + $0x6c] sm:$0xf]
  %v2840 = vld [vmem:[%s3 + $0x70] sm:$0xf]
  %v2841 = vld [vmem:[%s3 + $0x74] sm:$0xf]
  %v2842 = vld [vmem:[%s3 + $0x78] sm:$0xf]
  %v2843 = vld [vmem:[%s3 + $0x7c] sm:$0xf]
  %v2844 = vld [vmem:[%s3 + $0x80] sm:$0xf]
  %v2845 = vld [vmem:[%s3 + $0x84] sm:$0xf]
  %v2846 = vld [vmem:[%s3 + $0x88] sm:$0xf]
  %v2847 = vld [vmem:[%s3 + $0x8c] sm:$0xf]
  %v2848 = vld [vmem:[%s3 + $0x90] sm:$0xf]
  %v2849 = vld [vmem:[%s3 + $0x94] sm:$0xf]
  %v2850 = vld [vmem:[%s3 + $0x98] sm:$0xf]
  %v2851 = vld [vmem:[%s3 + $0x9c] sm:$0xf]
  %v2852 = vld [vmem:[%s3 + $0xa0] sm:$0xf]
  %v2853 = vld [vmem:[%s3 + $0xa4] sm:$0xf]
  %v2854 = vld [vmem:[%s3 + $0xa8] sm:$0xf]
  %v2855 = vld [vmem:[%s3 + $0xac] sm:$0xf]
  %v2856 = vld [vmem:[%s3 + $0xb0] sm:$0xf]
  %v2857 = vld [vmem:[%s3 + $0xb4] sm:$0xf]
  %v2858 = vld [vmem:[%s3 + $0xb8] sm:$0xf]
  %v2859 = vld [vmem:[%s3 + $0xbc] sm:$0xf]
  %v2860 = vld [vmem:[%s3 + $0xc0] sm:$0xf]
  %v2861 = vld [vmem:[%s3 + $0xc4] sm:$0xf]
  %v2862 = vld [vmem:[%s3 + $0xc8] sm:$0xf]
  %v2863 = vld [vmem:[%s3 + $0xcc] sm:$0xf]
  %v2864 = vld [vmem:[%s3 + $0xd0] sm:$0xf]
  %v2865 = vld [vmem:[%s3 + $0xd4] sm:$0xf]
  %v2866 = vld [vmem:[%s3 + $0xd8] sm:$0xf]
  %v2867 = vld [vmem:[%s3 + $0xdc] sm:$0xf]
  %v2868 = vld [vmem:[%s3 + $0xe0] sm:$0xf]
  %v2869 = vld [vmem:[%s3 + $0xe4] sm:$0xf]
  %v2870 = vld [vmem:[%s3 + $0xe8] sm:$0xf]
  %v2871 = vld [vmem:[%s3 + $0xec] sm:$0xf]
  %v2872 = vld [vmem:[%s3 + $0xf0] sm:$0xf]
  %v2873 = vld [vmem:[%s3 + $0xf4] sm:$0xf]
  %v2874 = vld [vmem:[%s3 + $0xf8] sm:$0xf]
  %v2875 = vld [vmem:[%s3 + $0xfc] sm:$0xf]
  %v2876 = vunpack.c.l.bf16 %v2812
  %v2877 = vunpack.c.l.bf16 %v2813
  %v2878 = vunpack.c.l.bf16 %v2814
  %v2879 = vunpack.c.l.bf16 %v2815
  %v2880 = vunpack.c.l.bf16 %v2816
  %v2881 = vunpack.c.l.bf16 %v2817
  %v2882 = vunpack.c.l.bf16 %v2818
  %v2883 = vunpack.c.l.bf16 %v2819
  %v2884 = vunpack.c.l.bf16 %v2820
  %v2885 = vunpack.c.l.bf16 %v2821
  %v2886 = vunpack.c.l.bf16 %v2822
  %v2887 = vunpack.c.l.bf16 %v2823
  %v2888 = vunpack.c.l.bf16 %v2824
  %v2889 = vunpack.c.l.bf16 %v2825
  %v2890 = vunpack.c.l.bf16 %v2826
  %v2891 = vunpack.c.l.bf16 %v2827
  %v2892 = vunpack.c.l.bf16 %v2828
  %v2893 = vunpack.c.l.bf16 %v2829
  %v2894 = vunpack.c.l.bf16 %v2830
  %v2895 = vunpack.c.l.bf16 %v2831
  %v2896 = vunpack.c.l.bf16 %v2832
  %v2897 = vunpack.c.l.bf16 %v2833
  %v2898 = vunpack.c.l.bf16 %v2834
  %v2899 = vunpack.c.l.bf16 %v2835
  %v2900 = vunpack.c.l.bf16 %v2836
  %v2901 = vunpack.c.l.bf16 %v2837
  %v2902 = vunpack.c.l.bf16 %v2838
  %v2903 = vunpack.c.l.bf16 %v2839
  %v2904 = vunpack.c.l.bf16 %v2840
  %v2905 = vunpack.c.l.bf16 %v2841
  %v2906 = vunpack.c.l.bf16 %v2842
  %v2907 = vunpack.c.l.bf16 %v2843
  %v2908 = vunpack.c.l.bf16 %v2844
  %v2909 = vunpack.c.l.bf16 %v2845
  %v2910 = vunpack.c.l.bf16 %v2846
  %v2911 = vunpack.c.l.bf16 %v2847
  %v2912 = vunpack.c.l.bf16 %v2848
  %v2913 = vunpack.c.l.bf16 %v2849
  %v2914 = vunpack.c.l.bf16 %v2850
  %v2915 = vunpack.c.l.bf16 %v2851
  %v2916 = vunpack.c.l.bf16 %v2852
  %v2917 = vunpack.c.l.bf16 %v2853
  %v2918 = vunpack.c.l.bf16 %v2854
  %v2919 = vunpack.c.l.bf16 %v2855
  %v2920 = vunpack.c.l.bf16 %v2856
  %v2921 = vunpack.c.l.bf16 %v2857
  %v2922 = vunpack.c.l.bf16 %v2858
  %v2923 = vunpack.c.l.bf16 %v2859
  %v2924 = vunpack.c.l.bf16 %v2860
  %v2925 = vunpack.c.l.bf16 %v2861
  %v2926 = vunpack.c.l.bf16 %v2862
  %v2927 = vunpack.c.l.bf16 %v2863
  %v2928 = vunpack.c.l.bf16 %v2864
  %v2929 = vunpack.c.l.bf16 %v2865
  %v2930 = vunpack.c.l.bf16 %v2866
  %v2931 = vunpack.c.l.bf16 %v2867
  %v2932 = vunpack.c.l.bf16 %v2868
  %v2933 = vunpack.c.l.bf16 %v2869
  %v2934 = vunpack.c.l.bf16 %v2870
  %v2935 = vunpack.c.l.bf16 %v2871
  %v2936 = vunpack.c.l.bf16 %v2872
  %v2937 = vunpack.c.l.bf16 %v2873
  %v2938 = vunpack.c.l.bf16 %v2874
  %v2939 = vunpack.c.l.bf16 %v2875
  %3004 = vrot.lane.b32.xlu0 %v2876, 4
  %v3005 = vpop.permute.xlu0 %3004
  %3006 = vrot.lane.b32.xlu0 %v2877, 4
  %v3007 = vpop.permute.xlu0 %3006
  %3008 = vrot.lane.b32.xlu0 %v2878, 4
  %v3009 = vpop.permute.xlu0 %3008
  %3010 = vrot.lane.b32.xlu0 %v2879, 4
  %v3011 = vpop.permute.xlu0 %3010
  %3012 = vrot.lane.b32.xlu0 %v2880, 4
  %v3013 = vpop.permute.xlu0 %3012
  %3014 = vrot.lane.b32.xlu0 %v2881, 4
  %v3015 = vpop.permute.xlu0 %3014
  %3016 = vrot.lane.b32.xlu0 %v2882, 4
  %v3017 = vpop.permute.xlu0 %3016
  %3018 = vrot.lane.b32.xlu0 %v2883, 4
  %v3019 = vpop.permute.xlu0 %3018
  %3020 = vrot.lane.b32.xlu0 %v2884, 4
  %v3021 = vpop.permute.xlu0 %3020
  %3022 = vrot.lane.b32.xlu0 %v2885, 4
  %v3023 = vpop.permute.xlu0 %3022
  %3024 = vrot.lane.b32.xlu0 %v2886, 4
  %v3025 = vpop.permute.xlu0 %3024
  %3026 = vrot.lane.b32.xlu0 %v2887, 4
  %v3027 = vpop.permute.xlu0 %3026
  %3028 = vrot.lane.b32.xlu0 %v2888, 4
  %v3029 = vpop.permute.xlu0 %3028
  %3030 = vrot.lane.b32.xlu0 %v2889, 4
  %v3031 = vpop.permute.xlu0 %3030
  %3032 = vrot.lane.b32.xlu0 %v2890, 4
  %v3033 = vpop.permute.xlu0 %3032
  %3034 = vrot.lane.b32.xlu0 %v2891, 4
  %v3035 = vpop.permute.xlu0 %3034
  %3036 = vrot.lane.b32.xlu0 %v2892, 4
  %v3037 = vpop.permute.xlu0 %3036
  %3038 = vrot.lane.b32.xlu0 %v2893, 4
  %v3039 = vpop.permute.xlu0 %3038
  %3040 = vrot.lane.b32.xlu0 %v2894, 4
  %v3041 = vpop.permute.xlu0 %3040
  %3042 = vrot.lane.b32.xlu0 %v2895, 4
  %v3043 = vpop.permute.xlu0 %3042
  %3044 = vrot.lane.b32.xlu0 %v2896, 4
  %v3045 = vpop.permute.xlu0 %3044
  %3046 = vrot.lane.b32.xlu0 %v2897, 4
  %v3047 = vpop.permute.xlu0 %3046
  %3048 = vrot.lane.b32.xlu0 %v2898, 4
  %v3049 = vpop.permute.xlu0 %3048
  %3050 = vrot.lane.b32.xlu0 %v2899, 4
  %v3051 = vpop.permute.xlu0 %3050
  %3052 = vrot.lane.b32.xlu0 %v2900, 4
  %v3053 = vpop.permute.xlu0 %3052
  %3054 = vrot.lane.b32.xlu0 %v2901, 4
  %v3055 = vpop.permute.xlu0 %3054
  %3056 = vrot.lane.b32.xlu0 %v2902, 4
  %v3057 = vpop.permute.xlu0 %3056
  %3058 = vrot.lane.b32.xlu0 %v2903, 4
  %v3059 = vpop.permute.xlu0 %3058
  %3060 = vrot.lane.b32.xlu0 %v2904, 4
  %v3061 = vpop.permute.xlu0 %3060
  %3062 = vrot.lane.b32.xlu0 %v2905, 4
  %v3063 = vpop.permute.xlu0 %3062
  %3064 = vrot.lane.b32.xlu0 %v2906, 4
  %v3065 = vpop.permute.xlu0 %3064
  %3066 = vrot.lane.b32.xlu0 %v2907, 4
  %v3067 = vpop.permute.xlu0 %3066
  %3068 = vrot.lane.b32.xlu0 %v2908, 4
  %v3069 = vpop.permute.xlu0 %3068
  %3070 = vrot.lane.b32.xlu0 %v2909, 4
  %v3071 = vpop.permute.xlu0 %3070
  %3072 = vrot.lane.b32.xlu0 %v2910, 4
  %v3073 = vpop.permute.xlu0 %3072
  %3074 = vrot.lane.b32.xlu0 %v2911, 4
  %v3075 = vpop.permute.xlu0 %3074
  %3076 = vrot.lane.b32.xlu0 %v2912, 4
  %v3077 = vpop.permute.xlu0 %3076
  %3078 = vrot.lane.b32.xlu0 %v2913, 4
  %v3079 = vpop.permute.xlu0 %3078
  %3080 = vrot.lane.b32.xlu0 %v2914, 4
  %v3081 = vpop.permute.xlu0 %3080
  %3082 = vrot.lane.b32.xlu0 %v2915, 4
  %v3083 = vpop.permute.xlu0 %3082
  %3084 = vrot.lane.b32.xlu0 %v2916, 4
  %v3085 = vpop.permute.xlu0 %3084
  %3086 = vrot.lane.b32.xlu0 %v2917, 4
  %v3087 = vpop.permute.xlu0 %3086
  %3088 = vrot.lane.b32.xlu0 %v2918, 4
  %v3089 = vpop.permute.xlu0 %3088
  %3090 = vrot.lane.b32.xlu0 %v2919, 4
  %v3091 = vpop.permute.xlu0 %3090
  %3092 = vrot.lane.b32.xlu0 %v2920, 4
  %v3093 = vpop.permute.xlu0 %3092
  %3094 = vrot.lane.b32.xlu0 %v2921, 4
  %v3095 = vpop.permute.xlu0 %3094
  %3096 = vrot.lane.b32.xlu0 %v2922, 4
  %v3097 = vpop.permute.xlu0 %3096
  %3098 = vrot.lane.b32.xlu0 %v2923, 4
  %v3099 = vpop.permute.xlu0 %3098
  %3100 = vrot.lane.b32.xlu0 %v2924, 4
  %v3101 = vpop.permute.xlu0 %3100
  %3102 = vrot.lane.b32.xlu0 %v2925, 4
  %v3103 = vpop.permute.xlu0 %3102
  %3104 = vrot.lane.b32.xlu0 %v2926, 4
  %v3105 = vpop.permute.xlu0 %3104
  %3106 = vrot.lane.b32.xlu0 %v2927, 4
  %v3107 = vpop.permute.xlu0 %3106
  %3108 = vrot.lane.b32.xlu0 %v2928, 4
  %v3109 = vpop.permute.xlu0 %3108
  %3110 = vrot.lane.b32.xlu0 %v2929, 4
  %v3111 = vpop.permute.xlu0 %3110
  %3112 = vrot.lane.b32.xlu0 %v2930, 4
  %v3113 = vpop.permute.xlu0 %3112
  %3114 = vrot.lane.b32.xlu0 %v2931, 4
  %v3115 = vpop.permute.xlu0 %3114
  %3116 = vrot.lane.b32.xlu0 %v2932, 4
  %v3117 = vpop.permute.xlu0 %3116
  %3118 = vrot.lane.b32.xlu0 %v2933, 4
  %v3119 = vpop.permute.xlu0 %3118
  %3120 = vrot.lane.b32.xlu0 %v2934, 4
  %v3121 = vpop.permute.xlu0 %3120
  %3122 = vrot.lane.b32.xlu0 %v2935, 4
  %v3123 = vpop.permute.xlu0 %3122
  %3124 = vrot.lane.b32.xlu0 %v2936, 4
  %v3125 = vpop.permute.xlu0 %3124
  %3126 = vrot.lane.b32.xlu0 %v2937, 4
  %v3127 = vpop.permute.xlu0 %3126
  %3128 = vrot.lane.b32.xlu0 %v2938, 4
  %v3129 = vpop.permute.xlu0 %3128
  %3130 = vrot.lane.b32.xlu0 %v2939, 4
  %v3131 = vpop.permute.xlu0 %3130
  %vm3196 = vcmask 31744
  %v3197 = vsel %vm3196, %v2639, %v3005
  %v3198 = vsel %vm3196, %v2640, %v3007
  %v3199 = vsel %vm3196, %v2641, %v3009
  %v3200 = vsel %vm3196, %v2642, %v3011
  %v3201 = vsel %vm3196, %v2643, %v3013
  %v3202 = vsel %vm3196, %v2644, %v3015
  %v3203 = vsel %vm3196, %v2645, %v3017
  %v3204 = vsel %vm3196, %v2646, %v3019
  %v3205 = vsel %vm3196, %v2647, %v3021
  %v3206 = vsel %vm3196, %v2648, %v3023
  %v3207 = vsel %vm3196, %v2649, %v3025
  %v3208 = vsel %vm3196, %v2650, %v3027
  %v3209 = vsel %vm3196, %v2651, %v3029
  %v3210 = vsel %vm3196, %v2652, %v3031
  %v3211 = vsel %vm3196, %v2653, %v3033
  %v3212 = vsel %vm3196, %v2654, %v3035
  %v3213 = vsel %vm3196, %v2655, %v3037
  %v3214 = vsel %vm3196, %v2656, %v3039
  %v3215 = vsel %vm3196, %v2657, %v3041
  %v3216 = vsel %vm3196, %v2658, %v3043
  %v3217 = vsel %vm3196, %v2659, %v3045
  %v3218 = vsel %vm3196, %v2660, %v3047
  %v3219 = vsel %vm3196, %v2661, %v3049
  %v3220 = vsel %vm3196, %v2662, %v3051
  %v3221 = vsel %vm3196, %v2663, %v3053
  %v3222 = vsel %vm3196, %v2664, %v3055
  %v3223 = vsel %vm3196, %v2665, %v3057
  %v3224 = vsel %vm3196, %v2666, %v3059
  %v3225 = vsel %vm3196, %v2667, %v3061
  %v3226 = vsel %vm3196, %v2668, %v3063
  %v3227 = vsel %vm3196, %v2669, %v3065
  %v3228 = vsel %vm3196, %v2670, %v3067
  %v3229 = vsel %vm3196, %v2671, %v3069
  %v3230 = vsel %vm3196, %v2672, %v3071
  %v3231 = vsel %vm3196, %v2673, %v3073
  %v3232 = vsel %vm3196, %v2674, %v3075
  %v3233 = vsel %vm3196, %v2675, %v3077
  %v3234 = vsel %vm3196, %v2676, %v3079
  %v3235 = vsel %vm3196, %v2677, %v3081
  %v3236 = vsel %vm3196, %v2678, %v3083
  %v3237 = vsel %vm3196, %v2679, %v3085
  %v3238 = vsel %vm3196, %v2680, %v3087
  %v3239 = vsel %vm3196, %v2681, %v3089
  %v3240 = vsel %vm3196, %v2682, %v3091
  %v3241 = vsel %vm3196, %v2683, %v3093
  %v3242 = vsel %vm3196, %v2684, %v3095
  %v3243 = vsel %vm3196, %v2685, %v3097
  %v3244 = vsel %vm3196, %v2686, %v3099
  %v3245 = vsel %vm3196, %v2687, %v3101
  %v3246 = vsel %vm3196, %v2688, %v3103
  %v3247 = vsel %vm3196, %v2689, %v3105
  %v3248 = vsel %vm3196, %v2690, %v3107
  %v3249 = vsel %vm3196, %v2691, %v3109
  %v3250 = vsel %vm3196, %v2692, %v3111
  %v3251 = vsel %vm3196, %v2693, %v3113
  %v3252 = vsel %vm3196, %v2694, %v3115
  %v3253 = vsel %vm3196, %v2695, %v3117
  %v3254 = vsel %vm3196, %v2696, %v3119
  %v3255 = vsel %vm3196, %v2697, %v3121
  %v3256 = vsel %vm3196, %v2698, %v3123
  %v3257 = vsel %vm3196, %v2699, %v3125
  %v3258 = vsel %vm3196, %v2700, %v3127
  %v3259 = vsel %vm3196, %v2701, %v3129
  %v3260 = vsel %vm3196, %v2702, %v3131
  %s3261 = scalar_lea.vmem [#allocation2], 24
  %3262 = vst.msk [vmem:[%s3261 + $0x1] sm:$0xff] %vm100, %v3197
  %3263 = vst.msk [vmem:[%s3261 + $0x9] sm:$0xff] %vm100, %v3198
  %3264 = vst.msk [vmem:[%s3261 + $0x19] sm:$0xff] %vm100, %v3199
  %3265 = vst.msk [vmem:[%s3261 + $0x21] sm:$0xff] %vm100, %v3200
  %3266 = vst.msk [vmem:[%s3261 + $0x31] sm:$0xff] %vm100, %v3201
  %3267 = vst.msk [vmem:[%s3261 + $0x39] sm:$0xff] %vm100, %v3202
  %3268 = vst.msk [vmem:[%s3261 + $0x49] sm:$0xff] %vm100, %v3203
  %3269 = vst.msk [vmem:[%s3261 + $0x51] sm:$0xff] %vm100, %v3204
  %3270 = vst.msk [vmem:[%s3261 + $0x61] sm:$0xff] %vm100, %v3205
  %3271 = vst.msk [vmem:[%s3261 + $0x69] sm:$0xff] %vm100, %v3206
  %3272 = vst.msk [vmem:[%s3261 + $0x79] sm:$0xff] %vm100, %v3207
  %3273 = vst.msk [vmem:[%s3261 + $0x81] sm:$0xff] %vm100, %v3208
  %3274 = vst.msk [vmem:[%s3261 + $0x91] sm:$0xff] %vm100, %v3209
  %3275 = vst.msk [vmem:[%s3261 + $0x99] sm:$0xff] %vm100, %v3210
  %3276 = vst.msk [vmem:[%s3261 + $0xa9] sm:$0xff] %vm100, %v3211
  %3277 = vst.msk [vmem:[%s3261 + $0xb1] sm:$0xff] %vm100, %v3212
  %3278 = vst.msk [vmem:[%s3261 + $0xc1] sm:$0xff] %vm100, %v3213
  %3279 = vst.msk [vmem:[%s3261 + $0xc9] sm:$0xff] %vm100, %v3214
  %3280 = vst.msk [vmem:[%s3261 + $0xd9] sm:$0xff] %vm100, %v3215
  %3281 = vst.msk [vmem:[%s3261 + $0xe1] sm:$0xff] %vm100, %v3216
  %3282 = vst.msk [vmem:[%s3261 + $0xf1] sm:$0xff] %vm100, %v3217
  %3283 = vst.msk [vmem:[%s3261 + $0xf9] sm:$0xff] %vm100, %v3218
  %3284 = vst.msk [vmem:[%s3261 + $0x109] sm:$0xff] %vm100, %v3219
  %3285 = vst.msk [vmem:[%s3261 + $0x111] sm:$0xff] %vm100, %v3220
  %3286 = vst.msk [vmem:[%s3261 + $0x121] sm:$0xff] %vm100, %v3221
  %3287 = vst.msk [vmem:[%s3261 + $0x129] sm:$0xff] %vm100, %v3222
  %3288 = vst.msk [vmem:[%s3261 + $0x139] sm:$0xff] %vm100, %v3223
  %3289 = vst.msk [vmem:[%s3261 + $0x141] sm:$0xff] %vm100, %v3224
  %3290 = vst.msk [vmem:[%s3261 + $0x151] sm:$0xff] %vm100, %v3225
  %3291 = vst.msk [vmem:[%s3261 + $0x159] sm:$0xff] %vm100, %v3226
  %3292 = vst.msk [vmem:[%s3261 + $0x169] sm:$0xff] %vm100, %v3227
  %3293 = vst.msk [vmem:[%s3261 + $0x171] sm:$0xff] %vm100, %v3228
  %3294 = vst.msk [vmem:[%s3261 + $0x1b1] sm:$0xff] %vm100, %v3229
  %3295 = vst.msk [vmem:[%s3261 + $0x1b9] sm:$0xff] %vm100, %v3230
  %3296 = vst.msk [vmem:[%s3261 + $0x1c9] sm:$0xff] %vm100, %v3231
  %3297 = vst.msk [vmem:[%s3261 + $0x1d1] sm:$0xff] %vm100, %v3232
  %3298 = vst.msk [vmem:[%s3261 + $0x1e1] sm:$0xff] %vm100, %v3233
  %3299 = vst.msk [vmem:[%s3261 + $0x1e9] sm:$0xff] %vm100, %v3234
  %3300 = vst.msk [vmem:[%s3261 + $0x1f9] sm:$0xff] %vm100, %v3235
  %3301 = vst.msk [vmem:[%s3261 + $0x201] sm:$0xff] %vm100, %v3236
  %3302 = vst.msk [vmem:[%s3261 + $0x211] sm:$0xff] %vm100, %v3237
  %3303 = vst.msk [vmem:[%s3261 + $0x219] sm:$0xff] %vm100, %v3238
  %3304 = vst.msk [vmem:[%s3261 + $0x229] sm:$0xff] %vm100, %v3239
  %3305 = vst.msk [vmem:[%s3261 + $0x231] sm:$0xff] %vm100, %v3240
  %3306 = vst.msk [vmem:[%s3261 + $0x241] sm:$0xff] %vm100, %v3241
  %3307 = vst.msk [vmem:[%s3261 + $0x249] sm:$0xff] %vm100, %v3242
  %3308 = vst.msk [vmem:[%s3261 + $0x259] sm:$0xff] %vm100, %v3243
  %3309 = vst.msk [vmem:[%s3261 + $0x261] sm:$0xff] %vm100, %v3244
  %3310 = vst.msk [vmem:[%s3261 + $0x271] sm:$0xff] %vm100, %v3245
  %3311 = vst.msk [vmem:[%s3261 + $0x279] sm:$0xff] %vm100, %v3246
  %3312 = vst.msk [vmem:[%s3261 + $0x289] sm:$0xff] %vm100, %v3247
  %3313 = vst.msk [vmem:[%s3261 + $0x291] sm:$0xff] %vm100, %v3248
  %3314 = vst.msk [vmem:[%s3261 + $0x2a1] sm:$0xff] %vm100, %v3249
  %3315 = vst.msk [vmem:[%s3261 + $0x2a9] sm:$0xff] %vm100, %v3250
  %3316 = vst.msk [vmem:[%s3261 + $0x2b9] sm:$0xff] %vm100, %v3251
  %3317 = vst.msk [vmem:[%s3261 + $0x2c1] sm:$0xff] %vm100, %v3252
  %3318 = vst.msk [vmem:[%s3261 + $0x2d1] sm:$0xff] %vm100, %v3253
  %3319 = vst.msk [vmem:[%s3261 + $0x2d9] sm:$0xff] %vm100, %v3254
  %3320 = vst.msk [vmem:[%s3261 + $0x2e9] sm:$0xff] %vm100, %v3255
  %3321 = vst.msk [vmem:[%s3261 + $0x2f1] sm:$0xff] %vm100, %v3256
  %3322 = vst.msk [vmem:[%s3261 + $0x301] sm:$0xff] %vm100, %v3257
  %3323 = vst.msk [vmem:[%s3261 + $0x309] sm:$0xff] %vm100, %v3258
  %3324 = vst.msk [vmem:[%s3261 + $0x319] sm:$0xff] %vm100, %v3259
  %3325 = vst.msk [vmem:[%s3261 + $0x321] sm:$0xff] %vm100, %v3260
  %v3326 = vld [vmem:[#allocation2] sm:$0xff]
  %v3327 = vld [vmem:[#allocation2 + $0x8] sm:$0xff]
  %v3328 = vld [vmem:[#allocation2 + $0x10] sm:$0x3]
  %v3329 = vld [vmem:[#allocation2 + $0x18] sm:$0xff]
  %v3330 = vld [vmem:[#allocation2 + $0x20] sm:$0xff]
  %v3331 = vld [vmem:[#allocation2 + $0x28] sm:$0x3]
  %v3332 = vld [vmem:[#allocation2 + $0x30] sm:$0xff]
  %v3333 = vld [vmem:[#allocation2 + $0x38] sm:$0xff]
  %v3334 = vld [vmem:[#allocation2 + $0x40] sm:$0x3]
  %v3335 = vld [vmem:[#allocation2 + $0x48] sm:$0xff]
  %v3336 = vld [vmem:[#allocation2 + $0x50] sm:$0xff]
  %v3337 = vld [vmem:[#allocation2 + $0x58] sm:$0x3]
  %v3338 = vld [vmem:[#allocation2 + $0x60] sm:$0xff]
  %v3339 = vld [vmem:[#allocation2 + $0x68] sm:$0xff]
  %v3340 = vld [vmem:[#allocation2 + $0x70] sm:$0x3]
  %v3341 = vld [vmem:[#allocation2 + $0x78] sm:$0xff]
  %v3342 = vld [vmem:[#allocation2 + $0x80] sm:$0xff]
  %v3343 = vld [vmem:[#allocation2 + $0x88] sm:$0x3]
  %v3344 = vld [vmem:[#allocation2 + $0x90] sm:$0xff]
  %v3345 = vld [vmem:[#allocation2 + $0x98] sm:$0xff]
  %v3346 = vld [vmem:[#allocation2 + $0xa0] sm:$0x3]
  %v3347 = vld [vmem:[#allocation2 + $0xa8] sm:$0xff]
  %v3348 = vld [vmem:[#allocation2 + $0xb0] sm:$0xff]
  %v3349 = vld [vmem:[#allocation2 + $0xb8] sm:$0x3]
  %v3350 = vld [vmem:[#allocation2 + $0xc0] sm:$0xff]
  %v3351 = vld [vmem:[#allocation2 + $0xc8] sm:$0xff]
  %v3352 = vld [vmem:[#allocation2 + $0xd0] sm:$0x3]
  %v3353 = vld [vmem:[#allocation2 + $0xd8] sm:$0xff]
  %v3354 = vld [vmem:[#allocation2 + $0xe0] sm:$0xff]
  %v3355 = vld [vmem:[#allocation2 + $0xe8] sm:$0x3]
  %v3356 = vld [vmem:[#allocation2 + $0xf0] sm:$0xff]
  %v3357 = vld [vmem:[#allocation2 + $0xf8] sm:$0xff]
  %v3358 = vld [vmem:[#allocation2 + $0x100] sm:$0x3]
  %v3359 = vld [vmem:[#allocation2 + $0x108] sm:$0xff]
  %v3360 = vld [vmem:[#allocation2 + $0x110] sm:$0xff]
  %v3361 = vld [vmem:[#allocation2 + $0x118] sm:$0x3]
  %v3362 = vld [vmem:[#allocation2 + $0x120] sm:$0xff]
  %v3363 = vld [vmem:[#allocation2 + $0x128] sm:$0xff]
  %v3364 = vld [vmem:[#allocation2 + $0x130] sm:$0x3]
  %v3365 = vld [vmem:[#allocation2 + $0x138] sm:$0xff]
  %v3366 = vld [vmem:[#allocation2 + $0x140] sm:$0xff]
  %v3367 = vld [vmem:[#allocation2 + $0x148] sm:$0x3]
  %v3368 = vld [vmem:[#allocation2 + $0x150] sm:$0xff]
  %v3369 = vld [vmem:[#allocation2 + $0x158] sm:$0xff]
  %v3370 = vld [vmem:[#allocation2 + $0x160] sm:$0x3]
  %v3371 = vld [vmem:[#allocation2 + $0x168] sm:$0xff]
  %v3372 = vld [vmem:[#allocation2 + $0x170] sm:$0xff]
  %v3373 = vld [vmem:[#allocation2 + $0x178] sm:$0x3]
  %v3374 = vld [vmem:[#allocation2 + $0x180] sm:$0xff]
  %v3375 = vld [vmem:[#allocation2 + $0x188] sm:$0xff]
  %v3376 = vld [vmem:[#allocation2 + $0x190] sm:$0x3]
  %v3377 = vld [vmem:[#allocation2 + $0x198] sm:$0xff]
  %v3378 = vld [vmem:[#allocation2 + $0x1a0] sm:$0xff]
  %v3379 = vld [vmem:[#allocation2 + $0x1a8] sm:$0x3]
  %v3380 = vld [vmem:[#allocation2 + $0x1b0] sm:$0xff]
  %v3381 = vld [vmem:[#allocation2 + $0x1b8] sm:$0xff]
  %v3382 = vld [vmem:[#allocation2 + $0x1c0] sm:$0x3]
  %v3383 = vld [vmem:[#allocation2 + $0x1c8] sm:$0xff]
  %v3384 = vld [vmem:[#allocation2 + $0x1d0] sm:$0xff]
  %v3385 = vld [vmem:[#allocation2 + $0x1d8] sm:$0x3]
  %v3386 = vld [vmem:[#allocation2 + $0x1e0] sm:$0xff]
  %v3387 = vld [vmem:[#allocation2 + $0x1e8] sm:$0xff]
  %v3388 = vld [vmem:[#allocation2 + $0x1f0] sm:$0x3]
  %v3389 = vld [vmem:[#allocation2 + $0x1f8] sm:$0xff]
  %v3390 = vld [vmem:[#allocation2 + $0x200] sm:$0xff]
  %v3391 = vld [vmem:[#allocation2 + $0x208] sm:$0x3]
  %v3392 = vld [vmem:[#allocation2 + $0x210] sm:$0xff]
  %v3393 = vld [vmem:[#allocation2 + $0x218] sm:$0xff]
  %v3394 = vld [vmem:[#allocation2 + $0x220] sm:$0x3]
  %v3395 = vld [vmem:[#allocation2 + $0x228] sm:$0xff]
  %v3396 = vld [vmem:[#allocation2 + $0x230] sm:$0xff]
  %v3397 = vld [vmem:[#allocation2 + $0x238] sm:$0x3]
  %v3398 = vld [vmem:[#allocation2 + $0x240] sm:$0xff]
  %v3399 = vld [vmem:[#allocation2 + $0x248] sm:$0xff]
  %v3400 = vld [vmem:[#allocation2 + $0x250] sm:$0x3]
  %v3401 = vld [vmem:[#allocation2 + $0x258] sm:$0xff]
  %v3402 = vld [vmem:[#allocation2 + $0x260] sm:$0xff]
  %v3403 = vld [vmem:[#allocation2 + $0x268] sm:$0x3]
  %v3404 = vld [vmem:[#allocation2 + $0x270] sm:$0xff]
  %v3405 = vld [vmem:[#allocation2 + $0x278] sm:$0xff]
  %v3406 = vld [vmem:[#allocation2 + $0x280] sm:$0x3]
  %v3407 = vld [vmem:[#allocation2 + $0x288] sm:$0xff]
  %v3408 = vld [vmem:[#allocation2 + $0x290] sm:$0xff]
  %v3409 = vld [vmem:[#allocation2 + $0x298] sm:$0x3]
  %v3410 = vld [vmem:[#allocation2 + $0x2a0] sm:$0xff]
  %v3411 = vld [vmem:[#allocation2 + $0x2a8] sm:$0xff]
  %v3412 = vld [vmem:[#allocation2 + $0x2b0] sm:$0x3]
  %v3413 = vld [vmem:[#allocation2 + $0x2b8] sm:$0xff]
  %v3414 = vld [vmem:[#allocation2 + $0x2c0] sm:$0xff]
  %v3415 = vld [vmem:[#allocation2 + $0x2c8] sm:$0x3]
  %v3416 = vld [vmem:[#allocation2 + $0x2d0] sm:$0xff]
  %v3417 = vld [vmem:[#allocation2 + $0x2d8] sm:$0xff]
  %v3418 = vld [vmem:[#allocation2 + $0x2e0] sm:$0x3]
  %v3419 = vld [vmem:[#allocation2 + $0x2e8] sm:$0xff]
  %v3420 = vld [vmem:[#allocation2 + $0x2f0] sm:$0xff]
  %v3421 = vld [vmem:[#allocation2 + $0x2f8] sm:$0x3]
  %v3422 = vld [vmem:[#allocation2 + $0x300] sm:$0xff]
  %v3423 = vld [vmem:[#allocation2 + $0x308] sm:$0xff]
  %v3424 = vld [vmem:[#allocation2 + $0x310] sm:$0x3]
  %v3425 = vld [vmem:[#allocation2 + $0x318] sm:$0xff]
  %v3426 = vld [vmem:[#allocation2 + $0x320] sm:$0xff]
  %v3427 = vld [vmem:[#allocation2 + $0x328] sm:$0x3]
  %v3428 = vld [vmem:[#allocation2 + $0x330] sm:$0xff]
  %v3429 = vld [vmem:[#allocation2 + $0x338] sm:$0xff]
  %v3430 = vld [vmem:[#allocation2 + $0x340] sm:$0x3]
  %v3431 = vld [vmem:[#allocation2 + $0x348] sm:$0xff]
  %v3432 = vld [vmem:[#allocation2 + $0x350] sm:$0xff]
  %v3433 = vld [vmem:[#allocation2 + $0x358] sm:$0x3]
  %vm3530 = vcmask 1046528
  %v3531 = vrot.slane %v3326, 1
  %v3532 = vrot.slane %v3327, 1
  %v3533 = vsel %vm3530, %v3531, %v3532
  %v3534 = vrot.slane %v3328, 1
  %v3535 = vsel %vm3530, %v3532, %v3534
  %v3536 = vrot.slane %v3329, 1
  %v3537 = vrot.slane %v3330, 1
  %v3538 = vsel %vm3530, %v3536, %v3537
  %v3539 = vrot.slane %v3331, 1
  %v3540 = vsel %vm3530, %v3537, %v3539
  %v3541 = vrot.slane %v3332, 1
  %v3542 = vrot.slane %v3333, 1
  %v3543 = vsel %vm3530, %v3541, %v3542
  %v3544 = vrot.slane %v3334, 1
  %v3545 = vsel %vm3530, %v3542, %v3544
  %v3546 = vrot.slane %v3335, 1
  %v3547 = vrot.slane %v3336, 1
  %v3548 = vsel %vm3530, %v3546, %v3547
  %v3549 = vrot.slane %v3337, 1
  %v3550 = vsel %vm3530, %v3547, %v3549
  %v3551 = vrot.slane %v3338, 1
  %v3552 = vrot.slane %v3339, 1
  %v3553 = vsel %vm3530, %v3551, %v3552
  %v3554 = vrot.slane %v3340, 1
  %v3555 = vsel %vm3530, %v3552, %v3554
  %v3556 = vrot.slane %v3341, 1
  %v3557 = vrot.slane %v3342, 1
  %v3558 = vsel %vm3530, %v3556, %v3557
  %v3559 = vrot.slane %v3343, 1
  %v3560 = vsel %vm3530, %v3557, %v3559
  %v3561 = vrot.slane %v3344, 1
  %v3562 = vrot.slane %v3345, 1
  %v3563 = vsel %vm3530, %v3561, %v3562
  %v3564 = vrot.slane %v3346, 1
  %v3565 = vsel %vm3530, %v3562, %v3564
  %v3566 = vrot.slane %v3347, 1
  %v3567 = vrot.slane %v3348, 1
  %v3568 = vsel %vm3530, %v3566, %v3567
  %v3569 = vrot.slane %v3349, 1
  %v3570 = vsel %vm3530, %v3567, %v3569
  %v3571 = vrot.slane %v3350, 1
  %v3572 = vrot.slane %v3351, 1
  %v3573 = vsel %vm3530, %v3571, %v3572
  %v3574 = vrot.slane %v3352, 1
  %v3575 = vsel %vm3530, %v3572, %v3574
  %v3576 = vrot.slane %v3353, 1
  %v3577 = vrot.slane %v3354, 1
  %v3578 = vsel %vm3530, %v3576, %v3577
  %v3579 = vrot.slane %v3355, 1
  %v3580 = vsel %vm3530, %v3577, %v3579
  %v3581 = vrot.slane %v3356, 1
  %v3582 = vrot.slane %v3357, 1
  %v3583 = vsel %vm3530, %v3581, %v3582
  %v3584 = vrot.slane %v3358, 1
  %v3585 = vsel %vm3530, %v3582, %v3584
  %v3586 = vrot.slane %v3359, 1
  %v3587 = vrot.slane %v3360, 1
  %v3588 = vsel %vm3530, %v3586, %v3587
  %v3589 = vrot.slane %v3361, 1
  %v3590 = vsel %vm3530, %v3587, %v3589
  %v3591 = vrot.slane %v3362, 1
  %v3592 = vrot.slane %v3363, 1
  %v3593 = vsel %vm3530, %v3591, %v3592
  %v3594 = vrot.slane %v3364, 1
  %v3595 = vsel %vm3530, %v3592, %v3594
  %v3596 = vrot.slane %v3365, 1
  %v3597 = vrot.slane %v3366, 1
  %v3598 = vsel %vm3530, %v3596, %v3597
  %v3599 = vrot.slane %v3367, 1
  %v3600 = vsel %vm3530, %v3597, %v3599
  %v3601 = vrot.slane %v3368, 1
  %v3602 = vrot.slane %v3369, 1
  %v3603 = vsel %vm3530, %v3601, %v3602
  %v3604 = vrot.slane %v3370, 1
  %v3605 = vsel %vm3530, %v3602, %v3604
  %v3606 = vrot.slane %v3371, 1
  %v3607 = vrot.slane %v3372, 1
  %v3608 = vsel %vm3530, %v3606, %v3607
  %v3609 = vrot.slane %v3373, 1
  %v3610 = vsel %vm3530, %v3607, %v3609
  %v3611 = vrot.slane %v3380, 1
  %v3612 = vrot.slane %v3381, 1
  %v3613 = vsel %vm3530, %v3611, %v3612
  %v3614 = vrot.slane %v3382, 1
  %v3615 = vsel %vm3530, %v3612, %v3614
  %v3616 = vrot.slane %v3383, 1
  %v3617 = vrot.slane %v3384, 1
  %v3618 = vsel %vm3530, %v3616, %v3617
  %v3619 = vrot.slane %v3385, 1
  %v3620 = vsel %vm3530, %v3617, %v3619
  %v3621 = vrot.slane %v3386, 1
  %v3622 = vrot.slane %v3387, 1
  %v3623 = vsel %vm3530, %v3621, %v3622
  %v3624 = vrot.slane %v3388, 1
  %v3625 = vsel %vm3530, %v3622, %v3624
  %v3626 = vrot.slane %v3389, 1
  %v3627 = vrot.slane %v3390, 1
  %v3628 = vsel %vm3530, %v3626, %v3627
  %v3629 = vrot.slane %v3391, 1
  %v3630 = vsel %vm3530, %v3627, %v3629
  %v3631 = vrot.slane %v3392, 1
  %v3632 = vrot.slane %v3393, 1
  %v3633 = vsel %vm3530, %v3631, %v3632
  %v3634 = vrot.slane %v3394, 1
  %v3635 = vsel %vm3530, %v3632, %v3634
  %v3636 = vrot.slane %v3395, 1
  %v3637 = vrot.slane %v3396, 1
  %v3638 = vsel %vm3530, %v3636, %v3637
  %v3639 = vrot.slane %v3397, 1
  %v3640 = vsel %vm3530, %v3637, %v3639
  %v3641 = vrot.slane %v3398, 1
  %v3642 = vrot.slane %v3399, 1
  %v3643 = vsel %vm3530, %v3641, %v3642
  %v3644 = vrot.slane %v3400, 1
  %v3645 = vsel %vm3530, %v3642, %v3644
  %v3646 = vrot.slane %v3401, 1
  %v3647 = vrot.slane %v3402, 1
  %v3648 = vsel %vm3530, %v3646, %v3647
  %v3649 = vrot.slane %v3403, 1
  %v3650 = vsel %vm3530, %v3647, %v3649
  %v3651 = vrot.slane %v3404, 1
  %v3652 = vrot.slane %v3405, 1
  %v3653 = vsel %vm3530, %v3651, %v3652
  %v3654 = vrot.slane %v3406, 1
  %v3655 = vsel %vm3530, %v3652, %v3654
  %v3656 = vrot.slane %v3407, 1
  %v3657 = vrot.slane %v3408, 1
  %v3658 = vsel %vm3530, %v3656, %v3657
  %v3659 = vrot.slane %v3409, 1
  %v3660 = vsel %vm3530, %v3657, %v3659
  %v3661 = vrot.slane %v3410, 1
  %v3662 = vrot.slane %v3411, 1
  %v3663 = vsel %vm3530, %v3661, %v3662
  %v3664 = vrot.slane %v3412, 1
  %v3665 = vsel %vm3530, %v3662, %v3664
  %v3666 = vrot.slane %v3413, 1
  %v3667 = vrot.slane %v3414, 1
  %v3668 = vsel %vm3530, %v3666, %v3667
  %v3669 = vrot.slane %v3415, 1
  %v3670 = vsel %vm3530, %v3667, %v3669
  %v3671 = vrot.slane %v3416, 1
  %v3672 = vrot.slane %v3417, 1
  %v3673 = vsel %vm3530, %v3671, %v3672
  %v3674 = vrot.slane %v3418, 1
  %v3675 = vsel %vm3530, %v3672, %v3674
  %v3676 = vrot.slane %v3419, 1
  %v3677 = vrot.slane %v3420, 1
  %v3678 = vsel %vm3530, %v3676, %v3677
  %v3679 = vrot.slane %v3421, 1
  %v3680 = vsel %vm3530, %v3677, %v3679
  %v3681 = vrot.slane %v3422, 1
  %v3682 = vrot.slane %v3423, 1
  %v3683 = vsel %vm3530, %v3681, %v3682
  %v3684 = vrot.slane %v3424, 1
  %v3685 = vsel %vm3530, %v3682, %v3684
  %v3686 = vrot.slane %v3425, 1
  %v3687 = vrot.slane %v3426, 1
  %v3688 = vsel %vm3530, %v3686, %v3687
  %v3689 = vrot.slane %v3427, 1
  %v3690 = vsel %vm3530, %v3687, %v3689
  %3691 = vrot.lane.b32.xlu0 %v3533, 8
  %v3692 = vpop.permute.xlu0 %3691
  %3693 = vrot.lane.b32.xlu0 %v3535, 8
  %v3694 = vpop.permute.xlu0 %3693
  %3695 = vrot.lane.b32.xlu0 %v3538, 8
  %v3696 = vpop.permute.xlu0 %3695
  %3697 = vrot.lane.b32.xlu0 %v3540, 8
  %v3698 = vpop.permute.xlu0 %3697
  %3699 = vrot.lane.b32.xlu0 %v3543, 8
  %v3700 = vpop.permute.xlu0 %3699
  %3701 = vrot.lane.b32.xlu0 %v3545, 8
  %v3702 = vpop.permute.xlu0 %3701
  %3703 = vrot.lane.b32.xlu0 %v3548, 8
  %v3704 = vpop.permute.xlu0 %3703
  %3705 = vrot.lane.b32.xlu0 %v3550, 8
  %v3706 = vpop.permute.xlu0 %3705
  %3707 = vrot.lane.b32.xlu0 %v3553, 8
  %v3708 = vpop.permute.xlu0 %3707
  %3709 = vrot.lane.b32.xlu0 %v3555, 8
  %v3710 = vpop.permute.xlu0 %3709
  %3711 = vrot.lane.b32.xlu0 %v3558, 8
  %v3712 = vpop.permute.xlu0 %3711
  %3713 = vrot.lane.b32.xlu0 %v3560, 8
  %v3714 = vpop.permute.xlu0 %3713
  %3715 = vrot.lane.b32.xlu0 %v3563, 8
  %v3716 = vpop.permute.xlu0 %3715
  %3717 = vrot.lane.b32.xlu0 %v3565, 8
  %v3718 = vpop.permute.xlu0 %3717
  %3719 = vrot.lane.b32.xlu0 %v3568, 8
  %v3720 = vpop.permute.xlu0 %3719
  %3721 = vrot.lane.b32.xlu0 %v3570, 8
  %v3722 = vpop.permute.xlu0 %3721
  %3723 = vrot.lane.b32.xlu0 %v3573, 8
  %v3724 = vpop.permute.xlu0 %3723
  %3725 = vrot.lane.b32.xlu0 %v3575, 8
  %v3726 = vpop.permute.xlu0 %3725
  %3727 = vrot.lane.b32.xlu0 %v3578, 8
  %v3728 = vpop.permute.xlu0 %3727
  %3729 = vrot.lane.b32.xlu0 %v3580, 8
  %v3730 = vpop.permute.xlu0 %3729
  %3731 = vrot.lane.b32.xlu0 %v3583, 8
  %v3732 = vpop.permute.xlu0 %3731
  %3733 = vrot.lane.b32.xlu0 %v3585, 8
  %v3734 = vpop.permute.xlu0 %3733
  %3735 = vrot.lane.b32.xlu0 %v3588, 8
  %v3736 = vpop.permute.xlu0 %3735
  %3737 = vrot.lane.b32.xlu0 %v3590, 8
  %v3738 = vpop.permute.xlu0 %3737
  %3739 = vrot.lane.b32.xlu0 %v3593, 8
  %v3740 = vpop.permute.xlu0 %3739
  %3741 = vrot.lane.b32.xlu0 %v3595, 8
  %v3742 = vpop.permute.xlu0 %3741
  %3743 = vrot.lane.b32.xlu0 %v3598, 8
  %v3744 = vpop.permute.xlu0 %3743
  %3745 = vrot.lane.b32.xlu0 %v3600, 8
  %v3746 = vpop.permute.xlu0 %3745
  %3747 = vrot.lane.b32.xlu0 %v3603, 8
  %v3748 = vpop.permute.xlu0 %3747
  %3749 = vrot.lane.b32.xlu0 %v3605, 8
  %v3750 = vpop.permute.xlu0 %3749
  %3751 = vrot.lane.b32.xlu0 %v3608, 8
  %v3752 = vpop.permute.xlu0 %3751
  %3753 = vrot.lane.b32.xlu0 %v3610, 8
  %v3754 = vpop.permute.xlu0 %3753
  %3755 = vrot.lane.b32.xlu0 %v3613, 8
  %v3756 = vpop.permute.xlu0 %3755
  %3757 = vrot.lane.b32.xlu0 %v3615, 8
  %v3758 = vpop.permute.xlu0 %3757
  %3759 = vrot.lane.b32.xlu0 %v3618, 8
  %v3760 = vpop.permute.xlu0 %3759
  %3761 = vrot.lane.b32.xlu0 %v3620, 8
  %v3762 = vpop.permute.xlu0 %3761
  %3763 = vrot.lane.b32.xlu0 %v3623, 8
  %v3764 = vpop.permute.xlu0 %3763
  %3765 = vrot.lane.b32.xlu0 %v3625, 8
  %v3766 = vpop.permute.xlu0 %3765
  %3767 = vrot.lane.b32.xlu0 %v3628, 8
  %v3768 = vpop.permute.xlu0 %3767
  %3769 = vrot.lane.b32.xlu0 %v3630, 8
  %v3770 = vpop.permute.xlu0 %3769
  %3771 = vrot.lane.b32.xlu0 %v3633, 8
  %v3772 = vpop.permute.xlu0 %3771
  %3773 = vrot.lane.b32.xlu0 %v3635, 8
  %v3774 = vpop.permute.xlu0 %3773
  %3775 = vrot.lane.b32.xlu0 %v3638, 8
  %v3776 = vpop.permute.xlu0 %3775
  %3777 = vrot.lane.b32.xlu0 %v3640, 8
  %v3778 = vpop.permute.xlu0 %3777
  %3779 = vrot.lane.b32.xlu0 %v3643, 8
  %v3780 = vpop.permute.xlu0 %3779
  %3781 = vrot.lane.b32.xlu0 %v3645, 8
  %v3782 = vpop.permute.xlu0 %3781
  %3783 = vrot.lane.b32.xlu0 %v3648, 8
  %v3784 = vpop.permute.xlu0 %3783
  %3785 = vrot.lane.b32.xlu0 %v3650, 8
  %v3786 = vpop.permute.xlu0 %3785
  %3787 = vrot.lane.b32.xlu0 %v3653, 8
  %v3788 = vpop.permute.xlu0 %3787
  %3789 = vrot.lane.b32.xlu0 %v3655, 8
  %v3790 = vpop.permute.xlu0 %3789
  %3791 = vrot.lane.b32.xlu0 %v3658, 8
  %v3792 = vpop.permute.xlu0 %3791
  %3793 = vrot.lane.b32.xlu0 %v3660, 8
  %v3794 = vpop.permute.xlu0 %3793
  %3795 = vrot.lane.b32.xlu0 %v3663, 8
  %v3796 = vpop.permute.xlu0 %3795
  %3797 = vrot.lane.b32.xlu0 %v3665, 8
  %v3798 = vpop.permute.xlu0 %3797
  %3799 = vrot.lane.b32.xlu0 %v3668, 8
  %v3800 = vpop.permute.xlu0 %3799
  %3801 = vrot.lane.b32.xlu0 %v3670, 8
  %v3802 = vpop.permute.xlu0 %3801
  %3803 = vrot.lane.b32.xlu0 %v3673, 8
  %v3804 = vpop.permute.xlu0 %3803
  %3805 = vrot.lane.b32.xlu0 %v3675, 8
  %v3806 = vpop.permute.xlu0 %3805
  %3807 = vrot.lane.b32.xlu0 %v3678, 8
  %v3808 = vpop.permute.xlu0 %3807
  %3809 = vrot.lane.b32.xlu0 %v3680, 8
  %v3810 = vpop.permute.xlu0 %3809
  %3811 = vrot.lane.b32.xlu0 %v3683, 8
  %v3812 = vpop.permute.xlu0 %3811
  %3813 = vrot.lane.b32.xlu0 %v3685, 8
  %v3814 = vpop.permute.xlu0 %3813
  %3815 = vrot.lane.b32.xlu0 %v3688, 8
  %v3816 = vpop.permute.xlu0 %3815
  %3817 = vrot.lane.b32.xlu0 %v3690, 8
  %v3818 = vpop.permute.xlu0 %3817
  %vm3883 = vcmask 1045504
  %v3884 = vrot.slane %v3326, 2
  %v3885 = vrot.slane %v3327, 2
  %v3886 = vsel %vm3883, %v3884, %v3885
  %v3887 = vrot.slane %v3328, 2
  %v3888 = vsel %vm3883, %v3885, %v3887
  %v3889 = vrot.slane %v3329, 2
  %v3890 = vrot.slane %v3330, 2
  %v3891 = vsel %vm3883, %v3889, %v3890
  %v3892 = vrot.slane %v3331, 2
  %v3893 = vsel %vm3883, %v3890, %v3892
  %v3894 = vrot.slane %v3332, 2
  %v3895 = vrot.slane %v3333, 2
  %v3896 = vsel %vm3883, %v3894, %v3895
  %v3897 = vrot.slane %v3334, 2
  %v3898 = vsel %vm3883, %v3895, %v3897
  %v3899 = vrot.slane %v3335, 2
  %v3900 = vrot.slane %v3336, 2
  %v3901 = vsel %vm3883, %v3899, %v3900
  %v3902 = vrot.slane %v3337, 2
  %v3903 = vsel %vm3883, %v3900, %v3902
  %v3904 = vrot.slane %v3338, 2
  %v3905 = vrot.slane %v3339, 2
  %v3906 = vsel %vm3883, %v3904, %v3905
  %v3907 = vrot.slane %v3340, 2
  %v3908 = vsel %vm3883, %v3905, %v3907
  %v3909 = vrot.slane %v3341, 2
  %v3910 = vrot.slane %v3342, 2
  %v3911 = vsel %vm3883, %v3909, %v3910
  %v3912 = vrot.slane %v3343, 2
  %v3913 = vsel %vm3883, %v3910, %v3912
  %v3914 = vrot.slane %v3344, 2
  %v3915 = vrot.slane %v3345, 2
  %v3916 = vsel %vm3883, %v3914, %v3915
  %v3917 = vrot.slane %v3346, 2
  %v3918 = vsel %vm3883, %v3915, %v3917
  %v3919 = vrot.slane %v3347, 2
  %v3920 = vrot.slane %v3348, 2
  %v3921 = vsel %vm3883, %v3919, %v3920
  %v3922 = vrot.slane %v3349, 2
  %v3923 = vsel %vm3883, %v3920, %v3922
  %v3924 = vrot.slane %v3350, 2
  %v3925 = vrot.slane %v3351, 2
  %v3926 = vsel %vm3883, %v3924, %v3925
  %v3927 = vrot.slane %v3352, 2
  %v3928 = vsel %vm3883, %v3925, %v3927
  %v3929 = vrot.slane %v3353, 2
  %v3930 = vrot.slane %v3354, 2
  %v3931 = vsel %vm3883, %v3929, %v3930
  %v3932 = vrot.slane %v3355, 2
  %v3933 = vsel %vm3883, %v3930, %v3932
  %v3934 = vrot.slane %v3356, 2
  %v3935 = vrot.slane %v3357, 2
  %v3936 = vsel %vm3883, %v3934, %v3935
  %v3937 = vrot.slane %v3358, 2
  %v3938 = vsel %vm3883, %v3935, %v3937
  %v3939 = vrot.slane %v3359, 2
  %v3940 = vrot.slane %v3360, 2
  %v3941 = vsel %vm3883, %v3939, %v3940
  %v3942 = vrot.slane %v3361, 2
  %v3943 = vsel %vm3883, %v3940, %v3942
  %v3944 = vrot.slane %v3362, 2
  %v3945 = vrot.slane %v3363, 2
  %v3946 = vsel %vm3883, %v3944, %v3945
  %v3947 = vrot.slane %v3364, 2
  %v3948 = vsel %vm3883, %v3945, %v3947
  %v3949 = vrot.slane %v3365, 2
  %v3950 = vrot.slane %v3366, 2
  %v3951 = vsel %vm3883, %v3949, %v3950
  %v3952 = vrot.slane %v3367, 2
  %v3953 = vsel %vm3883, %v3950, %v3952
  %v3954 = vrot.slane %v3368, 2
  %v3955 = vrot.slane %v3369, 2
  %v3956 = vsel %vm3883, %v3954, %v3955
  %v3957 = vrot.slane %v3370, 2
  %v3958 = vsel %vm3883, %v3955, %v3957
  %v3959 = vrot.slane %v3371, 2
  %v3960 = vrot.slane %v3372, 2
  %v3961 = vsel %vm3883, %v3959, %v3960
  %v3962 = vrot.slane %v3373, 2
  %v3963 = vsel %vm3883, %v3960, %v3962
  %v3964 = vrot.slane %v3380, 2
  %v3965 = vrot.slane %v3381, 2
  %v3966 = vsel %vm3883, %v3964, %v3965
  %v3967 = vrot.slane %v3382, 2
  %v3968 = vsel %vm3883, %v3965, %v3967
  %v3969 = vrot.slane %v3383, 2
  %v3970 = vrot.slane %v3384, 2
  %v3971 = vsel %vm3883, %v3969, %v3970
  %v3972 = vrot.slane %v3385, 2
  %v3973 = vsel %vm3883, %v3970, %v3972
  %v3974 = vrot.slane %v3386, 2
  %v3975 = vrot.slane %v3387, 2
  %v3976 = vsel %vm3883, %v3974, %v3975
  %v3977 = vrot.slane %v3388, 2
  %v3978 = vsel %vm3883, %v3975, %v3977
  %v3979 = vrot.slane %v3389, 2
  %v3980 = vrot.slane %v3390, 2
  %v3981 = vsel %vm3883, %v3979, %v3980
  %v3982 = vrot.slane %v3391, 2
  %v3983 = vsel %vm3883, %v3980, %v3982
  %v3984 = vrot.slane %v3392, 2
  %v3985 = vrot.slane %v3393, 2
  %v3986 = vsel %vm3883, %v3984, %v3985
  %v3987 = vrot.slane %v3394, 2
  %v3988 = vsel %vm3883, %v3985, %v3987
  %v3989 = vrot.slane %v3395, 2
  %v3990 = vrot.slane %v3396, 2
  %v3991 = vsel %vm3883, %v3989, %v3990
  %v3992 = vrot.slane %v3397, 2
  %v3993 = vsel %vm3883, %v3990, %v3992
  %v3994 = vrot.slane %v3398, 2
  %v3995 = vrot.slane %v3399, 2
  %v3996 = vsel %vm3883, %v3994, %v3995
  %v3997 = vrot.slane %v3400, 2
  %v3998 = vsel %vm3883, %v3995, %v3997
  %v3999 = vrot.slane %v3401, 2
  %v4000 = vrot.slane %v3402, 2
  %v4001 = vsel %vm3883, %v3999, %v4000
  %v4002 = vrot.slane %v3403, 2
  %v4003 = vsel %vm3883, %v4000, %v4002
  %v4004 = vrot.slane %v3404, 2
  %v4005 = vrot.slane %v3405, 2
  %v4006 = vsel %vm3883, %v4004, %v4005
  %v4007 = vrot.slane %v3406, 2
  %v4008 = vsel %vm3883, %v4005, %v4007
  %v4009 = vrot.slane %v3407, 2
  %v4010 = vrot.slane %v3408, 2
  %v4011 = vsel %vm3883, %v4009, %v4010
  %v4012 = vrot.slane %v3409, 2
  %v4013 = vsel %vm3883, %v4010, %v4012
  %v4014 = vrot.slane %v3410, 2
  %v4015 = vrot.slane %v3411, 2
  %v4016 = vsel %vm3883, %v4014, %v4015
  %v4017 = vrot.slane %v3412, 2
  %v4018 = vsel %vm3883, %v4015, %v4017
  %v4019 = vrot.slane %v3413, 2
  %v4020 = vrot.slane %v3414, 2
  %v4021 = vsel %vm3883, %v4019, %v4020
  %v4022 = vrot.slane %v3415, 2
  %v4023 = vsel %vm3883, %v4020, %v4022
  %v4024 = vrot.slane %v3416, 2
  %v4025 = vrot.slane %v3417, 2
  %v4026 = vsel %vm3883, %v4024, %v4025
  %v4027 = vrot.slane %v3418, 2
  %v4028 = vsel %vm3883, %v4025, %v4027
  %v4029 = vrot.slane %v3419, 2
  %v4030 = vrot.slane %v3420, 2
  %v4031 = vsel %vm3883, %v4029, %v4030
  %v4032 = vrot.slane %v3421, 2
  %v4033 = vsel %vm3883, %v4030, %v4032
  %v4034 = vrot.slane %v3422, 2
  %v4035 = vrot.slane %v3423, 2
  %v4036 = vsel %vm3883, %v4034, %v4035
  %v4037 = vrot.slane %v3424, 2
  %v4038 = vsel %vm3883, %v4035, %v4037
  %v4039 = vrot.slane %v3425, 2
  %v4040 = vrot.slane %v3426, 2
  %v4041 = vsel %vm3883, %v4039, %v4040
  %v4042 = vrot.slane %v3427, 2
  %v4043 = vsel %vm3883, %v4040, %v4042
  %4044 = vrot.lane.b32.xlu0 %v3886, 16
  %v4045 = vpop.permute.xlu0 %4044
  %4046 = vrot.lane.b32.xlu0 %v3888, 16
  %v4047 = vpop.permute.xlu0 %4046
  %4048 = vrot.lane.b32.xlu0 %v3891, 16
  %v4049 = vpop.permute.xlu0 %4048
  %4050 = vrot.lane.b32.xlu0 %v3893, 16
  %v4051 = vpop.permute.xlu0 %4050
  %4052 = vrot.lane.b32.xlu0 %v3896, 16
  %v4053 = vpop.permute.xlu0 %4052
  %4054 = vrot.lane.b32.xlu0 %v3898, 16
  %v4055 = vpop.permute.xlu0 %4054
  %4056 = vrot.lane.b32.xlu0 %v3901, 16
  %v4057 = vpop.permute.xlu0 %4056
  %4058 = vrot.lane.b32.xlu0 %v3903, 16
  %v4059 = vpop.permute.xlu0 %4058
  %4060 = vrot.lane.b32.xlu0 %v3906, 16
  %v4061 = vpop.permute.xlu0 %4060
  %4062 = vrot.lane.b32.xlu0 %v3908, 16
  %v4063 = vpop.permute.xlu0 %4062
  %4064 = vrot.lane.b32.xlu0 %v3911, 16
  %v4065 = vpop.permute.xlu0 %4064
  %4066 = vrot.lane.b32.xlu0 %v3913, 16
  %v4067 = vpop.permute.xlu0 %4066
  %4068 = vrot.lane.b32.xlu0 %v3916, 16
  %v4069 = vpop.permute.xlu0 %4068
  %4070 = vrot.lane.b32.xlu0 %v3918, 16
  %v4071 = vpop.permute.xlu0 %4070
  %4072 = vrot.lane.b32.xlu0 %v3921, 16
  %v4073 = vpop.permute.xlu0 %4072
  %4074 = vrot.lane.b32.xlu0 %v3923, 16
  %v4075 = vpop.permute.xlu0 %4074
  %4076 = vrot.lane.b32.xlu0 %v3926, 16
  %v4077 = vpop.permute.xlu0 %4076
  %4078 = vrot.lane.b32.xlu0 %v3928, 16
  %v4079 = vpop.permute.xlu0 %4078
  %4080 = vrot.lane.b32.xlu0 %v3931, 16
  %v4081 = vpop.permute.xlu0 %4080
  %4082 = vrot.lane.b32.xlu0 %v3933, 16
  %v4083 = vpop.permute.xlu0 %4082
  %4084 = vrot.lane.b32.xlu0 %v3936, 16
  %v4085 = vpop.permute.xlu0 %4084
  %4086 = vrot.lane.b32.xlu0 %v3938, 16
  %v4087 = vpop.permute.xlu0 %4086
  %4088 = vrot.lane.b32.xlu0 %v3941, 16
  %v4089 = vpop.permute.xlu0 %4088
  %4090 = vrot.lane.b32.xlu0 %v3943, 16
  %v4091 = vpop.permute.xlu0 %4090
  %4092 = vrot.lane.b32.xlu0 %v3946, 16
  %v4093 = vpop.permute.xlu0 %4092
  %4094 = vrot.lane.b32.xlu0 %v3948, 16
  %v4095 = vpop.permute.xlu0 %4094
  %4096 = vrot.lane.b32.xlu0 %v3951, 16
  %v4097 = vpop.permute.xlu0 %4096
  %4098 = vrot.lane.b32.xlu0 %v3953, 16
  %v4099 = vpop.permute.xlu0 %4098
  %4100 = vrot.lane.b32.xlu0 %v3956, 16
  %v4101 = vpop.permute.xlu0 %4100
  %4102 = vrot.lane.b32.xlu0 %v3958, 16
  %v4103 = vpop.permute.xlu0 %4102
  %4104 = vrot.lane.b32.xlu0 %v3961, 16
  %v4105 = vpop.permute.xlu0 %4104
  %4106 = vrot.lane.b32.xlu0 %v3963, 16
  %v4107 = vpop.permute.xlu0 %4106
  %4108 = vrot.lane.b32.xlu0 %v3966, 16
  %v4109 = vpop.permute.xlu0 %4108
  %4110 = vrot.lane.b32.xlu0 %v3968, 16
  %v4111 = vpop.permute.xlu0 %4110
  %4112 = vrot.lane.b32.xlu0 %v3971, 16
  %v4113 = vpop.permute.xlu0 %4112
  %4114 = vrot.lane.b32.xlu0 %v3973, 16
  %v4115 = vpop.permute.xlu0 %4114
  %4116 = vrot.lane.b32.xlu0 %v3976, 16
  %v4117 = vpop.permute.xlu0 %4116
  %4118 = vrot.lane.b32.xlu0 %v3978, 16
  %v4119 = vpop.permute.xlu0 %4118
  %4120 = vrot.lane.b32.xlu0 %v3981, 16
  %v4121 = vpop.permute.xlu0 %4120
  %4122 = vrot.lane.b32.xlu0 %v3983, 16
  %v4123 = vpop.permute.xlu0 %4122
  %4124 = vrot.lane.b32.xlu0 %v3986, 16
  %v4125 = vpop.permute.xlu0 %4124
  %4126 = vrot.lane.b32.xlu0 %v3988, 16
  %v4127 = vpop.permute.xlu0 %4126
  %4128 = vrot.lane.b32.xlu0 %v3991, 16
  %v4129 = vpop.permute.xlu0 %4128
  %4130 = vrot.lane.b32.xlu0 %v3993, 16
  %v4131 = vpop.permute.xlu0 %4130
  %4132 = vrot.lane.b32.xlu0 %v3996, 16
  %v4133 = vpop.permute.xlu0 %4132
  %4134 = vrot.lane.b32.xlu0 %v3998, 16
  %v4135 = vpop.permute.xlu0 %4134
  %4136 = vrot.lane.b32.xlu0 %v4001, 16
  %v4137 = vpop.permute.xlu0 %4136
  %4138 = vrot.lane.b32.xlu0 %v4003, 16
  %v4139 = vpop.permute.xlu0 %4138
  %4140 = vrot.lane.b32.xlu0 %v4006, 16
  %v4141 = vpop.permute.xlu0 %4140
  %4142 = vrot.lane.b32.xlu0 %v4008, 16
  %v4143 = vpop.permute.xlu0 %4142
  %4144 = vrot.lane.b32.xlu0 %v4011, 16
  %v4145 = vpop.permute.xlu0 %4144
  %4146 = vrot.lane.b32.xlu0 %v4013, 16
  %v4147 = vpop.permute.xlu0 %4146
  %4148 = vrot.lane.b32.xlu0 %v4016, 16
  %v4149 = vpop.permute.xlu0 %4148
  %4150 = vrot.lane.b32.xlu0 %v4018, 16
  %v4151 = vpop.permute.xlu0 %4150
  %4152 = vrot.lane.b32.xlu0 %v4021, 16
  %v4153 = vpop.permute.xlu0 %4152
  %4154 = vrot.lane.b32.xlu0 %v4023, 16
  %v4155 = vpop.permute.xlu0 %4154
  %4156 = vrot.lane.b32.xlu0 %v4026, 16
  %v4157 = vpop.permute.xlu0 %4156
  %4158 = vrot.lane.b32.xlu0 %v4028, 16
  %v4159 = vpop.permute.xlu0 %4158
  %4160 = vrot.lane.b32.xlu0 %v4031, 16
  %v4161 = vpop.permute.xlu0 %4160
  %4162 = vrot.lane.b32.xlu0 %v4033, 16
  %v4163 = vpop.permute.xlu0 %4162
  %4164 = vrot.lane.b32.xlu0 %v4036, 16
  %v4165 = vpop.permute.xlu0 %4164
  %4166 = vrot.lane.b32.xlu0 %v4038, 16
  %v4167 = vpop.permute.xlu0 %4166
  %4168 = vrot.lane.b32.xlu0 %v4041, 16
  %v4169 = vpop.permute.xlu0 %4168
  %4170 = vrot.lane.b32.xlu0 %v4043, 16
  %v4171 = vpop.permute.xlu0 %4170
  %4240 = vrot.lane.b32.xlu0 %v3329, 24
  %v4241 = vpop.permute.xlu0 %4240
  %4242 = vrot.lane.b32.xlu0 %v3330, 24
  %v4243 = vpop.permute.xlu0 %4242
  %4244 = vrot.lane.b32.xlu0 %v3332, 24
  %v4245 = vpop.permute.xlu0 %4244
  %4246 = vrot.lane.b32.xlu0 %v3333, 24
  %v4247 = vpop.permute.xlu0 %4246
  %4248 = vrot.lane.b32.xlu0 %v3335, 24
  %v4249 = vpop.permute.xlu0 %4248
  %4250 = vrot.lane.b32.xlu0 %v3336, 24
  %v4251 = vpop.permute.xlu0 %4250
  %4252 = vrot.lane.b32.xlu0 %v3338, 24
  %v4253 = vpop.permute.xlu0 %4252
  %4254 = vrot.lane.b32.xlu0 %v3339, 24
  %v4255 = vpop.permute.xlu0 %4254
  %4256 = vrot.lane.b32.xlu0 %v3341, 24
  %v4257 = vpop.permute.xlu0 %4256
  %4258 = vrot.lane.b32.xlu0 %v3342, 24
  %v4259 = vpop.permute.xlu0 %4258
  %4260 = vrot.lane.b32.xlu0 %v3344, 24
  %v4261 = vpop.permute.xlu0 %4260
  %4262 = vrot.lane.b32.xlu0 %v3345, 24
  %v4263 = vpop.permute.xlu0 %4262
  %4264 = vrot.lane.b32.xlu0 %v3347, 24
  %v4265 = vpop.permute.xlu0 %4264
  %4266 = vrot.lane.b32.xlu0 %v3348, 24
  %v4267 = vpop.permute.xlu0 %4266
  %4268 = vrot.lane.b32.xlu0 %v3350, 24
  %v4269 = vpop.permute.xlu0 %4268
  %4270 = vrot.lane.b32.xlu0 %v3351, 24
  %v4271 = vpop.permute.xlu0 %4270
  %4272 = vrot.lane.b32.xlu0 %v3353, 24
  %v4273 = vpop.permute.xlu0 %4272
  %4274 = vrot.lane.b32.xlu0 %v3354, 24
  %v4275 = vpop.permute.xlu0 %4274
  %4276 = vrot.lane.b32.xlu0 %v3356, 24
  %v4277 = vpop.permute.xlu0 %4276
  %4278 = vrot.lane.b32.xlu0 %v3357, 24
  %v4279 = vpop.permute.xlu0 %4278
  %4280 = vrot.lane.b32.xlu0 %v3359, 24
  %v4281 = vpop.permute.xlu0 %4280
  %4282 = vrot.lane.b32.xlu0 %v3360, 24
  %v4283 = vpop.permute.xlu0 %4282
  %4284 = vrot.lane.b32.xlu0 %v3362, 24
  %v4285 = vpop.permute.xlu0 %4284
  %4286 = vrot.lane.b32.xlu0 %v3363, 24
  %v4287 = vpop.permute.xlu0 %4286
  %4288 = vrot.lane.b32.xlu0 %v3365, 24
  %v4289 = vpop.permute.xlu0 %4288
  %4290 = vrot.lane.b32.xlu0 %v3366, 24
  %v4291 = vpop.permute.xlu0 %4290
  %4292 = vrot.lane.b32.xlu0 %v3368, 24
  %v4293 = vpop.permute.xlu0 %4292
  %4294 = vrot.lane.b32.xlu0 %v3369, 24
  %v4295 = vpop.permute.xlu0 %4294
  %4296 = vrot.lane.b32.xlu0 %v3371, 24
  %v4297 = vpop.permute.xlu0 %4296
  %4298 = vrot.lane.b32.xlu0 %v3372, 24
  %v4299 = vpop.permute.xlu0 %4298
  %4300 = vrot.lane.b32.xlu0 %v3374, 24
  %v4301 = vpop.permute.xlu0 %4300
  %4302 = vrot.lane.b32.xlu0 %v3375, 24
  %v4303 = vpop.permute.xlu0 %4302
  %4304 = vrot.lane.b32.xlu0 %v3383, 24
  %v4305 = vpop.permute.xlu0 %4304
  %4306 = vrot.lane.b32.xlu0 %v3384, 24
  %v4307 = vpop.permute.xlu0 %4306
  %4308 = vrot.lane.b32.xlu0 %v3386, 24
  %v4309 = vpop.permute.xlu0 %4308
  %4310 = vrot.lane.b32.xlu0 %v3387, 24
  %v4311 = vpop.permute.xlu0 %4310
  %4312 = vrot.lane.b32.xlu0 %v3389, 24
  %v4313 = vpop.permute.xlu0 %4312
  %4314 = vrot.lane.b32.xlu0 %v3390, 24
  %v4315 = vpop.permute.xlu0 %4314
  %4316 = vrot.lane.b32.xlu0 %v3392, 24
  %v4317 = vpop.permute.xlu0 %4316
  %4318 = vrot.lane.b32.xlu0 %v3393, 24
  %v4319 = vpop.permute.xlu0 %4318
  %4320 = vrot.lane.b32.xlu0 %v3395, 24
  %v4321 = vpop.permute.xlu0 %4320
  %4322 = vrot.lane.b32.xlu0 %v3396, 24
  %v4323 = vpop.permute.xlu0 %4322
  %4324 = vrot.lane.b32.xlu0 %v3398, 24
  %v4325 = vpop.permute.xlu0 %4324
  %4326 = vrot.lane.b32.xlu0 %v3399, 24
  %v4327 = vpop.permute.xlu0 %4326
  %4328 = vrot.lane.b32.xlu0 %v3401, 24
  %v4329 = vpop.permute.xlu0 %4328
  %4330 = vrot.lane.b32.xlu0 %v3402, 24
  %v4331 = vpop.permute.xlu0 %4330
  %4332 = vrot.lane.b32.xlu0 %v3404, 24
  %v4333 = vpop.permute.xlu0 %4332
  %4334 = vrot.lane.b32.xlu0 %v3405, 24
  %v4335 = vpop.permute.xlu0 %4334
  %4336 = vrot.lane.b32.xlu0 %v3407, 24
  %v4337 = vpop.permute.xlu0 %4336
  %4338 = vrot.lane.b32.xlu0 %v3408, 24
  %v4339 = vpop.permute.xlu0 %4338
  %4340 = vrot.lane.b32.xlu0 %v3410, 24
  %v4341 = vpop.permute.xlu0 %4340
  %4342 = vrot.lane.b32.xlu0 %v3411, 24
  %v4343 = vpop.permute.xlu0 %4342
  %4344 = vrot.lane.b32.xlu0 %v3413, 24
  %v4345 = vpop.permute.xlu0 %4344
  %4346 = vrot.lane.b32.xlu0 %v3414, 24
  %v4347 = vpop.permute.xlu0 %4346
  %4348 = vrot.lane.b32.xlu0 %v3416, 24
  %v4349 = vpop.permute.xlu0 %4348
  %4350 = vrot.lane.b32.xlu0 %v3417, 24
  %v4351 = vpop.permute.xlu0 %4350
  %4352 = vrot.lane.b32.xlu0 %v3419, 24
  %v4353 = vpop.permute.xlu0 %4352
  %4354 = vrot.lane.b32.xlu0 %v3420, 24
  %v4355 = vpop.permute.xlu0 %4354
  %4356 = vrot.lane.b32.xlu0 %v3422, 24
  %v4357 = vpop.permute.xlu0 %4356
  %4358 = vrot.lane.b32.xlu0 %v3423, 24
  %v4359 = vpop.permute.xlu0 %4358
  %4360 = vrot.lane.b32.xlu0 %v3425, 24
  %v4361 = vpop.permute.xlu0 %4360
  %4362 = vrot.lane.b32.xlu0 %v3426, 24
  %v4363 = vpop.permute.xlu0 %4362
  %4364 = vrot.lane.b32.xlu0 %v3428, 24
  %v4365 = vpop.permute.xlu0 %4364
  %4366 = vrot.lane.b32.xlu0 %v3429, 24
  %v4367 = vpop.permute.xlu0 %4366
  %v4434 = vrot.slane %v3374, 1
  %v4435 = vrot.slane %v3375, 1
  %v4436 = vsel %vm3530, %v4434, %v4435
  %v4437 = vrot.slane %v3376, 1
  %v4438 = vsel %vm3530, %v4435, %v4437
  %v4439 = vrot.slane %v3428, 1
  %v4440 = vrot.slane %v3429, 1
  %v4441 = vsel %vm3530, %v4439, %v4440
  %v4442 = vrot.slane %v3430, 1
  %v4443 = vsel %vm3530, %v4440, %v4442
  %4444 = vrot.lane.b32.xlu0 %v3538, 32
  %v4445 = vpop.permute.xlu0 %4444
  %4446 = vrot.lane.b32.xlu0 %v3540, 32
  %v4447 = vpop.permute.xlu0 %4446
  %4448 = vrot.lane.b32.xlu0 %v3543, 32
  %v4449 = vpop.permute.xlu0 %4448
  %4450 = vrot.lane.b32.xlu0 %v3545, 32
  %v4451 = vpop.permute.xlu0 %4450
  %4452 = vrot.lane.b32.xlu0 %v3548, 32
  %v4453 = vpop.permute.xlu0 %4452
  %4454 = vrot.lane.b32.xlu0 %v3550, 32
  %v4455 = vpop.permute.xlu0 %4454
  %4456 = vrot.lane.b32.xlu0 %v3553, 32
  %v4457 = vpop.permute.xlu0 %4456
  %4458 = vrot.lane.b32.xlu0 %v3555, 32
  %v4459 = vpop.permute.xlu0 %4458
  %4460 = vrot.lane.b32.xlu0 %v3558, 32
  %v4461 = vpop.permute.xlu0 %4460
  %4462 = vrot.lane.b32.xlu0 %v3560, 32
  %v4463 = vpop.permute.xlu0 %4462
  %4464 = vrot.lane.b32.xlu0 %v3563, 32
  %v4465 = vpop.permute.xlu0 %4464
  %4466 = vrot.lane.b32.xlu0 %v3565, 32
  %v4467 = vpop.permute.xlu0 %4466
  %4468 = vrot.lane.b32.xlu0 %v3568, 32
  %v4469 = vpop.permute.xlu0 %4468
  %4470 = vrot.lane.b32.xlu0 %v3570, 32
  %v4471 = vpop.permute.xlu0 %4470
  %4472 = vrot.lane.b32.xlu0 %v3573, 32
  %v4473 = vpop.permute.xlu0 %4472
  %4474 = vrot.lane.b32.xlu0 %v3575, 32
  %v4475 = vpop.permute.xlu0 %4474
  %4476 = vrot.lane.b32.xlu0 %v3578, 32
  %v4477 = vpop.permute.xlu0 %4476
  %4478 = vrot.lane.b32.xlu0 %v3580, 32
  %v4479 = vpop.permute.xlu0 %4478
  %4480 = vrot.lane.b32.xlu0 %v3583, 32
  %v4481 = vpop.permute.xlu0 %4480
  %4482 = vrot.lane.b32.xlu0 %v3585, 32
  %v4483 = vpop.permute.xlu0 %4482
  %4484 = vrot.lane.b32.xlu0 %v3588, 32
  %v4485 = vpop.permute.xlu0 %4484
  %4486 = vrot.lane.b32.xlu0 %v3590, 32
  %v4487 = vpop.permute.xlu0 %4486
  %4488 = vrot.lane.b32.xlu0 %v3593, 32
  %v4489 = vpop.permute.xlu0 %4488
  %4490 = vrot.lane.b32.xlu0 %v3595, 32
  %v4491 = vpop.permute.xlu0 %4490
  %4492 = vrot.lane.b32.xlu0 %v3598, 32
  %v4493 = vpop.permute.xlu0 %4492
  %4494 = vrot.lane.b32.xlu0 %v3600, 32
  %v4495 = vpop.permute.xlu0 %4494
  %4496 = vrot.lane.b32.xlu0 %v3603, 32
  %v4497 = vpop.permute.xlu0 %4496
  %4498 = vrot.lane.b32.xlu0 %v3605, 32
  %v4499 = vpop.permute.xlu0 %4498
  %4500 = vrot.lane.b32.xlu0 %v3608, 32
  %v4501 = vpop.permute.xlu0 %4500
  %4502 = vrot.lane.b32.xlu0 %v3610, 32
  %v4503 = vpop.permute.xlu0 %4502
  %4504 = vrot.lane.b32.xlu0 %v4436, 32
  %v4505 = vpop.permute.xlu0 %4504
  %4506 = vrot.lane.b32.xlu0 %v4438, 32
  %v4507 = vpop.permute.xlu0 %4506
  %4508 = vrot.lane.b32.xlu0 %v3618, 32
  %v4509 = vpop.permute.xlu0 %4508
  %4510 = vrot.lane.b32.xlu0 %v3620, 32
  %v4511 = vpop.permute.xlu0 %4510
  %4512 = vrot.lane.b32.xlu0 %v3623, 32
  %v4513 = vpop.permute.xlu0 %4512
  %4514 = vrot.lane.b32.xlu0 %v3625, 32
  %v4515 = vpop.permute.xlu0 %4514
  %4516 = vrot.lane.b32.xlu0 %v3628, 32
  %v4517 = vpop.permute.xlu0 %4516
  %4518 = vrot.lane.b32.xlu0 %v3630, 32
  %v4519 = vpop.permute.xlu0 %4518
  %4520 = vrot.lane.b32.xlu0 %v3633, 32
  %v4521 = vpop.permute.xlu0 %4520
  %4522 = vrot.lane.b32.xlu0 %v3635, 32
  %v4523 = vpop.permute.xlu0 %4522
  %4524 = vrot.lane.b32.xlu0 %v3638, 32
  %v4525 = vpop.permute.xlu0 %4524
  %4526 = vrot.lane.b32.xlu0 %v3640, 32
  %v4527 = vpop.permute.xlu0 %4526
  %4528 = vrot.lane.b32.xlu0 %v3643, 32
  %v4529 = vpop.permute.xlu0 %4528
  %4530 = vrot.lane.b32.xlu0 %v3645, 32
  %v4531 = vpop.permute.xlu0 %4530
  %4532 = vrot.lane.b32.xlu0 %v3648, 32
  %v4533 = vpop.permute.xlu0 %4532
  %4534 = vrot.lane.b32.xlu0 %v3650, 32
  %v4535 = vpop.permute.xlu0 %4534
  %4536 = vrot.lane.b32.xlu0 %v3653, 32
  %v4537 = vpop.permute.xlu0 %4536
  %4538 = vrot.lane.b32.xlu0 %v3655, 32
  %v4539 = vpop.permute.xlu0 %4538
  %4540 = vrot.lane.b32.xlu0 %v3658, 32
  %v4541 = vpop.permute.xlu0 %4540
  %4542 = vrot.lane.b32.xlu0 %v3660, 32
  %v4543 = vpop.permute.xlu0 %4542
  %4544 = vrot.lane.b32.xlu0 %v3663, 32
  %v4545 = vpop.permute.xlu0 %4544
  %4546 = vrot.lane.b32.xlu0 %v3665, 32
  %v4547 = vpop.permute.xlu0 %4546
  %4548 = vrot.lane.b32.xlu0 %v3668, 32
  %v4549 = vpop.permute.xlu0 %4548
  %4550 = vrot.lane.b32.xlu0 %v3670, 32
  %v4551 = vpop.permute.xlu0 %4550
  %4552 = vrot.lane.b32.xlu0 %v3673, 32
  %v4553 = vpop.permute.xlu0 %4552
  %4554 = vrot.lane.b32.xlu0 %v3675, 32
  %v4555 = vpop.permute.xlu0 %4554
  %4556 = vrot.lane.b32.xlu0 %v3678, 32
  %v4557 = vpop.permute.xlu0 %4556
  %4558 = vrot.lane.b32.xlu0 %v3680, 32
  %v4559 = vpop.permute.xlu0 %4558
  %4560 = vrot.lane.b32.xlu0 %v3683, 32
  %v4561 = vpop.permute.xlu0 %4560
  %4562 = vrot.lane.b32.xlu0 %v3685, 32
  %v4563 = vpop.permute.xlu0 %4562
  %4564 = vrot.lane.b32.xlu0 %v3688, 32
  %v4565 = vpop.permute.xlu0 %4564
  %4566 = vrot.lane.b32.xlu0 %v3690, 32
  %v4567 = vpop.permute.xlu0 %4566
  %4568 = vrot.lane.b32.xlu0 %v4441, 32
  %v4569 = vpop.permute.xlu0 %4568
  %4570 = vrot.lane.b32.xlu0 %v4443, 32
  %v4571 = vpop.permute.xlu0 %4570
  %v4636 = vrot.slane %v3374, 2
  %v4637 = vrot.slane %v3375, 2
  %v4638 = vsel %vm3883, %v4636, %v4637
  %v4639 = vrot.slane %v3376, 2
  %v4640 = vsel %vm3883, %v4637, %v4639
  %v4641 = vrot.slane %v3428, 2
  %v4642 = vrot.slane %v3429, 2
  %v4643 = vsel %vm3883, %v4641, %v4642
  %v4644 = vrot.slane %v3430, 2
  %v4645 = vsel %vm3883, %v4642, %v4644
  %4646 = vrot.lane.b32.xlu0 %v3891, 40
  %v4647 = vpop.permute.xlu0 %4646
  %4648 = vrot.lane.b32.xlu0 %v3893, 40
  %v4649 = vpop.permute.xlu0 %4648
  %4650 = vrot.lane.b32.xlu0 %v3896, 40
  %v4651 = vpop.permute.xlu0 %4650
  %4652 = vrot.lane.b32.xlu0 %v3898, 40
  %v4653 = vpop.permute.xlu0 %4652
  %4654 = vrot.lane.b32.xlu0 %v3901, 40
  %v4655 = vpop.permute.xlu0 %4654
  %4656 = vrot.lane.b32.xlu0 %v3903, 40
  %v4657 = vpop.permute.xlu0 %4656
  %4658 = vrot.lane.b32.xlu0 %v3906, 40
  %v4659 = vpop.permute.xlu0 %4658
  %4660 = vrot.lane.b32.xlu0 %v3908, 40
  %v4661 = vpop.permute.xlu0 %4660
  %4662 = vrot.lane.b32.xlu0 %v3911, 40
  %v4663 = vpop.permute.xlu0 %4662
  %4664 = vrot.lane.b32.xlu0 %v3913, 40
  %v4665 = vpop.permute.xlu0 %4664
  %4666 = vrot.lane.b32.xlu0 %v3916, 40
  %v4667 = vpop.permute.xlu0 %4666
  %4668 = vrot.lane.b32.xlu0 %v3918, 40
  %v4669 = vpop.permute.xlu0 %4668
  %4670 = vrot.lane.b32.xlu0 %v3921, 40
  %v4671 = vpop.permute.xlu0 %4670
  %4672 = vrot.lane.b32.xlu0 %v3923, 40
  %v4673 = vpop.permute.xlu0 %4672
  %4674 = vrot.lane.b32.xlu0 %v3926, 40
  %v4675 = vpop.permute.xlu0 %4674
  %4676 = vrot.lane.b32.xlu0 %v3928, 40
  %v4677 = vpop.permute.xlu0 %4676
  %4678 = vrot.lane.b32.xlu0 %v3931, 40
  %v4679 = vpop.permute.xlu0 %4678
  %4680 = vrot.lane.b32.xlu0 %v3933, 40
  %v4681 = vpop.permute.xlu0 %4680
  %4682 = vrot.lane.b32.xlu0 %v3936, 40
  %v4683 = vpop.permute.xlu0 %4682
  %4684 = vrot.lane.b32.xlu0 %v3938, 40
  %v4685 = vpop.permute.xlu0 %4684
  %4686 = vrot.lane.b32.xlu0 %v3941, 40
  %v4687 = vpop.permute.xlu0 %4686
  %4688 = vrot.lane.b32.xlu0 %v3943, 40
  %v4689 = vpop.permute.xlu0 %4688
  %4690 = vrot.lane.b32.xlu0 %v3946, 40
  %v4691 = vpop.permute.xlu0 %4690
  %4692 = vrot.lane.b32.xlu0 %v3948, 40
  %v4693 = vpop.permute.xlu0 %4692
  %4694 = vrot.lane.b32.xlu0 %v3951, 40
  %v4695 = vpop.permute.xlu0 %4694
  %4696 = vrot.lane.b32.xlu0 %v3953, 40
  %v4697 = vpop.permute.xlu0 %4696
  %4698 = vrot.lane.b32.xlu0 %v3956, 40
  %v4699 = vpop.permute.xlu0 %4698
  %4700 = vrot.lane.b32.xlu0 %v3958, 40
  %v4701 = vpop.permute.xlu0 %4700
  %4702 = vrot.lane.b32.xlu0 %v3961, 40
  %v4703 = vpop.permute.xlu0 %4702
  %4704 = vrot.lane.b32.xlu0 %v3963, 40
  %v4705 = vpop.permute.xlu0 %4704
  %4706 = vrot.lane.b32.xlu0 %v4638, 40
  %v4707 = vpop.permute.xlu0 %4706
  %4708 = vrot.lane.b32.xlu0 %v4640, 40
  %v4709 = vpop.permute.xlu0 %4708
  %4710 = vrot.lane.b32.xlu0 %v3971, 40
  %v4711 = vpop.permute.xlu0 %4710
  %4712 = vrot.lane.b32.xlu0 %v3973, 40
  %v4713 = vpop.permute.xlu0 %4712
  %4714 = vrot.lane.b32.xlu0 %v3976, 40
  %v4715 = vpop.permute.xlu0 %4714
  %4716 = vrot.lane.b32.xlu0 %v3978, 40
  %v4717 = vpop.permute.xlu0 %4716
  %4718 = vrot.lane.b32.xlu0 %v3981, 40
  %v4719 = vpop.permute.xlu0 %4718
  %4720 = vrot.lane.b32.xlu0 %v3983, 40
  %v4721 = vpop.permute.xlu0 %4720
  %4722 = vrot.lane.b32.xlu0 %v3986, 40
  %v4723 = vpop.permute.xlu0 %4722
  %4724 = vrot.lane.b32.xlu0 %v3988, 40
  %v4725 = vpop.permute.xlu0 %4724
  %4726 = vrot.lane.b32.xlu0 %v3991, 40
  %v4727 = vpop.permute.xlu0 %4726
  %4728 = vrot.lane.b32.xlu0 %v3993, 40
  %v4729 = vpop.permute.xlu0 %4728
  %4730 = vrot.lane.b32.xlu0 %v3996, 40
  %v4731 = vpop.permute.xlu0 %4730
  %4732 = vrot.lane.b32.xlu0 %v3998, 40
  %v4733 = vpop.permute.xlu0 %4732
  %4734 = vrot.lane.b32.xlu0 %v4001, 40
  %v4735 = vpop.permute.xlu0 %4734
  %4736 = vrot.lane.b32.xlu0 %v4003, 40
  %v4737 = vpop.permute.xlu0 %4736
  %4738 = vrot.lane.b32.xlu0 %v4006, 40
  %v4739 = vpop.permute.xlu0 %4738
  %4740 = vrot.lane.b32.xlu0 %v4008, 40
  %v4741 = vpop.permute.xlu0 %4740
  %4742 = vrot.lane.b32.xlu0 %v4011, 40
  %v4743 = vpop.permute.xlu0 %4742
  %4744 = vrot.lane.b32.xlu0 %v4013, 40
  %v4745 = vpop.permute.xlu0 %4744
  %4746 = vrot.lane.b32.xlu0 %v4016, 40
  %v4747 = vpop.permute.xlu0 %4746
  %4748 = vrot.lane.b32.xlu0 %v4018, 40
  %v4749 = vpop.permute.xlu0 %4748
  %4750 = vrot.lane.b32.xlu0 %v4021, 40
  %v4751 = vpop.permute.xlu0 %4750
  %4752 = vrot.lane.b32.xlu0 %v4023, 40
  %v4753 = vpop.permute.xlu0 %4752
  %4754 = vrot.lane.b32.xlu0 %v4026, 40
  %v4755 = vpop.permute.xlu0 %4754
  %4756 = vrot.lane.b32.xlu0 %v4028, 40
  %v4757 = vpop.permute.xlu0 %4756
  %4758 = vrot.lane.b32.xlu0 %v4031, 40
  %v4759 = vpop.permute.xlu0 %4758
  %4760 = vrot.lane.b32.xlu0 %v4033, 40
  %v4761 = vpop.permute.xlu0 %4760
  %4762 = vrot.lane.b32.xlu0 %v4036, 40
  %v4763 = vpop.permute.xlu0 %4762
  %4764 = vrot.lane.b32.xlu0 %v4038, 40
  %v4765 = vpop.permute.xlu0 %4764
  %4766 = vrot.lane.b32.xlu0 %v4041, 40
  %v4767 = vpop.permute.xlu0 %4766
  %4768 = vrot.lane.b32.xlu0 %v4043, 40
  %v4769 = vpop.permute.xlu0 %4768
  %4770 = vrot.lane.b32.xlu0 %v4643, 40
  %v4771 = vpop.permute.xlu0 %4770
  %4772 = vrot.lane.b32.xlu0 %v4645, 40
  %v4773 = vpop.permute.xlu0 %4772
  %4842 = vrot.lane.b32.xlu0 %v3332, 48
  %v4843 = vpop.permute.xlu0 %4842
  %4844 = vrot.lane.b32.xlu0 %v3333, 48
  %v4845 = vpop.permute.xlu0 %4844
  %4846 = vrot.lane.b32.xlu0 %v3335, 48
  %v4847 = vpop.permute.xlu0 %4846
  %4848 = vrot.lane.b32.xlu0 %v3336, 48
  %v4849 = vpop.permute.xlu0 %4848
  %4850 = vrot.lane.b32.xlu0 %v3338, 48
  %v4851 = vpop.permute.xlu0 %4850
  %4852 = vrot.lane.b32.xlu0 %v3339, 48
  %v4853 = vpop.permute.xlu0 %4852
  %4854 = vrot.lane.b32.xlu0 %v3341, 48
  %v4855 = vpop.permute.xlu0 %4854
  %4856 = vrot.lane.b32.xlu0 %v3342, 48
  %v4857 = vpop.permute.xlu0 %4856
  %4858 = vrot.lane.b32.xlu0 %v3344, 48
  %v4859 = vpop.permute.xlu0 %4858
  %4860 = vrot.lane.b32.xlu0 %v3345, 48
  %v4861 = vpop.permute.xlu0 %4860
  %4862 = vrot.lane.b32.xlu0 %v3347, 48
  %v4863 = vpop.permute.xlu0 %4862
  %4864 = vrot.lane.b32.xlu0 %v3348, 48
  %v4865 = vpop.permute.xlu0 %4864
  %4866 = vrot.lane.b32.xlu0 %v3350, 48
  %v4867 = vpop.permute.xlu0 %4866
  %4868 = vrot.lane.b32.xlu0 %v3351, 48
  %v4869 = vpop.permute.xlu0 %4868
  %4870 = vrot.lane.b32.xlu0 %v3353, 48
  %v4871 = vpop.permute.xlu0 %4870
  %4872 = vrot.lane.b32.xlu0 %v3354, 48
  %v4873 = vpop.permute.xlu0 %4872
  %4874 = vrot.lane.b32.xlu0 %v3356, 48
  %v4875 = vpop.permute.xlu0 %4874
  %4876 = vrot.lane.b32.xlu0 %v3357, 48
  %v4877 = vpop.permute.xlu0 %4876
  %4878 = vrot.lane.b32.xlu0 %v3359, 48
  %v4879 = vpop.permute.xlu0 %4878
  %4880 = vrot.lane.b32.xlu0 %v3360, 48
  %v4881 = vpop.permute.xlu0 %4880
  %4882 = vrot.lane.b32.xlu0 %v3362, 48
  %v4883 = vpop.permute.xlu0 %4882
  %4884 = vrot.lane.b32.xlu0 %v3363, 48
  %v4885 = vpop.permute.xlu0 %4884
  %4886 = vrot.lane.b32.xlu0 %v3365, 48
  %v4887 = vpop.permute.xlu0 %4886
  %4888 = vrot.lane.b32.xlu0 %v3366, 48
  %v4889 = vpop.permute.xlu0 %4888
  %4890 = vrot.lane.b32.xlu0 %v3368, 48
  %v4891 = vpop.permute.xlu0 %4890
  %4892 = vrot.lane.b32.xlu0 %v3369, 48
  %v4893 = vpop.permute.xlu0 %4892
  %4894 = vrot.lane.b32.xlu0 %v3371, 48
  %v4895 = vpop.permute.xlu0 %4894
  %4896 = vrot.lane.b32.xlu0 %v3372, 48
  %v4897 = vpop.permute.xlu0 %4896
  %4898 = vrot.lane.b32.xlu0 %v3374, 48
  %v4899 = vpop.permute.xlu0 %4898
  %4900 = vrot.lane.b32.xlu0 %v3375, 48
  %v4901 = vpop.permute.xlu0 %4900
  %4902 = vrot.lane.b32.xlu0 %v3377, 48
  %v4903 = vpop.permute.xlu0 %4902
  %4904 = vrot.lane.b32.xlu0 %v3378, 48
  %v4905 = vpop.permute.xlu0 %4904
  %4906 = vrot.lane.b32.xlu0 %v3386, 48
  %v4907 = vpop.permute.xlu0 %4906
  %4908 = vrot.lane.b32.xlu0 %v3387, 48
  %v4909 = vpop.permute.xlu0 %4908
  %4910 = vrot.lane.b32.xlu0 %v3389, 48
  %v4911 = vpop.permute.xlu0 %4910
  %4912 = vrot.lane.b32.xlu0 %v3390, 48
  %v4913 = vpop.permute.xlu0 %4912
  %4914 = vrot.lane.b32.xlu0 %v3392, 48
  %v4915 = vpop.permute.xlu0 %4914
  %4916 = vrot.lane.b32.xlu0 %v3393, 48
  %v4917 = vpop.permute.xlu0 %4916
  %4918 = vrot.lane.b32.xlu0 %v3395, 48
  %v4919 = vpop.permute.xlu0 %4918
  %4920 = vrot.lane.b32.xlu0 %v3396, 48
  %v4921 = vpop.permute.xlu0 %4920
  %4922 = vrot.lane.b32.xlu0 %v3398, 48
  %v4923 = vpop.permute.xlu0 %4922
  %4924 = vrot.lane.b32.xlu0 %v3399, 48
  %v4925 = vpop.permute.xlu0 %4924
  %4926 = vrot.lane.b32.xlu0 %v3401, 48
  %v4927 = vpop.permute.xlu0 %4926
  %4928 = vrot.lane.b32.xlu0 %v3402, 48
  %v4929 = vpop.permute.xlu0 %4928
  %4930 = vrot.lane.b32.xlu0 %v3404, 48
  %v4931 = vpop.permute.xlu0 %4930
  %4932 = vrot.lane.b32.xlu0 %v3405, 48
  %v4933 = vpop.permute.xlu0 %4932
  %4934 = vrot.lane.b32.xlu0 %v3407, 48
  %v4935 = vpop.permute.xlu0 %4934
  %4936 = vrot.lane.b32.xlu0 %v3408, 48
  %v4937 = vpop.permute.xlu0 %4936
  %4938 = vrot.lane.b32.xlu0 %v3410, 48
  %v4939 = vpop.permute.xlu0 %4938
  %4940 = vrot.lane.b32.xlu0 %v3411, 48
  %v4941 = vpop.permute.xlu0 %4940
  %4942 = vrot.lane.b32.xlu0 %v3413, 48
  %v4943 = vpop.permute.xlu0 %4942
  %4944 = vrot.lane.b32.xlu0 %v3414, 48
  %v4945 = vpop.permute.xlu0 %4944
  %4946 = vrot.lane.b32.xlu0 %v3416, 48
  %v4947 = vpop.permute.xlu0 %4946
  %4948 = vrot.lane.b32.xlu0 %v3417, 48
  %v4949 = vpop.permute.xlu0 %4948
  %4950 = vrot.lane.b32.xlu0 %v3419, 48
  %v4951 = vpop.permute.xlu0 %4950
  %4952 = vrot.lane.b32.xlu0 %v3420, 48
  %v4953 = vpop.permute.xlu0 %4952
  %4954 = vrot.lane.b32.xlu0 %v3422, 48
  %v4955 = vpop.permute.xlu0 %4954
  %4956 = vrot.lane.b32.xlu0 %v3423, 48
  %v4957 = vpop.permute.xlu0 %4956
  %4958 = vrot.lane.b32.xlu0 %v3425, 48
  %v4959 = vpop.permute.xlu0 %4958
  %4960 = vrot.lane.b32.xlu0 %v3426, 48
  %v4961 = vpop.permute.xlu0 %4960
  %4962 = vrot.lane.b32.xlu0 %v3428, 48
  %v4963 = vpop.permute.xlu0 %4962
  %4964 = vrot.lane.b32.xlu0 %v3429, 48
  %v4965 = vpop.permute.xlu0 %4964
  %4966 = vrot.lane.b32.xlu0 %v3431, 48
  %v4967 = vpop.permute.xlu0 %4966
  %4968 = vrot.lane.b32.xlu0 %v3432, 48
  %v4969 = vpop.permute.xlu0 %4968
  %v5036 = vrot.slane %v3377, 1
  %v5037 = vrot.slane %v3378, 1
  %v5038 = vsel %vm3530, %v5036, %v5037
  %v5039 = vrot.slane %v3379, 1
  %v5040 = vsel %vm3530, %v5037, %v5039
  %v5041 = vrot.slane %v3431, 1
  %v5042 = vrot.slane %v3432, 1
  %v5043 = vsel %vm3530, %v5041, %v5042
  %v5044 = vrot.slane %v3433, 1
  %v5045 = vsel %vm3530, %v5042, %v5044
  %5046 = vrot.lane.b32.xlu0 %v3543, 56
  %v5047 = vpop.permute.xlu0 %5046
  %5048 = vrot.lane.b32.xlu0 %v3545, 56
  %v5049 = vpop.permute.xlu0 %5048
  %5050 = vrot.lane.b32.xlu0 %v3548, 56
  %v5051 = vpop.permute.xlu0 %5050
  %5052 = vrot.lane.b32.xlu0 %v3550, 56
  %v5053 = vpop.permute.xlu0 %5052
  %5054 = vrot.lane.b32.xlu0 %v3553, 56
  %v5055 = vpop.permute.xlu0 %5054
  %5056 = vrot.lane.b32.xlu0 %v3555, 56
  %v5057 = vpop.permute.xlu0 %5056
  %5058 = vrot.lane.b32.xlu0 %v3558, 56
  %v5059 = vpop.permute.xlu0 %5058
  %5060 = vrot.lane.b32.xlu0 %v3560, 56
  %v5061 = vpop.permute.xlu0 %5060
  %5062 = vrot.lane.b32.xlu0 %v3563, 56
  %v5063 = vpop.permute.xlu0 %5062
  %5064 = vrot.lane.b32.xlu0 %v3565, 56
  %v5065 = vpop.permute.xlu0 %5064
  %5066 = vrot.lane.b32.xlu0 %v3568, 56
  %v5067 = vpop.permute.xlu0 %5066
  %5068 = vrot.lane.b32.xlu0 %v3570, 56
  %v5069 = vpop.permute.xlu0 %5068
  %5070 = vrot.lane.b32.xlu0 %v3573, 56
  %v5071 = vpop.permute.xlu0 %5070
  %5072 = vrot.lane.b32.xlu0 %v3575, 56
  %v5073 = vpop.permute.xlu0 %5072
  %5074 = vrot.lane.b32.xlu0 %v3578, 56
  %v5075 = vpop.permute.xlu0 %5074
  %5076 = vrot.lane.b32.xlu0 %v3580, 56
  %v5077 = vpop.permute.xlu0 %5076
  %5078 = vrot.lane.b32.xlu0 %v3583, 56
  %v5079 = vpop.permute.xlu0 %5078
  %5080 = vrot.lane.b32.xlu0 %v3585, 56
  %v5081 = vpop.permute.xlu0 %5080
  %5082 = vrot.lane.b32.xlu0 %v3588, 56
  %v5083 = vpop.permute.xlu0 %5082
  %5084 = vrot.lane.b32.xlu0 %v3590, 56
  %v5085 = vpop.permute.xlu0 %5084
  %5086 = vrot.lane.b32.xlu0 %v3593, 56
  %v5087 = vpop.permute.xlu0 %5086
  %5088 = vrot.lane.b32.xlu0 %v3595, 56
  %v5089 = vpop.permute.xlu0 %5088
  %5090 = vrot.lane.b32.xlu0 %v3598, 56
  %v5091 = vpop.permute.xlu0 %5090
  %5092 = vrot.lane.b32.xlu0 %v3600, 56
  %v5093 = vpop.permute.xlu0 %5092
  %5094 = vrot.lane.b32.xlu0 %v3603, 56
  %v5095 = vpop.permute.xlu0 %5094
  %5096 = vrot.lane.b32.xlu0 %v3605, 56
  %v5097 = vpop.permute.xlu0 %5096
  %5098 = vrot.lane.b32.xlu0 %v3608, 56
  %v5099 = vpop.permute.xlu0 %5098
  %5100 = vrot.lane.b32.xlu0 %v3610, 56
  %v5101 = vpop.permute.xlu0 %5100
  %5102 = vrot.lane.b32.xlu0 %v4436, 56
  %v5103 = vpop.permute.xlu0 %5102
  %5104 = vrot.lane.b32.xlu0 %v4438, 56
  %v5105 = vpop.permute.xlu0 %5104
  %5106 = vrot.lane.b32.xlu0 %v5038, 56
  %v5107 = vpop.permute.xlu0 %5106
  %5108 = vrot.lane.b32.xlu0 %v5040, 56
  %v5109 = vpop.permute.xlu0 %5108
  %5110 = vrot.lane.b32.xlu0 %v3623, 56
  %v5111 = vpop.permute.xlu0 %5110
  %5112 = vrot.lane.b32.xlu0 %v3625, 56
  %v5113 = vpop.permute.xlu0 %5112
  %5114 = vrot.lane.b32.xlu0 %v3628, 56
  %v5115 = vpop.permute.xlu0 %5114
  %5116 = vrot.lane.b32.xlu0 %v3630, 56
  %v5117 = vpop.permute.xlu0 %5116
  %5118 = vrot.lane.b32.xlu0 %v3633, 56
  %v5119 = vpop.permute.xlu0 %5118
  %5120 = vrot.lane.b32.xlu0 %v3635, 56
  %v5121 = vpop.permute.xlu0 %5120
  %5122 = vrot.lane.b32.xlu0 %v3638, 56
  %v5123 = vpop.permute.xlu0 %5122
  %5124 = vrot.lane.b32.xlu0 %v3640, 56
  %v5125 = vpop.permute.xlu0 %5124
  %5126 = vrot.lane.b32.xlu0 %v3643, 56
  %v5127 = vpop.permute.xlu0 %5126
  %5128 = vrot.lane.b32.xlu0 %v3645, 56
  %v5129 = vpop.permute.xlu0 %5128
  %5130 = vrot.lane.b32.xlu0 %v3648, 56
  %v5131 = vpop.permute.xlu0 %5130
  %5132 = vrot.lane.b32.xlu0 %v3650, 56
  %v5133 = vpop.permute.xlu0 %5132
  %5134 = vrot.lane.b32.xlu0 %v3653, 56
  %v5135 = vpop.permute.xlu0 %5134
  %5136 = vrot.lane.b32.xlu0 %v3655, 56
  %v5137 = vpop.permute.xlu0 %5136
  %5138 = vrot.lane.b32.xlu0 %v3658, 56
  %v5139 = vpop.permute.xlu0 %5138
  %5140 = vrot.lane.b32.xlu0 %v3660, 56
  %v5141 = vpop.permute.xlu0 %5140
  %5142 = vrot.lane.b32.xlu0 %v3663, 56
  %v5143 = vpop.permute.xlu0 %5142
  %5144 = vrot.lane.b32.xlu0 %v3665, 56
  %v5145 = vpop.permute.xlu0 %5144
  %5146 = vrot.lane.b32.xlu0 %v3668, 56
  %v5147 = vpop.permute.xlu0 %5146
  %5148 = vrot.lane.b32.xlu0 %v3670, 56
  %v5149 = vpop.permute.xlu0 %5148
  %5150 = vrot.lane.b32.xlu0 %v3673, 56
  %v5151 = vpop.permute.xlu0 %5150
  %5152 = vrot.lane.b32.xlu0 %v3675, 56
  %v5153 = vpop.permute.xlu0 %5152
  %5154 = vrot.lane.b32.xlu0 %v3678, 56
  %v5155 = vpop.permute.xlu0 %5154
  %5156 = vrot.lane.b32.xlu0 %v3680, 56
  %v5157 = vpop.permute.xlu0 %5156
  %5158 = vrot.lane.b32.xlu0 %v3683, 56
  %v5159 = vpop.permute.xlu0 %5158
  %5160 = vrot.lane.b32.xlu0 %v3685, 56
  %v5161 = vpop.permute.xlu0 %5160
  %5162 = vrot.lane.b32.xlu0 %v3688, 56
  %v5163 = vpop.permute.xlu0 %5162
  %5164 = vrot.lane.b32.xlu0 %v3690, 56
  %v5165 = vpop.permute.xlu0 %5164
  %5166 = vrot.lane.b32.xlu0 %v4441, 56
  %v5167 = vpop.permute.xlu0 %5166
  %5168 = vrot.lane.b32.xlu0 %v4443, 56
  %v5169 = vpop.permute.xlu0 %5168
  %5170 = vrot.lane.b32.xlu0 %v5043, 56
  %v5171 = vpop.permute.xlu0 %5170
  %5172 = vrot.lane.b32.xlu0 %v5045, 56
  %v5173 = vpop.permute.xlu0 %5172
  %v5238 = vrot.slane %v3377, 2
  %v5239 = vrot.slane %v3378, 2
  %v5240 = vsel %vm3883, %v5238, %v5239
  %v5241 = vrot.slane %v3379, 2
  %v5242 = vsel %vm3883, %v5239, %v5241
  %v5243 = vrot.slane %v3431, 2
  %v5244 = vrot.slane %v3432, 2
  %v5245 = vsel %vm3883, %v5243, %v5244
  %v5246 = vrot.slane %v3433, 2
  %v5247 = vsel %vm3883, %v5244, %v5246
  %5248 = vrot.lane.b32.xlu0 %v3896, 64
  %v5249 = vpop.permute.xlu0 %5248
  %5250 = vrot.lane.b32.xlu0 %v3898, 64
  %v5251 = vpop.permute.xlu0 %5250
  %5252 = vrot.lane.b32.xlu0 %v3901, 64
  %v5253 = vpop.permute.xlu0 %5252
  %5254 = vrot.lane.b32.xlu0 %v3903, 64
  %v5255 = vpop.permute.xlu0 %5254
  %5256 = vrot.lane.b32.xlu0 %v3906, 64
  %v5257 = vpop.permute.xlu0 %5256
  %5258 = vrot.lane.b32.xlu0 %v3908, 64
  %v5259 = vpop.permute.xlu0 %5258
  %5260 = vrot.lane.b32.xlu0 %v3911, 64
  %v5261 = vpop.permute.xlu0 %5260
  %5262 = vrot.lane.b32.xlu0 %v3913, 64
  %v5263 = vpop.permute.xlu0 %5262
  %5264 = vrot.lane.b32.xlu0 %v3916, 64
  %v5265 = vpop.permute.xlu0 %5264
  %5266 = vrot.lane.b32.xlu0 %v3918, 64
  %v5267 = vpop.permute.xlu0 %5266
  %5268 = vrot.lane.b32.xlu0 %v3921, 64
  %v5269 = vpop.permute.xlu0 %5268
  %5270 = vrot.lane.b32.xlu0 %v3923, 64
  %v5271 = vpop.permute.xlu0 %5270
  %5272 = vrot.lane.b32.xlu0 %v3926, 64
  %v5273 = vpop.permute.xlu0 %5272
  %5274 = vrot.lane.b32.xlu0 %v3928, 64
  %v5275 = vpop.permute.xlu0 %5274
  %5276 = vrot.lane.b32.xlu0 %v3931, 64
  %v5277 = vpop.permute.xlu0 %5276
  %5278 = vrot.lane.b32.xlu0 %v3933, 64
  %v5279 = vpop.permute.xlu0 %5278
  %5280 = vrot.lane.b32.xlu0 %v3936, 64
  %v5281 = vpop.permute.xlu0 %5280
  %5282 = vrot.lane.b32.xlu0 %v3938, 64
  %v5283 = vpop.permute.xlu0 %5282
  %5284 = vrot.lane.b32.xlu0 %v3941, 64
  %v5285 = vpop.permute.xlu0 %5284
  %5286 = vrot.lane.b32.xlu0 %v3943, 64
  %v5287 = vpop.permute.xlu0 %5286
  %5288 = vrot.lane.b32.xlu0 %v3946, 64
  %v5289 = vpop.permute.xlu0 %5288
  %5290 = vrot.lane.b32.xlu0 %v3948, 64
  %v5291 = vpop.permute.xlu0 %5290
  %5292 = vrot.lane.b32.xlu0 %v3951, 64
  %v5293 = vpop.permute.xlu0 %5292
  %5294 = vrot.lane.b32.xlu0 %v3953, 64
  %v5295 = vpop.permute.xlu0 %5294
  %5296 = vrot.lane.b32.xlu0 %v3956, 64
  %v5297 = vpop.permute.xlu0 %5296
  %5298 = vrot.lane.b32.xlu0 %v3958, 64
  %v5299 = vpop.permute.xlu0 %5298
  %5300 = vrot.lane.b32.xlu0 %v3961, 64
  %v5301 = vpop.permute.xlu0 %5300
  %5302 = vrot.lane.b32.xlu0 %v3963, 64
  %v5303 = vpop.permute.xlu0 %5302
  %5304 = vrot.lane.b32.xlu0 %v4638, 64
  %v5305 = vpop.permute.xlu0 %5304
  %5306 = vrot.lane.b32.xlu0 %v4640, 64
  %v5307 = vpop.permute.xlu0 %5306
  %5308 = vrot.lane.b32.xlu0 %v5240, 64
  %v5309 = vpop.permute.xlu0 %5308
  %5310 = vrot.lane.b32.xlu0 %v5242, 64
  %v5311 = vpop.permute.xlu0 %5310
  %5312 = vrot.lane.b32.xlu0 %v3976, 64
  %v5313 = vpop.permute.xlu0 %5312
  %5314 = vrot.lane.b32.xlu0 %v3978, 64
  %v5315 = vpop.permute.xlu0 %5314
  %5316 = vrot.lane.b32.xlu0 %v3981, 64
  %v5317 = vpop.permute.xlu0 %5316
  %5318 = vrot.lane.b32.xlu0 %v3983, 64
  %v5319 = vpop.permute.xlu0 %5318
  %5320 = vrot.lane.b32.xlu0 %v3986, 64
  %v5321 = vpop.permute.xlu0 %5320
  %5322 = vrot.lane.b32.xlu0 %v3988, 64
  %v5323 = vpop.permute.xlu0 %5322
  %5324 = vrot.lane.b32.xlu0 %v3991, 64
  %v5325 = vpop.permute.xlu0 %5324
  %5326 = vrot.lane.b32.xlu0 %v3993, 64
  %v5327 = vpop.permute.xlu0 %5326
  %5328 = vrot.lane.b32.xlu0 %v3996, 64
  %v5329 = vpop.permute.xlu0 %5328
  %5330 = vrot.lane.b32.xlu0 %v3998, 64
  %v5331 = vpop.permute.xlu0 %5330
  %5332 = vrot.lane.b32.xlu0 %v4001, 64
  %v5333 = vpop.permute.xlu0 %5332
  %5334 = vrot.lane.b32.xlu0 %v4003, 64
  %v5335 = vpop.permute.xlu0 %5334
  %5336 = vrot.lane.b32.xlu0 %v4006, 64
  %v5337 = vpop.permute.xlu0 %5336
  %5338 = vrot.lane.b32.xlu0 %v4008, 64
  %v5339 = vpop.permute.xlu0 %5338
  %5340 = vrot.lane.b32.xlu0 %v4011, 64
  %v5341 = vpop.permute.xlu0 %5340
  %5342 = vrot.lane.b32.xlu0 %v4013, 64
  %v5343 = vpop.permute.xlu0 %5342
  %5344 = vrot.lane.b32.xlu0 %v4016, 64
  %v5345 = vpop.permute.xlu0 %5344
  %5346 = vrot.lane.b32.xlu0 %v4018, 64
  %v5347 = vpop.permute.xlu0 %5346
  %5348 = vrot.lane.b32.xlu0 %v4021, 64
  %v5349 = vpop.permute.xlu0 %5348
  %5350 = vrot.lane.b32.xlu0 %v4023, 64
  %v5351 = vpop.permute.xlu0 %5350
  %5352 = vrot.lane.b32.xlu0 %v4026, 64
  %v5353 = vpop.permute.xlu0 %5352
  %5354 = vrot.lane.b32.xlu0 %v4028, 64
  %v5355 = vpop.permute.xlu0 %5354
  %5356 = vrot.lane.b32.xlu0 %v4031, 64
  %v5357 = vpop.permute.xlu0 %5356
  %5358 = vrot.lane.b32.xlu0 %v4033, 64
  %v5359 = vpop.permute.xlu0 %5358
  %5360 = vrot.lane.b32.xlu0 %v4036, 64
  %v5361 = vpop.permute.xlu0 %5360
  %5362 = vrot.lane.b32.xlu0 %v4038, 64
  %v5363 = vpop.permute.xlu0 %5362
  %5364 = vrot.lane.b32.xlu0 %v4041, 64
  %v5365 = vpop.permute.xlu0 %5364
  %5366 = vrot.lane.b32.xlu0 %v4043, 64
  %v5367 = vpop.permute.xlu0 %5366
  %5368 = vrot.lane.b32.xlu0 %v4643, 64
  %v5369 = vpop.permute.xlu0 %5368
  %5370 = vrot.lane.b32.xlu0 %v4645, 64
  %v5371 = vpop.permute.xlu0 %5370
  %5372 = vrot.lane.b32.xlu0 %v5245, 64
  %v5373 = vpop.permute.xlu0 %5372
  %5374 = vrot.lane.b32.xlu0 %v5247, 64
  %v5375 = vpop.permute.xlu0 %5374
  %v5440 = vsel %vm100, %v3326, %v3692
  %v5441 = vsel %vm100, %v3327, %v3694
  %v5442 = vsel %vm100, %v3329, %v3696
  %v5443 = vsel %vm100, %v3330, %v3698
  %v5444 = vsel %vm100, %v3332, %v3700
  %v5445 = vsel %vm100, %v3333, %v3702
  %v5446 = vsel %vm100, %v3335, %v3704
  %v5447 = vsel %vm100, %v3336, %v3706
  %v5448 = vsel %vm100, %v3338, %v3708
  %v5449 = vsel %vm100, %v3339, %v3710
  %v5450 = vsel %vm100, %v3341, %v3712
  %v5451 = vsel %vm100, %v3342, %v3714
  %v5452 = vsel %vm100, %v3344, %v3716
  %v5453 = vsel %vm100, %v3345, %v3718
  %v5454 = vsel %vm100, %v3347, %v3720
  %v5455 = vsel %vm100, %v3348, %v3722
  %v5456 = vsel %vm100, %v3350, %v3724
  %v5457 = vsel %vm100, %v3351, %v3726
  %v5458 = vsel %vm100, %v3353, %v3728
  %v5459 = vsel %vm100, %v3354, %v3730
  %v5460 = vsel %vm100, %v3356, %v3732
  %v5461 = vsel %vm100, %v3357, %v3734
  %v5462 = vsel %vm100, %v3359, %v3736
  %v5463 = vsel %vm100, %v3360, %v3738
  %v5464 = vsel %vm100, %v3362, %v3740
  %v5465 = vsel %vm100, %v3363, %v3742
  %v5466 = vsel %vm100, %v3365, %v3744
  %v5467 = vsel %vm100, %v3366, %v3746
  %v5468 = vsel %vm100, %v3368, %v3748
  %v5469 = vsel %vm100, %v3369, %v3750
  %v5470 = vsel %vm100, %v3371, %v3752
  %v5471 = vsel %vm100, %v3372, %v3754
  %v5472 = vsel %vm100, %v3380, %v3756
  %v5473 = vsel %vm100, %v3381, %v3758
  %v5474 = vsel %vm100, %v3383, %v3760
  %v5475 = vsel %vm100, %v3384, %v3762
  %v5476 = vsel %vm100, %v3386, %v3764
  %v5477 = vsel %vm100, %v3387, %v3766
  %v5478 = vsel %vm100, %v3389, %v3768
  %v5479 = vsel %vm100, %v3390, %v3770
  %v5480 = vsel %vm100, %v3392, %v3772
  %v5481 = vsel %vm100, %v3393, %v3774
  %v5482 = vsel %vm100, %v3395, %v3776
  %v5483 = vsel %vm100, %v3396, %v3778
  %v5484 = vsel %vm100, %v3398, %v3780
  %v5485 = vsel %vm100, %v3399, %v3782
  %v5486 = vsel %vm100, %v3401, %v3784
  %v5487 = vsel %vm100, %v3402, %v3786
  %v5488 = vsel %vm100, %v3404, %v3788
  %v5489 = vsel %vm100, %v3405, %v3790
  %v5490 = vsel %vm100, %v3407, %v3792
  %v5491 = vsel %vm100, %v3408, %v3794
  %v5492 = vsel %vm100, %v3410, %v3796
  %v5493 = vsel %vm100, %v3411, %v3798
  %v5494 = vsel %vm100, %v3413, %v3800
  %v5495 = vsel %vm100, %v3414, %v3802
  %v5496 = vsel %vm100, %v3416, %v3804
  %v5497 = vsel %vm100, %v3417, %v3806
  %v5498 = vsel %vm100, %v3419, %v3808
  %v5499 = vsel %vm100, %v3420, %v3810
  %v5500 = vsel %vm100, %v3422, %v3812
  %v5501 = vsel %vm100, %v3423, %v3814
  %v5502 = vsel %vm100, %v3425, %v3816
  %v5503 = vsel %vm100, %v3426, %v3818
  %vm5504 = vcmask 130048
  %v5505 = vsel %vm5504, %v5440, %v4045
  %v5506 = vsel %vm5504, %v5441, %v4047
  %v5507 = vsel %vm5504, %v5442, %v4049
  %v5508 = vsel %vm5504, %v5443, %v4051
  %v5509 = vsel %vm5504, %v5444, %v4053
  %v5510 = vsel %vm5504, %v5445, %v4055
  %v5511 = vsel %vm5504, %v5446, %v4057
  %v5512 = vsel %vm5504, %v5447, %v4059
  %v5513 = vsel %vm5504, %v5448, %v4061
  %v5514 = vsel %vm5504, %v5449, %v4063
  %v5515 = vsel %vm5504, %v5450, %v4065
  %v5516 = vsel %vm5504, %v5451, %v4067
  %v5517 = vsel %vm5504, %v5452, %v4069
  %v5518 = vsel %vm5504, %v5453, %v4071
  %v5519 = vsel %vm5504, %v5454, %v4073
  %v5520 = vsel %vm5504, %v5455, %v4075
  %v5521 = vsel %vm5504, %v5456, %v4077
  %v5522 = vsel %vm5504, %v5457, %v4079
  %v5523 = vsel %vm5504, %v5458, %v4081
  %v5524 = vsel %vm5504, %v5459, %v4083
  %v5525 = vsel %vm5504, %v5460, %v4085
  %v5526 = vsel %vm5504, %v5461, %v4087
  %v5527 = vsel %vm5504, %v5462, %v4089
  %v5528 = vsel %vm5504, %v5463, %v4091
  %v5529 = vsel %vm5504, %v5464, %v4093
  %v5530 = vsel %vm5504, %v5465, %v4095
  %v5531 = vsel %vm5504, %v5466, %v4097
  %v5532 = vsel %vm5504, %v5467, %v4099
  %v5533 = vsel %vm5504, %v5468, %v4101
  %v5534 = vsel %vm5504, %v5469, %v4103
  %v5535 = vsel %vm5504, %v5470, %v4105
  %v5536 = vsel %vm5504, %v5471, %v4107
  %v5537 = vsel %vm5504, %v5472, %v4109
  %v5538 = vsel %vm5504, %v5473, %v4111
  %v5539 = vsel %vm5504, %v5474, %v4113
  %v5540 = vsel %vm5504, %v5475, %v4115
  %v5541 = vsel %vm5504, %v5476, %v4117
  %v5542 = vsel %vm5504, %v5477, %v4119
  %v5543 = vsel %vm5504, %v5478, %v4121
  %v5544 = vsel %vm5504, %v5479, %v4123
  %v5545 = vsel %vm5504, %v5480, %v4125
  %v5546 = vsel %vm5504, %v5481, %v4127
  %v5547 = vsel %vm5504, %v5482, %v4129
  %v5548 = vsel %vm5504, %v5483, %v4131
  %v5549 = vsel %vm5504, %v5484, %v4133
  %v5550 = vsel %vm5504, %v5485, %v4135
  %v5551 = vsel %vm5504, %v5486, %v4137
  %v5552 = vsel %vm5504, %v5487, %v4139
  %v5553 = vsel %vm5504, %v5488, %v4141
  %v5554 = vsel %vm5504, %v5489, %v4143
  %v5555 = vsel %vm5504, %v5490, %v4145
  %v5556 = vsel %vm5504, %v5491, %v4147
  %v5557 = vsel %vm5504, %v5492, %v4149
  %v5558 = vsel %vm5504, %v5493, %v4151
  %v5559 = vsel %vm5504, %v5494, %v4153
  %v5560 = vsel %vm5504, %v5495, %v4155
  %v5561 = vsel %vm5504, %v5496, %v4157
  %v5562 = vsel %vm5504, %v5497, %v4159
  %v5563 = vsel %vm5504, %v5498, %v4161
  %v5564 = vsel %vm5504, %v5499, %v4163
  %v5565 = vsel %vm5504, %v5500, %v4165
  %v5566 = vsel %vm5504, %v5501, %v4167
  %v5567 = vsel %vm5504, %v5502, %v4169
  %v5568 = vsel %vm5504, %v5503, %v4171
  %vm5569 = vcmask 195584
  %v5570 = vsel %vm5569, %v5505, %v4241
  %v5571 = vsel %vm5569, %v5506, %v4243
  %v5572 = vsel %vm5569, %v5507, %v4245
  %v5573 = vsel %vm5569, %v5508, %v4247
  %v5574 = vsel %vm5569, %v5509, %v4249
  %v5575 = vsel %vm5569, %v5510, %v4251
  %v5576 = vsel %vm5569, %v5511, %v4253
  %v5577 = vsel %vm5569, %v5512, %v4255
  %v5578 = vsel %vm5569, %v5513, %v4257
  %v5579 = vsel %vm5569, %v5514, %v4259
  %v5580 = vsel %vm5569, %v5515, %v4261
  %v5581 = vsel %vm5569, %v5516, %v4263
  %v5582 = vsel %vm5569, %v5517, %v4265
  %v5583 = vsel %vm5569, %v5518, %v4267
  %v5584 = vsel %vm5569, %v5519, %v4269
  %v5585 = vsel %vm5569, %v5520, %v4271
  %v5586 = vsel %vm5569, %v5521, %v4273
  %v5587 = vsel %vm5569, %v5522, %v4275
  %v5588 = vsel %vm5569, %v5523, %v4277
  %v5589 = vsel %vm5569, %v5524, %v4279
  %v5590 = vsel %vm5569, %v5525, %v4281
  %v5591 = vsel %vm5569, %v5526, %v4283
  %v5592 = vsel %vm5569, %v5527, %v4285
  %v5593 = vsel %vm5569, %v5528, %v4287
  %v5594 = vsel %vm5569, %v5529, %v4289
  %v5595 = vsel %vm5569, %v5530, %v4291
  %v5596 = vsel %vm5569, %v5531, %v4293
  %v5597 = vsel %vm5569, %v5532, %v4295
  %v5598 = vsel %vm5569, %v5533, %v4297
  %v5599 = vsel %vm5569, %v5534, %v4299
  %v5600 = vsel %vm5569, %v5535, %v4301
  %v5601 = vsel %vm5569, %v5536, %v4303
  %v5602 = vsel %vm5569, %v5537, %v4305
  %v5603 = vsel %vm5569, %v5538, %v4307
  %v5604 = vsel %vm5569, %v5539, %v4309
  %v5605 = vsel %vm5569, %v5540, %v4311
  %v5606 = vsel %vm5569, %v5541, %v4313
  %v5607 = vsel %vm5569, %v5542, %v4315
  %v5608 = vsel %vm5569, %v5543, %v4317
  %v5609 = vsel %vm5569, %v5544, %v4319
  %v5610 = vsel %vm5569, %v5545, %v4321
  %v5611 = vsel %vm5569, %v5546, %v4323
  %v5612 = vsel %vm5569, %v5547, %v4325
  %v5613 = vsel %vm5569, %v5548, %v4327
  %v5614 = vsel %vm5569, %v5549, %v4329
  %v5615 = vsel %vm5569, %v5550, %v4331
  %v5616 = vsel %vm5569, %v5551, %v4333
  %v5617 = vsel %vm5569, %v5552, %v4335
  %v5618 = vsel %vm5569, %v5553, %v4337
  %v5619 = vsel %vm5569, %v5554, %v4339
  %v5620 = vsel %vm5569, %v5555, %v4341
  %v5621 = vsel %vm5569, %v5556, %v4343
  %v5622 = vsel %vm5569, %v5557, %v4345
  %v5623 = vsel %vm5569, %v5558, %v4347
  %v5624 = vsel %vm5569, %v5559, %v4349
  %v5625 = vsel %vm5569, %v5560, %v4351
  %v5626 = vsel %vm5569, %v5561, %v4353
  %v5627 = vsel %vm5569, %v5562, %v4355
  %v5628 = vsel %vm5569, %v5563, %v4357
  %v5629 = vsel %vm5569, %v5564, %v4359
  %v5630 = vsel %vm5569, %v5565, %v4361
  %v5631 = vsel %vm5569, %v5566, %v4363
  %v5632 = vsel %vm5569, %v5567, %v4365
  %v5633 = vsel %vm5569, %v5568, %v4367
  %vm5634 = vcmask 261120
  %v5635 = vsel %vm5634, %v5570, %v4445
  %v5636 = vsel %vm5634, %v5571, %v4447
  %v5637 = vsel %vm5634, %v5572, %v4449
  %v5638 = vsel %vm5634, %v5573, %v4451
  %v5639 = vsel %vm5634, %v5574, %v4453
  %v5640 = vsel %vm5634, %v5575, %v4455
  %v5641 = vsel %vm5634, %v5576, %v4457
  %v5642 = vsel %vm5634, %v5577, %v4459
  %v5643 = vsel %vm5634, %v5578, %v4461
  %v5644 = vsel %vm5634, %v5579, %v4463
  %v5645 = vsel %vm5634, %v5580, %v4465
  %v5646 = vsel %vm5634, %v5581, %v4467
  %v5647 = vsel %vm5634, %v5582, %v4469
  %v5648 = vsel %vm5634, %v5583, %v4471
  %v5649 = vsel %vm5634, %v5584, %v4473
  %v5650 = vsel %vm5634, %v5585, %v4475
  %v5651 = vsel %vm5634, %v5586, %v4477
  %v5652 = vsel %vm5634, %v5587, %v4479
  %v5653 = vsel %vm5634, %v5588, %v4481
  %v5654 = vsel %vm5634, %v5589, %v4483
  %v5655 = vsel %vm5634, %v5590, %v4485
  %v5656 = vsel %vm5634, %v5591, %v4487
  %v5657 = vsel %vm5634, %v5592, %v4489
  %v5658 = vsel %vm5634, %v5593, %v4491
  %v5659 = vsel %vm5634, %v5594, %v4493
  %v5660 = vsel %vm5634, %v5595, %v4495
  %v5661 = vsel %vm5634, %v5596, %v4497
  %v5662 = vsel %vm5634, %v5597, %v4499
  %v5663 = vsel %vm5634, %v5598, %v4501
  %v5664 = vsel %vm5634, %v5599, %v4503
  %v5665 = vsel %vm5634, %v5600, %v4505
  %v5666 = vsel %vm5634, %v5601, %v4507
  %v5667 = vsel %vm5634, %v5602, %v4509
  %v5668 = vsel %vm5634, %v5603, %v4511
  %v5669 = vsel %vm5634, %v5604, %v4513
  %v5670 = vsel %vm5634, %v5605, %v4515
  %v5671 = vsel %vm5634, %v5606, %v4517
  %v5672 = vsel %vm5634, %v5607, %v4519
  %v5673 = vsel %vm5634, %v5608, %v4521
  %v5674 = vsel %vm5634, %v5609, %v4523
  %v5675 = vsel %vm5634, %v5610, %v4525
  %v5676 = vsel %vm5634, %v5611, %v4527
  %v5677 = vsel %vm5634, %v5612, %v4529
  %v5678 = vsel %vm5634, %v5613, %v4531
  %v5679 = vsel %vm5634, %v5614, %v4533
  %v5680 = vsel %vm5634, %v5615, %v4535
  %v5681 = vsel %vm5634, %v5616, %v4537
  %v5682 = vsel %vm5634, %v5617, %v4539
  %v5683 = vsel %vm5634, %v5618, %v4541
  %v5684 = vsel %vm5634, %v5619, %v4543
  %v5685 = vsel %vm5634, %v5620, %v4545
  %v5686 = vsel %vm5634, %v5621, %v4547
  %v5687 = vsel %vm5634, %v5622, %v4549
  %v5688 = vsel %vm5634, %v5623, %v4551
  %v5689 = vsel %vm5634, %v5624, %v4553
  %v5690 = vsel %vm5634, %v5625, %v4555
  %v5691 = vsel %vm5634, %v5626, %v4557
  %v5692 = vsel %vm5634, %v5627, %v4559
  %v5693 = vsel %vm5634, %v5628, %v4561
  %v5694 = vsel %vm5634, %v5629, %v4563
  %v5695 = vsel %vm5634, %v5630, %v4565
  %v5696 = vsel %vm5634, %v5631, %v4567
  %v5697 = vsel %vm5634, %v5632, %v4569
  %v5698 = vsel %vm5634, %v5633, %v4571
  %vm5699 = vcmask 326656
  %v5700 = vsel %vm5699, %v5635, %v4647
  %v5701 = vsel %vm5699, %v5636, %v4649
  %v5702 = vsel %vm5699, %v5637, %v4651
  %v5703 = vsel %vm5699, %v5638, %v4653
  %v5704 = vsel %vm5699, %v5639, %v4655
  %v5705 = vsel %vm5699, %v5640, %v4657
  %v5706 = vsel %vm5699, %v5641, %v4659
  %v5707 = vsel %vm5699, %v5642, %v4661
  %v5708 = vsel %vm5699, %v5643, %v4663
  %v5709 = vsel %vm5699, %v5644, %v4665
  %v5710 = vsel %vm5699, %v5645, %v4667
  %v5711 = vsel %vm5699, %v5646, %v4669
  %v5712 = vsel %vm5699, %v5647, %v4671
  %v5713 = vsel %vm5699, %v5648, %v4673
  %v5714 = vsel %vm5699, %v5649, %v4675
  %v5715 = vsel %vm5699, %v5650, %v4677
  %v5716 = vsel %vm5699, %v5651, %v4679
  %v5717 = vsel %vm5699, %v5652, %v4681
  %v5718 = vsel %vm5699, %v5653, %v4683
  %v5719 = vsel %vm5699, %v5654, %v4685
  %v5720 = vsel %vm5699, %v5655, %v4687
  %v5721 = vsel %vm5699, %v5656, %v4689
  %v5722 = vsel %vm5699, %v5657, %v4691
  %v5723 = vsel %vm5699, %v5658, %v4693
  %v5724 = vsel %vm5699, %v5659, %v4695
  %v5725 = vsel %vm5699, %v5660, %v4697
  %v5726 = vsel %vm5699, %v5661, %v4699
  %v5727 = vsel %vm5699, %v5662, %v4701
  %v5728 = vsel %vm5699, %v5663, %v4703
  %v5729 = vsel %vm5699, %v5664, %v4705
  %v5730 = vsel %vm5699, %v5665, %v4707
  %v5731 = vsel %vm5699, %v5666, %v4709
  %v5732 = vsel %vm5699, %v5667, %v4711
  %v5733 = vsel %vm5699, %v5668, %v4713
  %v5734 = vsel %vm5699, %v5669, %v4715
  %v5735 = vsel %vm5699, %v5670, %v4717
  %v5736 = vsel %vm5699, %v5671, %v4719
  %v5737 = vsel %vm5699, %v5672, %v4721
  %v5738 = vsel %vm5699, %v5673, %v4723
  %v5739 = vsel %vm5699, %v5674, %v4725
  %v5740 = vsel %vm5699, %v5675, %v4727
  %v5741 = vsel %vm5699, %v5676, %v4729
  %v5742 = vsel %vm5699, %v5677, %v4731
  %v5743 = vsel %vm5699, %v5678, %v4733
  %v5744 = vsel %vm5699, %v5679, %v4735
  %v5745 = vsel %vm5699, %v5680, %v4737
  %v5746 = vsel %vm5699, %v5681, %v4739
  %v5747 = vsel %vm5699, %v5682, %v4741
  %v5748 = vsel %vm5699, %v5683, %v4743
  %v5749 = vsel %vm5699, %v5684, %v4745
  %v5750 = vsel %vm5699, %v5685, %v4747
  %v5751 = vsel %vm5699, %v5686, %v4749
  %v5752 = vsel %vm5699, %v5687, %v4751
  %v5753 = vsel %vm5699, %v5688, %v4753
  %v5754 = vsel %vm5699, %v5689, %v4755
  %v5755 = vsel %vm5699, %v5690, %v4757
  %v5756 = vsel %vm5699, %v5691, %v4759
  %v5757 = vsel %vm5699, %v5692, %v4761
  %v5758 = vsel %vm5699, %v5693, %v4763
  %v5759 = vsel %vm5699, %v5694, %v4765
  %v5760 = vsel %vm5699, %v5695, %v4767
  %v5761 = vsel %vm5699, %v5696, %v4769
  %v5762 = vsel %vm5699, %v5697, %v4771
  %v5763 = vsel %vm5699, %v5698, %v4773
  %vm5764 = vcmask 392192
  %v5765 = vsel %vm5764, %v5700, %v4843
  %v5766 = vsel %vm5764, %v5701, %v4845
  %v5767 = vsel %vm5764, %v5702, %v4847
  %v5768 = vsel %vm5764, %v5703, %v4849
  %v5769 = vsel %vm5764, %v5704, %v4851
  %v5770 = vsel %vm5764, %v5705, %v4853
  %v5771 = vsel %vm5764, %v5706, %v4855
  %v5772 = vsel %vm5764, %v5707, %v4857
  %v5773 = vsel %vm5764, %v5708, %v4859
  %v5774 = vsel %vm5764, %v5709, %v4861
  %v5775 = vsel %vm5764, %v5710, %v4863
  %v5776 = vsel %vm5764, %v5711, %v4865
  %v5777 = vsel %vm5764, %v5712, %v4867
  %v5778 = vsel %vm5764, %v5713, %v4869
  %v5779 = vsel %vm5764, %v5714, %v4871
  %v5780 = vsel %vm5764, %v5715, %v4873
  %v5781 = vsel %vm5764, %v5716, %v4875
  %v5782 = vsel %vm5764, %v5717, %v4877
  %v5783 = vsel %vm5764, %v5718, %v4879
  %v5784 = vsel %vm5764, %v5719, %v4881
  %v5785 = vsel %vm5764, %v5720, %v4883
  %v5786 = vsel %vm5764, %v5721, %v4885
  %v5787 = vsel %vm5764, %v5722, %v4887
  %v5788 = vsel %vm5764, %v5723, %v4889
  %v5789 = vsel %vm5764, %v5724, %v4891
  %v5790 = vsel %vm5764, %v5725, %v4893
  %v5791 = vsel %vm5764, %v5726, %v4895
  %v5792 = vsel %vm5764, %v5727, %v4897
  %v5793 = vsel %vm5764, %v5728, %v4899
  %v5794 = vsel %vm5764, %v5729, %v4901
  %v5795 = vsel %vm5764, %v5730, %v4903
  %v5796 = vsel %vm5764, %v5731, %v4905
  %v5797 = vsel %vm5764, %v5732, %v4907
  %v5798 = vsel %vm5764, %v5733, %v4909
  %v5799 = vsel %vm5764, %v5734, %v4911
  %v5800 = vsel %vm5764, %v5735, %v4913
  %v5801 = vsel %vm5764, %v5736, %v4915
  %v5802 = vsel %vm5764, %v5737, %v4917
  %v5803 = vsel %vm5764, %v5738, %v4919
  %v5804 = vsel %vm5764, %v5739, %v4921
  %v5805 = vsel %vm5764, %v5740, %v4923
  %v5806 = vsel %vm5764, %v5741, %v4925
  %v5807 = vsel %vm5764, %v5742, %v4927
  %v5808 = vsel %vm5764, %v5743, %v4929
  %v5809 = vsel %vm5764, %v5744, %v4931
  %v5810 = vsel %vm5764, %v5745, %v4933
  %v5811 = vsel %vm5764, %v5746, %v4935
  %v5812 = vsel %vm5764, %v5747, %v4937
  %v5813 = vsel %vm5764, %v5748, %v4939
  %v5814 = vsel %vm5764, %v5749, %v4941
  %v5815 = vsel %vm5764, %v5750, %v4943
  %v5816 = vsel %vm5764, %v5751, %v4945
  %v5817 = vsel %vm5764, %v5752, %v4947
  %v5818 = vsel %vm5764, %v5753, %v4949
  %v5819 = vsel %vm5764, %v5754, %v4951
  %v5820 = vsel %vm5764, %v5755, %v4953
  %v5821 = vsel %vm5764, %v5756, %v4955
  %v5822 = vsel %vm5764, %v5757, %v4957
  %v5823 = vsel %vm5764, %v5758, %v4959
  %v5824 = vsel %vm5764, %v5759, %v4961
  %v5825 = vsel %vm5764, %v5760, %v4963
  %v5826 = vsel %vm5764, %v5761, %v4965
  %v5827 = vsel %vm5764, %v5762, %v4967
  %v5828 = vsel %vm5764, %v5763, %v4969
  %vm5829 = vcmask 457728
  %v5830 = vsel %vm5829, %v5765, %v5047
  %v5831 = vsel %vm5829, %v5766, %v5049
  %v5832 = vsel %vm5829, %v5767, %v5051
  %v5833 = vsel %vm5829, %v5768, %v5053
  %v5834 = vsel %vm5829, %v5769, %v5055
  %v5835 = vsel %vm5829, %v5770, %v5057
  %v5836 = vsel %vm5829, %v5771, %v5059
  %v5837 = vsel %vm5829, %v5772, %v5061
  %v5838 = vsel %vm5829, %v5773, %v5063
  %v5839 = vsel %vm5829, %v5774, %v5065
  %v5840 = vsel %vm5829, %v5775, %v5067
  %v5841 = vsel %vm5829, %v5776, %v5069
  %v5842 = vsel %vm5829, %v5777, %v5071
  %v5843 = vsel %vm5829, %v5778, %v5073
  %v5844 = vsel %vm5829, %v5779, %v5075
  %v5845 = vsel %vm5829, %v5780, %v5077
  %v5846 = vsel %vm5829, %v5781, %v5079
  %v5847 = vsel %vm5829, %v5782, %v5081
  %v5848 = vsel %vm5829, %v5783, %v5083
  %v5849 = vsel %vm5829, %v5784, %v5085
  %v5850 = vsel %vm5829, %v5785, %v5087
  %v5851 = vsel %vm5829, %v5786, %v5089
  %v5852 = vsel %vm5829, %v5787, %v5091
  %v5853 = vsel %vm5829, %v5788, %v5093
  %v5854 = vsel %vm5829, %v5789, %v5095
  %v5855 = vsel %vm5829, %v5790, %v5097
  %v5856 = vsel %vm5829, %v5791, %v5099
  %v5857 = vsel %vm5829, %v5792, %v5101
  %v5858 = vsel %vm5829, %v5793, %v5103
  %v5859 = vsel %vm5829, %v5794, %v5105
  %v5860 = vsel %vm5829, %v5795, %v5107
  %v5861 = vsel %vm5829, %v5796, %v5109
  %v5862 = vsel %vm5829, %v5797, %v5111
  %v5863 = vsel %vm5829, %v5798, %v5113
  %v5864 = vsel %vm5829, %v5799, %v5115
  %v5865 = vsel %vm5829, %v5800, %v5117
  %v5866 = vsel %vm5829, %v5801, %v5119
  %v5867 = vsel %vm5829, %v5802, %v5121
  %v5868 = vsel %vm5829, %v5803, %v5123
  %v5869 = vsel %vm5829, %v5804, %v5125
  %v5870 = vsel %vm5829, %v5805, %v5127
  %v5871 = vsel %vm5829, %v5806, %v5129
  %v5872 = vsel %vm5829, %v5807, %v5131
  %v5873 = vsel %vm5829, %v5808, %v5133
  %v5874 = vsel %vm5829, %v5809, %v5135
  %v5875 = vsel %vm5829, %v5810, %v5137
  %v5876 = vsel %vm5829, %v5811, %v5139
  %v5877 = vsel %vm5829, %v5812, %v5141
  %v5878 = vsel %vm5829, %v5813, %v5143
  %v5879 = vsel %vm5829, %v5814, %v5145
  %v5880 = vsel %vm5829, %v5815, %v5147
  %v5881 = vsel %vm5829, %v5816, %v5149
  %v5882 = vsel %vm5829, %v5817, %v5151
  %v5883 = vsel %vm5829, %v5818, %v5153
  %v5884 = vsel %vm5829, %v5819, %v5155
  %v5885 = vsel %vm5829, %v5820, %v5157
  %v5886 = vsel %vm5829, %v5821, %v5159
  %v5887 = vsel %vm5829, %v5822, %v5161
  %v5888 = vsel %vm5829, %v5823, %v5163
  %v5889 = vsel %vm5829, %v5824, %v5165
  %v5890 = vsel %vm5829, %v5825, %v5167
  %v5891 = vsel %vm5829, %v5826, %v5169
  %v5892 = vsel %vm5829, %v5827, %v5171
  %v5893 = vsel %vm5829, %v5828, %v5173
  %vm5894 = vcmask 523264
  %v5895 = vsel %vm5894, %v5830, %v5249
  %v5896 = vsel %vm5894, %v5831, %v5251
  %v5897 = vsel %vm5894, %v5832, %v5253
  %v5898 = vsel %vm5894, %v5833, %v5255
  %v5899 = vsel %vm5894, %v5834, %v5257
  %v5900 = vsel %vm5894, %v5835, %v5259
  %v5901 = vsel %vm5894, %v5836, %v5261
  %v5902 = vsel %vm5894, %v5837, %v5263
  %v5903 = vsel %vm5894, %v5838, %v5265
  %v5904 = vsel %vm5894, %v5839, %v5267
  %v5905 = vsel %vm5894, %v5840, %v5269
  %v5906 = vsel %vm5894, %v5841, %v5271
  %v5907 = vsel %vm5894, %v5842, %v5273
  %v5908 = vsel %vm5894, %v5843, %v5275
  %v5909 = vsel %vm5894, %v5844, %v5277
  %v5910 = vsel %vm5894, %v5845, %v5279
  %v5911 = vsel %vm5894, %v5846, %v5281
  %v5912 = vsel %vm5894, %v5847, %v5283
  %v5913 = vsel %vm5894, %v5848, %v5285
  %v5914 = vsel %vm5894, %v5849, %v5287
  %v5915 = vsel %vm5894, %v5850, %v5289
  %v5916 = vsel %vm5894, %v5851, %v5291
  %v5917 = vsel %vm5894, %v5852, %v5293
  %v5918 = vsel %vm5894, %v5853, %v5295
  %v5919 = vsel %vm5894, %v5854, %v5297
  %v5920 = vsel %vm5894, %v5855, %v5299
  %v5921 = vsel %vm5894, %v5856, %v5301
  %v5922 = vsel %vm5894, %v5857, %v5303
  %v5923 = vsel %vm5894, %v5858, %v5305
  %v5924 = vsel %vm5894, %v5859, %v5307
  %v5925 = vsel %vm5894, %v5860, %v5309
  %v5926 = vsel %vm5894, %v5861, %v5311
  %v5927 = vsel %vm5894, %v5862, %v5313
  %v5928 = vsel %vm5894, %v5863, %v5315
  %v5929 = vsel %vm5894, %v5864, %v5317
  %v5930 = vsel %vm5894, %v5865, %v5319
  %v5931 = vsel %vm5894, %v5866, %v5321
  %v5932 = vsel %vm5894, %v5867, %v5323
  %v5933 = vsel %vm5894, %v5868, %v5325
  %v5934 = vsel %vm5894, %v5869, %v5327
  %v5935 = vsel %vm5894, %v5870, %v5329
  %v5936 = vsel %vm5894, %v5871, %v5331
  %v5937 = vsel %vm5894, %v5872, %v5333
  %v5938 = vsel %vm5894, %v5873, %v5335
  %v5939 = vsel %vm5894, %v5874, %v5337
  %v5940 = vsel %vm5894, %v5875, %v5339
  %v5941 = vsel %vm5894, %v5876, %v5341
  %v5942 = vsel %vm5894, %v5877, %v5343
  %v5943 = vsel %vm5894, %v5878, %v5345
  %v5944 = vsel %vm5894, %v5879, %v5347
  %v5945 = vsel %vm5894, %v5880, %v5349
  %v5946 = vsel %vm5894, %v5881, %v5351
  %v5947 = vsel %vm5894, %v5882, %v5353
  %v5948 = vsel %vm5894, %v5883, %v5355
  %v5949 = vsel %vm5894, %v5884, %v5357
  %v5950 = vsel %vm5894, %v5885, %v5359
  %v5951 = vsel %vm5894, %v5886, %v5361
  %v5952 = vsel %vm5894, %v5887, %v5363
  %v5953 = vsel %vm5894, %v5888, %v5365
  %v5954 = vsel %vm5894, %v5889, %v5367
  %v5955 = vsel %vm5894, %v5890, %v5369
  %v5956 = vsel %vm5894, %v5891, %v5371
  %v5957 = vsel %vm5894, %v5892, %v5373
  %v5958 = vsel %vm5894, %v5893, %v5375
  %v5959 = vpack.c.bf16 %v5896, %v5895
  %v5960 = vpack.c.bf16 %v5898, %v5897
  %v5961 = vpack.c.bf16 %v5900, %v5899
  %v5962 = vpack.c.bf16 %v5902, %v5901
  %v5963 = vpack.c.bf16 %v5904, %v5903
  %v5964 = vpack.c.bf16 %v5906, %v5905
  %v5965 = vpack.c.bf16 %v5908, %v5907
  %v5966 = vpack.c.bf16 %v5910, %v5909
  %v5967 = vpack.c.bf16 %v5912, %v5911
  %v5968 = vpack.c.bf16 %v5914, %v5913
  %v5969 = vpack.c.bf16 %v5916, %v5915
  %v5970 = vpack.c.bf16 %v5918, %v5917
  %v5971 = vpack.c.bf16 %v5920, %v5919
  %v5972 = vpack.c.bf16 %v5922, %v5921
  %v5973 = vpack.c.bf16 %v5924, %v5923
  %v5974 = vpack.c.bf16 %v5926, %v5925
  %v5975 = vpack.c.bf16 %v5928, %v5927
  %v5976 = vpack.c.bf16 %v5930, %v5929
  %v5977 = vpack.c.bf16 %v5932, %v5931
  %v5978 = vpack.c.bf16 %v5934, %v5933
  %v5979 = vpack.c.bf16 %v5936, %v5935
  %v5980 = vpack.c.bf16 %v5938, %v5937
  %v5981 = vpack.c.bf16 %v5940, %v5939
  %v5982 = vpack.c.bf16 %v5942, %v5941
  %v5983 = vpack.c.bf16 %v5944, %v5943
  %v5984 = vpack.c.bf16 %v5946, %v5945
  %v5985 = vpack.c.bf16 %v5948, %v5947
  %v5986 = vpack.c.bf16 %v5950, %v5949
  %v5987 = vpack.c.bf16 %v5952, %v5951
  %v5988 = vpack.c.bf16 %v5954, %v5953
  %v5989 = vpack.c.bf16 %v5956, %v5955
  %v5990 = vpack.c.bf16 %v5958, %v5957
  %v5991 = vld [vmem:[%s4] sm:$0xf]
  %v5992 = vld [vmem:[%s4 + $0x4] sm:$0xf]
  %v5993 = vld [vmem:[%s4 + $0x8] sm:$0xf]
  %v5994 = vld [vmem:[%s4 + $0xc] sm:$0xf]
  %v5995 = vld [vmem:[%s4 + $0x10] sm:$0xf]
  %v5996 = vld [vmem:[%s4 + $0x14] sm:$0xf]
  %v5997 = vld [vmem:[%s4 + $0x18] sm:$0xf]
  %v5998 = vld [vmem:[%s4 + $0x1c] sm:$0xf]
  %v5999 = vld [vmem:[%s4 + $0x20] sm:$0xf]
  %v6009 = vunpack.c.l.b16 %v5991
  %v6010 = vunpack.c.l.b16 %v5992
  %v6011 = vunpack.c.l.b16 %v5993
  %v6012 = vunpack.c.l.b16 %v5994
  %v6013 = vunpack.c.l.b16 %v5995
  %v6014 = vunpack.c.l.b16 %v5996
  %v6015 = vunpack.c.l.b16 %v5997
  %v6016 = vunpack.c.l.b16 %v5998
  %v6017 = vunpack.c.l.b16 %v5999
  %v6018 = vpack.c.b16 %v6010, %v6009
  %v6019 = vpack.c.b16 %v6012, %v6011
  %v6020 = vpack.c.b16 %v6014, %v6013
  %v6021 = vpack.c.b16 %v6016, %v6015
  %v6022 = vpack.c.b16 %v6017, %v6017
  %vm6027 = vcmask 588800
  %v6029 = vsel %vm6027, %v5959, 0
  %v6032 = vsel %vm6027, %v5960, 0
  %v6035 = vsel %vm6027, %v5961, 0
  %v6038 = vsel %vm6027, %v5962, 0
  %v6041 = vsel %vm6027, %v5963, 0
  %v6044 = vsel %vm6027, %v5964, 0
  %v6047 = vsel %vm6027, %v5965, 0
  %v6050 = vsel %vm6027, %v5966, 0
  %v6053 = vsel %vm6027, %v5967, 0
  %v6056 = vsel %vm6027, %v5968, 0
  %v6059 = vsel %vm6027, %v5969, 0
  %v6062 = vsel %vm6027, %v5970, 0
  %v6065 = vsel %vm6027, %v5971, 0
  %v6068 = vsel %vm6027, %v5972, 0
  %v6071 = vsel %vm6027, %v5973, 0
  %v6074 = vsel %vm6027, %v5974, 0
  %v6077 = vsel %vm6027, %v5975, 0
  %v6080 = vsel %vm6027, %v5976, 0
  %v6083 = vsel %vm6027, %v5977, 0
  %v6086 = vsel %vm6027, %v5978, 0
  %v6089 = vsel %vm6027, %v5979, 0
  %v6092 = vsel %vm6027, %v5980, 0
  %v6095 = vsel %vm6027, %v5981, 0
  %v6098 = vsel %vm6027, %v5982, 0
  %v6101 = vsel %vm6027, %v5983, 0
  %v6104 = vsel %vm6027, %v5984, 0
  %v6107 = vsel %vm6027, %v5985, 0
  %v6110 = vsel %vm6027, %v5986, 0
  %v6113 = vsel %vm6027, %v5987, 0
  %v6116 = vsel %vm6027, %v5988, 0
  %v6119 = vsel %vm6027, %v5989, 0
  %v6122 = vsel %vm6027, %v5990, 0
  %v6125 = vsel %vm125, %v6022, 0
  %6127 = vmatprep.subr.bf16.mxu0 0
  %6128 = vmatpush1.bf16.msra.mxu0 %v6018
  %6129 = vmatprep.subr.bf16.mxu0 0
  %6130 = vmatpush1.bf16.msra.mxu0 %v6019
  %6131 = vmatprep.subr.bf16.mxu0 0
  %6132 = vmatpush1.bf16.msra.mxu0 %v6020
  %6133 = vmatprep.subr.bf16.mxu0 0
  %6134 = vmatpush1.bf16.msra.mxu0 %v6021
  %6135 = vmatprep.subr.bf16.mxu0 0
  %6136 = vmatpush1.bf16.msra.mxu0 %v6125
  %6137 = vmatprep.subr.bf16.mxu0 0
  %6138 = vmatpush1.bf16.msra.mxu0 0
  %6139 = vmatprep.subr.bf16.mxu0 0
  %6140 = vmatpush1.bf16.msra.mxu0 0
  %6141 = vmatprep.subr.bf16.mxu0 0
  %6142 = vmatpush1.bf16.msra.mxu0 0
  %6143 = vmatprep.subr.bf16.mxu0 0
  %6144 = vmatpush1.bf16.msra.mxu0 0
  %6145 = vmatprep.subr.bf16.mxu0 0
  %6146 = vmatpush1.bf16.msra.mxu0 0
  %6147 = vmatprep.subr.bf16.mxu0 0
  %6148 = vmatpush1.bf16.msra.mxu0 0
  %6149 = vmatprep.subr.bf16.mxu0 0
  %6150 = vmatpush1.bf16.msra.mxu0 0
  %6151 = vmatprep.subr.bf16.mxu0 0
  %6152 = vmatpush1.bf16.msra.mxu0 0
  %6153 = vmatprep.subr.bf16.mxu0 0
  %6154 = vmatpush1.bf16.msra.mxu0 0
  %6155 = vmatprep.subr.bf16.mxu0 0
  %6156 = vmatpush1.bf16.msra.mxu0 0
  %6157 = vmatprep.subr.bf16.mxu0 0
  %6158 = vmatpush1.bf16.msra.mxu0 0
  %6159 = vmatprep.mubr.bf16.mxu0 0
  %6160 = vmatmul.mubr.bf16.gmra.mrb[0].mxu0 %v6029
  %v6161 = vpop.f32.mrb[0].mxu0
  %v6162 = vadd.f32 0.0, %v6161
  %v6163 = vpop.f32.mrb[0].mxu0
  %v6164 = vpop.f32.mrb[0].mxu0
  %v6165 = vadd.f32 0.0, %v6164
  %v6166 = vpop.f32.mrb[0].mxu0
  %6167 = vmatprep.mubr.bf16.mxu0 0
  %6168 = vmatmul.mubr.bf16.gmra.mrb[0].mxu0 %v6032
  %v6169 = vpop.f32.mrb[0].mxu0
  %v6170 = vadd.f32 0.0, %v6169
  %v6171 = vpop.f32.mrb[0].mxu0
  %v6172 = vpop.f32.mrb[0].mxu0
  %v6173 = vadd.f32 0.0, %v6172
  %v6174 = vpop.f32.mrb[0].mxu0
  %6175 = vmatprep.mubr.bf16.mxu0 0
  %6176 = vmatmul.mubr.bf16.gmra.mrb[0].mxu0 %v6035
  %v6177 = vpop.f32.mrb[0].mxu0
  %v6178 = vadd.f32 0.0, %v6177
  %v6179 = vpop.f32.mrb[0].mxu0
  %v6180 = vpop.f32.mrb[0].mxu0
  %v6181 = vadd.f32 0.0, %v6180
  %v6182 = vpop.f32.mrb[0].mxu0
  %6183 = vmatprep.mubr.bf16.mxu0 0
  %6184 = vmatmul.mubr.bf16.gmra.mrb[0].mxu0 %v6038
  %v6185 = vpop.f32.mrb[0].mxu0
  %v6186 = vadd.f32 0.0, %v6185
  %v6187 = vpop.f32.mrb[0].mxu0
  %v6188 = vpop.f32.mrb[0].mxu0
  %v6189 = vadd.f32 0.0, %v6188
  %v6190 = vpop.f32.mrb[0].mxu0
  %6191 = vmatprep.mubr.bf16.mxu0 0
  %6192 = vmatmul.mubr.bf16.gmra.mrb[0].mxu0 %v6041
  %v6193 = vpop.f32.mrb[0].mxu0
  %v6194 = vadd.f32 0.0, %v6193
  %v6195 = vpop.f32.mrb[0].mxu0
  %v6196 = vpop.f32.mrb[0].mxu0
  %v6197 = vadd.f32 0.0, %v6196
  %v6198 = vpop.f32.mrb[0].mxu0
  %6199 = vmatprep.mubr.bf16.mxu0 0
  %6200 = vmatmul.mubr.bf16.gmra.mrb[0].mxu0 %v6044
  %v6201 = vpop.f32.mrb[0].mxu0
  %v6202 = vadd.f32 0.0, %v6201
  %v6203 = vpop.f32.mrb[0].mxu0
  %v6204 = vpop.f32.mrb[0].mxu0
  %v6205 = vadd.f32 0.0, %v6204
  %v6206 = vpop.f32.mrb[0].mxu0
  %6207 = vmatprep.mubr.bf16.mxu0 0
  %6208 = vmatmul.mubr.bf16.gmra.mrb[0].mxu0 %v6047
  %v6209 = vpop.f32.mrb[0].mxu0
  %v6210 = vadd.f32 0.0, %v6209
  %v6211 = vpop.f32.mrb[0].mxu0
  %v6212 = vpop.f32.mrb[0].mxu0
  %v6213 = vadd.f32 0.0, %v6212
  %v6214 = vpop.f32.mrb[0].mxu0
  %6215 = vmatprep.mubr.bf16.mxu0 0
  %6216 = vmatmul.mubr.bf16.gmra.mrb[0].mxu0 %v6050
  %v6217 = vpop.f32.mrb[0].mxu0
  %v6218 = vadd.f32 0.0, %v6217
  %v6219 = vpop.f32.mrb[0].mxu0
  %v6220 = vpop.f32.mrb[0].mxu0
  %v6221 = vadd.f32 0.0, %v6220
  %v6222 = vpop.f32.mrb[0].mxu0
  %6223 = vmatprep.mubr.bf16.mxu0 0
  %6224 = vmatmul.mubr.bf16.gmra.mrb[0].mxu0 %v6053
  %v6225 = vpop.f32.mrb[0].mxu0
  %v6226 = vadd.f32 0.0, %v6225
  %v6227 = vpop.f32.mrb[0].mxu0
  %v6228 = vpop.f32.mrb[0].mxu0
  %v6229 = vadd.f32 0.0, %v6228
  %v6230 = vpop.f32.mrb[0].mxu0
  %6231 = vmatprep.mubr.bf16.mxu0 0
  %6232 = vmatmul.mubr.bf16.gmra.mrb[0].mxu0 %v6056
  %v6233 = vpop.f32.mrb[0].mxu0
  %v6234 = vadd.f32 0.0, %v6233
  %v6235 = vpop.f32.mrb[0].mxu0
  %v6236 = vpop.f32.mrb[0].mxu0
  %v6237 = vadd.f32 0.0, %v6236
  %v6238 = vpop.f32.mrb[0].mxu0
  %6239 = vmatprep.mubr.bf16.mxu0 0
  %6240 = vmatmul.mubr.bf16.gmra.mrb[0].mxu0 %v6059
  %v6241 = vpop.f32.mrb[0].mxu0
  %v6242 = vadd.f32 0.0, %v6241
  %v6243 = vpop.f32.mrb[0].mxu0
  %v6244 = vpop.f32.mrb[0].mxu0
  %v6245 = vadd.f32 0.0, %v6244
  %v6246 = vpop.f32.mrb[0].mxu0
  %6247 = vmatprep.mubr.bf16.mxu0 0
  %6248 = vmatmul.mubr.bf16.gmra.mrb[0].mxu0 %v6062
  %v6249 = vpop.f32.mrb[0].mxu0
  %v6250 = vadd.f32 0.0, %v6249
  %v6251 = vpop.f32.mrb[0].mxu0
  %v6252 = vpop.f32.mrb[0].mxu0
  %v6253 = vadd.f32 0.0, %v6252
  %v6254 = vpop.f32.mrb[0].mxu0
  %6255 = vmatprep.mubr.bf16.mxu0 0
  %6256 = vmatmul.mubr.bf16.gmra.mrb[0].mxu0 %v6065
  %v6257 = vpop.f32.mrb[0].mxu0
  %v6258 = vadd.f32 0.0, %v6257
  %v6259 = vpop.f32.mrb[0].mxu0
  %v6260 = vpop.f32.mrb[0].mxu0
  %v6261 = vadd.f32 0.0, %v6260
  %v6262 = vpop.f32.mrb[0].mxu0
  %6263 = vmatprep.mubr.bf16.mxu0 0
  %6264 = vmatmul.mubr.bf16.gmra.mrb[0].mxu0 %v6068
  %v6265 = vpop.f32.mrb[0].mxu0
  %v6266 = vadd.f32 0.0, %v6265
  %v6267 = vpop.f32.mrb[0].mxu0
  %v6268 = vpop.f32.mrb[0].mxu0
  %v6269 = vadd.f32 0.0, %v6268
  %v6270 = vpop.f32.mrb[0].mxu0
  %6271 = vmatprep.mubr.bf16.mxu0 0
  %6272 = vmatmul.mubr.bf16.gmra.mrb[0].mxu0 %v6071
  %v6273 = vpop.f32.mrb[0].mxu0
  %v6274 = vadd.f32 0.0, %v6273
  %v6275 = vpop.f32.mrb[0].mxu0
  %v6276 = vpop.f32.mrb[0].mxu0
  %v6277 = vadd.f32 0.0, %v6276
  %v6278 = vpop.f32.mrb[0].mxu0
  %6279 = vmatprep.mubr.bf16.mxu0 0
  %6280 = vmatmul.mubr.bf16.gmra.mrb[0].mxu0 %v6074
  %v6281 = vpop.f32.mrb[0].mxu0
  %v6282 = vadd.f32 0.0, %v6281
  %v6283 = vpop.f32.mrb[0].mxu0
  %v6284 = vpop.f32.mrb[0].mxu0
  %v6285 = vadd.f32 0.0, %v6284
  %v6286 = vpop.f32.mrb[0].mxu0
  %6287 = vmatprep.mubr.bf16.mxu0 0
  %6288 = vmatmul.mubr.bf16.gmra.mrb[0].mxu0 %v6077
  %v6289 = vpop.f32.mrb[0].mxu0
  %v6290 = vadd.f32 0.0, %v6289
  %v6291 = vpop.f32.mrb[0].mxu0
  %v6292 = vpop.f32.mrb[0].mxu0
  %v6293 = vadd.f32 0.0, %v6292
  %v6294 = vpop.f32.mrb[0].mxu0
  %6295 = vmatprep.mubr.bf16.mxu0 0
  %6296 = vmatmul.mubr.bf16.gmra.mrb[0].mxu0 %v6080
  %v6297 = vpop.f32.mrb[0].mxu0
  %v6298 = vadd.f32 0.0, %v6297
  %v6299 = vpop.f32.mrb[0].mxu0
  %v6300 = vpop.f32.mrb[0].mxu0
  %v6301 = vadd.f32 0.0, %v6300
  %v6302 = vpop.f32.mrb[0].mxu0
  %6303 = vmatprep.mubr.bf16.mxu0 0
  %6304 = vmatmul.mubr.bf16.gmra.mrb[0].mxu0 %v6083
  %v6305 = vpop.f32.mrb[0].mxu0
  %v6306 = vadd.f32 0.0, %v6305
  %v6307 = vpop.f32.mrb[0].mxu0
  %v6308 = vpop.f32.mrb[0].mxu0
  %v6309 = vadd.f32 0.0, %v6308
  %v6310 = vpop.f32.mrb[0].mxu0
  %6311 = vmatprep.mubr.bf16.mxu0 0
  %6312 = vmatmul.mubr.bf16.gmra.mrb[0].mxu0 %v6086
  %v6313 = vpop.f32.mrb[0].mxu0
  %v6314 = vadd.f32 0.0, %v6313
  %v6315 = vpop.f32.mrb[0].mxu0
  %v6316 = vpop.f32.mrb[0].mxu0
  %v6317 = vadd.f32 0.0, %v6316
  %v6318 = vpop.f32.mrb[0].mxu0
  %6319 = vmatprep.mubr.bf16.mxu0 0
  %6320 = vmatmul.mubr.bf16.gmra.mrb[0].mxu0 %v6089
  %v6321 = vpop.f32.mrb[0].mxu0
  %v6322 = vadd.f32 0.0, %v6321
  %v6323 = vpop.f32.mrb[0].mxu0
  %v6324 = vpop.f32.mrb[0].mxu0
  %v6325 = vadd.f32 0.0, %v6324
  %v6326 = vpop.f32.mrb[0].mxu0
  %6327 = vmatprep.mubr.bf16.mxu0 0
  %6328 = vmatmul.mubr.bf16.gmra.mrb[0].mxu0 %v6092
  %v6329 = vpop.f32.mrb[0].mxu0
  %v6330 = vadd.f32 0.0, %v6329
  %v6331 = vpop.f32.mrb[0].mxu0
  %v6332 = vpop.f32.mrb[0].mxu0
  %v6333 = vadd.f32 0.0, %v6332
  %v6334 = vpop.f32.mrb[0].mxu0
  %6335 = vmatprep.mubr.bf16.mxu0 0
  %6336 = vmatmul.mubr.bf16.gmra.mrb[0].mxu0 %v6095
  %v6337 = vpop.f32.mrb[0].mxu0
  %v6338 = vadd.f32 0.0, %v6337
  %v6339 = vpop.f32.mrb[0].mxu0
  %v6340 = vpop.f32.mrb[0].mxu0
  %v6341 = vadd.f32 0.0, %v6340
  %v6342 = vpop.f32.mrb[0].mxu0
  %6343 = vmatprep.mubr.bf16.mxu0 0
  %6344 = vmatmul.mubr.bf16.gmra.mrb[0].mxu0 %v6098
  %v6345 = vpop.f32.mrb[0].mxu0
  %v6346 = vadd.f32 0.0, %v6345
  %v6347 = vpop.f32.mrb[0].mxu0
  %v6348 = vpop.f32.mrb[0].mxu0
  %v6349 = vadd.f32 0.0, %v6348
  %v6350 = vpop.f32.mrb[0].mxu0
  %6351 = vmatprep.mubr.bf16.mxu0 0
  %6352 = vmatmul.mubr.bf16.gmra.mrb[0].mxu0 %v6101
  %v6353 = vpop.f32.mrb[0].mxu0
  %v6354 = vadd.f32 0.0, %v6353
  %v6355 = vpop.f32.mrb[0].mxu0
  %v6356 = vpop.f32.mrb[0].mxu0
  %v6357 = vadd.f32 0.0, %v6356
  %v6358 = vpop.f32.mrb[0].mxu0
  %6359 = vmatprep.mubr.bf16.mxu0 0
  %6360 = vmatmul.mubr.bf16.gmra.mrb[0].mxu0 %v6104
  %v6361 = vpop.f32.mrb[0].mxu0
  %v6362 = vadd.f32 0.0, %v6361
  %v6363 = vpop.f32.mrb[0].mxu0
  %v6364 = vpop.f32.mrb[0].mxu0
  %v6365 = vadd.f32 0.0, %v6364
  %v6366 = vpop.f32.mrb[0].mxu0
  %6367 = vmatprep.mubr.bf16.mxu0 0
  %6368 = vmatmul.mubr.bf16.gmra.mrb[0].mxu0 %v6107
  %v6369 = vpop.f32.mrb[0].mxu0
  %v6370 = vadd.f32 0.0, %v6369
  %v6371 = vpop.f32.mrb[0].mxu0
  %v6372 = vpop.f32.mrb[0].mxu0
  %v6373 = vadd.f32 0.0, %v6372
  %v6374 = vpop.f32.mrb[0].mxu0
  %6375 = vmatprep.mubr.bf16.mxu0 0
  %6376 = vmatmul.mubr.bf16.gmra.mrb[0].mxu0 %v6110
  %v6377 = vpop.f32.mrb[0].mxu0
  %v6378 = vadd.f32 0.0, %v6377
  %v6379 = vpop.f32.mrb[0].mxu0
  %v6380 = vpop.f32.mrb[0].mxu0
  %v6381 = vadd.f32 0.0, %v6380
  %v6382 = vpop.f32.mrb[0].mxu0
  %6383 = vmatprep.mubr.bf16.mxu0 0
  %6384 = vmatmul.mubr.bf16.gmra.mrb[0].mxu0 %v6113
  %v6385 = vpop.f32.mrb[0].mxu0
  %v6386 = vadd.f32 0.0, %v6385
  %v6387 = vpop.f32.mrb[0].mxu0
  %v6388 = vpop.f32.mrb[0].mxu0
  %v6389 = vadd.f32 0.0, %v6388
  %v6390 = vpop.f32.mrb[0].mxu0
  %6391 = vmatprep.mubr.bf16.mxu0 0
  %6392 = vmatmul.mubr.bf16.gmra.mrb[0].mxu0 %v6116
  %v6393 = vpop.f32.mrb[0].mxu0
  %v6394 = vadd.f32 0.0, %v6393
  %v6395 = vpop.f32.mrb[0].mxu0
  %v6396 = vpop.f32.mrb[0].mxu0
  %v6397 = vadd.f32 0.0, %v6396
  %v6398 = vpop.f32.mrb[0].mxu0
  %6399 = vmatprep.mubr.bf16.mxu0 0
  %6400 = vmatmul.mubr.bf16.gmra.mrb[0].mxu0 %v6119
  %v6401 = vpop.f32.mrb[0].mxu0
  %v6402 = vadd.f32 0.0, %v6401
  %v6403 = vpop.f32.mrb[0].mxu0
  %v6404 = vpop.f32.mrb[0].mxu0
  %v6405 = vadd.f32 0.0, %v6404
  %v6406 = vpop.f32.mrb[0].mxu0
  %6407 = vmatprep.mubr.bf16.mxu0 0
  %6408 = vmatmul.mubr.bf16.gmra.mrb[0].mxu0 %v6122
  %v6409 = vpop.f32.mrb[0].mxu0
  %v6410 = vadd.f32 0.0, %v6409
  %v6411 = vpop.f32.mrb[0].mxu0
  %v6412 = vpop.f32.mrb[0].mxu0
  %v6413 = vadd.f32 0.0, %v6412
  %v6414 = vpop.f32.mrb[0].mxu0
  %6415 = vdwg.mxu0
  %v6416 = vsel %vm3196, %v6162, 0.0
  %v6417 = vsel %vm3196, %v6165, 0.0
  %v6418 = vadd.f32 %v6416, %v6417
  %v6419 = vsel %vm3196, %v6170, 0.0
  %v6420 = vadd.f32 %v6418, %v6419
  %v6421 = vsel %vm3196, %v6173, 0.0
  %v6422 = vadd.f32 %v6420, %v6421
  %v6423 = vsel %vm3196, %v6178, 0.0
  %v6424 = vadd.f32 %v6422, %v6423
  %v6425 = vsel %vm3196, %v6181, 0.0
  %v6426 = vadd.f32 %v6424, %v6425
  %v6427 = vsel %vm3196, %v6186, 0.0
  %v6428 = vadd.f32 %v6426, %v6427
  %v6429 = vsel %vm3196, %v6189, 0.0
  %v6430 = vadd.f32 %v6428, %v6429
  %v6431 = vsel %vm3196, %v6194, 0.0
  %v6432 = vadd.f32 %v6430, %v6431
  %v6433 = vsel %vm3196, %v6197, 0.0
  %v6434 = vadd.f32 %v6432, %v6433
  %v6435 = vsel %vm3196, %v6202, 0.0
  %v6436 = vadd.f32 %v6434, %v6435
  %v6437 = vsel %vm3196, %v6205, 0.0
  %v6438 = vadd.f32 %v6436, %v6437
  %v6439 = vsel %vm3196, %v6210, 0.0
  %v6440 = vadd.f32 %v6438, %v6439
  %v6441 = vsel %vm3196, %v6213, 0.0
  %v6442 = vadd.f32 %v6440, %v6441
  %v6443 = vsel %vm3196, %v6218, 0.0
  %v6444 = vadd.f32 %v6442, %v6443
  %v6445 = vsel %vm3196, %v6221, 0.0
  %v6446 = vadd.f32 %v6444, %v6445
  %v6447 = vsel %vm3196, %v6226, 0.0
  %v6448 = vadd.f32 %v6446, %v6447
  %v6449 = vsel %vm3196, %v6229, 0.0
  %v6450 = vadd.f32 %v6448, %v6449
  %v6451 = vsel %vm3196, %v6234, 0.0
  %v6452 = vadd.f32 %v6450, %v6451
  %v6453 = vsel %vm3196, %v6237, 0.0
  %v6454 = vadd.f32 %v6452, %v6453
  %v6455 = vsel %vm3196, %v6242, 0.0
  %v6456 = vadd.f32 %v6454, %v6455
  %v6457 = vsel %vm3196, %v6245, 0.0
  %v6458 = vadd.f32 %v6456, %v6457
  %v6459 = vsel %vm3196, %v6250, 0.0
  %v6460 = vadd.f32 %v6458, %v6459
  %v6461 = vsel %vm3196, %v6253, 0.0
  %v6462 = vadd.f32 %v6460, %v6461
  %v6463 = vsel %vm3196, %v6258, 0.0
  %v6464 = vadd.f32 %v6462, %v6463
  %v6465 = vsel %vm3196, %v6261, 0.0
  %v6466 = vadd.f32 %v6464, %v6465
  %v6467 = vsel %vm3196, %v6266, 0.0
  %v6468 = vadd.f32 %v6466, %v6467
  %v6469 = vsel %vm3196, %v6269, 0.0
  %v6470 = vadd.f32 %v6468, %v6469
  %v6471 = vsel %vm3196, %v6274, 0.0
  %v6472 = vadd.f32 %v6470, %v6471
  %v6473 = vsel %vm3196, %v6277, 0.0
  %v6474 = vadd.f32 %v6472, %v6473
  %v6475 = vsel %vm3196, %v6282, 0.0
  %v6476 = vadd.f32 %v6474, %v6475
  %v6477 = vsel %vm3196, %v6285, 0.0
  %v6478 = vadd.f32 %v6476, %v6477
  %v6479 = vsel %vm3196, %v6290, 0.0
  %v6480 = vadd.f32 %v6478, %v6479
  %v6481 = vsel %vm3196, %v6293, 0.0
  %v6482 = vadd.f32 %v6480, %v6481
  %v6483 = vsel %vm3196, %v6298, 0.0
  %v6484 = vadd.f32 %v6482, %v6483
  %v6485 = vsel %vm3196, %v6301, 0.0
  %v6486 = vadd.f32 %v6484, %v6485
  %v6487 = vsel %vm3196, %v6306, 0.0
  %v6488 = vadd.f32 %v6486, %v6487
  %v6489 = vsel %vm3196, %v6309, 0.0
  %v6490 = vadd.f32 %v6488, %v6489
  %v6491 = vsel %vm3196, %v6314, 0.0
  %v6492 = vadd.f32 %v6490, %v6491
  %v6493 = vsel %vm3196, %v6317, 0.0
  %v6494 = vadd.f32 %v6492, %v6493
  %v6495 = vsel %vm3196, %v6322, 0.0
  %v6496 = vadd.f32 %v6494, %v6495
  %v6497 = vsel %vm3196, %v6325, 0.0
  %v6498 = vadd.f32 %v6496, %v6497
  %v6499 = vsel %vm3196, %v6330, 0.0
  %v6500 = vadd.f32 %v6498, %v6499
  %v6501 = vsel %vm3196, %v6333, 0.0
  %v6502 = vadd.f32 %v6500, %v6501
  %v6503 = vsel %vm3196, %v6338, 0.0
  %v6504 = vadd.f32 %v6502, %v6503
  %v6505 = vsel %vm3196, %v6341, 0.0
  %v6506 = vadd.f32 %v6504, %v6505
  %v6507 = vsel %vm3196, %v6346, 0.0
  %v6508 = vadd.f32 %v6506, %v6507
  %v6509 = vsel %vm3196, %v6349, 0.0
  %v6510 = vadd.f32 %v6508, %v6509
  %v6511 = vsel %vm3196, %v6354, 0.0
  %v6512 = vadd.f32 %v6510, %v6511
  %v6513 = vsel %vm3196, %v6357, 0.0
  %v6514 = vadd.f32 %v6512, %v6513
  %v6515 = vsel %vm3196, %v6362, 0.0
  %v6516 = vadd.f32 %v6514, %v6515
  %v6517 = vsel %vm3196, %v6365, 0.0
  %v6518 = vadd.f32 %v6516, %v6517
  %v6519 = vsel %vm3196, %v6370, 0.0
  %v6520 = vadd.f32 %v6518, %v6519
  %v6521 = vsel %vm3196, %v6373, 0.0
  %v6522 = vadd.f32 %v6520, %v6521
  %v6523 = vsel %vm3196, %v6378, 0.0
  %v6524 = vadd.f32 %v6522, %v6523
  %v6525 = vsel %vm3196, %v6381, 0.0
  %v6526 = vadd.f32 %v6524, %v6525
  %v6527 = vsel %vm3196, %v6386, 0.0
  %v6528 = vadd.f32 %v6526, %v6527
  %v6529 = vsel %vm3196, %v6389, 0.0
  %v6530 = vadd.f32 %v6528, %v6529
  %v6531 = vsel %vm3196, %v6394, 0.0
  %v6532 = vadd.f32 %v6530, %v6531
  %v6533 = vsel %vm3196, %v6397, 0.0
  %v6534 = vadd.f32 %v6532, %v6533
  %v6535 = vsel %vm3196, %v6402, 0.0
  %v6536 = vadd.f32 %v6534, %v6535
  %v6537 = vsel %vm3196, %v6405, 0.0
  %v6538 = vadd.f32 %v6536, %v6537
  %v6539 = vsel %vm3196, %v6410, 0.0
  %v6540 = vadd.f32 %v6538, %v6539
  %v6541 = vsel %vm3196, %v6413, 0.0
  %v6542 = vadd.f32 %v6540, %v6541
  %v6543 = vrot.slane %v6542, 4
  %v6544 = vadd.f32 %v6542, %v6543
  %v6545 = vrot.slane %v6544, 2
  %v6546 = vadd.f32 %v6544, %v6545
  %v6547 = vrot.slane %v6546, 1
  %v6548 = vadd.f32 %v6546, %v6547
  %v6549 = vmul.f32 %v6548, 0.001953125
  %v6550 = vsub.f32 %v6162, %v6549
  %v6551 = vsub.f32 %v6165, %v6549
  %v6552 = vsub.f32 %v6170, %v6549
  %v6553 = vsub.f32 %v6173, %v6549
  %v6554 = vsub.f32 %v6178, %v6549
  %v6555 = vsub.f32 %v6181, %v6549
  %v6556 = vsub.f32 %v6186, %v6549
  %v6557 = vsub.f32 %v6189, %v6549
  %v6558 = vsub.f32 %v6194, %v6549
  %v6559 = vsub.f32 %v6197, %v6549
  %v6560 = vsub.f32 %v6202, %v6549
  %v6561 = vsub.f32 %v6205, %v6549
  %v6562 = vsub.f32 %v6210, %v6549
  %v6563 = vsub.f32 %v6213, %v6549
  %v6564 = vsub.f32 %v6218, %v6549
  %v6565 = vsub.f32 %v6221, %v6549
  %v6566 = vsub.f32 %v6226, %v6549
  %v6567 = vsub.f32 %v6229, %v6549
  %v6568 = vsub.f32 %v6234, %v6549
  %v6569 = vsub.f32 %v6237, %v6549
  %v6570 = vsub.f32 %v6242, %v6549
  %v6571 = vsub.f32 %v6245, %v6549
  %v6572 = vsub.f32 %v6250, %v6549
  %v6573 = vsub.f32 %v6253, %v6549
  %v6574 = vsub.f32 %v6258, %v6549
  %v6575 = vsub.f32 %v6261, %v6549
  %v6576 = vsub.f32 %v6266, %v6549
  %v6577 = vsub.f32 %v6269, %v6549
  %v6578 = vsub.f32 %v6274, %v6549
  %v6579 = vsub.f32 %v6277, %v6549
  %v6580 = vsub.f32 %v6282, %v6549
  %v6581 = vsub.f32 %v6285, %v6549
  %v6582 = vsub.f32 %v6290, %v6549
  %v6583 = vsub.f32 %v6293, %v6549
  %v6584 = vsub.f32 %v6298, %v6549
  %v6585 = vsub.f32 %v6301, %v6549
  %v6586 = vsub.f32 %v6306, %v6549
  %v6587 = vsub.f32 %v6309, %v6549
  %v6588 = vsub.f32 %v6314, %v6549
  %v6589 = vsub.f32 %v6317, %v6549
  %v6590 = vsub.f32 %v6322, %v6549
  %v6591 = vsub.f32 %v6325, %v6549
  %v6592 = vsub.f32 %v6330, %v6549
  %v6593 = vsub.f32 %v6333, %v6549
  %v6594 = vsub.f32 %v6338, %v6549
  %v6595 = vsub.f32 %v6341, %v6549
  %v6596 = vsub.f32 %v6346, %v6549
  %v6597 = vsub.f32 %v6349, %v6549
  %v6598 = vsub.f32 %v6354, %v6549
  %v6599 = vsub.f32 %v6357, %v6549
  %v6600 = vsub.f32 %v6362, %v6549
  %v6601 = vsub.f32 %v6365, %v6549
  %v6602 = vsub.f32 %v6370, %v6549
  %v6603 = vsub.f32 %v6373, %v6549
  %v6604 = vsub.f32 %v6378, %v6549
  %v6605 = vsub.f32 %v6381, %v6549
  %v6606 = vsub.f32 %v6386, %v6549
  %v6607 = vsub.f32 %v6389, %v6549
  %v6608 = vsub.f32 %v6394, %v6549
  %v6609 = vsub.f32 %v6397, %v6549
  %v6610 = vsub.f32 %v6402, %v6549
  %v6611 = vsub.f32 %v6405, %v6549
  %v6612 = vsub.f32 %v6410, %v6549
  %v6613 = vsub.f32 %v6413, %v6549
  %v6614 = vmul.f32 %v6550, %v6550
  %v6615 = vmul.f32 %v6551, %v6551
  %v6616 = vmul.f32 %v6552, %v6552
  %v6617 = vmul.f32 %v6553, %v6553
  %v6618 = vmul.f32 %v6554, %v6554
  %v6619 = vmul.f32 %v6555, %v6555
  %v6620 = vmul.f32 %v6556, %v6556
  %v6621 = vmul.f32 %v6557, %v6557
  %v6622 = vmul.f32 %v6558, %v6558
  %v6623 = vmul.f32 %v6559, %v6559
  %v6624 = vmul.f32 %v6560, %v6560
  %v6625 = vmul.f32 %v6561, %v6561
  %v6626 = vmul.f32 %v6562, %v6562
  %v6627 = vmul.f32 %v6563, %v6563
  %v6628 = vmul.f32 %v6564, %v6564
  %v6629 = vmul.f32 %v6565, %v6565
  %v6630 = vmul.f32 %v6566, %v6566
  %v6631 = vmul.f32 %v6567, %v6567
  %v6632 = vmul.f32 %v6568, %v6568
  %v6633 = vmul.f32 %v6569, %v6569
  %v6634 = vmul.f32 %v6570, %v6570
  %v6635 = vmul.f32 %v6571, %v6571
  %v6636 = vmul.f32 %v6572, %v6572
  %v6637 = vmul.f32 %v6573, %v6573
  %v6638 = vmul.f32 %v6574, %v6574
  %v6639 = vmul.f32 %v6575, %v6575
  %v6640 = vmul.f32 %v6576, %v6576
  %v6641 = vmul.f32 %v6577, %v6577
  %v6642 = vmul.f32 %v6578, %v6578
  %v6643 = vmul.f32 %v6579, %v6579
  %v6644 = vmul.f32 %v6580, %v6580
  %v6645 = vmul.f32 %v6581, %v6581
  %v6646 = vmul.f32 %v6582, %v6582
  %v6647 = vmul.f32 %v6583, %v6583
  %v6648 = vmul.f32 %v6584, %v6584
  %v6649 = vmul.f32 %v6585, %v6585
  %v6650 = vmul.f32 %v6586, %v6586
  %v6651 = vmul.f32 %v6587, %v6587
  %v6652 = vmul.f32 %v6588, %v6588
  %v6653 = vmul.f32 %v6589, %v6589
  %v6654 = vmul.f32 %v6590, %v6590
  %v6655 = vmul.f32 %v6591, %v6591
  %v6656 = vmul.f32 %v6592, %v6592
  %v6657 = vmul.f32 %v6593, %v6593
  %v6658 = vmul.f32 %v6594, %v6594
  %v6659 = vmul.f32 %v6595, %v6595
  %v6660 = vmul.f32 %v6596, %v6596
  %v6661 = vmul.f32 %v6597, %v6597
  %v6662 = vmul.f32 %v6598, %v6598
  %v6663 = vmul.f32 %v6599, %v6599
  %v6664 = vmul.f32 %v6600, %v6600
  %v6665 = vmul.f32 %v6601, %v6601
  %v6666 = vmul.f32 %v6602, %v6602
  %v6667 = vmul.f32 %v6603, %v6603
  %v6668 = vmul.f32 %v6604, %v6604
  %v6669 = vmul.f32 %v6605, %v6605
  %v6670 = vmul.f32 %v6606, %v6606
  %v6671 = vmul.f32 %v6607, %v6607
  %v6672 = vmul.f32 %v6608, %v6608
  %v6673 = vmul.f32 %v6609, %v6609
  %v6674 = vmul.f32 %v6610, %v6610
  %v6675 = vmul.f32 %v6611, %v6611
  %v6676 = vmul.f32 %v6612, %v6612
  %v6677 = vmul.f32 %v6613, %v6613
  %v6678 = vsel %vm3196, %v6614, 0.0
  %v6679 = vsel %vm3196, %v6615, 0.0
  %v6680 = vadd.f32 %v6678, %v6679
  %v6681 = vsel %vm3196, %v6616, 0.0
  %v6682 = vadd.f32 %v6680, %v6681
  %v6683 = vsel %vm3196, %v6617, 0.0
  %v6684 = vadd.f32 %v6682, %v6683
  %v6685 = vsel %vm3196, %v6618, 0.0
  %v6686 = vadd.f32 %v6684, %v6685
  %v6687 = vsel %vm3196, %v6619, 0.0
  %v6688 = vadd.f32 %v6686, %v6687
  %v6689 = vsel %vm3196, %v6620, 0.0
  %v6690 = vadd.f32 %v6688, %v6689
  %v6691 = vsel %vm3196, %v6621, 0.0
  %v6692 = vadd.f32 %v6690, %v6691
  %v6693 = vsel %vm3196, %v6622, 0.0
  %v6694 = vadd.f32 %v6692, %v6693
  %v6695 = vsel %vm3196, %v6623, 0.0
  %v6696 = vadd.f32 %v6694, %v6695
  %v6697 = vsel %vm3196, %v6624, 0.0
  %v6698 = vadd.f32 %v6696, %v6697
  %v6699 = vsel %vm3196, %v6625, 0.0
  %v6700 = vadd.f32 %v6698, %v6699
  %v6701 = vsel %vm3196, %v6626, 0.0
  %v6702 = vadd.f32 %v6700, %v6701
  %v6703 = vsel %vm3196, %v6627, 0.0
  %v6704 = vadd.f32 %v6702, %v6703
  %v6705 = vsel %vm3196, %v6628, 0.0
  %v6706 = vadd.f32 %v6704, %v6705
  %v6707 = vsel %vm3196, %v6629, 0.0
  %v6708 = vadd.f32 %v6706, %v6707
  %v6709 = vsel %vm3196, %v6630, 0.0
  %v6710 = vadd.f32 %v6708, %v6709
  %v6711 = vsel %vm3196, %v6631, 0.0
  %v6712 = vadd.f32 %v6710, %v6711
  %v6713 = vsel %vm3196, %v6632, 0.0
  %v6714 = vadd.f32 %v6712, %v6713
  %v6715 = vsel %vm3196, %v6633, 0.0
  %v6716 = vadd.f32 %v6714, %v6715
  %v6717 = vsel %vm3196, %v6634, 0.0
  %v6718 = vadd.f32 %v6716, %v6717
  %v6719 = vsel %vm3196, %v6635, 0.0
  %v6720 = vadd.f32 %v6718, %v6719
  %v6721 = vsel %vm3196, %v6636, 0.0
  %v6722 = vadd.f32 %v6720, %v6721
  %v6723 = vsel %vm3196, %v6637, 0.0
  %v6724 = vadd.f32 %v6722, %v6723
  %v6725 = vsel %vm3196, %v6638, 0.0
  %v6726 = vadd.f32 %v6724, %v6725
  %v6727 = vsel %vm3196, %v6639, 0.0
  %v6728 = vadd.f32 %v6726, %v6727
  %v6729 = vsel %vm3196, %v6640, 0.0
  %v6730 = vadd.f32 %v6728, %v6729
  %v6731 = vsel %vm3196, %v6641, 0.0
  %v6732 = vadd.f32 %v6730, %v6731
  %v6733 = vsel %vm3196, %v6642, 0.0
  %v6734 = vadd.f32 %v6732, %v6733
  %v6735 = vsel %vm3196, %v6643, 0.0
  %v6736 = vadd.f32 %v6734, %v6735
  %v6737 = vsel %vm3196, %v6644, 0.0
  %v6738 = vadd.f32 %v6736, %v6737
  %v6739 = vsel %vm3196, %v6645, 0.0
  %v6740 = vadd.f32 %v6738, %v6739
  %v6741 = vsel %vm3196, %v6646, 0.0
  %v6742 = vadd.f32 %v6740, %v6741
  %v6743 = vsel %vm3196, %v6647, 0.0
  %v6744 = vadd.f32 %v6742, %v6743
  %v6745 = vsel %vm3196, %v6648, 0.0
  %v6746 = vadd.f32 %v6744, %v6745
  %v6747 = vsel %vm3196, %v6649, 0.0
  %v6748 = vadd.f32 %v6746, %v6747
  %v6749 = vsel %vm3196, %v6650, 0.0
  %v6750 = vadd.f32 %v6748, %v6749
  %v6751 = vsel %vm3196, %v6651, 0.0
  %v6752 = vadd.f32 %v6750, %v6751
  %v6753 = vsel %vm3196, %v6652, 0.0
  %v6754 = vadd.f32 %v6752, %v6753
  %v6755 = vsel %vm3196, %v6653, 0.0
  %v6756 = vadd.f32 %v6754, %v6755
  %v6757 = vsel %vm3196, %v6654, 0.0
  %v6758 = vadd.f32 %v6756, %v6757
  %v6759 = vsel %vm3196, %v6655, 0.0
  %v6760 = vadd.f32 %v6758, %v6759
  %v6761 = vsel %vm3196, %v6656, 0.0
  %v6762 = vadd.f32 %v6760, %v6761
  %v6763 = vsel %vm3196, %v6657, 0.0
  %v6764 = vadd.f32 %v6762, %v6763
  %v6765 = vsel %vm3196, %v6658, 0.0
  %v6766 = vadd.f32 %v6764, %v6765
  %v6767 = vsel %vm3196, %v6659, 0.0
  %v6768 = vadd.f32 %v6766, %v6767
  %v6769 = vsel %vm3196, %v6660, 0.0
  %v6770 = vadd.f32 %v6768, %v6769
  %v6771 = vsel %vm3196, %v6661, 0.0
  %v6772 = vadd.f32 %v6770, %v6771
  %v6773 = vsel %vm3196, %v6662, 0.0
  %v6774 = vadd.f32 %v6772, %v6773
  %v6775 = vsel %vm3196, %v6663, 0.0
  %v6776 = vadd.f32 %v6774, %v6775
  %v6777 = vsel %vm3196, %v6664, 0.0
  %v6778 = vadd.f32 %v6776, %v6777
  %v6779 = vsel %vm3196, %v6665, 0.0
  %v6780 = vadd.f32 %v6778, %v6779
  %v6781 = vsel %vm3196, %v6666, 0.0
  %v6782 = vadd.f32 %v6780, %v6781
  %v6783 = vsel %vm3196, %v6667, 0.0
  %v6784 = vadd.f32 %v6782, %v6783
  %v6785 = vsel %vm3196, %v6668, 0.0
  %v6786 = vadd.f32 %v6784, %v6785
  %v6787 = vsel %vm3196, %v6669, 0.0
  %v6788 = vadd.f32 %v6786, %v6787
  %v6789 = vsel %vm3196, %v6670, 0.0
  %v6790 = vadd.f32 %v6788, %v6789
  %v6791 = vsel %vm3196, %v6671, 0.0
  %v6792 = vadd.f32 %v6790, %v6791
  %v6793 = vsel %vm3196, %v6672, 0.0
  %v6794 = vadd.f32 %v6792, %v6793
  %v6795 = vsel %vm3196, %v6673, 0.0
  %v6796 = vadd.f32 %v6794, %v6795
  %v6797 = vsel %vm3196, %v6674, 0.0
  %v6798 = vadd.f32 %v6796, %v6797
  %v6799 = vsel %vm3196, %v6675, 0.0
  %v6800 = vadd.f32 %v6798, %v6799
  %v6801 = vsel %vm3196, %v6676, 0.0
  %v6802 = vadd.f32 %v6800, %v6801
  %v6803 = vsel %vm3196, %v6677, 0.0
  %v6804 = vadd.f32 %v6802, %v6803
  %v6805 = vrot.slane %v6804, 4
  %v6806 = vadd.f32 %v6804, %v6805
  %v6807 = vrot.slane %v6806, 2
  %v6808 = vadd.f32 %v6806, %v6807
  %v6809 = vrot.slane %v6808, 1
  %v6810 = vadd.f32 %v6808, %v6809
  %v6811 = vmul.f32 %v6810, 0.001953125
  %v6812 = vld [vmem:[%s5] sm:$0x1]
  %v6813 = vadd.f32 %v6811, 1e-05
  %v6814 = vrsqrt.pop %v6813
  %v6815 = vmul.f32 %v6812, %v6814
  %v6816 = vld [vmem:[%s6] sm:$0x1]
  %v6817 = vmul.f32 %v6549, %v6815
  %v6818 = vsub.f32 %v6816, %v6817
  %v6820 = vlaneseq
  %v6821 = vshrl.u32 %v6820, 7
  %v6822 = vsub.s32 0, %v6821
  %v6823 = vrot.slane %v6815, %v6822
  %v6825 = vmul.f32 %v6162, %v6823
  %v6826 = vmul.f32 %v6165, %v6823
  %v6827 = vmul.f32 %v6170, %v6823
  %v6828 = vmul.f32 %v6173, %v6823
  %v6829 = vmul.f32 %v6178, %v6823
  %v6830 = vmul.f32 %v6181, %v6823
  %v6831 = vmul.f32 %v6186, %v6823
  %v6832 = vmul.f32 %v6189, %v6823
  %v6833 = vmul.f32 %v6194, %v6823
  %v6834 = vmul.f32 %v6197, %v6823
  %v6835 = vmul.f32 %v6202, %v6823
  %v6836 = vmul.f32 %v6205, %v6823
  %v6837 = vmul.f32 %v6210, %v6823
  %v6838 = vmul.f32 %v6213, %v6823
  %v6839 = vmul.f32 %v6218, %v6823
  %v6840 = vmul.f32 %v6221, %v6823
  %v6841 = vmul.f32 %v6226, %v6823
  %v6842 = vmul.f32 %v6229, %v6823
  %v6843 = vmul.f32 %v6234, %v6823
  %v6844 = vmul.f32 %v6237, %v6823
  %v6845 = vmul.f32 %v6242, %v6823
  %v6846 = vmul.f32 %v6245, %v6823
  %v6847 = vmul.f32 %v6250, %v6823
  %v6848 = vmul.f32 %v6253, %v6823
  %v6849 = vmul.f32 %v6258, %v6823
  %v6850 = vmul.f32 %v6261, %v6823
  %v6851 = vmul.f32 %v6266, %v6823
  %v6852 = vmul.f32 %v6269, %v6823
  %v6853 = vmul.f32 %v6274, %v6823
  %v6854 = vmul.f32 %v6277, %v6823
  %v6855 = vmul.f32 %v6282, %v6823
  %v6856 = vmul.f32 %v6285, %v6823
  %v6857 = vmul.f32 %v6290, %v6823
  %v6858 = vmul.f32 %v6293, %v6823
  %v6859 = vmul.f32 %v6298, %v6823
  %v6860 = vmul.f32 %v6301, %v6823
  %v6861 = vmul.f32 %v6306, %v6823
  %v6862 = vmul.f32 %v6309, %v6823
  %v6863 = vmul.f32 %v6314, %v6823
  %v6864 = vmul.f32 %v6317, %v6823
  %v6865 = vmul.f32 %v6322, %v6823
  %v6866 = vmul.f32 %v6325, %v6823
  %v6867 = vmul.f32 %v6330, %v6823
  %v6868 = vmul.f32 %v6333, %v6823
  %v6869 = vmul.f32 %v6338, %v6823
  %v6870 = vmul.f32 %v6341, %v6823
  %v6871 = vmul.f32 %v6346, %v6823
  %v6872 = vmul.f32 %v6349, %v6823
  %v6873 = vmul.f32 %v6354, %v6823
  %v6874 = vmul.f32 %v6357, %v6823
  %v6875 = vmul.f32 %v6362, %v6823
  %v6876 = vmul.f32 %v6365, %v6823
  %v6877 = vmul.f32 %v6370, %v6823
  %v6878 = vmul.f32 %v6373, %v6823
  %v6879 = vmul.f32 %v6378, %v6823
  %v6880 = vmul.f32 %v6381, %v6823
  %v6881 = vmul.f32 %v6386, %v6823
  %v6882 = vmul.f32 %v6389, %v6823
  %v6883 = vmul.f32 %v6394, %v6823
  %v6884 = vmul.f32 %v6397, %v6823
  %v6885 = vmul.f32 %v6402, %v6823
  %v6886 = vmul.f32 %v6405, %v6823
  %v6887 = vmul.f32 %v6410, %v6823
  %v6888 = vmul.f32 %v6413, %v6823
  %v6890 = vlaneseq
  %v6891 = vshrl.u32 %v6890, 7
  %v6892 = vsub.s32 0, %v6891
  %v6893 = vrot.slane %v6818, %v6892
  %v6895 = vadd.f32 %v6825, %v6893
  %v6896 = vadd.f32 %v6826, %v6893
  %v6897 = vadd.f32 %v6827, %v6893
  %v6898 = vadd.f32 %v6828, %v6893
  %v6899 = vadd.f32 %v6829, %v6893
  %v6900 = vadd.f32 %v6830, %v6893
  %v6901 = vadd.f32 %v6831, %v6893
  %v6902 = vadd.f32 %v6832, %v6893
  %v6903 = vadd.f32 %v6833, %v6893
  %v6904 = vadd.f32 %v6834, %v6893
  %v6905 = vadd.f32 %v6835, %v6893
  %v6906 = vadd.f32 %v6836, %v6893
  %v6907 = vadd.f32 %v6837, %v6893
  %v6908 = vadd.f32 %v6838, %v6893
  %v6909 = vadd.f32 %v6839, %v6893
  %v6910 = vadd.f32 %v6840, %v6893
  %v6911 = vadd.f32 %v6841, %v6893
  %v6912 = vadd.f32 %v6842, %v6893
  %v6913 = vadd.f32 %v6843, %v6893
  %v6914 = vadd.f32 %v6844, %v6893
  %v6915 = vadd.f32 %v6845, %v6893
  %v6916 = vadd.f32 %v6846, %v6893
  %v6917 = vadd.f32 %v6847, %v6893
  %v6918 = vadd.f32 %v6848, %v6893
  %v6919 = vadd.f32 %v6849, %v6893
  %v6920 = vadd.f32 %v6850, %v6893
  %v6921 = vadd.f32 %v6851, %v6893
  %v6922 = vadd.f32 %v6852, %v6893
  %v6923 = vadd.f32 %v6853, %v6893
  %v6924 = vadd.f32 %v6854, %v6893
  %v6925 = vadd.f32 %v6855, %v6893
  %v6926 = vadd.f32 %v6856, %v6893
  %v6927 = vadd.f32 %v6857, %v6893
  %v6928 = vadd.f32 %v6858, %v6893
  %v6929 = vadd.f32 %v6859, %v6893
  %v6930 = vadd.f32 %v6860, %v6893
  %v6931 = vadd.f32 %v6861, %v6893
  %v6932 = vadd.f32 %v6862, %v6893
  %v6933 = vadd.f32 %v6863, %v6893
  %v6934 = vadd.f32 %v6864, %v6893
  %v6935 = vadd.f32 %v6865, %v6893
  %v6936 = vadd.f32 %v6866, %v6893
  %v6937 = vadd.f32 %v6867, %v6893
  %v6938 = vadd.f32 %v6868, %v6893
  %v6939 = vadd.f32 %v6869, %v6893
  %v6940 = vadd.f32 %v6870, %v6893
  %v6941 = vadd.f32 %v6871, %v6893
  %v6942 = vadd.f32 %v6872, %v6893
  %v6943 = vadd.f32 %v6873, %v6893
  %v6944 = vadd.f32 %v6874, %v6893
  %v6945 = vadd.f32 %v6875, %v6893
  %v6946 = vadd.f32 %v6876, %v6893
  %v6947 = vadd.f32 %v6877, %v6893
  %v6948 = vadd.f32 %v6878, %v6893
  %v6949 = vadd.f32 %v6879, %v6893
  %v6950 = vadd.f32 %v6880, %v6893
  %v6951 = vadd.f32 %v6881, %v6893
  %v6952 = vadd.f32 %v6882, %v6893
  %v6953 = vadd.f32 %v6883, %v6893
  %v6954 = vadd.f32 %v6884, %v6893
  %v6955 = vadd.f32 %v6885, %v6893
  %v6956 = vadd.f32 %v6886, %v6893
  %v6957 = vadd.f32 %v6887, %v6893
  %v6958 = vadd.f32 %v6888, %v6893
  %v6959 = vmax.f32 %v6895, 0.0
  %v6960 = vmax.f32 %v6896, 0.0
  %v6961 = vmax.f32 %v6897, 0.0
  %v6962 = vmax.f32 %v6898, 0.0
  %v6963 = vmax.f32 %v6899, 0.0
  %v6964 = vmax.f32 %v6900, 0.0
  %v6965 = vmax.f32 %v6901, 0.0
  %v6966 = vmax.f32 %v6902, 0.0
  %v6967 = vmax.f32 %v6903, 0.0
  %v6968 = vmax.f32 %v6904, 0.0
  %v6969 = vmax.f32 %v6905, 0.0
  %v6970 = vmax.f32 %v6906, 0.0
  %v6971 = vmax.f32 %v6907, 0.0
  %v6972 = vmax.f32 %v6908, 0.0
  %v6973 = vmax.f32 %v6909, 0.0
  %v6974 = vmax.f32 %v6910, 0.0
  %v6975 = vmax.f32 %v6911, 0.0
  %v6976 = vmax.f32 %v6912, 0.0
  %v6977 = vmax.f32 %v6913, 0.0
  %v6978 = vmax.f32 %v6914, 0.0
  %v6979 = vmax.f32 %v6915, 0.0
  %v6980 = vmax.f32 %v6916, 0.0
  %v6981 = vmax.f32 %v6917, 0.0
  %v6982 = vmax.f32 %v6918, 0.0
  %v6983 = vmax.f32 %v6919, 0.0
  %v6984 = vmax.f32 %v6920, 0.0
  %v6985 = vmax.f32 %v6921, 0.0
  %v6986 = vmax.f32 %v6922, 0.0
  %v6987 = vmax.f32 %v6923, 0.0
  %v6988 = vmax.f32 %v6924, 0.0
  %v6989 = vmax.f32 %v6925, 0.0
  %v6990 = vmax.f32 %v6926, 0.0
  %v6991 = vmax.f32 %v6927, 0.0
  %v6992 = vmax.f32 %v6928, 0.0
  %v6993 = vmax.f32 %v6929, 0.0
  %v6994 = vmax.f32 %v6930, 0.0
  %v6995 = vmax.f32 %v6931, 0.0
  %v6996 = vmax.f32 %v6932, 0.0
  %v6997 = vmax.f32 %v6933, 0.0
  %v6998 = vmax.f32 %v6934, 0.0
  %v6999 = vmax.f32 %v6935, 0.0
  %v7000 = vmax.f32 %v6936, 0.0
  %v7001 = vmax.f32 %v6937, 0.0
  %v7002 = vmax.f32 %v6938, 0.0
  %v7003 = vmax.f32 %v6939, 0.0
  %v7004 = vmax.f32 %v6940, 0.0
  %v7005 = vmax.f32 %v6941, 0.0
  %v7006 = vmax.f32 %v6942, 0.0
  %v7007 = vmax.f32 %v6943, 0.0
  %v7008 = vmax.f32 %v6944, 0.0
  %v7009 = vmax.f32 %v6945, 0.0
  %v7010 = vmax.f32 %v6946, 0.0
  %v7011 = vmax.f32 %v6947, 0.0
  %v7012 = vmax.f32 %v6948, 0.0
  %v7013 = vmax.f32 %v6949, 0.0
  %v7014 = vmax.f32 %v6950, 0.0
  %v7015 = vmax.f32 %v6951, 0.0
  %v7016 = vmax.f32 %v6952, 0.0
  %v7017 = vmax.f32 %v6953, 0.0
  %v7018 = vmax.f32 %v6954, 0.0
  %v7019 = vmax.f32 %v6955, 0.0
  %v7020 = vmax.f32 %v6956, 0.0
  %v7021 = vmax.f32 %v6957, 0.0
  %v7022 = vmax.f32 %v6958, 0.0
  %7023 = vst.msk [vmem:[#allocation3] sm:$0xff] %vm3196, 0.0
  %7024 = vst.msk [vmem:[#allocation3 + $0x8] sm:$0xff] %vm3196, 0.0
  %vm7025 = vcmask 25600
  %7026 = vst.msk [vmem:[#allocation3 + $0x10] sm:$0x3] %vm7025, 0.0
  %7027 = vst.msk [vmem:[#allocation3 + $0x18] sm:$0xff] %vm3196, 0.0
  %7028 = vst.msk [vmem:[#allocation3 + $0x20] sm:$0xff] %vm3196, 0.0
  %7029 = vst.msk [vmem:[#allocation3 + $0x28] sm:$0x3] %vm7025, 0.0
  %7030 = vst.msk [vmem:[#allocation3 + $0x30] sm:$0xff] %vm3196, 0.0
  %7031 = vst.msk [vmem:[#allocation3 + $0x38] sm:$0xff] %vm3196, 0.0
  %7032 = vst.msk [vmem:[#allocation3 + $0x40] sm:$0x3] %vm7025, 0.0
  %7033 = vst.msk [vmem:[#allocation3 + $0x48] sm:$0xff] %vm3196, 0.0
  %7034 = vst.msk [vmem:[#allocation3 + $0x50] sm:$0xff] %vm3196, 0.0
  %7035 = vst.msk [vmem:[#allocation3 + $0x58] sm:$0x3] %vm7025, 0.0
  %7036 = vst.msk [vmem:[#allocation3 + $0x60] sm:$0xff] %vm3196, 0.0
  %7037 = vst.msk [vmem:[#allocation3 + $0x68] sm:$0xff] %vm3196, 0.0
  %7038 = vst.msk [vmem:[#allocation3 + $0x70] sm:$0x3] %vm7025, 0.0
  %7039 = vst.msk [vmem:[#allocation3 + $0x78] sm:$0xff] %vm3196, 0.0
  %7040 = vst.msk [vmem:[#allocation3 + $0x80] sm:$0xff] %vm3196, 0.0
  %7041 = vst.msk [vmem:[#allocation3 + $0x88] sm:$0x3] %vm7025, 0.0
  %7042 = vst.msk [vmem:[#allocation3 + $0x90] sm:$0xff] %vm3196, 0.0
  %7043 = vst.msk [vmem:[#allocation3 + $0x98] sm:$0xff] %vm3196, 0.0
  %7044 = vst.msk [vmem:[#allocation3 + $0xa0] sm:$0x3] %vm7025, 0.0
  %7045 = vst.msk [vmem:[#allocation3 + $0xa8] sm:$0xff] %vm3196, 0.0
  %7046 = vst.msk [vmem:[#allocation3 + $0xb0] sm:$0xff] %vm3196, 0.0
  %7047 = vst.msk [vmem:[#allocation3 + $0xb8] sm:$0x3] %vm7025, 0.0
  %7048 = vst.msk [vmem:[#allocation3 + $0xc0] sm:$0xff] %vm3196, 0.0
  %7049 = vst.msk [vmem:[#allocation3 + $0xc8] sm:$0xff] %vm3196, 0.0
  %7050 = vst.msk [vmem:[#allocation3 + $0xd0] sm:$0x3] %vm7025, 0.0
  %7051 = vst.msk [vmem:[#allocation3 + $0xd8] sm:$0xff] %vm3196, 0.0
  %7052 = vst.msk [vmem:[#allocation3 + $0xe0] sm:$0xff] %vm3196, 0.0
  %7053 = vst.msk [vmem:[#allocation3 + $0xe8] sm:$0x3] %vm7025, 0.0
  %7054 = vst.msk [vmem:[#allocation3 + $0xf0] sm:$0xff] %vm3196, 0.0
  %7055 = vst.msk [vmem:[#allocation3 + $0xf8] sm:$0xff] %vm3196, 0.0
  %7056 = vst.msk [vmem:[#allocation3 + $0x100] sm:$0x3] %vm7025, 0.0
  %7057 = vst.msk [vmem:[#allocation3 + $0x108] sm:$0xff] %vm3196, 0.0
  %7058 = vst.msk [vmem:[#allocation3 + $0x110] sm:$0xff] %vm3196, 0.0
  %7059 = vst.msk [vmem:[#allocation3 + $0x118] sm:$0x3] %vm7025, 0.0
  %7060 = vst.msk [vmem:[#allocation3 + $0x120] sm:$0xff] %vm3196, 0.0
  %7061 = vst.msk [vmem:[#allocation3 + $0x128] sm:$0xff] %vm3196, 0.0
  %7062 = vst.msk [vmem:[#allocation3 + $0x130] sm:$0x3] %vm7025, 0.0
  %7063 = vst.msk [vmem:[#allocation3 + $0x138] sm:$0xff] %vm3196, 0.0
  %7064 = vst.msk [vmem:[#allocation3 + $0x140] sm:$0xff] %vm3196, 0.0
  %7065 = vst.msk [vmem:[#allocation3 + $0x148] sm:$0x3] %vm7025, 0.0
  %7066 = vst.msk [vmem:[#allocation3 + $0x150] sm:$0xff] %vm3196, 0.0
  %7067 = vst.msk [vmem:[#allocation3 + $0x158] sm:$0xff] %vm3196, 0.0
  %7068 = vst.msk [vmem:[#allocation3 + $0x160] sm:$0x3] %vm7025, 0.0
  %7069 = vst.msk [vmem:[#allocation3 + $0x168] sm:$0xff] %vm3196, 0.0
  %7070 = vst.msk [vmem:[#allocation3 + $0x170] sm:$0xff] %vm3196, 0.0
  %7071 = vst.msk [vmem:[#allocation3 + $0x178] sm:$0x3] %vm7025, 0.0
  %7072 = vst.msk [vmem:[#allocation3 + $0x180] sm:$0xff] %vm3196, 0.0
  %7073 = vst.msk [vmem:[#allocation3 + $0x188] sm:$0xff] %vm3196, 0.0
  %7074 = vst.msk [vmem:[#allocation3 + $0x190] sm:$0x3] %vm7025, 0.0
  %7075 = vst.msk [vmem:[#allocation3 + $0x198] sm:$0xff] %vm3196, 0.0
  %7076 = vst.msk [vmem:[#allocation3 + $0x1a0] sm:$0xff] %vm3196, 0.0
  %7077 = vst.msk [vmem:[#allocation3 + $0x1a8] sm:$0x3] %vm7025, 0.0
  %7078 = vst.msk [vmem:[#allocation3 + $0x1b0] sm:$0xff] %vm3196, 0.0
  %7079 = vst.msk [vmem:[#allocation3 + $0x1b8] sm:$0xff] %vm3196, 0.0
  %7080 = vst.msk [vmem:[#allocation3 + $0x1c0] sm:$0x3] %vm7025, 0.0
  %7081 = vst.msk [vmem:[#allocation3 + $0x1c8] sm:$0xff] %vm3196, 0.0
  %7082 = vst.msk [vmem:[#allocation3 + $0x1d0] sm:$0xff] %vm3196, 0.0
  %7083 = vst.msk [vmem:[#allocation3 + $0x1d8] sm:$0x3] %vm7025, 0.0
  %7084 = vst.msk [vmem:[#allocation3 + $0x1e0] sm:$0xff] %vm3196, 0.0
  %7085 = vst.msk [vmem:[#allocation3 + $0x1e8] sm:$0xff] %vm3196, 0.0
  %7086 = vst.msk [vmem:[#allocation3 + $0x1f0] sm:$0x3] %vm7025, 0.0
  %7087 = vst.msk [vmem:[#allocation3 + $0x1f8] sm:$0xff] %vm3196, 0.0
  %7088 = vst.msk [vmem:[#allocation3 + $0x200] sm:$0xff] %vm3196, 0.0
  %7089 = vst.msk [vmem:[#allocation3 + $0x208] sm:$0x3] %vm7025, 0.0
  %7090 = vst.msk [vmem:[#allocation3 + $0x210] sm:$0xff] %vm3196, 0.0
  %7091 = vst.msk [vmem:[#allocation3 + $0x218] sm:$0xff] %vm3196, 0.0
  %7092 = vst.msk [vmem:[#allocation3 + $0x220] sm:$0x3] %vm7025, 0.0
  %7093 = vst.msk [vmem:[#allocation3 + $0x228] sm:$0xff] %vm3196, 0.0
  %7094 = vst.msk [vmem:[#allocation3 + $0x230] sm:$0xff] %vm3196, 0.0
  %7095 = vst.msk [vmem:[#allocation3 + $0x238] sm:$0x3] %vm7025, 0.0
  %7096 = vst.msk [vmem:[#allocation3 + $0x240] sm:$0xff] %vm3196, 0.0
  %7097 = vst.msk [vmem:[#allocation3 + $0x248] sm:$0xff] %vm3196, 0.0
  %7098 = vst.msk [vmem:[#allocation3 + $0x250] sm:$0x3] %vm7025, 0.0
  %7099 = vst.msk [vmem:[#allocation3 + $0x258] sm:$0xff] %vm3196, 0.0
  %7100 = vst.msk [vmem:[#allocation3 + $0x260] sm:$0xff] %vm3196, 0.0
  %7101 = vst.msk [vmem:[#allocation3 + $0x268] sm:$0x3] %vm7025, 0.0
  %7102 = vst.msk [vmem:[#allocation3 + $0x270] sm:$0xff] %vm3196, 0.0
  %7103 = vst.msk [vmem:[#allocation3 + $0x278] sm:$0xff] %vm3196, 0.0
  %7104 = vst.msk [vmem:[#allocation3 + $0x280] sm:$0x3] %vm7025, 0.0
  %7105 = vst.msk [vmem:[#allocation3 + $0x288] sm:$0xff] %vm3196, 0.0
  %7106 = vst.msk [vmem:[#allocation3 + $0x290] sm:$0xff] %vm3196, 0.0
  %7107 = vst.msk [vmem:[#allocation3 + $0x298] sm:$0x3] %vm7025, 0.0
  %7108 = vst.msk [vmem:[#allocation3 + $0x2a0] sm:$0xff] %vm3196, 0.0
  %7109 = vst.msk [vmem:[#allocation3 + $0x2a8] sm:$0xff] %vm3196, 0.0
  %7110 = vst.msk [vmem:[#allocation3 + $0x2b0] sm:$0x3] %vm7025, 0.0
  %7111 = vst.msk [vmem:[#allocation3 + $0x2b8] sm:$0xff] %vm3196, 0.0
  %7112 = vst.msk [vmem:[#allocation3 + $0x2c0] sm:$0xff] %vm3196, 0.0
  %7113 = vst.msk [vmem:[#allocation3 + $0x2c8] sm:$0x3] %vm7025, 0.0
  %7114 = vst.msk [vmem:[#allocation3 + $0x2d0] sm:$0xff] %vm3196, 0.0
  %7115 = vst.msk [vmem:[#allocation3 + $0x2d8] sm:$0xff] %vm3196, 0.0
  %7116 = vst.msk [vmem:[#allocation3 + $0x2e0] sm:$0x3] %vm7025, 0.0
  %7117 = vst.msk [vmem:[#allocation3 + $0x2e8] sm:$0xff] %vm3196, 0.0
  %7118 = vst.msk [vmem:[#allocation3 + $0x2f0] sm:$0xff] %vm3196, 0.0
  %7119 = vst.msk [vmem:[#allocation3 + $0x2f8] sm:$0x3] %vm7025, 0.0
  %7120 = vst.msk [vmem:[#allocation3 + $0x300] sm:$0xff] %vm3196, 0.0
  %7121 = vst.msk [vmem:[#allocation3 + $0x308] sm:$0xff] %vm3196, 0.0
  %7122 = vst.msk [vmem:[#allocation3 + $0x310] sm:$0x3] %vm7025, 0.0
  %7123 = vst.msk [vmem:[#allocation3 + $0x318] sm:$0xff] %vm3196, 0.0
  %7124 = vst.msk [vmem:[#allocation3 + $0x320] sm:$0xff] %vm3196, 0.0
  %7125 = vst.msk [vmem:[#allocation3 + $0x328] sm:$0x3] %vm7025, 0.0
  %7126 = vst.msk [vmem:[#allocation3 + $0x330] sm:$0xff] %vm3196, 0.0
  %7127 = vst.msk [vmem:[#allocation3 + $0x338] sm:$0xff] %vm3196, 0.0
  %7128 = vst.msk [vmem:[#allocation3 + $0x340] sm:$0x3] %vm7025, 0.0
  %7129 = vst.msk [vmem:[#allocation3 + $0x348] sm:$0xff] %vm3196, 0.0
  %7130 = vst.msk [vmem:[#allocation3 + $0x350] sm:$0xff] %vm3196, 0.0
  %7131 = vst.msk [vmem:[#allocation3 + $0x358] sm:$0x3] %vm7025, 0.0
  %s7132 = scalar_lea.vmem [#allocation3], 24
  %7133 = vst.msk [vmem:[%s7132 + $0x1] sm:$0xff] %vm3196, %v6959
  %7134 = vst.msk [vmem:[%s7132 + $0x9] sm:$0xff] %vm3196, %v6960
  %7135 = vst.msk [vmem:[%s7132 + $0x19] sm:$0xff] %vm3196, %v6961
  %7136 = vst.msk [vmem:[%s7132 + $0x21] sm:$0xff] %vm3196, %v6962
  %7137 = vst.msk [vmem:[%s7132 + $0x31] sm:$0xff] %vm3196, %v6963
  %7138 = vst.msk [vmem:[%s7132 + $0x39] sm:$0xff] %vm3196, %v6964
  %7139 = vst.msk [vmem:[%s7132 + $0x49] sm:$0xff] %vm3196, %v6965
  %7140 = vst.msk [vmem:[%s7132 + $0x51] sm:$0xff] %vm3196, %v6966
  %7141 = vst.msk [vmem:[%s7132 + $0x61] sm:$0xff] %vm3196, %v6967
  %7142 = vst.msk [vmem:[%s7132 + $0x69] sm:$0xff] %vm3196, %v6968
  %7143 = vst.msk [vmem:[%s7132 + $0x79] sm:$0xff] %vm3196, %v6969
  %7144 = vst.msk [vmem:[%s7132 + $0x81] sm:$0xff] %vm3196, %v6970
  %7145 = vst.msk [vmem:[%s7132 + $0x91] sm:$0xff] %vm3196, %v6971
  %7146 = vst.msk [vmem:[%s7132 + $0x99] sm:$0xff] %vm3196, %v6972
  %7147 = vst.msk [vmem:[%s7132 + $0xa9] sm:$0xff] %vm3196, %v6973
  %7148 = vst.msk [vmem:[%s7132 + $0xb1] sm:$0xff] %vm3196, %v6974
  %7149 = vst.msk [vmem:[%s7132 + $0xc1] sm:$0xff] %vm3196, %v6975
  %7150 = vst.msk [vmem:[%s7132 + $0xc9] sm:$0xff] %vm3196, %v6976
  %7151 = vst.msk [vmem:[%s7132 + $0xd9] sm:$0xff] %vm3196, %v6977
  %7152 = vst.msk [vmem:[%s7132 + $0xe1] sm:$0xff] %vm3196, %v6978
  %7153 = vst.msk [vmem:[%s7132 + $0xf1] sm:$0xff] %vm3196, %v6979
  %7154 = vst.msk [vmem:[%s7132 + $0xf9] sm:$0xff] %vm3196, %v6980
  %7155 = vst.msk [vmem:[%s7132 + $0x109] sm:$0xff] %vm3196, %v6981
  %7156 = vst.msk [vmem:[%s7132 + $0x111] sm:$0xff] %vm3196, %v6982
  %7157 = vst.msk [vmem:[%s7132 + $0x121] sm:$0xff] %vm3196, %v6983
  %7158 = vst.msk [vmem:[%s7132 + $0x129] sm:$0xff] %vm3196, %v6984
  %7159 = vst.msk [vmem:[%s7132 + $0x139] sm:$0xff] %vm3196, %v6985
  %7160 = vst.msk [vmem:[%s7132 + $0x141] sm:$0xff] %vm3196, %v6986
  %7161 = vst.msk [vmem:[%s7132 + $0x151] sm:$0xff] %vm3196, %v6987
  %7162 = vst.msk [vmem:[%s7132 + $0x159] sm:$0xff] %vm3196, %v6988
  %7163 = vst.msk [vmem:[%s7132 + $0x169] sm:$0xff] %vm3196, %v6989
  %7164 = vst.msk [vmem:[%s7132 + $0x171] sm:$0xff] %vm3196, %v6990
  %7165 = vst.msk [vmem:[%s7132 + $0x1b1] sm:$0xff] %vm3196, %v6991
  %7166 = vst.msk [vmem:[%s7132 + $0x1b9] sm:$0xff] %vm3196, %v6992
  %7167 = vst.msk [vmem:[%s7132 + $0x1c9] sm:$0xff] %vm3196, %v6993
  %7168 = vst.msk [vmem:[%s7132 + $0x1d1] sm:$0xff] %vm3196, %v6994
  %7169 = vst.msk [vmem:[%s7132 + $0x1e1] sm:$0xff] %vm3196, %v6995
  %7170 = vst.msk [vmem:[%s7132 + $0x1e9] sm:$0xff] %vm3196, %v6996
  %7171 = vst.msk [vmem:[%s7132 + $0x1f9] sm:$0xff] %vm3196, %v6997
  %7172 = vst.msk [vmem:[%s7132 + $0x201] sm:$0xff] %vm3196, %v6998
  %7173 = vst.msk [vmem:[%s7132 + $0x211] sm:$0xff] %vm3196, %v6999
  %7174 = vst.msk [vmem:[%s7132 + $0x219] sm:$0xff] %vm3196, %v7000
  %7175 = vst.msk [vmem:[%s7132 + $0x229] sm:$0xff] %vm3196, %v7001
  %7176 = vst.msk [vmem:[%s7132 + $0x231] sm:$0xff] %vm3196, %v7002
  %7177 = vst.msk [vmem:[%s7132 + $0x241] sm:$0xff] %vm3196, %v7003
  %7178 = vst.msk [vmem:[%s7132 + $0x249] sm:$0xff] %vm3196, %v7004
  %7179 = vst.msk [vmem:[%s7132 + $0x259] sm:$0xff] %vm3196, %v7005
  %7180 = vst.msk [vmem:[%s7132 + $0x261] sm:$0xff] %vm3196, %v7006
  %7181 = vst.msk [vmem:[%s7132 + $0x271] sm:$0xff] %vm3196, %v7007
  %7182 = vst.msk [vmem:[%s7132 + $0x279] sm:$0xff] %vm3196, %v7008
  %7183 = vst.msk [vmem:[%s7132 + $0x289] sm:$0xff] %vm3196, %v7009
  %7184 = vst.msk [vmem:[%s7132 + $0x291] sm:$0xff] %vm3196, %v7010
  %7185 = vst.msk [vmem:[%s7132 + $0x2a1] sm:$0xff] %vm3196, %v7011
  %7186 = vst.msk [vmem:[%s7132 + $0x2a9] sm:$0xff] %vm3196, %v7012
  %7187 = vst.msk [vmem:[%s7132 + $0x2b9] sm:$0xff] %vm3196, %v7013
  %7188 = vst.msk [vmem:[%s7132 + $0x2c1] sm:$0xff] %vm3196, %v7014
  %7189 = vst.msk [vmem:[%s7132 + $0x2d1] sm:$0xff] %vm3196, %v7015
  %7190 = vst.msk [vmem:[%s7132 + $0x2d9] sm:$0xff] %vm3196, %v7016
  %7191 = vst.msk [vmem:[%s7132 + $0x2e9] sm:$0xff] %vm3196, %v7017
  %7192 = vst.msk [vmem:[%s7132 + $0x2f1] sm:$0xff] %vm3196, %v7018
  %7193 = vst.msk [vmem:[%s7132 + $0x301] sm:$0xff] %vm3196, %v7019
  %7194 = vst.msk [vmem:[%s7132 + $0x309] sm:$0xff] %vm3196, %v7020
  %7195 = vst.msk [vmem:[%s7132 + $0x319] sm:$0xff] %vm3196, %v7021
  %7196 = vst.msk [vmem:[%s7132 + $0x321] sm:$0xff] %vm3196, %v7022
  %v7197 = vld [vmem:[#allocation3] sm:$0xff]
  %v7198 = vld [vmem:[#allocation3 + $0x8] sm:$0xff]
  %v7199 = vld [vmem:[#allocation3 + $0x10] sm:$0x3]
  %v7200 = vld [vmem:[#allocation3 + $0x18] sm:$0xff]
  %v7201 = vld [vmem:[#allocation3 + $0x20] sm:$0xff]
  %v7202 = vld [vmem:[#allocation3 + $0x28] sm:$0x3]
  %v7203 = vld [vmem:[#allocation3 + $0x30] sm:$0xff]
  %v7204 = vld [vmem:[#allocation3 + $0x38] sm:$0xff]
  %v7205 = vld [vmem:[#allocation3 + $0x40] sm:$0x3]
  %v7206 = vld [vmem:[#allocation3 + $0x48] sm:$0xff]
  %v7207 = vld [vmem:[#allocation3 + $0x50] sm:$0xff]
  %v7208 = vld [vmem:[#allocation3 + $0x58] sm:$0x3]
  %v7209 = vld [vmem:[#allocation3 + $0x60] sm:$0xff]
  %v7210 = vld [vmem:[#allocation3 + $0x68] sm:$0xff]
  %v7211 = vld [vmem:[#allocation3 + $0x70] sm:$0x3]
  %v7212 = vld [vmem:[#allocation3 + $0x78] sm:$0xff]
  %v7213 = vld [vmem:[#allocation3 + $0x80] sm:$0xff]
  %v7214 = vld [vmem:[#allocation3 + $0x88] sm:$0x3]
  %v7215 = vld [vmem:[#allocation3 + $0x90] sm:$0xff]
  %v7216 = vld [vmem:[#allocation3 + $0x98] sm:$0xff]
  %v7217 = vld [vmem:[#allocation3 + $0xa0] sm:$0x3]
  %v7218 = vld [vmem:[#allocation3 + $0xa8] sm:$0xff]
  %v7219 = vld [vmem:[#allocation3 + $0xb0] sm:$0xff]
  %v7220 = vld [vmem:[#allocation3 + $0xb8] sm:$0x3]
  %v7221 = vld [vmem:[#allocation3 + $0xc0] sm:$0xff]
  %v7222 = vld [vmem:[#allocation3 + $0xc8] sm:$0xff]
  %v7223 = vld [vmem:[#allocation3 + $0xd0] sm:$0x3]
  %v7224 = vld [vmem:[#allocation3 + $0xd8] sm:$0xff]
  %v7225 = vld [vmem:[#allocation3 + $0xe0] sm:$0xff]
  %v7226 = vld [vmem:[#allocation3 + $0xe8] sm:$0x3]
  %v7227 = vld [vmem:[#allocation3 + $0xf0] sm:$0xff]
  %v7228 = vld [vmem:[#allocation3 + $0xf8] sm:$0xff]
  %v7229 = vld [vmem:[#allocation3 + $0x100] sm:$0x3]
  %v7230 = vld [vmem:[#allocation3 + $0x108] sm:$0xff]
  %v7231 = vld [vmem:[#allocation3 + $0x110] sm:$0xff]
  %v7232 = vld [vmem:[#allocation3 + $0x118] sm:$0x3]
  %v7233 = vld [vmem:[#allocation3 + $0x120] sm:$0xff]
  %v7234 = vld [vmem:[#allocation3 + $0x128] sm:$0xff]
  %v7235 = vld [vmem:[#allocation3 + $0x130] sm:$0x3]
  %v7236 = vld [vmem:[#allocation3 + $0x138] sm:$0xff]
  %v7237 = vld [vmem:[#allocation3 + $0x140] sm:$0xff]
  %v7238 = vld [vmem:[#allocation3 + $0x148] sm:$0x3]
  %v7239 = vld [vmem:[#allocation3 + $0x150] sm:$0xff]
  %v7240 = vld [vmem:[#allocation3 + $0x158] sm:$0xff]
  %v7241 = vld [vmem:[#allocation3 + $0x160] sm:$0x3]
  %v7242 = vld [vmem:[#allocation3 + $0x168] sm:$0xff]
  %v7243 = vld [vmem:[#allocation3 + $0x170] sm:$0xff]
  %v7244 = vld [vmem:[#allocation3 + $0x178] sm:$0x3]
  %v7245 = vld [vmem:[#allocation3 + $0x180] sm:$0xff]
  %v7246 = vld [vmem:[#allocation3 + $0x188] sm:$0xff]
  %v7247 = vld [vmem:[#allocation3 + $0x190] sm:$0x3]
  %v7248 = vld [vmem:[#allocation3 + $0x198] sm:$0xff]
  %v7249 = vld [vmem:[#allocation3 + $0x1a0] sm:$0xff]
  %v7250 = vld [vmem:[#allocation3 + $0x1a8] sm:$0x3]
  %v7251 = vld [vmem:[#allocation3 + $0x1b0] sm:$0xff]
  %v7252 = vld [vmem:[#allocation3 + $0x1b8] sm:$0xff]
  %v7253 = vld [vmem:[#allocation3 + $0x1c0] sm:$0x3]
  %v7254 = vld [vmem:[#allocation3 + $0x1c8] sm:$0xff]
  %v7255 = vld [vmem:[#allocation3 + $0x1d0] sm:$0xff]
  %v7256 = vld [vmem:[#allocation3 + $0x1d8] sm:$0x3]
  %v7257 = vld [vmem:[#allocation3 + $0x1e0] sm:$0xff]
  %v7258 = vld [vmem:[#allocation3 + $0x1e8] sm:$0xff]
  %v7259 = vld [vmem:[#allocation3 + $0x1f0] sm:$0x3]
  %v7260 = vld [vmem:[#allocation3 + $0x1f8] sm:$0xff]
  %v7261 = vld [vmem:[#allocation3 + $0x200] sm:$0xff]
  %v7262 = vld [vmem:[#allocation3 + $0x208] sm:$0x3]
  %v7263 = vld [vmem:[#allocation3 + $0x210] sm:$0xff]
  %v7264 = vld [vmem:[#allocation3 + $0x218] sm:$0xff]
  %v7265 = vld [vmem:[#allocation3 + $0x220] sm:$0x3]
  %v7266 = vld [vmem:[#allocation3 + $0x228] sm:$0xff]
  %v7267 = vld [vmem:[#allocation3 + $0x230] sm:$0xff]
  %v7268 = vld [vmem:[#allocation3 + $0x238] sm:$0x3]
  %v7269 = vld [vmem:[#allocation3 + $0x240] sm:$0xff]
  %v7270 = vld [vmem:[#allocation3 + $0x248] sm:$0xff]
  %v7271 = vld [vmem:[#allocation3 + $0x250] sm:$0x3]
  %v7272 = vld [vmem:[#allocation3 + $0x258] sm:$0xff]
  %v7273 = vld [vmem:[#allocation3 + $0x260] sm:$0xff]
  %v7274 = vld [vmem:[#allocation3 + $0x268] sm:$0x3]
  %v7275 = vld [vmem:[#allocation3 + $0x270] sm:$0xff]
  %v7276 = vld [vmem:[#allocation3 + $0x278] sm:$0xff]
  %v7277 = vld [vmem:[#allocation3 + $0x280] sm:$0x3]
  %v7278 = vld [vmem:[#allocation3 + $0x288] sm:$0xff]
  %v7279 = vld [vmem:[#allocation3 + $0x290] sm:$0xff]
  %v7280 = vld [vmem:[#allocation3 + $0x298] sm:$0x3]
  %v7281 = vld [vmem:[#allocation3 + $0x2a0] sm:$0xff]
  %v7282 = vld [vmem:[#allocation3 + $0x2a8] sm:$0xff]
  %v7283 = vld [vmem:[#allocation3 + $0x2b0] sm:$0x3]
  %v7284 = vld [vmem:[#allocation3 + $0x2b8] sm:$0xff]
  %v7285 = vld [vmem:[#allocation3 + $0x2c0] sm:$0xff]
  %v7286 = vld [vmem:[#allocation3 + $0x2c8] sm:$0x3]
  %v7287 = vld [vmem:[#allocation3 + $0x2d0] sm:$0xff]
  %v7288 = vld [vmem:[#allocation3 + $0x2d8] sm:$0xff]
  %v7289 = vld [vmem:[#allocation3 + $0x2e0] sm:$0x3]
  %v7290 = vld [vmem:[#allocation3 + $0x2e8] sm:$0xff]
  %v7291 = vld [vmem:[#allocation3 + $0x2f0] sm:$0xff]
  %v7292 = vld [vmem:[#allocation3 + $0x2f8] sm:$0x3]
  %v7293 = vld [vmem:[#allocation3 + $0x300] sm:$0xff]
  %v7294 = vld [vmem:[#allocation3 + $0x308] sm:$0xff]
  %v7295 = vld [vmem:[#allocation3 + $0x310] sm:$0x3]
  %v7296 = vld [vmem:[#allocation3 + $0x318] sm:$0xff]
  %v7297 = vld [vmem:[#allocation3 + $0x320] sm:$0xff]
  %v7298 = vld [vmem:[#allocation3 + $0x328] sm:$0x3]
  %v7299 = vld [vmem:[#allocation3 + $0x330] sm:$0xff]
  %v7300 = vld [vmem:[#allocation3 + $0x338] sm:$0xff]
  %v7301 = vld [vmem:[#allocation3 + $0x340] sm:$0x3]
  %v7302 = vld [vmem:[#allocation3 + $0x348] sm:$0xff]
  %v7303 = vld [vmem:[#allocation3 + $0x350] sm:$0xff]
  %v7304 = vld [vmem:[#allocation3 + $0x358] sm:$0x3]
  %v7401 = vrot.slane %v7197, 1
  %v7402 = vrot.slane %v7198, 1
  %v7403 = vsel %vm3530, %v7401, %v7402
  %v7404 = vrot.slane %v7199, 1
  %v7405 = vsel %vm3530, %v7402, %v7404
  %v7406 = vrot.slane %v7200, 1
  %v7407 = vrot.slane %v7201, 1
  %v7408 = vsel %vm3530, %v7406, %v7407
  %v7409 = vrot.slane %v7202, 1
  %v7410 = vsel %vm3530, %v7407, %v7409
  %v7411 = vrot.slane %v7203, 1
  %v7412 = vrot.slane %v7204, 1
  %v7413 = vsel %vm3530, %v7411, %v7412
  %v7414 = vrot.slane %v7205, 1
  %v7415 = vsel %vm3530, %v7412, %v7414
  %v7416 = vrot.slane %v7206, 1
  %v7417 = vrot.slane %v7207, 1
  %v7418 = vsel %vm3530, %v7416, %v7417
  %v7419 = vrot.slane %v7208, 1
  %v7420 = vsel %vm3530, %v7417, %v7419
  %v7421 = vrot.slane %v7209, 1
  %v7422 = vrot.slane %v7210, 1
  %v7423 = vsel %vm3530, %v7421, %v7422
  %v7424 = vrot.slane %v7211, 1
  %v7425 = vsel %vm3530, %v7422, %v7424
  %v7426 = vrot.slane %v7212, 1
  %v7427 = vrot.slane %v7213, 1
  %v7428 = vsel %vm3530, %v7426, %v7427
  %v7429 = vrot.slane %v7214, 1
  %v7430 = vsel %vm3530, %v7427, %v7429
  %v7431 = vrot.slane %v7215, 1
  %v7432 = vrot.slane %v7216, 1
  %v7433 = vsel %vm3530, %v7431, %v7432
  %v7434 = vrot.slane %v7217, 1
  %v7435 = vsel %vm3530, %v7432, %v7434
  %v7436 = vrot.slane %v7218, 1
  %v7437 = vrot.slane %v7219, 1
  %v7438 = vsel %vm3530, %v7436, %v7437
  %v7439 = vrot.slane %v7220, 1
  %v7440 = vsel %vm3530, %v7437, %v7439
  %v7441 = vrot.slane %v7221, 1
  %v7442 = vrot.slane %v7222, 1
  %v7443 = vsel %vm3530, %v7441, %v7442
  %v7444 = vrot.slane %v7223, 1
  %v7445 = vsel %vm3530, %v7442, %v7444
  %v7446 = vrot.slane %v7224, 1
  %v7447 = vrot.slane %v7225, 1
  %v7448 = vsel %vm3530, %v7446, %v7447
  %v7449 = vrot.slane %v7226, 1
  %v7450 = vsel %vm3530, %v7447, %v7449
  %v7451 = vrot.slane %v7227, 1
  %v7452 = vrot.slane %v7228, 1
  %v7453 = vsel %vm3530, %v7451, %v7452
  %v7454 = vrot.slane %v7229, 1
  %v7455 = vsel %vm3530, %v7452, %v7454
  %v7456 = vrot.slane %v7230, 1
  %v7457 = vrot.slane %v7231, 1
  %v7458 = vsel %vm3530, %v7456, %v7457
  %v7459 = vrot.slane %v7232, 1
  %v7460 = vsel %vm3530, %v7457, %v7459
  %v7461 = vrot.slane %v7233, 1
  %v7462 = vrot.slane %v7234, 1
  %v7463 = vsel %vm3530, %v7461, %v7462
  %v7464 = vrot.slane %v7235, 1
  %v7465 = vsel %vm3530, %v7462, %v7464
  %v7466 = vrot.slane %v7236, 1
  %v7467 = vrot.slane %v7237, 1
  %v7468 = vsel %vm3530, %v7466, %v7467
  %v7469 = vrot.slane %v7238, 1
  %v7470 = vsel %vm3530, %v7467, %v7469
  %v7471 = vrot.slane %v7239, 1
  %v7472 = vrot.slane %v7240, 1
  %v7473 = vsel %vm3530, %v7471, %v7472
  %v7474 = vrot.slane %v7241, 1
  %v7475 = vsel %vm3530, %v7472, %v7474
  %v7476 = vrot.slane %v7242, 1
  %v7477 = vrot.slane %v7243, 1
  %v7478 = vsel %vm3530, %v7476, %v7477
  %v7479 = vrot.slane %v7244, 1
  %v7480 = vsel %vm3530, %v7477, %v7479
  %v7481 = vrot.slane %v7251, 1
  %v7482 = vrot.slane %v7252, 1
  %v7483 = vsel %vm3530, %v7481, %v7482
  %v7484 = vrot.slane %v7253, 1
  %v7485 = vsel %vm3530, %v7482, %v7484
  %v7486 = vrot.slane %v7254, 1
  %v7487 = vrot.slane %v7255, 1
  %v7488 = vsel %vm3530, %v7486, %v7487
  %v7489 = vrot.slane %v7256, 1
  %v7490 = vsel %vm3530, %v7487, %v7489
  %v7491 = vrot.slane %v7257, 1
  %v7492 = vrot.slane %v7258, 1
  %v7493 = vsel %vm3530, %v7491, %v7492
  %v7494 = vrot.slane %v7259, 1
  %v7495 = vsel %vm3530, %v7492, %v7494
  %v7496 = vrot.slane %v7260, 1
  %v7497 = vrot.slane %v7261, 1
  %v7498 = vsel %vm3530, %v7496, %v7497
  %v7499 = vrot.slane %v7262, 1
  %v7500 = vsel %vm3530, %v7497, %v7499
  %v7501 = vrot.slane %v7263, 1
  %v7502 = vrot.slane %v7264, 1
  %v7503 = vsel %vm3530, %v7501, %v7502
  %v7504 = vrot.slane %v7265, 1
  %v7505 = vsel %vm3530, %v7502, %v7504
  %v7506 = vrot.slane %v7266, 1
  %v7507 = vrot.slane %v7267, 1
  %v7508 = vsel %vm3530, %v7506, %v7507
  %v7509 = vrot.slane %v7268, 1
  %v7510 = vsel %vm3530, %v7507, %v7509
  %v7511 = vrot.slane %v7269, 1
  %v7512 = vrot.slane %v7270, 1
  %v7513 = vsel %vm3530, %v7511, %v7512
  %v7514 = vrot.slane %v7271, 1
  %v7515 = vsel %vm3530, %v7512, %v7514
  %v7516 = vrot.slane %v7272, 1
  %v7517 = vrot.slane %v7273, 1
  %v7518 = vsel %vm3530, %v7516, %v7517
  %v7519 = vrot.slane %v7274, 1
  %v7520 = vsel %vm3530, %v7517, %v7519
  %v7521 = vrot.slane %v7275, 1
  %v7522 = vrot.slane %v7276, 1
  %v7523 = vsel %vm3530, %v7521, %v7522
  %v7524 = vrot.slane %v7277, 1
  %v7525 = vsel %vm3530, %v7522, %v7524
  %v7526 = vrot.slane %v7278, 1
  %v7527 = vrot.slane %v7279, 1
  %v7528 = vsel %vm3530, %v7526, %v7527
  %v7529 = vrot.slane %v7280, 1
  %v7530 = vsel %vm3530, %v7527, %v7529
  %v7531 = vrot.slane %v7281, 1
  %v7532 = vrot.slane %v7282, 1
  %v7533 = vsel %vm3530, %v7531, %v7532
  %v7534 = vrot.slane %v7283, 1
  %v7535 = vsel %vm3530, %v7532, %v7534
  %v7536 = vrot.slane %v7284, 1
  %v7537 = vrot.slane %v7285, 1
  %v7538 = vsel %vm3530, %v7536, %v7537
  %v7539 = vrot.slane %v7286, 1
  %v7540 = vsel %vm3530, %v7537, %v7539
  %v7541 = vrot.slane %v7287, 1
  %v7542 = vrot.slane %v7288, 1
  %v7543 = vsel %vm3530, %v7541, %v7542
  %v7544 = vrot.slane %v7289, 1
  %v7545 = vsel %vm3530, %v7542, %v7544
  %v7546 = vrot.slane %v7290, 1
  %v7547 = vrot.slane %v7291, 1
  %v7548 = vsel %vm3530, %v7546, %v7547
  %v7549 = vrot.slane %v7292, 1
  %v7550 = vsel %vm3530, %v7547, %v7549
  %v7551 = vrot.slane %v7293, 1
  %v7552 = vrot.slane %v7294, 1
  %v7553 = vsel %vm3530, %v7551, %v7552
  %v7554 = vrot.slane %v7295, 1
  %v7555 = vsel %vm3530, %v7552, %v7554
  %v7556 = vrot.slane %v7296, 1
  %v7557 = vrot.slane %v7297, 1
  %v7558 = vsel %vm3530, %v7556, %v7557
  %v7559 = vrot.slane %v7298, 1
  %v7560 = vsel %vm3530, %v7557, %v7559
  %7561 = vrot.lane.b32.xlu0 %v7403, 4
  %v7562 = vpop.permute.xlu0 %7561
  %7563 = vrot.lane.b32.xlu0 %v7405, 4
  %v7564 = vpop.permute.xlu0 %7563
  %7565 = vrot.lane.b32.xlu0 %v7408, 4
  %v7566 = vpop.permute.xlu0 %7565
  %7567 = vrot.lane.b32.xlu0 %v7410, 4
  %v7568 = vpop.permute.xlu0 %7567
  %7569 = vrot.lane.b32.xlu0 %v7413, 4
  %v7570 = vpop.permute.xlu0 %7569
  %7571 = vrot.lane.b32.xlu0 %v7415, 4
  %v7572 = vpop.permute.xlu0 %7571
  %7573 = vrot.lane.b32.xlu0 %v7418, 4
  %v7574 = vpop.permute.xlu0 %7573
  %7575 = vrot.lane.b32.xlu0 %v7420, 4
  %v7576 = vpop.permute.xlu0 %7575
  %7577 = vrot.lane.b32.xlu0 %v7423, 4
  %v7578 = vpop.permute.xlu0 %7577
  %7579 = vrot.lane.b32.xlu0 %v7425, 4
  %v7580 = vpop.permute.xlu0 %7579
  %7581 = vrot.lane.b32.xlu0 %v7428, 4
  %v7582 = vpop.permute.xlu0 %7581
  %7583 = vrot.lane.b32.xlu0 %v7430, 4
  %v7584 = vpop.permute.xlu0 %7583
  %7585 = vrot.lane.b32.xlu0 %v7433, 4
  %v7586 = vpop.permute.xlu0 %7585
  %7587 = vrot.lane.b32.xlu0 %v7435, 4
  %v7588 = vpop.permute.xlu0 %7587
  %7589 = vrot.lane.b32.xlu0 %v7438, 4
  %v7590 = vpop.permute.xlu0 %7589
  %7591 = vrot.lane.b32.xlu0 %v7440, 4
  %v7592 = vpop.permute.xlu0 %7591
  %7593 = vrot.lane.b32.xlu0 %v7443, 4
  %v7594 = vpop.permute.xlu0 %7593
  %7595 = vrot.lane.b32.xlu0 %v7445, 4
  %v7596 = vpop.permute.xlu0 %7595
  %7597 = vrot.lane.b32.xlu0 %v7448, 4
  %v7598 = vpop.permute.xlu0 %7597
  %7599 = vrot.lane.b32.xlu0 %v7450, 4
  %v7600 = vpop.permute.xlu0 %7599
  %7601 = vrot.lane.b32.xlu0 %v7453, 4
  %v7602 = vpop.permute.xlu0 %7601
  %7603 = vrot.lane.b32.xlu0 %v7455, 4
  %v7604 = vpop.permute.xlu0 %7603
  %7605 = vrot.lane.b32.xlu0 %v7458, 4
  %v7606 = vpop.permute.xlu0 %7605
  %7607 = vrot.lane.b32.xlu0 %v7460, 4
  %v7608 = vpop.permute.xlu0 %7607
  %7609 = vrot.lane.b32.xlu0 %v7463, 4
  %v7610 = vpop.permute.xlu0 %7609
  %7611 = vrot.lane.b32.xlu0 %v7465, 4
  %v7612 = vpop.permute.xlu0 %7611
  %7613 = vrot.lane.b32.xlu0 %v7468, 4
  %v7614 = vpop.permute.xlu0 %7613
  %7615 = vrot.lane.b32.xlu0 %v7470, 4
  %v7616 = vpop.permute.xlu0 %7615
  %7617 = vrot.lane.b32.xlu0 %v7473, 4
  %v7618 = vpop.permute.xlu0 %7617
  %7619 = vrot.lane.b32.xlu0 %v7475, 4
  %v7620 = vpop.permute.xlu0 %7619
  %7621 = vrot.lane.b32.xlu0 %v7478, 4
  %v7622 = vpop.permute.xlu0 %7621
  %7623 = vrot.lane.b32.xlu0 %v7480, 4
  %v7624 = vpop.permute.xlu0 %7623
  %7625 = vrot.lane.b32.xlu0 %v7483, 4
  %v7626 = vpop.permute.xlu0 %7625
  %7627 = vrot.lane.b32.xlu0 %v7485, 4
  %v7628 = vpop.permute.xlu0 %7627
  %7629 = vrot.lane.b32.xlu0 %v7488, 4
  %v7630 = vpop.permute.xlu0 %7629
  %7631 = vrot.lane.b32.xlu0 %v7490, 4
  %v7632 = vpop.permute.xlu0 %7631
  %7633 = vrot.lane.b32.xlu0 %v7493, 4
  %v7634 = vpop.permute.xlu0 %7633
  %7635 = vrot.lane.b32.xlu0 %v7495, 4
  %v7636 = vpop.permute.xlu0 %7635
  %7637 = vrot.lane.b32.xlu0 %v7498, 4
  %v7638 = vpop.permute.xlu0 %7637
  %7639 = vrot.lane.b32.xlu0 %v7500, 4
  %v7640 = vpop.permute.xlu0 %7639
  %7641 = vrot.lane.b32.xlu0 %v7503, 4
  %v7642 = vpop.permute.xlu0 %7641
  %7643 = vrot.lane.b32.xlu0 %v7505, 4
  %v7644 = vpop.permute.xlu0 %7643
  %7645 = vrot.lane.b32.xlu0 %v7508, 4
  %v7646 = vpop.permute.xlu0 %7645
  %7647 = vrot.lane.b32.xlu0 %v7510, 4
  %v7648 = vpop.permute.xlu0 %7647
  %7649 = vrot.lane.b32.xlu0 %v7513, 4
  %v7650 = vpop.permute.xlu0 %7649
  %7651 = vrot.lane.b32.xlu0 %v7515, 4
  %v7652 = vpop.permute.xlu0 %7651
  %7653 = vrot.lane.b32.xlu0 %v7518, 4
  %v7654 = vpop.permute.xlu0 %7653
  %7655 = vrot.lane.b32.xlu0 %v7520, 4
  %v7656 = vpop.permute.xlu0 %7655
  %7657 = vrot.lane.b32.xlu0 %v7523, 4
  %v7658 = vpop.permute.xlu0 %7657
  %7659 = vrot.lane.b32.xlu0 %v7525, 4
  %v7660 = vpop.permute.xlu0 %7659
  %7661 = vrot.lane.b32.xlu0 %v7528, 4
  %v7662 = vpop.permute.xlu0 %7661
  %7663 = vrot.lane.b32.xlu0 %v7530, 4
  %v7664 = vpop.permute.xlu0 %7663
  %7665 = vrot.lane.b32.xlu0 %v7533, 4
  %v7666 = vpop.permute.xlu0 %7665
  %7667 = vrot.lane.b32.xlu0 %v7535, 4
  %v7668 = vpop.permute.xlu0 %7667
  %7669 = vrot.lane.b32.xlu0 %v7538, 4
  %v7670 = vpop.permute.xlu0 %7669
  %7671 = vrot.lane.b32.xlu0 %v7540, 4
  %v7672 = vpop.permute.xlu0 %7671
  %7673 = vrot.lane.b32.xlu0 %v7543, 4
  %v7674 = vpop.permute.xlu0 %7673
  %7675 = vrot.lane.b32.xlu0 %v7545, 4
  %v7676 = vpop.permute.xlu0 %7675
  %7677 = vrot.lane.b32.xlu0 %v7548, 4
  %v7678 = vpop.permute.xlu0 %7677
  %7679 = vrot.lane.b32.xlu0 %v7550, 4
  %v7680 = vpop.permute.xlu0 %7679
  %7681 = vrot.lane.b32.xlu0 %v7553, 4
  %v7682 = vpop.permute.xlu0 %7681
  %7683 = vrot.lane.b32.xlu0 %v7555, 4
  %v7684 = vpop.permute.xlu0 %7683
  %7685 = vrot.lane.b32.xlu0 %v7558, 4
  %v7686 = vpop.permute.xlu0 %7685
  %7687 = vrot.lane.b32.xlu0 %v7560, 4
  %v7688 = vpop.permute.xlu0 %7687
  %v7753 = vrot.slane %v7197, 2
  %v7754 = vrot.slane %v7198, 2
  %v7755 = vsel %vm3883, %v7753, %v7754
  %v7756 = vrot.slane %v7199, 2
  %v7757 = vsel %vm3883, %v7754, %v7756
  %v7758 = vrot.slane %v7200, 2
  %v7759 = vrot.slane %v7201, 2
  %v7760 = vsel %vm3883, %v7758, %v7759
  %v7761 = vrot.slane %v7202, 2
  %v7762 = vsel %vm3883, %v7759, %v7761
  %v7763 = vrot.slane %v7203, 2
  %v7764 = vrot.slane %v7204, 2
  %v7765 = vsel %vm3883, %v7763, %v7764
  %v7766 = vrot.slane %v7205, 2
  %v7767 = vsel %vm3883, %v7764, %v7766
  %v7768 = vrot.slane %v7206, 2
  %v7769 = vrot.slane %v7207, 2
  %v7770 = vsel %vm3883, %v7768, %v7769
  %v7771 = vrot.slane %v7208, 2
  %v7772 = vsel %vm3883, %v7769, %v7771
  %v7773 = vrot.slane %v7209, 2
  %v7774 = vrot.slane %v7210, 2
  %v7775 = vsel %vm3883, %v7773, %v7774
  %v7776 = vrot.slane %v7211, 2
  %v7777 = vsel %vm3883, %v7774, %v7776
  %v7778 = vrot.slane %v7212, 2
  %v7779 = vrot.slane %v7213, 2
  %v7780 = vsel %vm3883, %v7778, %v7779
  %v7781 = vrot.slane %v7214, 2
  %v7782 = vsel %vm3883, %v7779, %v7781
  %v7783 = vrot.slane %v7215, 2
  %v7784 = vrot.slane %v7216, 2
  %v7785 = vsel %vm3883, %v7783, %v7784
  %v7786 = vrot.slane %v7217, 2
  %v7787 = vsel %vm3883, %v7784, %v7786
  %v7788 = vrot.slane %v7218, 2
  %v7789 = vrot.slane %v7219, 2
  %v7790 = vsel %vm3883, %v7788, %v7789
  %v7791 = vrot.slane %v7220, 2
  %v7792 = vsel %vm3883, %v7789, %v7791
  %v7793 = vrot.slane %v7221, 2
  %v7794 = vrot.slane %v7222, 2
  %v7795 = vsel %vm3883, %v7793, %v7794
  %v7796 = vrot.slane %v7223, 2
  %v7797 = vsel %vm3883, %v7794, %v7796
  %v7798 = vrot.slane %v7224, 2
  %v7799 = vrot.slane %v7225, 2
  %v7800 = vsel %vm3883, %v7798, %v7799
  %v7801 = vrot.slane %v7226, 2
  %v7802 = vsel %vm3883, %v7799, %v7801
  %v7803 = vrot.slane %v7227, 2
  %v7804 = vrot.slane %v7228, 2
  %v7805 = vsel %vm3883, %v7803, %v7804
  %v7806 = vrot.slane %v7229, 2
  %v7807 = vsel %vm3883, %v7804, %v7806
  %v7808 = vrot.slane %v7230, 2
  %v7809 = vrot.slane %v7231, 2
  %v7810 = vsel %vm3883, %v7808, %v7809
  %v7811 = vrot.slane %v7232, 2
  %v7812 = vsel %vm3883, %v7809, %v7811
  %v7813 = vrot.slane %v7233, 2
  %v7814 = vrot.slane %v7234, 2
  %v7815 = vsel %vm3883, %v7813, %v7814
  %v7816 = vrot.slane %v7235, 2
  %v7817 = vsel %vm3883, %v7814, %v7816
  %v7818 = vrot.slane %v7236, 2
  %v7819 = vrot.slane %v7237, 2
  %v7820 = vsel %vm3883, %v7818, %v7819
  %v7821 = vrot.slane %v7238, 2
  %v7822 = vsel %vm3883, %v7819, %v7821
  %v7823 = vrot.slane %v7239, 2
  %v7824 = vrot.slane %v7240, 2
  %v7825 = vsel %vm3883, %v7823, %v7824
  %v7826 = vrot.slane %v7241, 2
  %v7827 = vsel %vm3883, %v7824, %v7826
  %v7828 = vrot.slane %v7242, 2
  %v7829 = vrot.slane %v7243, 2
  %v7830 = vsel %vm3883, %v7828, %v7829
  %v7831 = vrot.slane %v7244, 2
  %v7832 = vsel %vm3883, %v7829, %v7831
  %v7833 = vrot.slane %v7251, 2
  %v7834 = vrot.slane %v7252, 2
  %v7835 = vsel %vm3883, %v7833, %v7834
  %v7836 = vrot.slane %v7253, 2
  %v7837 = vsel %vm3883, %v7834, %v7836
  %v7838 = vrot.slane %v7254, 2
  %v7839 = vrot.slane %v7255, 2
  %v7840 = vsel %vm3883, %v7838, %v7839
  %v7841 = vrot.slane %v7256, 2
  %v7842 = vsel %vm3883, %v7839, %v7841
  %v7843 = vrot.slane %v7257, 2
  %v7844 = vrot.slane %v7258, 2
  %v7845 = vsel %vm3883, %v7843, %v7844
  %v7846 = vrot.slane %v7259, 2
  %v7847 = vsel %vm3883, %v7844, %v7846
  %v7848 = vrot.slane %v7260, 2
  %v7849 = vrot.slane %v7261, 2
  %v7850 = vsel %vm3883, %v7848, %v7849
  %v7851 = vrot.slane %v7262, 2
  %v7852 = vsel %vm3883, %v7849, %v7851
  %v7853 = vrot.slane %v7263, 2
  %v7854 = vrot.slane %v7264, 2
  %v7855 = vsel %vm3883, %v7853, %v7854
  %v7856 = vrot.slane %v7265, 2
  %v7857 = vsel %vm3883, %v7854, %v7856
  %v7858 = vrot.slane %v7266, 2
  %v7859 = vrot.slane %v7267, 2
  %v7860 = vsel %vm3883, %v7858, %v7859
  %v7861 = vrot.slane %v7268, 2
  %v7862 = vsel %vm3883, %v7859, %v7861
  %v7863 = vrot.slane %v7269, 2
  %v7864 = vrot.slane %v7270, 2
  %v7865 = vsel %vm3883, %v7863, %v7864
  %v7866 = vrot.slane %v7271, 2
  %v7867 = vsel %vm3883, %v7864, %v7866
  %v7868 = vrot.slane %v7272, 2
  %v7869 = vrot.slane %v7273, 2
  %v7870 = vsel %vm3883, %v7868, %v7869
  %v7871 = vrot.slane %v7274, 2
  %v7872 = vsel %vm3883, %v7869, %v7871
  %v7873 = vrot.slane %v7275, 2
  %v7874 = vrot.slane %v7276, 2
  %v7875 = vsel %vm3883, %v7873, %v7874
  %v7876 = vrot.slane %v7277, 2
  %v7877 = vsel %vm3883, %v7874, %v7876
  %v7878 = vrot.slane %v7278, 2
  %v7879 = vrot.slane %v7279, 2
  %v7880 = vsel %vm3883, %v7878, %v7879
  %v7881 = vrot.slane %v7280, 2
  %v7882 = vsel %vm3883, %v7879, %v7881
  %v7883 = vrot.slane %v7281, 2
  %v7884 = vrot.slane %v7282, 2
  %v7885 = vsel %vm3883, %v7883, %v7884
  %v7886 = vrot.slane %v7283, 2
  %v7887 = vsel %vm3883, %v7884, %v7886
  %v7888 = vrot.slane %v7284, 2
  %v7889 = vrot.slane %v7285, 2
  %v7890 = vsel %vm3883, %v7888, %v7889
  %v7891 = vrot.slane %v7286, 2
  %v7892 = vsel %vm3883, %v7889, %v7891
  %v7893 = vrot.slane %v7287, 2
  %v7894 = vrot.slane %v7288, 2
  %v7895 = vsel %vm3883, %v7893, %v7894
  %v7896 = vrot.slane %v7289, 2
  %v7897 = vsel %vm3883, %v7894, %v7896
  %v7898 = vrot.slane %v7290, 2
  %v7899 = vrot.slane %v7291, 2
  %v7900 = vsel %vm3883, %v7898, %v7899
  %v7901 = vrot.slane %v7292, 2
  %v7902 = vsel %vm3883, %v7899, %v7901
  %v7903 = vrot.slane %v7293, 2
  %v7904 = vrot.slane %v7294, 2
  %v7905 = vsel %vm3883, %v7903, %v7904
  %v7906 = vrot.slane %v7295, 2
  %v7907 = vsel %vm3883, %v7904, %v7906
  %v7908 = vrot.slane %v7296, 2
  %v7909 = vrot.slane %v7297, 2
  %v7910 = vsel %vm3883, %v7908, %v7909
  %v7911 = vrot.slane %v7298, 2
  %v7912 = vsel %vm3883, %v7909, %v7911
  %7913 = vrot.lane.b32.xlu0 %v7755, 8
  %v7914 = vpop.permute.xlu0 %7913
  %7915 = vrot.lane.b32.xlu0 %v7757, 8
  %v7916 = vpop.permute.xlu0 %7915
  %7917 = vrot.lane.b32.xlu0 %v7760, 8
  %v7918 = vpop.permute.xlu0 %7917
  %7919 = vrot.lane.b32.xlu0 %v7762, 8
  %v7920 = vpop.permute.xlu0 %7919
  %7921 = vrot.lane.b32.xlu0 %v7765, 8
  %v7922 = vpop.permute.xlu0 %7921
  %7923 = vrot.lane.b32.xlu0 %v7767, 8
  %v7924 = vpop.permute.xlu0 %7923
  %7925 = vrot.lane.b32.xlu0 %v7770, 8
  %v7926 = vpop.permute.xlu0 %7925
  %7927 = vrot.lane.b32.xlu0 %v7772, 8
  %v7928 = vpop.permute.xlu0 %7927
  %7929 = vrot.lane.b32.xlu0 %v7775, 8
  %v7930 = vpop.permute.xlu0 %7929
  %7931 = vrot.lane.b32.xlu0 %v7777, 8
  %v7932 = vpop.permute.xlu0 %7931
  %7933 = vrot.lane.b32.xlu0 %v7780, 8
  %v7934 = vpop.permute.xlu0 %7933
  %7935 = vrot.lane.b32.xlu0 %v7782, 8
  %v7936 = vpop.permute.xlu0 %7935
  %7937 = vrot.lane.b32.xlu0 %v7785, 8
  %v7938 = vpop.permute.xlu0 %7937
  %7939 = vrot.lane.b32.xlu0 %v7787, 8
  %v7940 = vpop.permute.xlu0 %7939
  %7941 = vrot.lane.b32.xlu0 %v7790, 8
  %v7942 = vpop.permute.xlu0 %7941
  %7943 = vrot.lane.b32.xlu0 %v7792, 8
  %v7944 = vpop.permute.xlu0 %7943
  %7945 = vrot.lane.b32.xlu0 %v7795, 8
  %v7946 = vpop.permute.xlu0 %7945
  %7947 = vrot.lane.b32.xlu0 %v7797, 8
  %v7948 = vpop.permute.xlu0 %7947
  %7949 = vrot.lane.b32.xlu0 %v7800, 8
  %v7950 = vpop.permute.xlu0 %7949
  %7951 = vrot.lane.b32.xlu0 %v7802, 8
  %v7952 = vpop.permute.xlu0 %7951
  %7953 = vrot.lane.b32.xlu0 %v7805, 8
  %v7954 = vpop.permute.xlu0 %7953
  %7955 = vrot.lane.b32.xlu0 %v7807, 8
  %v7956 = vpop.permute.xlu0 %7955
  %7957 = vrot.lane.b32.xlu0 %v7810, 8
  %v7958 = vpop.permute.xlu0 %7957
  %7959 = vrot.lane.b32.xlu0 %v7812, 8
  %v7960 = vpop.permute.xlu0 %7959
  %7961 = vrot.lane.b32.xlu0 %v7815, 8
  %v7962 = vpop.permute.xlu0 %7961
  %7963 = vrot.lane.b32.xlu0 %v7817, 8
  %v7964 = vpop.permute.xlu0 %7963
  %7965 = vrot.lane.b32.xlu0 %v7820, 8
  %v7966 = vpop.permute.xlu0 %7965
  %7967 = vrot.lane.b32.xlu0 %v7822, 8
  %v7968 = vpop.permute.xlu0 %7967
  %7969 = vrot.lane.b32.xlu0 %v7825, 8
  %v7970 = vpop.permute.xlu0 %7969
  %7971 = vrot.lane.b32.xlu0 %v7827, 8
  %v7972 = vpop.permute.xlu0 %7971
  %7973 = vrot.lane.b32.xlu0 %v7830, 8
  %v7974 = vpop.permute.xlu0 %7973
  %7975 = vrot.lane.b32.xlu0 %v7832, 8
  %v7976 = vpop.permute.xlu0 %7975
  %7977 = vrot.lane.b32.xlu0 %v7835, 8
  %v7978 = vpop.permute.xlu0 %7977
  %7979 = vrot.lane.b32.xlu0 %v7837, 8
  %v7980 = vpop.permute.xlu0 %7979
  %7981 = vrot.lane.b32.xlu0 %v7840, 8
  %v7982 = vpop.permute.xlu0 %7981
  %7983 = vrot.lane.b32.xlu0 %v7842, 8
  %v7984 = vpop.permute.xlu0 %7983
  %7985 = vrot.lane.b32.xlu0 %v7845, 8
  %v7986 = vpop.permute.xlu0 %7985
  %7987 = vrot.lane.b32.xlu0 %v7847, 8
  %v7988 = vpop.permute.xlu0 %7987
  %7989 = vrot.lane.b32.xlu0 %v7850, 8
  %v7990 = vpop.permute.xlu0 %7989
  %7991 = vrot.lane.b32.xlu0 %v7852, 8
  %v7992 = vpop.permute.xlu0 %7991
  %7993 = vrot.lane.b32.xlu0 %v7855, 8
  %v7994 = vpop.permute.xlu0 %7993
  %7995 = vrot.lane.b32.xlu0 %v7857, 8
  %v7996 = vpop.permute.xlu0 %7995
  %7997 = vrot.lane.b32.xlu0 %v7860, 8
  %v7998 = vpop.permute.xlu0 %7997
  %7999 = vrot.lane.b32.xlu0 %v7862, 8
  %v8000 = vpop.permute.xlu0 %7999
  %8001 = vrot.lane.b32.xlu0 %v7865, 8
  %v8002 = vpop.permute.xlu0 %8001
  %8003 = vrot.lane.b32.xlu0 %v7867, 8
  %v8004 = vpop.permute.xlu0 %8003
  %8005 = vrot.lane.b32.xlu0 %v7870, 8
  %v8006 = vpop.permute.xlu0 %8005
  %8007 = vrot.lane.b32.xlu0 %v7872, 8
  %v8008 = vpop.permute.xlu0 %8007
  %8009 = vrot.lane.b32.xlu0 %v7875, 8
  %v8010 = vpop.permute.xlu0 %8009
  %8011 = vrot.lane.b32.xlu0 %v7877, 8
  %v8012 = vpop.permute.xlu0 %8011
  %8013 = vrot.lane.b32.xlu0 %v7880, 8
  %v8014 = vpop.permute.xlu0 %8013
  %8015 = vrot.lane.b32.xlu0 %v7882, 8
  %v8016 = vpop.permute.xlu0 %8015
  %8017 = vrot.lane.b32.xlu0 %v7885, 8
  %v8018 = vpop.permute.xlu0 %8017
  %8019 = vrot.lane.b32.xlu0 %v7887, 8
  %v8020 = vpop.permute.xlu0 %8019
  %8021 = vrot.lane.b32.xlu0 %v7890, 8
  %v8022 = vpop.permute.xlu0 %8021
  %8023 = vrot.lane.b32.xlu0 %v7892, 8
  %v8024 = vpop.permute.xlu0 %8023
  %8025 = vrot.lane.b32.xlu0 %v7895, 8
  %v8026 = vpop.permute.xlu0 %8025
  %8027 = vrot.lane.b32.xlu0 %v7897, 8
  %v8028 = vpop.permute.xlu0 %8027
  %8029 = vrot.lane.b32.xlu0 %v7900, 8
  %v8030 = vpop.permute.xlu0 %8029
  %8031 = vrot.lane.b32.xlu0 %v7902, 8
  %v8032 = vpop.permute.xlu0 %8031
  %8033 = vrot.lane.b32.xlu0 %v7905, 8
  %v8034 = vpop.permute.xlu0 %8033
  %8035 = vrot.lane.b32.xlu0 %v7907, 8
  %v8036 = vpop.permute.xlu0 %8035
  %8037 = vrot.lane.b32.xlu0 %v7910, 8
  %v8038 = vpop.permute.xlu0 %8037
  %8039 = vrot.lane.b32.xlu0 %v7912, 8
  %v8040 = vpop.permute.xlu0 %8039
  %8109 = vrot.lane.b32.xlu0 %v7200, 12
  %v8110 = vpop.permute.xlu0 %8109
  %8111 = vrot.lane.b32.xlu0 %v7201, 12
  %v8112 = vpop.permute.xlu0 %8111
  %8113 = vrot.lane.b32.xlu0 %v7203, 12
  %v8114 = vpop.permute.xlu0 %8113
  %8115 = vrot.lane.b32.xlu0 %v7204, 12
  %v8116 = vpop.permute.xlu0 %8115
  %8117 = vrot.lane.b32.xlu0 %v7206, 12
  %v8118 = vpop.permute.xlu0 %8117
  %8119 = vrot.lane.b32.xlu0 %v7207, 12
  %v8120 = vpop.permute.xlu0 %8119
  %8121 = vrot.lane.b32.xlu0 %v7209, 12
  %v8122 = vpop.permute.xlu0 %8121
  %8123 = vrot.lane.b32.xlu0 %v7210, 12
  %v8124 = vpop.permute.xlu0 %8123
  %8125 = vrot.lane.b32.xlu0 %v7212, 12
  %v8126 = vpop.permute.xlu0 %8125
  %8127 = vrot.lane.b32.xlu0 %v7213, 12
  %v8128 = vpop.permute.xlu0 %8127
  %8129 = vrot.lane.b32.xlu0 %v7215, 12
  %v8130 = vpop.permute.xlu0 %8129
  %8131 = vrot.lane.b32.xlu0 %v7216, 12
  %v8132 = vpop.permute.xlu0 %8131
  %8133 = vrot.lane.b32.xlu0 %v7218, 12
  %v8134 = vpop.permute.xlu0 %8133
  %8135 = vrot.lane.b32.xlu0 %v7219, 12
  %v8136 = vpop.permute.xlu0 %8135
  %8137 = vrot.lane.b32.xlu0 %v7221, 12
  %v8138 = vpop.permute.xlu0 %8137
  %8139 = vrot.lane.b32.xlu0 %v7222, 12
  %v8140 = vpop.permute.xlu0 %8139
  %8141 = vrot.lane.b32.xlu0 %v7224, 12
  %v8142 = vpop.permute.xlu0 %8141
  %8143 = vrot.lane.b32.xlu0 %v7225, 12
  %v8144 = vpop.permute.xlu0 %8143
  %8145 = vrot.lane.b32.xlu0 %v7227, 12
  %v8146 = vpop.permute.xlu0 %8145
  %8147 = vrot.lane.b32.xlu0 %v7228, 12
  %v8148 = vpop.permute.xlu0 %8147
  %8149 = vrot.lane.b32.xlu0 %v7230, 12
  %v8150 = vpop.permute.xlu0 %8149
  %8151 = vrot.lane.b32.xlu0 %v7231, 12
  %v8152 = vpop.permute.xlu0 %8151
  %8153 = vrot.lane.b32.xlu0 %v7233, 12
  %v8154 = vpop.permute.xlu0 %8153
  %8155 = vrot.lane.b32.xlu0 %v7234, 12
  %v8156 = vpop.permute.xlu0 %8155
  %8157 = vrot.lane.b32.xlu0 %v7236, 12
  %v8158 = vpop.permute.xlu0 %8157
  %8159 = vrot.lane.b32.xlu0 %v7237, 12
  %v8160 = vpop.permute.xlu0 %8159
  %8161 = vrot.lane.b32.xlu0 %v7239, 12
  %v8162 = vpop.permute.xlu0 %8161
  %8163 = vrot.lane.b32.xlu0 %v7240, 12
  %v8164 = vpop.permute.xlu0 %8163
  %8165 = vrot.lane.b32.xlu0 %v7242, 12
  %v8166 = vpop.permute.xlu0 %8165
  %8167 = vrot.lane.b32.xlu0 %v7243, 12
  %v8168 = vpop.permute.xlu0 %8167
  %8169 = vrot.lane.b32.xlu0 %v7245, 12
  %v8170 = vpop.permute.xlu0 %8169
  %8171 = vrot.lane.b32.xlu0 %v7246, 12
  %v8172 = vpop.permute.xlu0 %8171
  %8173 = vrot.lane.b32.xlu0 %v7254, 12
  %v8174 = vpop.permute.xlu0 %8173
  %8175 = vrot.lane.b32.xlu0 %v7255, 12
  %v8176 = vpop.permute.xlu0 %8175
  %8177 = vrot.lane.b32.xlu0 %v7257, 12
  %v8178 = vpop.permute.xlu0 %8177
  %8179 = vrot.lane.b32.xlu0 %v7258, 12
  %v8180 = vpop.permute.xlu0 %8179
  %8181 = vrot.lane.b32.xlu0 %v7260, 12
  %v8182 = vpop.permute.xlu0 %8181
  %8183 = vrot.lane.b32.xlu0 %v7261, 12
  %v8184 = vpop.permute.xlu0 %8183
  %8185 = vrot.lane.b32.xlu0 %v7263, 12
  %v8186 = vpop.permute.xlu0 %8185
  %8187 = vrot.lane.b32.xlu0 %v7264, 12
  %v8188 = vpop.permute.xlu0 %8187
  %8189 = vrot.lane.b32.xlu0 %v7266, 12
  %v8190 = vpop.permute.xlu0 %8189
  %8191 = vrot.lane.b32.xlu0 %v7267, 12
  %v8192 = vpop.permute.xlu0 %8191
  %8193 = vrot.lane.b32.xlu0 %v7269, 12
  %v8194 = vpop.permute.xlu0 %8193
  %8195 = vrot.lane.b32.xlu0 %v7270, 12
  %v8196 = vpop.permute.xlu0 %8195
  %8197 = vrot.lane.b32.xlu0 %v7272, 12
  %v8198 = vpop.permute.xlu0 %8197
  %8199 = vrot.lane.b32.xlu0 %v7273, 12
  %v8200 = vpop.permute.xlu0 %8199
  %8201 = vrot.lane.b32.xlu0 %v7275, 12
  %v8202 = vpop.permute.xlu0 %8201
  %8203 = vrot.lane.b32.xlu0 %v7276, 12
  %v8204 = vpop.permute.xlu0 %8203
  %8205 = vrot.lane.b32.xlu0 %v7278, 12
  %v8206 = vpop.permute.xlu0 %8205
  %8207 = vrot.lane.b32.xlu0 %v7279, 12
  %v8208 = vpop.permute.xlu0 %8207
  %8209 = vrot.lane.b32.xlu0 %v7281, 12
  %v8210 = vpop.permute.xlu0 %8209
  %8211 = vrot.lane.b32.xlu0 %v7282, 12
  %v8212 = vpop.permute.xlu0 %8211
  %8213 = vrot.lane.b32.xlu0 %v7284, 12
  %v8214 = vpop.permute.xlu0 %8213
  %8215 = vrot.lane.b32.xlu0 %v7285, 12
  %v8216 = vpop.permute.xlu0 %8215
  %8217 = vrot.lane.b32.xlu0 %v7287, 12
  %v8218 = vpop.permute.xlu0 %8217
  %8219 = vrot.lane.b32.xlu0 %v7288, 12
  %v8220 = vpop.permute.xlu0 %8219
  %8221 = vrot.lane.b32.xlu0 %v7290, 12
  %v8222 = vpop.permute.xlu0 %8221
  %8223 = vrot.lane.b32.xlu0 %v7291, 12
  %v8224 = vpop.permute.xlu0 %8223
  %8225 = vrot.lane.b32.xlu0 %v7293, 12
  %v8226 = vpop.permute.xlu0 %8225
  %8227 = vrot.lane.b32.xlu0 %v7294, 12
  %v8228 = vpop.permute.xlu0 %8227
  %8229 = vrot.lane.b32.xlu0 %v7296, 12
  %v8230 = vpop.permute.xlu0 %8229
  %8231 = vrot.lane.b32.xlu0 %v7297, 12
  %v8232 = vpop.permute.xlu0 %8231
  %8233 = vrot.lane.b32.xlu0 %v7299, 12
  %v8234 = vpop.permute.xlu0 %8233
  %8235 = vrot.lane.b32.xlu0 %v7300, 12
  %v8236 = vpop.permute.xlu0 %8235
  %v8303 = vrot.slane %v7245, 1
  %v8304 = vrot.slane %v7246, 1
  %v8305 = vsel %vm3530, %v8303, %v8304
  %v8306 = vrot.slane %v7247, 1
  %v8307 = vsel %vm3530, %v8304, %v8306
  %v8308 = vrot.slane %v7299, 1
  %v8309 = vrot.slane %v7300, 1
  %v8310 = vsel %vm3530, %v8308, %v8309
  %v8311 = vrot.slane %v7301, 1
  %v8312 = vsel %vm3530, %v8309, %v8311
  %8313 = vrot.lane.b32.xlu0 %v7408, 16
  %v8314 = vpop.permute.xlu0 %8313
  %8315 = vrot.lane.b32.xlu0 %v7410, 16
  %v8316 = vpop.permute.xlu0 %8315
  %8317 = vrot.lane.b32.xlu0 %v7413, 16
  %v8318 = vpop.permute.xlu0 %8317
  %8319 = vrot.lane.b32.xlu0 %v7415, 16
  %v8320 = vpop.permute.xlu0 %8319
  %8321 = vrot.lane.b32.xlu0 %v7418, 16
  %v8322 = vpop.permute.xlu0 %8321
  %8323 = vrot.lane.b32.xlu0 %v7420, 16
  %v8324 = vpop.permute.xlu0 %8323
  %8325 = vrot.lane.b32.xlu0 %v7423, 16
  %v8326 = vpop.permute.xlu0 %8325
  %8327 = vrot.lane.b32.xlu0 %v7425, 16
  %v8328 = vpop.permute.xlu0 %8327
  %8329 = vrot.lane.b32.xlu0 %v7428, 16
  %v8330 = vpop.permute.xlu0 %8329
  %8331 = vrot.lane.b32.xlu0 %v7430, 16
  %v8332 = vpop.permute.xlu0 %8331
  %8333 = vrot.lane.b32.xlu0 %v7433, 16
  %v8334 = vpop.permute.xlu0 %8333
  %8335 = vrot.lane.b32.xlu0 %v7435, 16
  %v8336 = vpop.permute.xlu0 %8335
  %8337 = vrot.lane.b32.xlu0 %v7438, 16
  %v8338 = vpop.permute.xlu0 %8337
  %8339 = vrot.lane.b32.xlu0 %v7440, 16
  %v8340 = vpop.permute.xlu0 %8339
  %8341 = vrot.lane.b32.xlu0 %v7443, 16
  %v8342 = vpop.permute.xlu0 %8341
  %8343 = vrot.lane.b32.xlu0 %v7445, 16
  %v8344 = vpop.permute.xlu0 %8343
  %8345 = vrot.lane.b32.xlu0 %v7448, 16
  %v8346 = vpop.permute.xlu0 %8345
  %8347 = vrot.lane.b32.xlu0 %v7450, 16
  %v8348 = vpop.permute.xlu0 %8347
  %8349 = vrot.lane.b32.xlu0 %v7453, 16
  %v8350 = vpop.permute.xlu0 %8349
  %8351 = vrot.lane.b32.xlu0 %v7455, 16
  %v8352 = vpop.permute.xlu0 %8351
  %8353 = vrot.lane.b32.xlu0 %v7458, 16
  %v8354 = vpop.permute.xlu0 %8353
  %8355 = vrot.lane.b32.xlu0 %v7460, 16
  %v8356 = vpop.permute.xlu0 %8355
  %8357 = vrot.lane.b32.xlu0 %v7463, 16
  %v8358 = vpop.permute.xlu0 %8357
  %8359 = vrot.lane.b32.xlu0 %v7465, 16
  %v8360 = vpop.permute.xlu0 %8359
  %8361 = vrot.lane.b32.xlu0 %v7468, 16
  %v8362 = vpop.permute.xlu0 %8361
  %8363 = vrot.lane.b32.xlu0 %v7470, 16
  %v8364 = vpop.permute.xlu0 %8363
  %8365 = vrot.lane.b32.xlu0 %v7473, 16
  %v8366 = vpop.permute.xlu0 %8365
  %8367 = vrot.lane.b32.xlu0 %v7475, 16
  %v8368 = vpop.permute.xlu0 %8367
  %8369 = vrot.lane.b32.xlu0 %v7478, 16
  %v8370 = vpop.permute.xlu0 %8369
  %8371 = vrot.lane.b32.xlu0 %v7480, 16
  %v8372 = vpop.permute.xlu0 %8371
  %8373 = vrot.lane.b32.xlu0 %v8305, 16
  %v8374 = vpop.permute.xlu0 %8373
  %8375 = vrot.lane.b32.xlu0 %v8307, 16
  %v8376 = vpop.permute.xlu0 %8375
  %8377 = vrot.lane.b32.xlu0 %v7488, 16
  %v8378 = vpop.permute.xlu0 %8377
  %8379 = vrot.lane.b32.xlu0 %v7490, 16
  %v8380 = vpop.permute.xlu0 %8379
  %8381 = vrot.lane.b32.xlu0 %v7493, 16
  %v8382 = vpop.permute.xlu0 %8381
  %8383 = vrot.lane.b32.xlu0 %v7495, 16
  %v8384 = vpop.permute.xlu0 %8383
  %8385 = vrot.lane.b32.xlu0 %v7498, 16
  %v8386 = vpop.permute.xlu0 %8385
  %8387 = vrot.lane.b32.xlu0 %v7500, 16
  %v8388 = vpop.permute.xlu0 %8387
  %8389 = vrot.lane.b32.xlu0 %v7503, 16
  %v8390 = vpop.permute.xlu0 %8389
  %8391 = vrot.lane.b32.xlu0 %v7505, 16
  %v8392 = vpop.permute.xlu0 %8391
  %8393 = vrot.lane.b32.xlu0 %v7508, 16
  %v8394 = vpop.permute.xlu0 %8393
  %8395 = vrot.lane.b32.xlu0 %v7510, 16
  %v8396 = vpop.permute.xlu0 %8395
  %8397 = vrot.lane.b32.xlu0 %v7513, 16
  %v8398 = vpop.permute.xlu0 %8397
  %8399 = vrot.lane.b32.xlu0 %v7515, 16
  %v8400 = vpop.permute.xlu0 %8399
  %8401 = vrot.lane.b32.xlu0 %v7518, 16
  %v8402 = vpop.permute.xlu0 %8401
  %8403 = vrot.lane.b32.xlu0 %v7520, 16
  %v8404 = vpop.permute.xlu0 %8403
  %8405 = vrot.lane.b32.xlu0 %v7523, 16
  %v8406 = vpop.permute.xlu0 %8405
  %8407 = vrot.lane.b32.xlu0 %v7525, 16
  %v8408 = vpop.permute.xlu0 %8407
  %8409 = vrot.lane.b32.xlu0 %v7528, 16
  %v8410 = vpop.permute.xlu0 %8409
  %8411 = vrot.lane.b32.xlu0 %v7530, 16
  %v8412 = vpop.permute.xlu0 %8411
  %8413 = vrot.lane.b32.xlu0 %v7533, 16
  %v8414 = vpop.permute.xlu0 %8413
  %8415 = vrot.lane.b32.xlu0 %v7535, 16
  %v8416 = vpop.permute.xlu0 %8415
  %8417 = vrot.lane.b32.xlu0 %v7538, 16
  %v8418 = vpop.permute.xlu0 %8417
  %8419 = vrot.lane.b32.xlu0 %v7540, 16
  %v8420 = vpop.permute.xlu0 %8419
  %8421 = vrot.lane.b32.xlu0 %v7543, 16
  %v8422 = vpop.permute.xlu0 %8421
  %8423 = vrot.lane.b32.xlu0 %v7545, 16
  %v8424 = vpop.permute.xlu0 %8423
  %8425 = vrot.lane.b32.xlu0 %v7548, 16
  %v8426 = vpop.permute.xlu0 %8425
  %8427 = vrot.lane.b32.xlu0 %v7550, 16
  %v8428 = vpop.permute.xlu0 %8427
  %8429 = vrot.lane.b32.xlu0 %v7553, 16
  %v8430 = vpop.permute.xlu0 %8429
  %8431 = vrot.lane.b32.xlu0 %v7555, 16
  %v8432 = vpop.permute.xlu0 %8431
  %8433 = vrot.lane.b32.xlu0 %v7558, 16
  %v8434 = vpop.permute.xlu0 %8433
  %8435 = vrot.lane.b32.xlu0 %v7560, 16
  %v8436 = vpop.permute.xlu0 %8435
  %8437 = vrot.lane.b32.xlu0 %v8310, 16
  %v8438 = vpop.permute.xlu0 %8437
  %8439 = vrot.lane.b32.xlu0 %v8312, 16
  %v8440 = vpop.permute.xlu0 %8439
  %v8505 = vrot.slane %v7245, 2
  %v8506 = vrot.slane %v7246, 2
  %v8507 = vsel %vm3883, %v8505, %v8506
  %v8508 = vrot.slane %v7247, 2
  %v8509 = vsel %vm3883, %v8506, %v8508
  %v8510 = vrot.slane %v7299, 2
  %v8511 = vrot.slane %v7300, 2
  %v8512 = vsel %vm3883, %v8510, %v8511
  %v8513 = vrot.slane %v7301, 2
  %v8514 = vsel %vm3883, %v8511, %v8513
  %8515 = vrot.lane.b32.xlu0 %v7760, 20
  %v8516 = vpop.permute.xlu0 %8515
  %8517 = vrot.lane.b32.xlu0 %v7762, 20
  %v8518 = vpop.permute.xlu0 %8517
  %8519 = vrot.lane.b32.xlu0 %v7765, 20
  %v8520 = vpop.permute.xlu0 %8519
  %8521 = vrot.lane.b32.xlu0 %v7767, 20
  %v8522 = vpop.permute.xlu0 %8521
  %8523 = vrot.lane.b32.xlu0 %v7770, 20
  %v8524 = vpop.permute.xlu0 %8523
  %8525 = vrot.lane.b32.xlu0 %v7772, 20
  %v8526 = vpop.permute.xlu0 %8525
  %8527 = vrot.lane.b32.xlu0 %v7775, 20
  %v8528 = vpop.permute.xlu0 %8527
  %8529 = vrot.lane.b32.xlu0 %v7777, 20
  %v8530 = vpop.permute.xlu0 %8529
  %8531 = vrot.lane.b32.xlu0 %v7780, 20
  %v8532 = vpop.permute.xlu0 %8531
  %8533 = vrot.lane.b32.xlu0 %v7782, 20
  %v8534 = vpop.permute.xlu0 %8533
  %8535 = vrot.lane.b32.xlu0 %v7785, 20
  %v8536 = vpop.permute.xlu0 %8535
  %8537 = vrot.lane.b32.xlu0 %v7787, 20
  %v8538 = vpop.permute.xlu0 %8537
  %8539 = vrot.lane.b32.xlu0 %v7790, 20
  %v8540 = vpop.permute.xlu0 %8539
  %8541 = vrot.lane.b32.xlu0 %v7792, 20
  %v8542 = vpop.permute.xlu0 %8541
  %8543 = vrot.lane.b32.xlu0 %v7795, 20
  %v8544 = vpop.permute.xlu0 %8543
  %8545 = vrot.lane.b32.xlu0 %v7797, 20
  %v8546 = vpop.permute.xlu0 %8545
  %8547 = vrot.lane.b32.xlu0 %v7800, 20
  %v8548 = vpop.permute.xlu0 %8547
  %8549 = vrot.lane.b32.xlu0 %v7802, 20
  %v8550 = vpop.permute.xlu0 %8549
  %8551 = vrot.lane.b32.xlu0 %v7805, 20
  %v8552 = vpop.permute.xlu0 %8551
  %8553 = vrot.lane.b32.xlu0 %v7807, 20
  %v8554 = vpop.permute.xlu0 %8553
  %8555 = vrot.lane.b32.xlu0 %v7810, 20
  %v8556 = vpop.permute.xlu0 %8555
  %8557 = vrot.lane.b32.xlu0 %v7812, 20
  %v8558 = vpop.permute.xlu0 %8557
  %8559 = vrot.lane.b32.xlu0 %v7815, 20
  %v8560 = vpop.permute.xlu0 %8559
  %8561 = vrot.lane.b32.xlu0 %v7817, 20
  %v8562 = vpop.permute.xlu0 %8561
  %8563 = vrot.lane.b32.xlu0 %v7820, 20
  %v8564 = vpop.permute.xlu0 %8563
  %8565 = vrot.lane.b32.xlu0 %v7822, 20
  %v8566 = vpop.permute.xlu0 %8565
  %8567 = vrot.lane.b32.xlu0 %v7825, 20
  %v8568 = vpop.permute.xlu0 %8567
  %8569 = vrot.lane.b32.xlu0 %v7827, 20
  %v8570 = vpop.permute.xlu0 %8569
  %8571 = vrot.lane.b32.xlu0 %v7830, 20
  %v8572 = vpop.permute.xlu0 %8571
  %8573 = vrot.lane.b32.xlu0 %v7832, 20
  %v8574 = vpop.permute.xlu0 %8573
  %8575 = vrot.lane.b32.xlu0 %v8507, 20
  %v8576 = vpop.permute.xlu0 %8575
  %8577 = vrot.lane.b32.xlu0 %v8509, 20
  %v8578 = vpop.permute.xlu0 %8577
  %8579 = vrot.lane.b32.xlu0 %v7840, 20
  %v8580 = vpop.permute.xlu0 %8579
  %8581 = vrot.lane.b32.xlu0 %v7842, 20
  %v8582 = vpop.permute.xlu0 %8581
  %8583 = vrot.lane.b32.xlu0 %v7845, 20
  %v8584 = vpop.permute.xlu0 %8583
  %8585 = vrot.lane.b32.xlu0 %v7847, 20
  %v8586 = vpop.permute.xlu0 %8585
  %8587 = vrot.lane.b32.xlu0 %v7850, 20
  %v8588 = vpop.permute.xlu0 %8587
  %8589 = vrot.lane.b32.xlu0 %v7852, 20
  %v8590 = vpop.permute.xlu0 %8589
  %8591 = vrot.lane.b32.xlu0 %v7855, 20
  %v8592 = vpop.permute.xlu0 %8591
  %8593 = vrot.lane.b32.xlu0 %v7857, 20
  %v8594 = vpop.permute.xlu0 %8593
  %8595 = vrot.lane.b32.xlu0 %v7860, 20
  %v8596 = vpop.permute.xlu0 %8595
  %8597 = vrot.lane.b32.xlu0 %v7862, 20
  %v8598 = vpop.permute.xlu0 %8597
  %8599 = vrot.lane.b32.xlu0 %v7865, 20
  %v8600 = vpop.permute.xlu0 %8599
  %8601 = vrot.lane.b32.xlu0 %v7867, 20
  %v8602 = vpop.permute.xlu0 %8601
  %8603 = vrot.lane.b32.xlu0 %v7870, 20
  %v8604 = vpop.permute.xlu0 %8603
  %8605 = vrot.lane.b32.xlu0 %v7872, 20
  %v8606 = vpop.permute.xlu0 %8605
  %8607 = vrot.lane.b32.xlu0 %v7875, 20
  %v8608 = vpop.permute.xlu0 %8607
  %8609 = vrot.lane.b32.xlu0 %v7877, 20
  %v8610 = vpop.permute.xlu0 %8609
  %8611 = vrot.lane.b32.xlu0 %v7880, 20
  %v8612 = vpop.permute.xlu0 %8611
  %8613 = vrot.lane.b32.xlu0 %v7882, 20
  %v8614 = vpop.permute.xlu0 %8613
  %8615 = vrot.lane.b32.xlu0 %v7885, 20
  %v8616 = vpop.permute.xlu0 %8615
  %8617 = vrot.lane.b32.xlu0 %v7887, 20
  %v8618 = vpop.permute.xlu0 %8617
  %8619 = vrot.lane.b32.xlu0 %v7890, 20
  %v8620 = vpop.permute.xlu0 %8619
  %8621 = vrot.lane.b32.xlu0 %v7892, 20
  %v8622 = vpop.permute.xlu0 %8621
  %8623 = vrot.lane.b32.xlu0 %v7895, 20
  %v8624 = vpop.permute.xlu0 %8623
  %8625 = vrot.lane.b32.xlu0 %v7897, 20
  %v8626 = vpop.permute.xlu0 %8625
  %8627 = vrot.lane.b32.xlu0 %v7900, 20
  %v8628 = vpop.permute.xlu0 %8627
  %8629 = vrot.lane.b32.xlu0 %v7902, 20
  %v8630 = vpop.permute.xlu0 %8629
  %8631 = vrot.lane.b32.xlu0 %v7905, 20
  %v8632 = vpop.permute.xlu0 %8631
  %8633 = vrot.lane.b32.xlu0 %v7907, 20
  %v8634 = vpop.permute.xlu0 %8633
  %8635 = vrot.lane.b32.xlu0 %v7910, 20
  %v8636 = vpop.permute.xlu0 %8635
  %8637 = vrot.lane.b32.xlu0 %v7912, 20
  %v8638 = vpop.permute.xlu0 %8637
  %8639 = vrot.lane.b32.xlu0 %v8512, 20
  %v8640 = vpop.permute.xlu0 %8639
  %8641 = vrot.lane.b32.xlu0 %v8514, 20
  %v8642 = vpop.permute.xlu0 %8641
  %8711 = vrot.lane.b32.xlu0 %v7203, 24
  %v8712 = vpop.permute.xlu0 %8711
  %8713 = vrot.lane.b32.xlu0 %v7204, 24
  %v8714 = vpop.permute.xlu0 %8713
  %8715 = vrot.lane.b32.xlu0 %v7206, 24
  %v8716 = vpop.permute.xlu0 %8715
  %8717 = vrot.lane.b32.xlu0 %v7207, 24
  %v8718 = vpop.permute.xlu0 %8717
  %8719 = vrot.lane.b32.xlu0 %v7209, 24
  %v8720 = vpop.permute.xlu0 %8719
  %8721 = vrot.lane.b32.xlu0 %v7210, 24
  %v8722 = vpop.permute.xlu0 %8721
  %8723 = vrot.lane.b32.xlu0 %v7212, 24
  %v8724 = vpop.permute.xlu0 %8723
  %8725 = vrot.lane.b32.xlu0 %v7213, 24
  %v8726 = vpop.permute.xlu0 %8725
  %8727 = vrot.lane.b32.xlu0 %v7215, 24
  %v8728 = vpop.permute.xlu0 %8727
  %8729 = vrot.lane.b32.xlu0 %v7216, 24
  %v8730 = vpop.permute.xlu0 %8729
  %8731 = vrot.lane.b32.xlu0 %v7218, 24
  %v8732 = vpop.permute.xlu0 %8731
  %8733 = vrot.lane.b32.xlu0 %v7219, 24
  %v8734 = vpop.permute.xlu0 %8733
  %8735 = vrot.lane.b32.xlu0 %v7221, 24
  %v8736 = vpop.permute.xlu0 %8735
  %8737 = vrot.lane.b32.xlu0 %v7222, 24
  %v8738 = vpop.permute.xlu0 %8737
  %8739 = vrot.lane.b32.xlu0 %v7224, 24
  %v8740 = vpop.permute.xlu0 %8739
  %8741 = vrot.lane.b32.xlu0 %v7225, 24
  %v8742 = vpop.permute.xlu0 %8741
  %8743 = vrot.lane.b32.xlu0 %v7227, 24
  %v8744 = vpop.permute.xlu0 %8743
  %8745 = vrot.lane.b32.xlu0 %v7228, 24
  %v8746 = vpop.permute.xlu0 %8745
  %8747 = vrot.lane.b32.xlu0 %v7230, 24
  %v8748 = vpop.permute.xlu0 %8747
  %8749 = vrot.lane.b32.xlu0 %v7231, 24
  %v8750 = vpop.permute.xlu0 %8749
  %8751 = vrot.lane.b32.xlu0 %v7233, 24
  %v8752 = vpop.permute.xlu0 %8751
  %8753 = vrot.lane.b32.xlu0 %v7234, 24
  %v8754 = vpop.permute.xlu0 %8753
  %8755 = vrot.lane.b32.xlu0 %v7236, 24
  %v8756 = vpop.permute.xlu0 %8755
  %8757 = vrot.lane.b32.xlu0 %v7237, 24
  %v8758 = vpop.permute.xlu0 %8757
  %8759 = vrot.lane.b32.xlu0 %v7239, 24
  %v8760 = vpop.permute.xlu0 %8759
  %8761 = vrot.lane.b32.xlu0 %v7240, 24
  %v8762 = vpop.permute.xlu0 %8761
  %8763 = vrot.lane.b32.xlu0 %v7242, 24
  %v8764 = vpop.permute.xlu0 %8763
  %8765 = vrot.lane.b32.xlu0 %v7243, 24
  %v8766 = vpop.permute.xlu0 %8765
  %8767 = vrot.lane.b32.xlu0 %v7245, 24
  %v8768 = vpop.permute.xlu0 %8767
  %8769 = vrot.lane.b32.xlu0 %v7246, 24
  %v8770 = vpop.permute.xlu0 %8769
  %8771 = vrot.lane.b32.xlu0 %v7248, 24
  %v8772 = vpop.permute.xlu0 %8771
  %8773 = vrot.lane.b32.xlu0 %v7249, 24
  %v8774 = vpop.permute.xlu0 %8773
  %8775 = vrot.lane.b32.xlu0 %v7257, 24
  %v8776 = vpop.permute.xlu0 %8775
  %8777 = vrot.lane.b32.xlu0 %v7258, 24
  %v8778 = vpop.permute.xlu0 %8777
  %8779 = vrot.lane.b32.xlu0 %v7260, 24
  %v8780 = vpop.permute.xlu0 %8779
  %8781 = vrot.lane.b32.xlu0 %v7261, 24
  %v8782 = vpop.permute.xlu0 %8781
  %8783 = vrot.lane.b32.xlu0 %v7263, 24
  %v8784 = vpop.permute.xlu0 %8783
  %8785 = vrot.lane.b32.xlu0 %v7264, 24
  %v8786 = vpop.permute.xlu0 %8785
  %8787 = vrot.lane.b32.xlu0 %v7266, 24
  %v8788 = vpop.permute.xlu0 %8787
  %8789 = vrot.lane.b32.xlu0 %v7267, 24
  %v8790 = vpop.permute.xlu0 %8789
  %8791 = vrot.lane.b32.xlu0 %v7269, 24
  %v8792 = vpop.permute.xlu0 %8791
  %8793 = vrot.lane.b32.xlu0 %v7270, 24
  %v8794 = vpop.permute.xlu0 %8793
  %8795 = vrot.lane.b32.xlu0 %v7272, 24
  %v8796 = vpop.permute.xlu0 %8795
  %8797 = vrot.lane.b32.xlu0 %v7273, 24
  %v8798 = vpop.permute.xlu0 %8797
  %8799 = vrot.lane.b32.xlu0 %v7275, 24
  %v8800 = vpop.permute.xlu0 %8799
  %8801 = vrot.lane.b32.xlu0 %v7276, 24
  %v8802 = vpop.permute.xlu0 %8801
  %8803 = vrot.lane.b32.xlu0 %v7278, 24
  %v8804 = vpop.permute.xlu0 %8803
  %8805 = vrot.lane.b32.xlu0 %v7279, 24
  %v8806 = vpop.permute.xlu0 %8805
  %8807 = vrot.lane.b32.xlu0 %v7281, 24
  %v8808 = vpop.permute.xlu0 %8807
  %8809 = vrot.lane.b32.xlu0 %v7282, 24
  %v8810 = vpop.permute.xlu0 %8809
  %8811 = vrot.lane.b32.xlu0 %v7284, 24
  %v8812 = vpop.permute.xlu0 %8811
  %8813 = vrot.lane.b32.xlu0 %v7285, 24
  %v8814 = vpop.permute.xlu0 %8813
  %8815 = vrot.lane.b32.xlu0 %v7287, 24
  %v8816 = vpop.permute.xlu0 %8815
  %8817 = vrot.lane.b32.xlu0 %v7288, 24
  %v8818 = vpop.permute.xlu0 %8817
  %8819 = vrot.lane.b32.xlu0 %v7290, 24
  %v8820 = vpop.permute.xlu0 %8819
  %8821 = vrot.lane.b32.xlu0 %v7291, 24
  %v8822 = vpop.permute.xlu0 %8821
  %8823 = vrot.lane.b32.xlu0 %v7293, 24
  %v8824 = vpop.permute.xlu0 %8823
  %8825 = vrot.lane.b32.xlu0 %v7294, 24
  %v8826 = vpop.permute.xlu0 %8825
  %8827 = vrot.lane.b32.xlu0 %v7296, 24
  %v8828 = vpop.permute.xlu0 %8827
  %8829 = vrot.lane.b32.xlu0 %v7297, 24
  %v8830 = vpop.permute.xlu0 %8829
  %8831 = vrot.lane.b32.xlu0 %v7299, 24
  %v8832 = vpop.permute.xlu0 %8831
  %8833 = vrot.lane.b32.xlu0 %v7300, 24
  %v8834 = vpop.permute.xlu0 %8833
  %8835 = vrot.lane.b32.xlu0 %v7302, 24
  %v8836 = vpop.permute.xlu0 %8835
  %8837 = vrot.lane.b32.xlu0 %v7303, 24
  %v8838 = vpop.permute.xlu0 %8837
  %v8905 = vrot.slane %v7248, 1
  %v8906 = vrot.slane %v7249, 1
  %v8907 = vsel %vm3530, %v8905, %v8906
  %v8908 = vrot.slane %v7250, 1
  %v8909 = vsel %vm3530, %v8906, %v8908
  %v8910 = vrot.slane %v7302, 1
  %v8911 = vrot.slane %v7303, 1
  %v8912 = vsel %vm3530, %v8910, %v8911
  %v8913 = vrot.slane %v7304, 1
  %v8914 = vsel %vm3530, %v8911, %v8913
  %8915 = vrot.lane.b32.xlu0 %v7413, 28
  %v8916 = vpop.permute.xlu0 %8915
  %8917 = vrot.lane.b32.xlu0 %v7415, 28
  %v8918 = vpop.permute.xlu0 %8917
  %8919 = vrot.lane.b32.xlu0 %v7418, 28
  %v8920 = vpop.permute.xlu0 %8919
  %8921 = vrot.lane.b32.xlu0 %v7420, 28
  %v8922 = vpop.permute.xlu0 %8921
  %8923 = vrot.lane.b32.xlu0 %v7423, 28
  %v8924 = vpop.permute.xlu0 %8923
  %8925 = vrot.lane.b32.xlu0 %v7425, 28
  %v8926 = vpop.permute.xlu0 %8925
  %8927 = vrot.lane.b32.xlu0 %v7428, 28
  %v8928 = vpop.permute.xlu0 %8927
  %8929 = vrot.lane.b32.xlu0 %v7430, 28
  %v8930 = vpop.permute.xlu0 %8929
  %8931 = vrot.lane.b32.xlu0 %v7433, 28
  %v8932 = vpop.permute.xlu0 %8931
  %8933 = vrot.lane.b32.xlu0 %v7435, 28
  %v8934 = vpop.permute.xlu0 %8933
  %8935 = vrot.lane.b32.xlu0 %v7438, 28
  %v8936 = vpop.permute.xlu0 %8935
  %8937 = vrot.lane.b32.xlu0 %v7440, 28
  %v8938 = vpop.permute.xlu0 %8937
  %8939 = vrot.lane.b32.xlu0 %v7443, 28
  %v8940 = vpop.permute.xlu0 %8939
  %8941 = vrot.lane.b32.xlu0 %v7445, 28
  %v8942 = vpop.permute.xlu0 %8941
  %8943 = vrot.lane.b32.xlu0 %v7448, 28
  %v8944 = vpop.permute.xlu0 %8943
  %8945 = vrot.lane.b32.xlu0 %v7450, 28
  %v8946 = vpop.permute.xlu0 %8945
  %8947 = vrot.lane.b32.xlu0 %v7453, 28
  %v8948 = vpop.permute.xlu0 %8947
  %8949 = vrot.lane.b32.xlu0 %v7455, 28
  %v8950 = vpop.permute.xlu0 %8949
  %8951 = vrot.lane.b32.xlu0 %v7458, 28
  %v8952 = vpop.permute.xlu0 %8951
  %8953 = vrot.lane.b32.xlu0 %v7460, 28
  %v8954 = vpop.permute.xlu0 %8953
  %8955 = vrot.lane.b32.xlu0 %v7463, 28
  %v8956 = vpop.permute.xlu0 %8955
  %8957 = vrot.lane.b32.xlu0 %v7465, 28
  %v8958 = vpop.permute.xlu0 %8957
  %8959 = vrot.lane.b32.xlu0 %v7468, 28
  %v8960 = vpop.permute.xlu0 %8959
  %8961 = vrot.lane.b32.xlu0 %v7470, 28
  %v8962 = vpop.permute.xlu0 %8961
  %8963 = vrot.lane.b32.xlu0 %v7473, 28
  %v8964 = vpop.permute.xlu0 %8963
  %8965 = vrot.lane.b32.xlu0 %v7475, 28
  %v8966 = vpop.permute.xlu0 %8965
  %8967 = vrot.lane.b32.xlu0 %v7478, 28
  %v8968 = vpop.permute.xlu0 %8967
  %8969 = vrot.lane.b32.xlu0 %v7480, 28
  %v8970 = vpop.permute.xlu0 %8969
  %8971 = vrot.lane.b32.xlu0 %v8305, 28
  %v8972 = vpop.permute.xlu0 %8971
  %8973 = vrot.lane.b32.xlu0 %v8307, 28
  %v8974 = vpop.permute.xlu0 %8973
  %8975 = vrot.lane.b32.xlu0 %v8907, 28
  %v8976 = vpop.permute.xlu0 %8975
  %8977 = vrot.lane.b32.xlu0 %v8909, 28
  %v8978 = vpop.permute.xlu0 %8977
  %8979 = vrot.lane.b32.xlu0 %v7493, 28
  %v8980 = vpop.permute.xlu0 %8979
  %8981 = vrot.lane.b32.xlu0 %v7495, 28
  %v8982 = vpop.permute.xlu0 %8981
  %8983 = vrot.lane.b32.xlu0 %v7498, 28
  %v8984 = vpop.permute.xlu0 %8983
  %8985 = vrot.lane.b32.xlu0 %v7500, 28
  %v8986 = vpop.permute.xlu0 %8985
  %8987 = vrot.lane.b32.xlu0 %v7503, 28
  %v8988 = vpop.permute.xlu0 %8987
  %8989 = vrot.lane.b32.xlu0 %v7505, 28
  %v8990 = vpop.permute.xlu0 %8989
  %8991 = vrot.lane.b32.xlu0 %v7508, 28
  %v8992 = vpop.permute.xlu0 %8991
  %8993 = vrot.lane.b32.xlu0 %v7510, 28
  %v8994 = vpop.permute.xlu0 %8993
  %8995 = vrot.lane.b32.xlu0 %v7513, 28
  %v8996 = vpop.permute.xlu0 %8995
  %8997 = vrot.lane.b32.xlu0 %v7515, 28
  %v8998 = vpop.permute.xlu0 %8997
  %8999 = vrot.lane.b32.xlu0 %v7518, 28
  %v9000 = vpop.permute.xlu0 %8999
  %9001 = vrot.lane.b32.xlu0 %v7520, 28
  %v9002 = vpop.permute.xlu0 %9001
  %9003 = vrot.lane.b32.xlu0 %v7523, 28
  %v9004 = vpop.permute.xlu0 %9003
  %9005 = vrot.lane.b32.xlu0 %v7525, 28
  %v9006 = vpop.permute.xlu0 %9005
  %9007 = vrot.lane.b32.xlu0 %v7528, 28
  %v9008 = vpop.permute.xlu0 %9007
  %9009 = vrot.lane.b32.xlu0 %v7530, 28
  %v9010 = vpop.permute.xlu0 %9009
  %9011 = vrot.lane.b32.xlu0 %v7533, 28
  %v9012 = vpop.permute.xlu0 %9011
  %9013 = vrot.lane.b32.xlu0 %v7535, 28
  %v9014 = vpop.permute.xlu0 %9013
  %9015 = vrot.lane.b32.xlu0 %v7538, 28
  %v9016 = vpop.permute.xlu0 %9015
  %9017 = vrot.lane.b32.xlu0 %v7540, 28
  %v9018 = vpop.permute.xlu0 %9017
  %9019 = vrot.lane.b32.xlu0 %v7543, 28
  %v9020 = vpop.permute.xlu0 %9019
  %9021 = vrot.lane.b32.xlu0 %v7545, 28
  %v9022 = vpop.permute.xlu0 %9021
  %9023 = vrot.lane.b32.xlu0 %v7548, 28
  %v9024 = vpop.permute.xlu0 %9023
  %9025 = vrot.lane.b32.xlu0 %v7550, 28
  %v9026 = vpop.permute.xlu0 %9025
  %9027 = vrot.lane.b32.xlu0 %v7553, 28
  %v9028 = vpop.permute.xlu0 %9027
  %9029 = vrot.lane.b32.xlu0 %v7555, 28
  %v9030 = vpop.permute.xlu0 %9029
  %9031 = vrot.lane.b32.xlu0 %v7558, 28
  %v9032 = vpop.permute.xlu0 %9031
  %9033 = vrot.lane.b32.xlu0 %v7560, 28
  %v9034 = vpop.permute.xlu0 %9033
  %9035 = vrot.lane.b32.xlu0 %v8310, 28
  %v9036 = vpop.permute.xlu0 %9035
  %9037 = vrot.lane.b32.xlu0 %v8312, 28
  %v9038 = vpop.permute.xlu0 %9037
  %9039 = vrot.lane.b32.xlu0 %v8912, 28
  %v9040 = vpop.permute.xlu0 %9039
  %9041 = vrot.lane.b32.xlu0 %v8914, 28
  %v9042 = vpop.permute.xlu0 %9041
  %v9107 = vrot.slane %v7248, 2
  %v9108 = vrot.slane %v7249, 2
  %v9109 = vsel %vm3883, %v9107, %v9108
  %v9110 = vrot.slane %v7250, 2
  %v9111 = vsel %vm3883, %v9108, %v9110
  %v9112 = vrot.slane %v7302, 2
  %v9113 = vrot.slane %v7303, 2
  %v9114 = vsel %vm3883, %v9112, %v9113
  %v9115 = vrot.slane %v7304, 2
  %v9116 = vsel %vm3883, %v9113, %v9115
  %9117 = vrot.lane.b32.xlu0 %v7765, 32
  %v9118 = vpop.permute.xlu0 %9117
  %9119 = vrot.lane.b32.xlu0 %v7767, 32
  %v9120 = vpop.permute.xlu0 %9119
  %9121 = vrot.lane.b32.xlu0 %v7770, 32
  %v9122 = vpop.permute.xlu0 %9121
  %9123 = vrot.lane.b32.xlu0 %v7772, 32
  %v9124 = vpop.permute.xlu0 %9123
  %9125 = vrot.lane.b32.xlu0 %v7775, 32
  %v9126 = vpop.permute.xlu0 %9125
  %9127 = vrot.lane.b32.xlu0 %v7777, 32
  %v9128 = vpop.permute.xlu0 %9127
  %9129 = vrot.lane.b32.xlu0 %v7780, 32
  %v9130 = vpop.permute.xlu0 %9129
  %9131 = vrot.lane.b32.xlu0 %v7782, 32
  %v9132 = vpop.permute.xlu0 %9131
  %9133 = vrot.lane.b32.xlu0 %v7785, 32
  %v9134 = vpop.permute.xlu0 %9133
  %9135 = vrot.lane.b32.xlu0 %v7787, 32
  %v9136 = vpop.permute.xlu0 %9135
  %9137 = vrot.lane.b32.xlu0 %v7790, 32
  %v9138 = vpop.permute.xlu0 %9137
  %9139 = vrot.lane.b32.xlu0 %v7792, 32
  %v9140 = vpop.permute.xlu0 %9139
  %9141 = vrot.lane.b32.xlu0 %v7795, 32
  %v9142 = vpop.permute.xlu0 %9141
  %9143 = vrot.lane.b32.xlu0 %v7797, 32
  %v9144 = vpop.permute.xlu0 %9143
  %9145 = vrot.lane.b32.xlu0 %v7800, 32
  %v9146 = vpop.permute.xlu0 %9145
  %9147 = vrot.lane.b32.xlu0 %v7802, 32
  %v9148 = vpop.permute.xlu0 %9147
  %9149 = vrot.lane.b32.xlu0 %v7805, 32
  %v9150 = vpop.permute.xlu0 %9149
  %9151 = vrot.lane.b32.xlu0 %v7807, 32
  %v9152 = vpop.permute.xlu0 %9151
  %9153 = vrot.lane.b32.xlu0 %v7810, 32
  %v9154 = vpop.permute.xlu0 %9153
  %9155 = vrot.lane.b32.xlu0 %v7812, 32
  %v9156 = vpop.permute.xlu0 %9155
  %9157 = vrot.lane.b32.xlu0 %v7815, 32
  %v9158 = vpop.permute.xlu0 %9157
  %9159 = vrot.lane.b32.xlu0 %v7817, 32
  %v9160 = vpop.permute.xlu0 %9159
  %9161 = vrot.lane.b32.xlu0 %v7820, 32
  %v9162 = vpop.permute.xlu0 %9161
  %9163 = vrot.lane.b32.xlu0 %v7822, 32
  %v9164 = vpop.permute.xlu0 %9163
  %9165 = vrot.lane.b32.xlu0 %v7825, 32
  %v9166 = vpop.permute.xlu0 %9165
  %9167 = vrot.lane.b32.xlu0 %v7827, 32
  %v9168 = vpop.permute.xlu0 %9167
  %9169 = vrot.lane.b32.xlu0 %v7830, 32
  %v9170 = vpop.permute.xlu0 %9169
  %9171 = vrot.lane.b32.xlu0 %v7832, 32
  %v9172 = vpop.permute.xlu0 %9171
  %9173 = vrot.lane.b32.xlu0 %v8507, 32
  %v9174 = vpop.permute.xlu0 %9173
  %9175 = vrot.lane.b32.xlu0 %v8509, 32
  %v9176 = vpop.permute.xlu0 %9175
  %9177 = vrot.lane.b32.xlu0 %v9109, 32
  %v9178 = vpop.permute.xlu0 %9177
  %9179 = vrot.lane.b32.xlu0 %v9111, 32
  %v9180 = vpop.permute.xlu0 %9179
  %9181 = vrot.lane.b32.xlu0 %v7845, 32
  %v9182 = vpop.permute.xlu0 %9181
  %9183 = vrot.lane.b32.xlu0 %v7847, 32
  %v9184 = vpop.permute.xlu0 %9183
  %9185 = vrot.lane.b32.xlu0 %v7850, 32
  %v9186 = vpop.permute.xlu0 %9185
  %9187 = vrot.lane.b32.xlu0 %v7852, 32
  %v9188 = vpop.permute.xlu0 %9187
  %9189 = vrot.lane.b32.xlu0 %v7855, 32
  %v9190 = vpop.permute.xlu0 %9189
  %9191 = vrot.lane.b32.xlu0 %v7857, 32
  %v9192 = vpop.permute.xlu0 %9191
  %9193 = vrot.lane.b32.xlu0 %v7860, 32
  %v9194 = vpop.permute.xlu0 %9193
  %9195 = vrot.lane.b32.xlu0 %v7862, 32
  %v9196 = vpop.permute.xlu0 %9195
  %9197 = vrot.lane.b32.xlu0 %v7865, 32
  %v9198 = vpop.permute.xlu0 %9197
  %9199 = vrot.lane.b32.xlu0 %v7867, 32
  %v9200 = vpop.permute.xlu0 %9199
  %9201 = vrot.lane.b32.xlu0 %v7870, 32
  %v9202 = vpop.permute.xlu0 %9201
  %9203 = vrot.lane.b32.xlu0 %v7872, 32
  %v9204 = vpop.permute.xlu0 %9203
  %9205 = vrot.lane.b32.xlu0 %v7875, 32
  %v9206 = vpop.permute.xlu0 %9205
  %9207 = vrot.lane.b32.xlu0 %v7877, 32
  %v9208 = vpop.permute.xlu0 %9207
  %9209 = vrot.lane.b32.xlu0 %v7880, 32
  %v9210 = vpop.permute.xlu0 %9209
  %9211 = vrot.lane.b32.xlu0 %v7882, 32
  %v9212 = vpop.permute.xlu0 %9211
  %9213 = vrot.lane.b32.xlu0 %v7885, 32
  %v9214 = vpop.permute.xlu0 %9213
  %9215 = vrot.lane.b32.xlu0 %v7887, 32
  %v9216 = vpop.permute.xlu0 %9215
  %9217 = vrot.lane.b32.xlu0 %v7890, 32
  %v9218 = vpop.permute.xlu0 %9217
  %9219 = vrot.lane.b32.xlu0 %v7892, 32
  %v9220 = vpop.permute.xlu0 %9219
  %9221 = vrot.lane.b32.xlu0 %v7895, 32
  %v9222 = vpop.permute.xlu0 %9221
  %9223 = vrot.lane.b32.xlu0 %v7897, 32
  %v9224 = vpop.permute.xlu0 %9223
  %9225 = vrot.lane.b32.xlu0 %v7900, 32
  %v9226 = vpop.permute.xlu0 %9225
  %9227 = vrot.lane.b32.xlu0 %v7902, 32
  %v9228 = vpop.permute.xlu0 %9227
  %9229 = vrot.lane.b32.xlu0 %v7905, 32
  %v9230 = vpop.permute.xlu0 %9229
  %9231 = vrot.lane.b32.xlu0 %v7907, 32
  %v9232 = vpop.permute.xlu0 %9231
  %9233 = vrot.lane.b32.xlu0 %v7910, 32
  %v9234 = vpop.permute.xlu0 %9233
  %9235 = vrot.lane.b32.xlu0 %v7912, 32
  %v9236 = vpop.permute.xlu0 %9235
  %9237 = vrot.lane.b32.xlu0 %v8512, 32
  %v9238 = vpop.permute.xlu0 %9237
  %9239 = vrot.lane.b32.xlu0 %v8514, 32
  %v9240 = vpop.permute.xlu0 %9239
  %9241 = vrot.lane.b32.xlu0 %v9114, 32
  %v9242 = vpop.permute.xlu0 %9241
  %9243 = vrot.lane.b32.xlu0 %v9116, 32
  %v9244 = vpop.permute.xlu0 %9243
  %v9309 = vsel %vm3196, %v7197, %v7562
  %v9310 = vsel %vm3196, %v7198, %v7564
  %v9311 = vsel %vm3196, %v7200, %v7566
  %v9312 = vsel %vm3196, %v7201, %v7568
  %v9313 = vsel %vm3196, %v7203, %v7570
  %v9314 = vsel %vm3196, %v7204, %v7572
  %v9315 = vsel %vm3196, %v7206, %v7574
  %v9316 = vsel %vm3196, %v7207, %v7576
  %v9317 = vsel %vm3196, %v7209, %v7578
  %v9318 = vsel %vm3196, %v7210, %v7580
  %v9319 = vsel %vm3196, %v7212, %v7582
  %v9320 = vsel %vm3196, %v7213, %v7584
  %v9321 = vsel %vm3196, %v7215, %v7586
  %v9322 = vsel %vm3196, %v7216, %v7588
  %v9323 = vsel %vm3196, %v7218, %v7590
  %v9324 = vsel %vm3196, %v7219, %v7592
  %v9325 = vsel %vm3196, %v7221, %v7594
  %v9326 = vsel %vm3196, %v7222, %v7596
  %v9327 = vsel %vm3196, %v7224, %v7598
  %v9328 = vsel %vm3196, %v7225, %v7600
  %v9329 = vsel %vm3196, %v7227, %v7602
  %v9330 = vsel %vm3196, %v7228, %v7604
  %v9331 = vsel %vm3196, %v7230, %v7606
  %v9332 = vsel %vm3196, %v7231, %v7608
  %v9333 = vsel %vm3196, %v7233, %v7610
  %v9334 = vsel %vm3196, %v7234, %v7612
  %v9335 = vsel %vm3196, %v7236, %v7614
  %v9336 = vsel %vm3196, %v7237, %v7616
  %v9337 = vsel %vm3196, %v7239, %v7618
  %v9338 = vsel %vm3196, %v7240, %v7620
  %v9339 = vsel %vm3196, %v7242, %v7622
  %v9340 = vsel %vm3196, %v7243, %v7624
  %v9341 = vsel %vm3196, %v7251, %v7626
  %v9342 = vsel %vm3196, %v7252, %v7628
  %v9343 = vsel %vm3196, %v7254, %v7630
  %v9344 = vsel %vm3196, %v7255, %v7632
  %v9345 = vsel %vm3196, %v7257, %v7634
  %v9346 = vsel %vm3196, %v7258, %v7636
  %v9347 = vsel %vm3196, %v7260, %v7638
  %v9348 = vsel %vm3196, %v7261, %v7640
  %v9349 = vsel %vm3196, %v7263, %v7642
  %v9350 = vsel %vm3196, %v7264, %v7644
  %v9351 = vsel %vm3196, %v7266, %v7646
  %v9352 = vsel %vm3196, %v7267, %v7648
  %v9353 = vsel %vm3196, %v7269, %v7650
  %v9354 = vsel %vm3196, %v7270, %v7652
  %v9355 = vsel %vm3196, %v7272, %v7654
  %v9356 = vsel %vm3196, %v7273, %v7656
  %v9357 = vsel %vm3196, %v7275, %v7658
  %v9358 = vsel %vm3196, %v7276, %v7660
  %v9359 = vsel %vm3196, %v7278, %v7662
  %v9360 = vsel %vm3196, %v7279, %v7664
  %v9361 = vsel %vm3196, %v7281, %v7666
  %v9362 = vsel %vm3196, %v7282, %v7668
  %v9363 = vsel %vm3196, %v7284, %v7670
  %v9364 = vsel %vm3196, %v7285, %v7672
  %v9365 = vsel %vm3196, %v7287, %v7674
  %v9366 = vsel %vm3196, %v7288, %v7676
  %v9367 = vsel %vm3196, %v7290, %v7678
  %v9368 = vsel %vm3196, %v7291, %v7680
  %v9369 = vsel %vm3196, %v7293, %v7682
  %v9370 = vsel %vm3196, %v7294, %v7684
  %v9371 = vsel %vm3196, %v7296, %v7686
  %v9372 = vsel %vm3196, %v7297, %v7688
  %v9373 = vsel %vm100, %v9309, %v7914
  %v9374 = vsel %vm100, %v9310, %v7916
  %v9375 = vsel %vm100, %v9311, %v7918
  %v9376 = vsel %vm100, %v9312, %v7920
  %v9377 = vsel %vm100, %v9313, %v7922
  %v9378 = vsel %vm100, %v9314, %v7924
  %v9379 = vsel %vm100, %v9315, %v7926
  %v9380 = vsel %vm100, %v9316, %v7928
  %v9381 = vsel %vm100, %v9317, %v7930
  %v9382 = vsel %vm100, %v9318, %v7932
  %v9383 = vsel %vm100, %v9319, %v7934
  %v9384 = vsel %vm100, %v9320, %v7936
  %v9385 = vsel %vm100, %v9321, %v7938
  %v9386 = vsel %vm100, %v9322, %v7940
  %v9387 = vsel %vm100, %v9323, %v7942
  %v9388 = vsel %vm100, %v9324, %v7944
  %v9389 = vsel %vm100, %v9325, %v7946
  %v9390 = vsel %vm100, %v9326, %v7948
  %v9391 = vsel %vm100, %v9327, %v7950
  %v9392 = vsel %vm100, %v9328, %v7952
  %v9393 = vsel %vm100, %v9329, %v7954
  %v9394 = vsel %vm100, %v9330, %v7956
  %v9395 = vsel %vm100, %v9331, %v7958
  %v9396 = vsel %vm100, %v9332, %v7960
  %v9397 = vsel %vm100, %v9333, %v7962
  %v9398 = vsel %vm100, %v9334, %v7964
  %v9399 = vsel %vm100, %v9335, %v7966
  %v9400 = vsel %vm100, %v9336, %v7968
  %v9401 = vsel %vm100, %v9337, %v7970
  %v9402 = vsel %vm100, %v9338, %v7972
  %v9403 = vsel %vm100, %v9339, %v7974
  %v9404 = vsel %vm100, %v9340, %v7976
  %v9405 = vsel %vm100, %v9341, %v7978
  %v9406 = vsel %vm100, %v9342, %v7980
  %v9407 = vsel %vm100, %v9343, %v7982
  %v9408 = vsel %vm100, %v9344, %v7984
  %v9409 = vsel %vm100, %v9345, %v7986
  %v9410 = vsel %vm100, %v9346, %v7988
  %v9411 = vsel %vm100, %v9347, %v7990
  %v9412 = vsel %vm100, %v9348, %v7992
  %v9413 = vsel %vm100, %v9349, %v7994
  %v9414 = vsel %vm100, %v9350, %v7996
  %v9415 = vsel %vm100, %v9351, %v7998
  %v9416 = vsel %vm100, %v9352, %v8000
  %v9417 = vsel %vm100, %v9353, %v8002
  %v9418 = vsel %vm100, %v9354, %v8004
  %v9419 = vsel %vm100, %v9355, %v8006
  %v9420 = vsel %vm100, %v9356, %v8008
  %v9421 = vsel %vm100, %v9357, %v8010
  %v9422 = vsel %vm100, %v9358, %v8012
  %v9423 = vsel %vm100, %v9359, %v8014
  %v9424 = vsel %vm100, %v9360, %v8016
  %v9425 = vsel %vm100, %v9361, %v8018
  %v9426 = vsel %vm100, %v9362, %v8020
  %v9427 = vsel %vm100, %v9363, %v8022
  %v9428 = vsel %vm100, %v9364, %v8024
  %v9429 = vsel %vm100, %v9365, %v8026
  %v9430 = vsel %vm100, %v9366, %v8028
  %v9431 = vsel %vm100, %v9367, %v8030
  %v9432 = vsel %vm100, %v9368, %v8032
  %v9433 = vsel %vm100, %v9369, %v8034
  %v9434 = vsel %vm100, %v9370, %v8036
  %v9435 = vsel %vm100, %v9371, %v8038
  %v9436 = vsel %vm100, %v9372, %v8040
  %vm9437 = vcmask 97280
  %v9438 = vsel %vm9437, %v9373, %v8110
  %v9439 = vsel %vm9437, %v9374, %v8112
  %v9440 = vsel %vm9437, %v9375, %v8114
  %v9441 = vsel %vm9437, %v9376, %v8116
  %v9442 = vsel %vm9437, %v9377, %v8118
  %v9443 = vsel %vm9437, %v9378, %v8120
  %v9444 = vsel %vm9437, %v9379, %v8122
  %v9445 = vsel %vm9437, %v9380, %v8124
  %v9446 = vsel %vm9437, %v9381, %v8126
  %v9447 = vsel %vm9437, %v9382, %v8128
  %v9448 = vsel %vm9437, %v9383, %v8130
  %v9449 = vsel %vm9437, %v9384, %v8132
  %v9450 = vsel %vm9437, %v9385, %v8134
  %v9451 = vsel %vm9437, %v9386, %v8136
  %v9452 = vsel %vm9437, %v9387, %v8138
  %v9453 = vsel %vm9437, %v9388, %v8140
  %v9454 = vsel %vm9437, %v9389, %v8142
  %v9455 = vsel %vm9437, %v9390, %v8144
  %v9456 = vsel %vm9437, %v9391, %v8146
  %v9457 = vsel %vm9437, %v9392, %v8148
  %v9458 = vsel %vm9437, %v9393, %v8150
  %v9459 = vsel %vm9437, %v9394, %v8152
  %v9460 = vsel %vm9437, %v9395, %v8154
  %v9461 = vsel %vm9437, %v9396, %v8156
  %v9462 = vsel %vm9437, %v9397, %v8158
  %v9463 = vsel %vm9437, %v9398, %v8160
  %v9464 = vsel %vm9437, %v9399, %v8162
  %v9465 = vsel %vm9437, %v9400, %v8164
  %v9466 = vsel %vm9437, %v9401, %v8166
  %v9467 = vsel %vm9437, %v9402, %v8168
  %v9468 = vsel %vm9437, %v9403, %v8170
  %v9469 = vsel %vm9437, %v9404, %v8172
  %v9470 = vsel %vm9437, %v9405, %v8174
  %v9471 = vsel %vm9437, %v9406, %v8176
  %v9472 = vsel %vm9437, %v9407, %v8178
  %v9473 = vsel %vm9437, %v9408, %v8180
  %v9474 = vsel %vm9437, %v9409, %v8182
  %v9475 = vsel %vm9437, %v9410, %v8184
  %v9476 = vsel %vm9437, %v9411, %v8186
  %v9477 = vsel %vm9437, %v9412, %v8188
  %v9478 = vsel %vm9437, %v9413, %v8190
  %v9479 = vsel %vm9437, %v9414, %v8192
  %v9480 = vsel %vm9437, %v9415, %v8194
  %v9481 = vsel %vm9437, %v9416, %v8196
  %v9482 = vsel %vm9437, %v9417, %v8198
  %v9483 = vsel %vm9437, %v9418, %v8200
  %v9484 = vsel %vm9437, %v9419, %v8202
  %v9485 = vsel %vm9437, %v9420, %v8204
  %v9486 = vsel %vm9437, %v9421, %v8206
  %v9487 = vsel %vm9437, %v9422, %v8208
  %v9488 = vsel %vm9437, %v9423, %v8210
  %v9489 = vsel %vm9437, %v9424, %v8212
  %v9490 = vsel %vm9437, %v9425, %v8214
  %v9491 = vsel %vm9437, %v9426, %v8216
  %v9492 = vsel %vm9437, %v9427, %v8218
  %v9493 = vsel %vm9437, %v9428, %v8220
  %v9494 = vsel %vm9437, %v9429, %v8222
  %v9495 = vsel %vm9437, %v9430, %v8224
  %v9496 = vsel %vm9437, %v9431, %v8226
  %v9497 = vsel %vm9437, %v9432, %v8228
  %v9498 = vsel %vm9437, %v9433, %v8230
  %v9499 = vsel %vm9437, %v9434, %v8232
  %v9500 = vsel %vm9437, %v9435, %v8234
  %v9501 = vsel %vm9437, %v9436, %v8236
  %v9502 = vsel %vm5504, %v9438, %v8314
  %v9503 = vsel %vm5504, %v9439, %v8316
  %v9504 = vsel %vm5504, %v9440, %v8318
  %v9505 = vsel %vm5504, %v9441, %v8320
  %v9506 = vsel %vm5504, %v9442, %v8322
  %v9507 = vsel %vm5504, %v9443, %v8324
  %v9508 = vsel %vm5504, %v9444, %v8326
  %v9509 = vsel %vm5504, %v9445, %v8328
  %v9510 = vsel %vm5504, %v9446, %v8330
  %v9511 = vsel %vm5504, %v9447, %v8332
  %v9512 = vsel %vm5504, %v9448, %v8334
  %v9513 = vsel %vm5504, %v9449, %v8336
  %v9514 = vsel %vm5504, %v9450, %v8338
  %v9515 = vsel %vm5504, %v9451, %v8340
  %v9516 = vsel %vm5504, %v9452, %v8342
  %v9517 = vsel %vm5504, %v9453, %v8344
  %v9518 = vsel %vm5504, %v9454, %v8346
  %v9519 = vsel %vm5504, %v9455, %v8348
  %v9520 = vsel %vm5504, %v9456, %v8350
  %v9521 = vsel %vm5504, %v9457, %v8352
  %v9522 = vsel %vm5504, %v9458, %v8354
  %v9523 = vsel %vm5504, %v9459, %v8356
  %v9524 = vsel %vm5504, %v9460, %v8358
  %v9525 = vsel %vm5504, %v9461, %v8360
  %v9526 = vsel %vm5504, %v9462, %v8362
  %v9527 = vsel %vm5504, %v9463, %v8364
  %v9528 = vsel %vm5504, %v9464, %v8366
  %v9529 = vsel %vm5504, %v9465, %v8368
  %v9530 = vsel %vm5504, %v9466, %v8370
  %v9531 = vsel %vm5504, %v9467, %v8372
  %v9532 = vsel %vm5504, %v9468, %v8374
  %v9533 = vsel %vm5504, %v9469, %v8376
  %v9534 = vsel %vm5504, %v9470, %v8378
  %v9535 = vsel %vm5504, %v9471, %v8380
  %v9536 = vsel %vm5504, %v9472, %v8382
  %v9537 = vsel %vm5504, %v9473, %v8384
  %v9538 = vsel %vm5504, %v9474, %v8386
  %v9539 = vsel %vm5504, %v9475, %v8388
  %v9540 = vsel %vm5504, %v9476, %v8390
  %v9541 = vsel %vm5504, %v9477, %v8392
  %v9542 = vsel %vm5504, %v9478, %v8394
  %v9543 = vsel %vm5504, %v9479, %v8396
  %v9544 = vsel %vm5504, %v9480, %v8398
  %v9545 = vsel %vm5504, %v9481, %v8400
  %v9546 = vsel %vm5504, %v9482, %v8402
  %v9547 = vsel %vm5504, %v9483, %v8404
  %v9548 = vsel %vm5504, %v9484, %v8406
  %v9549 = vsel %vm5504, %v9485, %v8408
  %v9550 = vsel %vm5504, %v9486, %v8410
  %v9551 = vsel %vm5504, %v9487, %v8412
  %v9552 = vsel %vm5504, %v9488, %v8414
  %v9553 = vsel %vm5504, %v9489, %v8416
  %v9554 = vsel %vm5504, %v9490, %v8418
  %v9555 = vsel %vm5504, %v9491, %v8420
  %v9556 = vsel %vm5504, %v9492, %v8422
  %v9557 = vsel %vm5504, %v9493, %v8424
  %v9558 = vsel %vm5504, %v9494, %v8426
  %v9559 = vsel %vm5504, %v9495, %v8428
  %v9560 = vsel %vm5504, %v9496, %v8430
  %v9561 = vsel %vm5504, %v9497, %v8432
  %v9562 = vsel %vm5504, %v9498, %v8434
  %v9563 = vsel %vm5504, %v9499, %v8436
  %v9564 = vsel %vm5504, %v9500, %v8438
  %v9565 = vsel %vm5504, %v9501, %v8440
  %vm9566 = vcmask 162816
  %v9567 = vsel %vm9566, %v9502, %v8516
  %v9568 = vsel %vm9566, %v9503, %v8518
  %v9569 = vsel %vm9566, %v9504, %v8520
  %v9570 = vsel %vm9566, %v9505, %v8522
  %v9571 = vsel %vm9566, %v9506, %v8524
  %v9572 = vsel %vm9566, %v9507, %v8526
  %v9573 = vsel %vm9566, %v9508, %v8528
  %v9574 = vsel %vm9566, %v9509, %v8530
  %v9575 = vsel %vm9566, %v9510, %v8532
  %v9576 = vsel %vm9566, %v9511, %v8534
  %v9577 = vsel %vm9566, %v9512, %v8536
  %v9578 = vsel %vm9566, %v9513, %v8538
  %v9579 = vsel %vm9566, %v9514, %v8540
  %v9580 = vsel %vm9566, %v9515, %v8542
  %v9581 = vsel %vm9566, %v9516, %v8544
  %v9582 = vsel %vm9566, %v9517, %v8546
  %v9583 = vsel %vm9566, %v9518, %v8548
  %v9584 = vsel %vm9566, %v9519, %v8550
  %v9585 = vsel %vm9566, %v9520, %v8552
  %v9586 = vsel %vm9566, %v9521, %v8554
  %v9587 = vsel %vm9566, %v9522, %v8556
  %v9588 = vsel %vm9566, %v9523, %v8558
  %v9589 = vsel %vm9566, %v9524, %v8560
  %v9590 = vsel %vm9566, %v9525, %v8562
  %v9591 = vsel %vm9566, %v9526, %v8564
  %v9592 = vsel %vm9566, %v9527, %v8566
  %v9593 = vsel %vm9566, %v9528, %v8568
  %v9594 = vsel %vm9566, %v9529, %v8570
  %v9595 = vsel %vm9566, %v9530, %v8572
  %v9596 = vsel %vm9566, %v9531, %v8574
  %v9597 = vsel %vm9566, %v9532, %v8576
  %v9598 = vsel %vm9566, %v9533, %v8578
  %v9599 = vsel %vm9566, %v9534, %v8580
  %v9600 = vsel %vm9566, %v9535, %v8582
  %v9601 = vsel %vm9566, %v9536, %v8584
  %v9602 = vsel %vm9566, %v9537, %v8586
  %v9603 = vsel %vm9566, %v9538, %v8588
  %v9604 = vsel %vm9566, %v9539, %v8590
  %v9605 = vsel %vm9566, %v9540, %v8592
  %v9606 = vsel %vm9566, %v9541, %v8594
  %v9607 = vsel %vm9566, %v9542, %v8596
  %v9608 = vsel %vm9566, %v9543, %v8598
  %v9609 = vsel %vm9566, %v9544, %v8600
  %v9610 = vsel %vm9566, %v9545, %v8602
  %v9611 = vsel %vm9566, %v9546, %v8604
  %v9612 = vsel %vm9566, %v9547, %v8606
  %v9613 = vsel %vm9566, %v9548, %v8608
  %v9614 = vsel %vm9566, %v9549, %v8610
  %v9615 = vsel %vm9566, %v9550, %v8612
  %v9616 = vsel %vm9566, %v9551, %v8614
  %v9617 = vsel %vm9566, %v9552, %v8616
  %v9618 = vsel %vm9566, %v9553, %v8618
  %v9619 = vsel %vm9566, %v9554, %v8620
  %v9620 = vsel %vm9566, %v9555, %v8622
  %v9621 = vsel %vm9566, %v9556, %v8624
  %v9622 = vsel %vm9566, %v9557, %v8626
  %v9623 = vsel %vm9566, %v9558, %v8628
  %v9624 = vsel %vm9566, %v9559, %v8630
  %v9625 = vsel %vm9566, %v9560, %v8632
  %v9626 = vsel %vm9566, %v9561, %v8634
  %v9627 = vsel %vm9566, %v9562, %v8636
  %v9628 = vsel %vm9566, %v9563, %v8638
  %v9629 = vsel %vm9566, %v9564, %v8640
  %v9630 = vsel %vm9566, %v9565, %v8642
  %v9631 = vsel %vm5569, %v9567, %v8712
  %v9632 = vsel %vm5569, %v9568, %v8714
  %v9633 = vsel %vm5569, %v9569, %v8716
  %v9634 = vsel %vm5569, %v9570, %v8718
  %v9635 = vsel %vm5569, %v9571, %v8720
  %v9636 = vsel %vm5569, %v9572, %v8722
  %v9637 = vsel %vm5569, %v9573, %v8724
  %v9638 = vsel %vm5569, %v9574, %v8726
  %v9639 = vsel %vm5569, %v9575, %v8728
  %v9640 = vsel %vm5569, %v9576, %v8730
  %v9641 = vsel %vm5569, %v9577, %v8732
  %v9642 = vsel %vm5569, %v9578, %v8734
  %v9643 = vsel %vm5569, %v9579, %v8736
  %v9644 = vsel %vm5569, %v9580, %v8738
  %v9645 = vsel %vm5569, %v9581, %v8740
  %v9646 = vsel %vm5569, %v9582, %v8742
  %v9647 = vsel %vm5569, %v9583, %v8744
  %v9648 = vsel %vm5569, %v9584, %v8746
  %v9649 = vsel %vm5569, %v9585, %v8748
  %v9650 = vsel %vm5569, %v9586, %v8750
  %v9651 = vsel %vm5569, %v9587, %v8752
  %v9652 = vsel %vm5569, %v9588, %v8754
  %v9653 = vsel %vm5569, %v9589, %v8756
  %v9654 = vsel %vm5569, %v9590, %v8758
  %v9655 = vsel %vm5569, %v9591, %v8760
  %v9656 = vsel %vm5569, %v9592, %v8762
  %v9657 = vsel %vm5569, %v9593, %v8764
  %v9658 = vsel %vm5569, %v9594, %v8766
  %v9659 = vsel %vm5569, %v9595, %v8768
  %v9660 = vsel %vm5569, %v9596, %v8770
  %v9661 = vsel %vm5569, %v9597, %v8772
  %v9662 = vsel %vm5569, %v9598, %v8774
  %v9663 = vsel %vm5569, %v9599, %v8776
  %v9664 = vsel %vm5569, %v9600, %v8778
  %v9665 = vsel %vm5569, %v9601, %v8780
  %v9666 = vsel %vm5569, %v9602, %v8782
  %v9667 = vsel %vm5569, %v9603, %v8784
  %v9668 = vsel %vm5569, %v9604, %v8786
  %v9669 = vsel %vm5569, %v9605, %v8788
  %v9670 = vsel %vm5569, %v9606, %v8790
  %v9671 = vsel %vm5569, %v9607, %v8792
  %v9672 = vsel %vm5569, %v9608, %v8794
  %v9673 = vsel %vm5569, %v9609, %v8796
  %v9674 = vsel %vm5569, %v9610, %v8798
  %v9675 = vsel %vm5569, %v9611, %v8800
  %v9676 = vsel %vm5569, %v9612, %v8802
  %v9677 = vsel %vm5569, %v9613, %v8804
  %v9678 = vsel %vm5569, %v9614, %v8806
  %v9679 = vsel %vm5569, %v9615, %v8808
  %v9680 = vsel %vm5569, %v9616, %v8810
  %v9681 = vsel %vm5569, %v9617, %v8812
  %v9682 = vsel %vm5569, %v9618, %v8814
  %v9683 = vsel %vm5569, %v9619, %v8816
  %v9684 = vsel %vm5569, %v9620, %v8818
  %v9685 = vsel %vm5569, %v9621, %v8820
  %v9686 = vsel %vm5569, %v9622, %v8822
  %v9687 = vsel %vm5569, %v9623, %v8824
  %v9688 = vsel %vm5569, %v9624, %v8826
  %v9689 = vsel %vm5569, %v9625, %v8828
  %v9690 = vsel %vm5569, %v9626, %v8830
  %v9691 = vsel %vm5569, %v9627, %v8832
  %v9692 = vsel %vm5569, %v9628, %v8834
  %v9693 = vsel %vm5569, %v9629, %v8836
  %v9694 = vsel %vm5569, %v9630, %v8838
  %vm9695 = vcmask 228352
  %v9696 = vsel %vm9695, %v9631, %v8916
  %v9697 = vsel %vm9695, %v9632, %v8918
  %v9698 = vsel %vm9695, %v9633, %v8920
  %v9699 = vsel %vm9695, %v9634, %v8922
  %v9700 = vsel %vm9695, %v9635, %v8924
  %v9701 = vsel %vm9695, %v9636, %v8926
  %v9702 = vsel %vm9695, %v9637, %v8928
  %v9703 = vsel %vm9695, %v9638, %v8930
  %v9704 = vsel %vm9695, %v9639, %v8932
  %v9705 = vsel %vm9695, %v9640, %v8934
  %v9706 = vsel %vm9695, %v9641, %v8936
  %v9707 = vsel %vm9695, %v9642, %v8938
  %v9708 = vsel %vm9695, %v9643, %v8940
  %v9709 = vsel %vm9695, %v9644, %v8942
  %v9710 = vsel %vm9695, %v9645, %v8944
  %v9711 = vsel %vm9695, %v9646, %v8946
  %v9712 = vsel %vm9695, %v9647, %v8948
  %v9713 = vsel %vm9695, %v9648, %v8950
  %v9714 = vsel %vm9695, %v9649, %v8952
  %v9715 = vsel %vm9695, %v9650, %v8954
  %v9716 = vsel %vm9695, %v9651, %v8956
  %v9717 = vsel %vm9695, %v9652, %v8958
  %v9718 = vsel %vm9695, %v9653, %v8960
  %v9719 = vsel %vm9695, %v9654, %v8962
  %v9720 = vsel %vm9695, %v9655, %v8964
  %v9721 = vsel %vm9695, %v9656, %v8966
  %v9722 = vsel %vm9695, %v9657, %v8968
  %v9723 = vsel %vm9695, %v9658, %v8970
  %v9724 = vsel %vm9695, %v9659, %v8972
  %v9725 = vsel %vm9695, %v9660, %v8974
  %v9726 = vsel %vm9695, %v9661, %v8976
  %v9727 = vsel %vm9695, %v9662, %v8978
  %v9728 = vsel %vm9695, %v9663, %v8980
  %v9729 = vsel %vm9695, %v9664, %v8982
  %v9730 = vsel %vm9695, %v9665, %v8984
  %v9731 = vsel %vm9695, %v9666, %v8986
  %v9732 = vsel %vm9695, %v9667, %v8988
  %v9733 = vsel %vm9695, %v9668, %v8990
  %v9734 = vsel %vm9695, %v9669, %v8992
  %v9735 = vsel %vm9695, %v9670, %v8994
  %v9736 = vsel %vm9695, %v9671, %v8996
  %v9737 = vsel %vm9695, %v9672, %v8998
  %v9738 = vsel %vm9695, %v9673, %v9000
  %v9739 = vsel %vm9695, %v9674, %v9002
  %v9740 = vsel %vm9695, %v9675, %v9004
  %v9741 = vsel %vm9695, %v9676, %v9006
  %v9742 = vsel %vm9695, %v9677, %v9008
  %v9743 = vsel %vm9695, %v9678, %v9010
  %v9744 = vsel %vm9695, %v9679, %v9012
  %v9745 = vsel %vm9695, %v9680, %v9014
  %v9746 = vsel %vm9695, %v9681, %v9016
  %v9747 = vsel %vm9695, %v9682, %v9018
  %v9748 = vsel %vm9695, %v9683, %v9020
  %v9749 = vsel %vm9695, %v9684, %v9022
  %v9750 = vsel %vm9695, %v9685, %v9024
  %v9751 = vsel %vm9695, %v9686, %v9026
  %v9752 = vsel %vm9695, %v9687, %v9028
  %v9753 = vsel %vm9695, %v9688, %v9030
  %v9754 = vsel %vm9695, %v9689, %v9032
  %v9755 = vsel %vm9695, %v9690, %v9034
  %v9756 = vsel %vm9695, %v9691, %v9036
  %v9757 = vsel %vm9695, %v9692, %v9038
  %v9758 = vsel %vm9695, %v9693, %v9040
  %v9759 = vsel %vm9695, %v9694, %v9042
  %v9760 = vsel %vm5634, %v9696, %v9118
  %v9761 = vsel %vm5634, %v9697, %v9120
  %v9762 = vsel %vm5634, %v9698, %v9122
  %v9763 = vsel %vm5634, %v9699, %v9124
  %v9764 = vsel %vm5634, %v9700, %v9126
  %v9765 = vsel %vm5634, %v9701, %v9128
  %v9766 = vsel %vm5634, %v9702, %v9130
  %v9767 = vsel %vm5634, %v9703, %v9132
  %v9768 = vsel %vm5634, %v9704, %v9134
  %v9769 = vsel %vm5634, %v9705, %v9136
  %v9770 = vsel %vm5634, %v9706, %v9138
  %v9771 = vsel %vm5634, %v9707, %v9140
  %v9772 = vsel %vm5634, %v9708, %v9142
  %v9773 = vsel %vm5634, %v9709, %v9144
  %v9774 = vsel %vm5634, %v9710, %v9146
  %v9775 = vsel %vm5634, %v9711, %v9148
  %v9776 = vsel %vm5634, %v9712, %v9150
  %v9777 = vsel %vm5634, %v9713, %v9152
  %v9778 = vsel %vm5634, %v9714, %v9154
  %v9779 = vsel %vm5634, %v9715, %v9156
  %v9780 = vsel %vm5634, %v9716, %v9158
  %v9781 = vsel %vm5634, %v9717, %v9160
  %v9782 = vsel %vm5634, %v9718, %v9162
  %v9783 = vsel %vm5634, %v9719, %v9164
  %v9784 = vsel %vm5634, %v9720, %v9166
  %v9785 = vsel %vm5634, %v9721, %v9168
  %v9786 = vsel %vm5634, %v9722, %v9170
  %v9787 = vsel %vm5634, %v9723, %v9172
  %v9788 = vsel %vm5634, %v9724, %v9174
  %v9789 = vsel %vm5634, %v9725, %v9176
  %v9790 = vsel %vm5634, %v9726, %v9178
  %v9791 = vsel %vm5634, %v9727, %v9180
  %v9792 = vsel %vm5634, %v9728, %v9182
  %v9793 = vsel %vm5634, %v9729, %v9184
  %v9794 = vsel %vm5634, %v9730, %v9186
  %v9795 = vsel %vm5634, %v9731, %v9188
  %v9796 = vsel %vm5634, %v9732, %v9190
  %v9797 = vsel %vm5634, %v9733, %v9192
  %v9798 = vsel %vm5634, %v9734, %v9194
  %v9799 = vsel %vm5634, %v9735, %v9196
  %v9800 = vsel %vm5634, %v9736, %v9198
  %v9801 = vsel %vm5634, %v9737, %v9200
  %v9802 = vsel %vm5634, %v9738, %v9202
  %v9803 = vsel %vm5634, %v9739, %v9204
  %v9804 = vsel %vm5634, %v9740, %v9206
  %v9805 = vsel %vm5634, %v9741, %v9208
  %v9806 = vsel %vm5634, %v9742, %v9210
  %v9807 = vsel %vm5634, %v9743, %v9212
  %v9808 = vsel %vm5634, %v9744, %v9214
  %v9809 = vsel %vm5634, %v9745, %v9216
  %v9810 = vsel %vm5634, %v9746, %v9218
  %v9811 = vsel %vm5634, %v9747, %v9220
  %v9812 = vsel %vm5634, %v9748, %v9222
  %v9813 = vsel %vm5634, %v9749, %v9224
  %v9814 = vsel %vm5634, %v9750, %v9226
  %v9815 = vsel %vm5634, %v9751, %v9228
  %v9816 = vsel %vm5634, %v9752, %v9230
  %v9817 = vsel %vm5634, %v9753, %v9232
  %v9818 = vsel %vm5634, %v9754, %v9234
  %v9819 = vsel %vm5634, %v9755, %v9236
  %v9820 = vsel %vm5634, %v9756, %v9238
  %v9821 = vsel %vm5634, %v9757, %v9240
  %v9822 = vsel %vm5634, %v9758, %v9242
  %v9823 = vsel %vm5634, %v9759, %v9244
  %v9824 = vpack.c.bf16 %v9761, %v9760
  %v9825 = vpack.c.bf16 %v9763, %v9762
  %v9826 = vpack.c.bf16 %v9765, %v9764
  %v9827 = vpack.c.bf16 %v9767, %v9766
  %v9828 = vpack.c.bf16 %v9769, %v9768
  %v9829 = vpack.c.bf16 %v9771, %v9770
  %v9830 = vpack.c.bf16 %v9773, %v9772
  %v9831 = vpack.c.bf16 %v9775, %v9774
  %v9832 = vpack.c.bf16 %v9777, %v9776
  %v9833 = vpack.c.bf16 %v9779, %v9778
  %v9834 = vpack.c.bf16 %v9781, %v9780
  %v9835 = vpack.c.bf16 %v9783, %v9782
  %v9836 = vpack.c.bf16 %v9785, %v9784
  %v9837 = vpack.c.bf16 %v9787, %v9786
  %v9838 = vpack.c.bf16 %v9789, %v9788
  %v9839 = vpack.c.bf16 %v9791, %v9790
  %v9840 = vpack.c.bf16 %v9793, %v9792
  %v9841 = vpack.c.bf16 %v9795, %v9794
  %v9842 = vpack.c.bf16 %v9797, %v9796
  %v9843 = vpack.c.bf16 %v9799, %v9798
  %v9844 = vpack.c.bf16 %v9801, %v9800
  %v9845 = vpack.c.bf16 %v9803, %v9802
  %v9846 = vpack.c.bf16 %v9805, %v9804
  %v9847 = vpack.c.bf16 %v9807, %v9806
  %v9848 = vpack.c.bf16 %v9809, %v9808
  %v9849 = vpack.c.bf16 %v9811, %v9810
  %v9850 = vpack.c.bf16 %v9813, %v9812
  %v9851 = vpack.c.bf16 %v9815, %v9814
  %v9852 = vpack.c.bf16 %v9817, %v9816
  %v9853 = vpack.c.bf16 %v9819, %v9818
  %v9854 = vpack.c.bf16 %v9821, %v9820
  %v9855 = vpack.c.bf16 %v9823, %v9822
  %v9856 = vld [vmem:[%s7] sm:$0xf]
  %v9857 = vld [vmem:[%s7 + $0x4] sm:$0xf]
  %v9858 = vld [vmem:[%s7 + $0x8] sm:$0xf]
  %v9859 = vld [vmem:[%s7 + $0xc] sm:$0xf]
  %v9860 = vld [vmem:[%s7 + $0x10] sm:$0x3]
  %v9866 = vunpack.c.l.b16 %v9856
  %v9867 = vunpack.c.l.b16 %v9857
  %v9868 = vunpack.c.l.b16 %v9858
  %v9869 = vunpack.c.l.b16 %v9859
  %v9870 = vunpack.c.l.b16 %v9860
  %v9871 = vpack.c.b16 %v9867, %v9866
  %v9872 = vpack.c.b16 %v9869, %v9868
  %v9873 = vpack.c.b16 %v9870, %v9870
  %vm9876 = vcmask 293888
  %v9878 = vsel %vm9876, %v9824, 0
  %v9881 = vsel %vm9876, %v9825, 0
  %v9884 = vsel %vm9876, %v9826, 0
  %v9887 = vsel %vm9876, %v9827, 0
  %v9890 = vsel %vm9876, %v9828, 0
  %v9893 = vsel %vm9876, %v9829, 0
  %v9896 = vsel %vm9876, %v9830, 0
  %v9899 = vsel %vm9876, %v9831, 0
  %v9902 = vsel %vm9876, %v9832, 0
  %v9905 = vsel %vm9876, %v9833, 0
  %v9908 = vsel %vm9876, %v9834, 0
  %v9911 = vsel %vm9876, %v9835, 0
  %v9914 = vsel %vm9876, %v9836, 0
  %v9917 = vsel %vm9876, %v9837, 0
  %v9920 = vsel %vm9876, %v9838, 0
  %v9923 = vsel %vm9876, %v9839, 0
  %v9926 = vsel %vm9876, %v9840, 0
  %v9929 = vsel %vm9876, %v9841, 0
  %v9932 = vsel %vm9876, %v9842, 0
  %v9935 = vsel %vm9876, %v9843, 0
  %v9938 = vsel %vm9876, %v9844, 0
  %v9941 = vsel %vm9876, %v9845, 0
  %v9944 = vsel %vm9876, %v9846, 0
  %v9947 = vsel %vm9876, %v9847, 0
  %v9950 = vsel %vm9876, %v9848, 0
  %v9953 = vsel %vm9876, %v9849, 0
  %v9956 = vsel %vm9876, %v9850, 0
  %v9959 = vsel %vm9876, %v9851, 0
  %v9962 = vsel %vm9876, %v9852, 0
  %v9965 = vsel %vm9876, %v9853, 0
  %v9968 = vsel %vm9876, %v9854, 0
  %v9971 = vsel %vm9876, %v9855, 0
  %vm9973 = vcmask 1041408
  %v9975 = vsel %vm9973, %v9873, 0
  %9977 = vmatprep.subr.bf16.mxu0 0
  %9978 = vmatpush1.bf16.msra.mxu0 %v9871
  %9979 = vmatprep.subr.bf16.mxu0 0
  %9980 = vmatpush1.bf16.msra.mxu0 %v9872
  %9981 = vmatprep.subr.bf16.mxu0 0
  %9982 = vmatpush1.bf16.msra.mxu0 %v9975
  %9983 = vmatprep.subr.bf16.mxu0 0
  %9984 = vmatpush1.bf16.msra.mxu0 0
  %9985 = vmatprep.subr.bf16.mxu0 0
  %9986 = vmatpush1.bf16.msra.mxu0 0
  %9987 = vmatprep.subr.bf16.mxu0 0
  %9988 = vmatpush1.bf16.msra.mxu0 0
  %9989 = vmatprep.subr.bf16.mxu0 0
  %9990 = vmatpush1.bf16.msra.mxu0 0
  %9991 = vmatprep.subr.bf16.mxu0 0
  %9992 = vmatpush1.bf16.msra.mxu0 0
  %9993 = vmatprep.subr.bf16.mxu0 0
  %9994 = vmatpush1.bf16.msra.mxu0 0
  %9995 = vmatprep.subr.bf16.mxu0 0
  %9996 = vmatpush1.bf16.msra.mxu0 0
  %9997 = vmatprep.subr.bf16.mxu0 0
  %9998 = vmatpush1.bf16.msra.mxu0 0
  %9999 = vmatprep.subr.bf16.mxu0 0
  %10000 = vmatpush1.bf16.msra.mxu0 0
  %10001 = vmatprep.subr.bf16.mxu0 0
  %10002 = vmatpush1.bf16.msra.mxu0 0
  %10003 = vmatprep.subr.bf16.mxu0 0
  %10004 = vmatpush1.bf16.msra.mxu0 0
  %10005 = vmatprep.subr.bf16.mxu0 0
  %10006 = vmatpush1.bf16.msra.mxu0 0
  %10007 = vmatprep.subr.bf16.mxu0 0
  %10008 = vmatpush1.bf16.msra.mxu0 0
  %10009 = vmatprep.mubr.bf16.mxu0 0
  %10010 = vmatmul.mubr.bf16.gmra.mrb[0].mxu0 %v9878
  %v10011 = vpop.f32.mrb[0].mxu0
  %v10012 = vadd.f32 0.0, %v10011
  %v10013 = vpop.f32.mrb[0].mxu0
  %v10014 = vpop.f32.mrb[0].mxu0
  %v10015 = vadd.f32 0.0, %v10014
  %v10016 = vpop.f32.mrb[0].mxu0
  %10017 = vmatprep.mubr.bf16.mxu0 0
  %10018 = vmatmul.mubr.bf16.gmra.mrb[0].mxu0 %v9881
  %v10019 = vpop.f32.mrb[0].mxu0
  %v10020 = vadd.f32 0.0, %v10019
  %v10021 = vpop.f32.mrb[0].mxu0
  %v10022 = vpop.f32.mrb[0].mxu0
  %v10023 = vadd.f32 0.0, %v10022
  %v10024 = vpop.f32.mrb[0].mxu0
  %10025 = vmatprep.mubr.bf16.mxu0 0
  %10026 = vmatmul.mubr.bf16.gmra.mrb[0].mxu0 %v9884
  %v10027 = vpop.f32.mrb[0].mxu0
  %v10028 = vadd.f32 0.0, %v10027
  %v10029 = vpop.f32.mrb[0].mxu0
  %v10030 = vpop.f32.mrb[0].mxu0
  %v10031 = vadd.f32 0.0, %v10030
  %v10032 = vpop.f32.mrb[0].mxu0
  %10033 = vmatprep.mubr.bf16.mxu0 0
  %10034 = vmatmul.mubr.bf16.gmra.mrb[0].mxu0 %v9887
  %v10035 = vpop.f32.mrb[0].mxu0
  %v10036 = vadd.f32 0.0, %v10035
  %v10037 = vpop.f32.mrb[0].mxu0
  %v10038 = vpop.f32.mrb[0].mxu0
  %v10039 = vadd.f32 0.0, %v10038
  %v10040 = vpop.f32.mrb[0].mxu0
  %10041 = vmatprep.mubr.bf16.mxu0 0
  %10042 = vmatmul.mubr.bf16.gmra.mrb[0].mxu0 %v9890
  %v10043 = vpop.f32.mrb[0].mxu0
  %v10044 = vadd.f32 0.0, %v10043
  %v10045 = vpop.f32.mrb[0].mxu0
  %v10046 = vpop.f32.mrb[0].mxu0
  %v10047 = vadd.f32 0.0, %v10046
  %v10048 = vpop.f32.mrb[0].mxu0
  %10049 = vmatprep.mubr.bf16.mxu0 0
  %10050 = vmatmul.mubr.bf16.gmra.mrb[0].mxu0 %v9893
  %v10051 = vpop.f32.mrb[0].mxu0
  %v10052 = vadd.f32 0.0, %v10051
  %v10053 = vpop.f32.mrb[0].mxu0
  %v10054 = vpop.f32.mrb[0].mxu0
  %v10055 = vadd.f32 0.0, %v10054
  %v10056 = vpop.f32.mrb[0].mxu0
  %10057 = vmatprep.mubr.bf16.mxu0 0
  %10058 = vmatmul.mubr.bf16.gmra.mrb[0].mxu0 %v9896
  %v10059 = vpop.f32.mrb[0].mxu0
  %v10060 = vadd.f32 0.0, %v10059
  %v10061 = vpop.f32.mrb[0].mxu0
  %v10062 = vpop.f32.mrb[0].mxu0
  %v10063 = vadd.f32 0.0, %v10062
  %v10064 = vpop.f32.mrb[0].mxu0
  %10065 = vmatprep.mubr.bf16.mxu0 0
  %10066 = vmatmul.mubr.bf16.gmra.mrb[0].mxu0 %v9899
  %v10067 = vpop.f32.mrb[0].mxu0
  %v10068 = vadd.f32 0.0, %v10067
  %v10069 = vpop.f32.mrb[0].mxu0
  %v10070 = vpop.f32.mrb[0].mxu0
  %v10071 = vadd.f32 0.0, %v10070
  %v10072 = vpop.f32.mrb[0].mxu0
  %10073 = vmatprep.mubr.bf16.mxu0 0
  %10074 = vmatmul.mubr.bf16.gmra.mrb[0].mxu0 %v9902
  %v10075 = vpop.f32.mrb[0].mxu0
  %v10076 = vadd.f32 0.0, %v10075
  %v10077 = vpop.f32.mrb[0].mxu0
  %v10078 = vpop.f32.mrb[0].mxu0
  %v10079 = vadd.f32 0.0, %v10078
  %v10080 = vpop.f32.mrb[0].mxu0
  %10081 = vmatprep.mubr.bf16.mxu0 0
  %10082 = vmatmul.mubr.bf16.gmra.mrb[0].mxu0 %v9905
  %v10083 = vpop.f32.mrb[0].mxu0
  %v10084 = vadd.f32 0.0, %v10083
  %v10085 = vpop.f32.mrb[0].mxu0
  %v10086 = vpop.f32.mrb[0].mxu0
  %v10087 = vadd.f32 0.0, %v10086
  %v10088 = vpop.f32.mrb[0].mxu0
  %10089 = vmatprep.mubr.bf16.mxu0 0
  %10090 = vmatmul.mubr.bf16.gmra.mrb[0].mxu0 %v9908
  %v10091 = vpop.f32.mrb[0].mxu0
  %v10092 = vadd.f32 0.0, %v10091
  %v10093 = vpop.f32.mrb[0].mxu0
  %v10094 = vpop.f32.mrb[0].mxu0
  %v10095 = vadd.f32 0.0, %v10094
  %v10096 = vpop.f32.mrb[0].mxu0
  %10097 = vmatprep.mubr.bf16.mxu0 0
  %10098 = vmatmul.mubr.bf16.gmra.mrb[0].mxu0 %v9911
  %v10099 = vpop.f32.mrb[0].mxu0
  %v10100 = vadd.f32 0.0, %v10099
  %v10101 = vpop.f32.mrb[0].mxu0
  %v10102 = vpop.f32.mrb[0].mxu0
  %v10103 = vadd.f32 0.0, %v10102
  %v10104 = vpop.f32.mrb[0].mxu0
  %10105 = vmatprep.mubr.bf16.mxu0 0
  %10106 = vmatmul.mubr.bf16.gmra.mrb[0].mxu0 %v9914
  %v10107 = vpop.f32.mrb[0].mxu0
  %v10108 = vadd.f32 0.0, %v10107
  %v10109 = vpop.f32.mrb[0].mxu0
  %v10110 = vpop.f32.mrb[0].mxu0
  %v10111 = vadd.f32 0.0, %v10110
  %v10112 = vpop.f32.mrb[0].mxu0
  %10113 = vmatprep.mubr.bf16.mxu0 0
  %10114 = vmatmul.mubr.bf16.gmra.mrb[0].mxu0 %v9917
  %v10115 = vpop.f32.mrb[0].mxu0
  %v10116 = vadd.f32 0.0, %v10115
  %v10117 = vpop.f32.mrb[0].mxu0
  %v10118 = vpop.f32.mrb[0].mxu0
  %v10119 = vadd.f32 0.0, %v10118
  %v10120 = vpop.f32.mrb[0].mxu0
  %10121 = vmatprep.mubr.bf16.mxu0 0
  %10122 = vmatmul.mubr.bf16.gmra.mrb[0].mxu0 %v9920
  %v10123 = vpop.f32.mrb[0].mxu0
  %v10124 = vadd.f32 0.0, %v10123
  %v10125 = vpop.f32.mrb[0].mxu0
  %v10126 = vpop.f32.mrb[0].mxu0
  %v10127 = vadd.f32 0.0, %v10126
  %v10128 = vpop.f32.mrb[0].mxu0
  %10129 = vmatprep.mubr.bf16.mxu0 0
  %10130 = vmatmul.mubr.bf16.gmra.mrb[0].mxu0 %v9923
  %v10131 = vpop.f32.mrb[0].mxu0
  %v10132 = vadd.f32 0.0, %v10131
  %v10133 = vpop.f32.mrb[0].mxu0
  %v10134 = vpop.f32.mrb[0].mxu0
  %v10135 = vadd.f32 0.0, %v10134
  %v10136 = vpop.f32.mrb[0].mxu0
  %10137 = vmatprep.mubr.bf16.mxu0 0
  %10138 = vmatmul.mubr.bf16.gmra.mrb[0].mxu0 %v9926
  %v10139 = vpop.f32.mrb[0].mxu0
  %v10140 = vadd.f32 0.0, %v10139
  %v10141 = vpop.f32.mrb[0].mxu0
  %v10142 = vpop.f32.mrb[0].mxu0
  %v10143 = vadd.f32 0.0, %v10142
  %v10144 = vpop.f32.mrb[0].mxu0
  %10145 = vmatprep.mubr.bf16.mxu0 0
  %10146 = vmatmul.mubr.bf16.gmra.mrb[0].mxu0 %v9929
  %v10147 = vpop.f32.mrb[0].mxu0
  %v10148 = vadd.f32 0.0, %v10147
  %v10149 = vpop.f32.mrb[0].mxu0
  %v10150 = vpop.f32.mrb[0].mxu0
  %v10151 = vadd.f32 0.0, %v10150
  %v10152 = vpop.f32.mrb[0].mxu0
  %10153 = vmatprep.mubr.bf16.mxu0 0
  %10154 = vmatmul.mubr.bf16.gmra.mrb[0].mxu0 %v9932
  %v10155 = vpop.f32.mrb[0].mxu0
  %v10156 = vadd.f32 0.0, %v10155
  %v10157 = vpop.f32.mrb[0].mxu0
  %v10158 = vpop.f32.mrb[0].mxu0
  %v10159 = vadd.f32 0.0, %v10158
  %v10160 = vpop.f32.mrb[0].mxu0
  %10161 = vmatprep.mubr.bf16.mxu0 0
  %10162 = vmatmul.mubr.bf16.gmra.mrb[0].mxu0 %v9935
  %v10163 = vpop.f32.mrb[0].mxu0
  %v10164 = vadd.f32 0.0, %v10163
  %v10165 = vpop.f32.mrb[0].mxu0
  %v10166 = vpop.f32.mrb[0].mxu0
  %v10167 = vadd.f32 0.0, %v10166
  %v10168 = vpop.f32.mrb[0].mxu0
  %10169 = vmatprep.mubr.bf16.mxu0 0
  %10170 = vmatmul.mubr.bf16.gmra.mrb[0].mxu0 %v9938
  %v10171 = vpop.f32.mrb[0].mxu0
  %v10172 = vadd.f32 0.0, %v10171
  %v10173 = vpop.f32.mrb[0].mxu0
  %v10174 = vpop.f32.mrb[0].mxu0
  %v10175 = vadd.f32 0.0, %v10174
  %v10176 = vpop.f32.mrb[0].mxu0
  %10177 = vmatprep.mubr.bf16.mxu0 0
  %10178 = vmatmul.mubr.bf16.gmra.mrb[0].mxu0 %v9941
  %v10179 = vpop.f32.mrb[0].mxu0
  %v10180 = vadd.f32 0.0, %v10179
  %v10181 = vpop.f32.mrb[0].mxu0
  %v10182 = vpop.f32.mrb[0].mxu0
  %v10183 = vadd.f32 0.0, %v10182
  %v10184 = vpop.f32.mrb[0].mxu0
  %10185 = vmatprep.mubr.bf16.mxu0 0
  %10186 = vmatmul.mubr.bf16.gmra.mrb[0].mxu0 %v9944
  %v10187 = vpop.f32.mrb[0].mxu0
  %v10188 = vadd.f32 0.0, %v10187
  %v10189 = vpop.f32.mrb[0].mxu0
  %v10190 = vpop.f32.mrb[0].mxu0
  %v10191 = vadd.f32 0.0, %v10190
  %v10192 = vpop.f32.mrb[0].mxu0
  %10193 = vmatprep.mubr.bf16.mxu0 0
  %10194 = vmatmul.mubr.bf16.gmra.mrb[0].mxu0 %v9947
  %v10195 = vpop.f32.mrb[0].mxu0
  %v10196 = vadd.f32 0.0, %v10195
  %v10197 = vpop.f32.mrb[0].mxu0
  %v10198 = vpop.f32.mrb[0].mxu0
  %v10199 = vadd.f32 0.0, %v10198
  %v10200 = vpop.f32.mrb[0].mxu0
  %10201 = vmatprep.mubr.bf16.mxu0 0
  %10202 = vmatmul.mubr.bf16.gmra.mrb[0].mxu0 %v9950
  %v10203 = vpop.f32.mrb[0].mxu0
  %v10204 = vadd.f32 0.0, %v10203
  %v10205 = vpop.f32.mrb[0].mxu0
  %v10206 = vpop.f32.mrb[0].mxu0
  %v10207 = vadd.f32 0.0, %v10206
  %v10208 = vpop.f32.mrb[0].mxu0
  %10209 = vmatprep.mubr.bf16.mxu0 0
  %10210 = vmatmul.mubr.bf16.gmra.mrb[0].mxu0 %v9953
  %v10211 = vpop.f32.mrb[0].mxu0
  %v10212 = vadd.f32 0.0, %v10211
  %v10213 = vpop.f32.mrb[0].mxu0
  %v10214 = vpop.f32.mrb[0].mxu0
  %v10215 = vadd.f32 0.0, %v10214
  %v10216 = vpop.f32.mrb[0].mxu0
  %10217 = vmatprep.mubr.bf16.mxu0 0
  %10218 = vmatmul.mubr.bf16.gmra.mrb[0].mxu0 %v9956
  %v10219 = vpop.f32.mrb[0].mxu0
  %v10220 = vadd.f32 0.0, %v10219
  %v10221 = vpop.f32.mrb[0].mxu0
  %v10222 = vpop.f32.mrb[0].mxu0
  %v10223 = vadd.f32 0.0, %v10222
  %v10224 = vpop.f32.mrb[0].mxu0
  %10225 = vmatprep.mubr.bf16.mxu0 0
  %10226 = vmatmul.mubr.bf16.gmra.mrb[0].mxu0 %v9959
  %v10227 = vpop.f32.mrb[0].mxu0
  %v10228 = vadd.f32 0.0, %v10227
  %v10229 = vpop.f32.mrb[0].mxu0
  %v10230 = vpop.f32.mrb[0].mxu0
  %v10231 = vadd.f32 0.0, %v10230
  %v10232 = vpop.f32.mrb[0].mxu0
  %10233 = vmatprep.mubr.bf16.mxu0 0
  %10234 = vmatmul.mubr.bf16.gmra.mrb[0].mxu0 %v9962
  %v10235 = vpop.f32.mrb[0].mxu0
  %v10236 = vadd.f32 0.0, %v10235
  %v10237 = vpop.f32.mrb[0].mxu0
  %v10238 = vpop.f32.mrb[0].mxu0
  %v10239 = vadd.f32 0.0, %v10238
  %v10240 = vpop.f32.mrb[0].mxu0
  %10241 = vmatprep.mubr.bf16.mxu0 0
  %10242 = vmatmul.mubr.bf16.gmra.mrb[0].mxu0 %v9965
  %v10243 = vpop.f32.mrb[0].mxu0
  %v10244 = vadd.f32 0.0, %v10243
  %v10245 = vpop.f32.mrb[0].mxu0
  %v10246 = vpop.f32.mrb[0].mxu0
  %v10247 = vadd.f32 0.0, %v10246
  %v10248 = vpop.f32.mrb[0].mxu0
  %10249 = vmatprep.mubr.bf16.mxu0 0
  %10250 = vmatmul.mubr.bf16.gmra.mrb[0].mxu0 %v9968
  %v10251 = vpop.f32.mrb[0].mxu0
  %v10252 = vadd.f32 0.0, %v10251
  %v10253 = vpop.f32.mrb[0].mxu0
  %v10254 = vpop.f32.mrb[0].mxu0
  %v10255 = vadd.f32 0.0, %v10254
  %v10256 = vpop.f32.mrb[0].mxu0
  %10257 = vmatprep.mubr.bf16.mxu0 0
  %10258 = vmatmul.mubr.bf16.gmra.mrb[0].mxu0 %v9971
  %v10259 = vpop.f32.mrb[0].mxu0
  %v10260 = vadd.f32 0.0, %v10259
  %v10261 = vpop.f32.mrb[0].mxu0
  %v10262 = vpop.f32.mrb[0].mxu0
  %v10263 = vadd.f32 0.0, %v10262
  %v10264 = vpop.f32.mrb[0].mxu0
  %10265 = vdwg.mxu0
  %v10266 = vsel %vm3196, %v10012, 0.0
  %v10267 = vsel %vm3196, %v10015, 0.0
  %v10268 = vadd.f32 %v10266, %v10267
  %v10269 = vsel %vm3196, %v10020, 0.0
  %v10270 = vadd.f32 %v10268, %v10269
  %v10271 = vsel %vm3196, %v10023, 0.0
  %v10272 = vadd.f32 %v10270, %v10271
  %v10273 = vsel %vm3196, %v10028, 0.0
  %v10274 = vadd.f32 %v10272, %v10273
  %v10275 = vsel %vm3196, %v10031, 0.0
  %v10276 = vadd.f32 %v10274, %v10275
  %v10277 = vsel %vm3196, %v10036, 0.0
  %v10278 = vadd.f32 %v10276, %v10277
  %v10279 = vsel %vm3196, %v10039, 0.0
  %v10280 = vadd.f32 %v10278, %v10279
  %v10281 = vsel %vm3196, %v10044, 0.0
  %v10282 = vadd.f32 %v10280, %v10281
  %v10283 = vsel %vm3196, %v10047, 0.0
  %v10284 = vadd.f32 %v10282, %v10283
  %v10285 = vsel %vm3196, %v10052, 0.0
  %v10286 = vadd.f32 %v10284, %v10285
  %v10287 = vsel %vm3196, %v10055, 0.0
  %v10288 = vadd.f32 %v10286, %v10287
  %v10289 = vsel %vm3196, %v10060, 0.0
  %v10290 = vadd.f32 %v10288, %v10289
  %v10291 = vsel %vm3196, %v10063, 0.0
  %v10292 = vadd.f32 %v10290, %v10291
  %v10293 = vsel %vm3196, %v10068, 0.0
  %v10294 = vadd.f32 %v10292, %v10293
  %v10295 = vsel %vm3196, %v10071, 0.0
  %v10296 = vadd.f32 %v10294, %v10295
  %v10297 = vsel %vm3196, %v10076, 0.0
  %v10298 = vadd.f32 %v10296, %v10297
  %v10299 = vsel %vm3196, %v10079, 0.0
  %v10300 = vadd.f32 %v10298, %v10299
  %v10301 = vsel %vm3196, %v10084, 0.0
  %v10302 = vadd.f32 %v10300, %v10301
  %v10303 = vsel %vm3196, %v10087, 0.0
  %v10304 = vadd.f32 %v10302, %v10303
  %v10305 = vsel %vm3196, %v10092, 0.0
  %v10306 = vadd.f32 %v10304, %v10305
  %v10307 = vsel %vm3196, %v10095, 0.0
  %v10308 = vadd.f32 %v10306, %v10307
  %v10309 = vsel %vm3196, %v10100, 0.0
  %v10310 = vadd.f32 %v10308, %v10309
  %v10311 = vsel %vm3196, %v10103, 0.0
  %v10312 = vadd.f32 %v10310, %v10311
  %v10313 = vsel %vm3196, %v10108, 0.0
  %v10314 = vadd.f32 %v10312, %v10313
  %v10315 = vsel %vm3196, %v10111, 0.0
  %v10316 = vadd.f32 %v10314, %v10315
  %v10317 = vsel %vm3196, %v10116, 0.0
  %v10318 = vadd.f32 %v10316, %v10317
  %v10319 = vsel %vm3196, %v10119, 0.0
  %v10320 = vadd.f32 %v10318, %v10319
  %v10321 = vsel %vm3196, %v10124, 0.0
  %v10322 = vadd.f32 %v10320, %v10321
  %v10323 = vsel %vm3196, %v10127, 0.0
  %v10324 = vadd.f32 %v10322, %v10323
  %v10325 = vsel %vm3196, %v10132, 0.0
  %v10326 = vadd.f32 %v10324, %v10325
  %v10327 = vsel %vm3196, %v10135, 0.0
  %v10328 = vadd.f32 %v10326, %v10327
  %v10329 = vsel %vm3196, %v10140, 0.0
  %v10330 = vadd.f32 %v10328, %v10329
  %v10331 = vsel %vm3196, %v10143, 0.0
  %v10332 = vadd.f32 %v10330, %v10331
  %v10333 = vsel %vm3196, %v10148, 0.0
  %v10334 = vadd.f32 %v10332, %v10333
  %v10335 = vsel %vm3196, %v10151, 0.0
  %v10336 = vadd.f32 %v10334, %v10335
  %v10337 = vsel %vm3196, %v10156, 0.0
  %v10338 = vadd.f32 %v10336, %v10337
  %v10339 = vsel %vm3196, %v10159, 0.0
  %v10340 = vadd.f32 %v10338, %v10339
  %v10341 = vsel %vm3196, %v10164, 0.0
  %v10342 = vadd.f32 %v10340, %v10341
  %v10343 = vsel %vm3196, %v10167, 0.0
  %v10344 = vadd.f32 %v10342, %v10343
  %v10345 = vsel %vm3196, %v10172, 0.0
  %v10346 = vadd.f32 %v10344, %v10345
  %v10347 = vsel %vm3196, %v10175, 0.0
  %v10348 = vadd.f32 %v10346, %v10347
  %v10349 = vsel %vm3196, %v10180, 0.0
  %v10350 = vadd.f32 %v10348, %v10349
  %v10351 = vsel %vm3196, %v10183, 0.0
  %v10352 = vadd.f32 %v10350, %v10351
  %v10353 = vsel %vm3196, %v10188, 0.0
  %v10354 = vadd.f32 %v10352, %v10353
  %v10355 = vsel %vm3196, %v10191, 0.0
  %v10356 = vadd.f32 %v10354, %v10355
  %v10357 = vsel %vm3196, %v10196, 0.0
  %v10358 = vadd.f32 %v10356, %v10357
  %v10359 = vsel %vm3196, %v10199, 0.0
  %v10360 = vadd.f32 %v10358, %v10359
  %v10361 = vsel %vm3196, %v10204, 0.0
  %v10362 = vadd.f32 %v10360, %v10361
  %v10363 = vsel %vm3196, %v10207, 0.0
  %v10364 = vadd.f32 %v10362, %v10363
  %v10365 = vsel %vm3196, %v10212, 0.0
  %v10366 = vadd.f32 %v10364, %v10365
  %v10367 = vsel %vm3196, %v10215, 0.0
  %v10368 = vadd.f32 %v10366, %v10367
  %v10369 = vsel %vm3196, %v10220, 0.0
  %v10370 = vadd.f32 %v10368, %v10369
  %v10371 = vsel %vm3196, %v10223, 0.0
  %v10372 = vadd.f32 %v10370, %v10371
  %v10373 = vsel %vm3196, %v10228, 0.0
  %v10374 = vadd.f32 %v10372, %v10373
  %v10375 = vsel %vm3196, %v10231, 0.0
  %v10376 = vadd.f32 %v10374, %v10375
  %v10377 = vsel %vm3196, %v10236, 0.0
  %v10378 = vadd.f32 %v10376, %v10377
  %v10379 = vsel %vm3196, %v10239, 0.0
  %v10380 = vadd.f32 %v10378, %v10379
  %v10381 = vsel %vm3196, %v10244, 0.0
  %v10382 = vadd.f32 %v10380, %v10381
  %v10383 = vsel %vm3196, %v10247, 0.0
  %v10384 = vadd.f32 %v10382, %v10383
  %v10385 = vsel %vm3196, %v10252, 0.0
  %v10386 = vadd.f32 %v10384, %v10385
  %v10387 = vsel %vm3196, %v10255, 0.0
  %v10388 = vadd.f32 %v10386, %v10387
  %v10389 = vsel %vm3196, %v10260, 0.0
  %v10390 = vadd.f32 %v10388, %v10389
  %v10391 = vsel %vm3196, %v10263, 0.0
  %v10392 = vadd.f32 %v10390, %v10391
  %v10393 = vrot.slane %v10392, 4
  %v10394 = vadd.f32 %v10392, %v10393
  %v10395 = vrot.slane %v10394, 2
  %v10396 = vadd.f32 %v10394, %v10395
  %v10397 = vrot.slane %v10396, 1
  %v10398 = vadd.f32 %v10396, %v10397
  %v10399 = vmul.f32 %v10398, 0.001953125
  %v10400 = vsub.f32 %v10012, %v10399
  %v10401 = vsub.f32 %v10015, %v10399
  %v10402 = vsub.f32 %v10020, %v10399
  %v10403 = vsub.f32 %v10023, %v10399
  %v10404 = vsub.f32 %v10028, %v10399
  %v10405 = vsub.f32 %v10031, %v10399
  %v10406 = vsub.f32 %v10036, %v10399
  %v10407 = vsub.f32 %v10039, %v10399
  %v10408 = vsub.f32 %v10044, %v10399
  %v10409 = vsub.f32 %v10047, %v10399
  %v10410 = vsub.f32 %v10052, %v10399
  %v10411 = vsub.f32 %v10055, %v10399
  %v10412 = vsub.f32 %v10060, %v10399
  %v10413 = vsub.f32 %v10063, %v10399
  %v10414 = vsub.f32 %v10068, %v10399
  %v10415 = vsub.f32 %v10071, %v10399
  %v10416 = vsub.f32 %v10076, %v10399
  %v10417 = vsub.f32 %v10079, %v10399
  %v10418 = vsub.f32 %v10084, %v10399
  %v10419 = vsub.f32 %v10087, %v10399
  %v10420 = vsub.f32 %v10092, %v10399
  %v10421 = vsub.f32 %v10095, %v10399
  %v10422 = vsub.f32 %v10100, %v10399
  %v10423 = vsub.f32 %v10103, %v10399
  %v10424 = vsub.f32 %v10108, %v10399
  %v10425 = vsub.f32 %v10111, %v10399
  %v10426 = vsub.f32 %v10116, %v10399
  %v10427 = vsub.f32 %v10119, %v10399
  %v10428 = vsub.f32 %v10124, %v10399
  %v10429 = vsub.f32 %v10127, %v10399
  %v10430 = vsub.f32 %v10132, %v10399
  %v10431 = vsub.f32 %v10135, %v10399
  %v10432 = vsub.f32 %v10140, %v10399
  %v10433 = vsub.f32 %v10143, %v10399
  %v10434 = vsub.f32 %v10148, %v10399
  %v10435 = vsub.f32 %v10151, %v10399
  %v10436 = vsub.f32 %v10156, %v10399
  %v10437 = vsub.f32 %v10159, %v10399
  %v10438 = vsub.f32 %v10164, %v10399
  %v10439 = vsub.f32 %v10167, %v10399
  %v10440 = vsub.f32 %v10172, %v10399
  %v10441 = vsub.f32 %v10175, %v10399
  %v10442 = vsub.f32 %v10180, %v10399
  %v10443 = vsub.f32 %v10183, %v10399
  %v10444 = vsub.f32 %v10188, %v10399
  %v10445 = vsub.f32 %v10191, %v10399
  %v10446 = vsub.f32 %v10196, %v10399
  %v10447 = vsub.f32 %v10199, %v10399
  %v10448 = vsub.f32 %v10204, %v10399
  %v10449 = vsub.f32 %v10207, %v10399
  %v10450 = vsub.f32 %v10212, %v10399
  %v10451 = vsub.f32 %v10215, %v10399
  %v10452 = vsub.f32 %v10220, %v10399
  %v10453 = vsub.f32 %v10223, %v10399
  %v10454 = vsub.f32 %v10228, %v10399
  %v10455 = vsub.f32 %v10231, %v10399
  %v10456 = vsub.f32 %v10236, %v10399
  %v10457 = vsub.f32 %v10239, %v10399
  %v10458 = vsub.f32 %v10244, %v10399
  %v10459 = vsub.f32 %v10247, %v10399
  %v10460 = vsub.f32 %v10252, %v10399
  %v10461 = vsub.f32 %v10255, %v10399
  %v10462 = vsub.f32 %v10260, %v10399
  %v10463 = vsub.f32 %v10263, %v10399
  %v10464 = vmul.f32 %v10400, %v10400
  %v10465 = vmul.f32 %v10401, %v10401
  %v10466 = vmul.f32 %v10402, %v10402
  %v10467 = vmul.f32 %v10403, %v10403
  %v10468 = vmul.f32 %v10404, %v10404
  %v10469 = vmul.f32 %v10405, %v10405
  %v10470 = vmul.f32 %v10406, %v10406
  %v10471 = vmul.f32 %v10407, %v10407
  %v10472 = vmul.f32 %v10408, %v10408
  %v10473 = vmul.f32 %v10409, %v10409
  %v10474 = vmul.f32 %v10410, %v10410
  %v10475 = vmul.f32 %v10411, %v10411
  %v10476 = vmul.f32 %v10412, %v10412
  %v10477 = vmul.f32 %v10413, %v10413
  %v10478 = vmul.f32 %v10414, %v10414
  %v10479 = vmul.f32 %v10415, %v10415
  %v10480 = vmul.f32 %v10416, %v10416
  %v10481 = vmul.f32 %v10417, %v10417
  %v10482 = vmul.f32 %v10418, %v10418
  %v10483 = vmul.f32 %v10419, %v10419
  %v10484 = vmul.f32 %v10420, %v10420
  %v10485 = vmul.f32 %v10421, %v10421
  %v10486 = vmul.f32 %v10422, %v10422
  %v10487 = vmul.f32 %v10423, %v10423
  %v10488 = vmul.f32 %v10424, %v10424
  %v10489 = vmul.f32 %v10425, %v10425
  %v10490 = vmul.f32 %v10426, %v10426
  %v10491 = vmul.f32 %v10427, %v10427
  %v10492 = vmul.f32 %v10428, %v10428
  %v10493 = vmul.f32 %v10429, %v10429
  %v10494 = vmul.f32 %v10430, %v10430
  %v10495 = vmul.f32 %v10431, %v10431
  %v10496 = vmul.f32 %v10432, %v10432
  %v10497 = vmul.f32 %v10433, %v10433
  %v10498 = vmul.f32 %v10434, %v10434
  %v10499 = vmul.f32 %v10435, %v10435
  %v10500 = vmul.f32 %v10436, %v10436
  %v10501 = vmul.f32 %v10437, %v10437
  %v10502 = vmul.f32 %v10438, %v10438
  %v10503 = vmul.f32 %v10439, %v10439
  %v10504 = vmul.f32 %v10440, %v10440
  %v10505 = vmul.f32 %v10441, %v10441
  %v10506 = vmul.f32 %v10442, %v10442
  %v10507 = vmul.f32 %v10443, %v10443
  %v10508 = vmul.f32 %v10444, %v10444
  %v10509 = vmul.f32 %v10445, %v10445
  %v10510 = vmul.f32 %v10446, %v10446
  %v10511 = vmul.f32 %v10447, %v10447
  %v10512 = vmul.f32 %v10448, %v10448
  %v10513 = vmul.f32 %v10449, %v10449
  %v10514 = vmul.f32 %v10450, %v10450
  %v10515 = vmul.f32 %v10451, %v10451
  %v10516 = vmul.f32 %v10452, %v10452
  %v10517 = vmul.f32 %v10453, %v10453
  %v10518 = vmul.f32 %v10454, %v10454
  %v10519 = vmul.f32 %v10455, %v10455
  %v10520 = vmul.f32 %v10456, %v10456
  %v10521 = vmul.f32 %v10457, %v10457
  %v10522 = vmul.f32 %v10458, %v10458
  %v10523 = vmul.f32 %v10459, %v10459
  %v10524 = vmul.f32 %v10460, %v10460
  %v10525 = vmul.f32 %v10461, %v10461
  %v10526 = vmul.f32 %v10462, %v10462
  %v10527 = vmul.f32 %v10463, %v10463
  %v10528 = vsel %vm3196, %v10464, 0.0
  %v10529 = vsel %vm3196, %v10465, 0.0
  %v10530 = vadd.f32 %v10528, %v10529
  %v10531 = vsel %vm3196, %v10466, 0.0
  %v10532 = vadd.f32 %v10530, %v10531
  %v10533 = vsel %vm3196, %v10467, 0.0
  %v10534 = vadd.f32 %v10532, %v10533
  %v10535 = vsel %vm3196, %v10468, 0.0
  %v10536 = vadd.f32 %v10534, %v10535
  %v10537 = vsel %vm3196, %v10469, 0.0
  %v10538 = vadd.f32 %v10536, %v10537
  %v10539 = vsel %vm3196, %v10470, 0.0
  %v10540 = vadd.f32 %v10538, %v10539
  %v10541 = vsel %vm3196, %v10471, 0.0
  %v10542 = vadd.f32 %v10540, %v10541
  %v10543 = vsel %vm3196, %v10472, 0.0
  %v10544 = vadd.f32 %v10542, %v10543
  %v10545 = vsel %vm3196, %v10473, 0.0
  %v10546 = vadd.f32 %v10544, %v10545
  %v10547 = vsel %vm3196, %v10474, 0.0
  %v10548 = vadd.f32 %v10546, %v10547
  %v10549 = vsel %vm3196, %v10475, 0.0
  %v10550 = vadd.f32 %v10548, %v10549
  %v10551 = vsel %vm3196, %v10476, 0.0
  %v10552 = vadd.f32 %v10550, %v10551
  %v10553 = vsel %vm3196, %v10477, 0.0
  %v10554 = vadd.f32 %v10552, %v10553
  %v10555 = vsel %vm3196, %v10478, 0.0
  %v10556 = vadd.f32 %v10554, %v10555
  %v10557 = vsel %vm3196, %v10479, 0.0
  %v10558 = vadd.f32 %v10556, %v10557
  %v10559 = vsel %vm3196, %v10480, 0.0
  %v10560 = vadd.f32 %v10558, %v10559
  %v10561 = vsel %vm3196, %v10481, 0.0
  %v10562 = vadd.f32 %v10560, %v10561
  %v10563 = vsel %vm3196, %v10482, 0.0
  %v10564 = vadd.f32 %v10562, %v10563
  %v10565 = vsel %vm3196, %v10483, 0.0
  %v10566 = vadd.f32 %v10564, %v10565
  %v10567 = vsel %vm3196, %v10484, 0.0
  %v10568 = vadd.f32 %v10566, %v10567
  %v10569 = vsel %vm3196, %v10485, 0.0
  %v10570 = vadd.f32 %v10568, %v10569
  %v10571 = vsel %vm3196, %v10486, 0.0
  %v10572 = vadd.f32 %v10570, %v10571
  %v10573 = vsel %vm3196, %v10487, 0.0
  %v10574 = vadd.f32 %v10572, %v10573
  %v10575 = vsel %vm3196, %v10488, 0.0
  %v10576 = vadd.f32 %v10574, %v10575
  %v10577 = vsel %vm3196, %v10489, 0.0
  %v10578 = vadd.f32 %v10576, %v10577
  %v10579 = vsel %vm3196, %v10490, 0.0
  %v10580 = vadd.f32 %v10578, %v10579
  %v10581 = vsel %vm3196, %v10491, 0.0
  %v10582 = vadd.f32 %v10580, %v10581
  %v10583 = vsel %vm3196, %v10492, 0.0
  %v10584 = vadd.f32 %v10582, %v10583
  %v10585 = vsel %vm3196, %v10493, 0.0
  %v10586 = vadd.f32 %v10584, %v10585
  %v10587 = vsel %vm3196, %v10494, 0.0
  %v10588 = vadd.f32 %v10586, %v10587
  %v10589 = vsel %vm3196, %v10495, 0.0
  %v10590 = vadd.f32 %v10588, %v10589
  %v10591 = vsel %vm3196, %v10496, 0.0
  %v10592 = vadd.f32 %v10590, %v10591
  %v10593 = vsel %vm3196, %v10497, 0.0
  %v10594 = vadd.f32 %v10592, %v10593
  %v10595 = vsel %vm3196, %v10498, 0.0
  %v10596 = vadd.f32 %v10594, %v10595
  %v10597 = vsel %vm3196, %v10499, 0.0
  %v10598 = vadd.f32 %v10596, %v10597
  %v10599 = vsel %vm3196, %v10500, 0.0
  %v10600 = vadd.f32 %v10598, %v10599
  %v10601 = vsel %vm3196, %v10501, 0.0
  %v10602 = vadd.f32 %v10600, %v10601
  %v10603 = vsel %vm3196, %v10502, 0.0
  %v10604 = vadd.f32 %v10602, %v10603
  %v10605 = vsel %vm3196, %v10503, 0.0
  %v10606 = vadd.f32 %v10604, %v10605
  %v10607 = vsel %vm3196, %v10504, 0.0
  %v10608 = vadd.f32 %v10606, %v10607
  %v10609 = vsel %vm3196, %v10505, 0.0
  %v10610 = vadd.f32 %v10608, %v10609
  %v10611 = vsel %vm3196, %v10506, 0.0
  %v10612 = vadd.f32 %v10610, %v10611
  %v10613 = vsel %vm3196, %v10507, 0.0
  %v10614 = vadd.f32 %v10612, %v10613
  %v10615 = vsel %vm3196, %v10508, 0.0
  %v10616 = vadd.f32 %v10614, %v10615
  %v10617 = vsel %vm3196, %v10509, 0.0
  %v10618 = vadd.f32 %v10616, %v10617
  %v10619 = vsel %vm3196, %v10510, 0.0
  %v10620 = vadd.f32 %v10618, %v10619
  %v10621 = vsel %vm3196, %v10511, 0.0
  %v10622 = vadd.f32 %v10620, %v10621
  %v10623 = vsel %vm3196, %v10512, 0.0
  %v10624 = vadd.f32 %v10622, %v10623
  %v10625 = vsel %vm3196, %v10513, 0.0
  %v10626 = vadd.f32 %v10624, %v10625
  %v10627 = vsel %vm3196, %v10514, 0.0
  %v10628 = vadd.f32 %v10626, %v10627
  %v10629 = vsel %vm3196, %v10515, 0.0
  %v10630 = vadd.f32 %v10628, %v10629
  %v10631 = vsel %vm3196, %v10516, 0.0
  %v10632 = vadd.f32 %v10630, %v10631
  %v10633 = vsel %vm3196, %v10517, 0.0
  %v10634 = vadd.f32 %v10632, %v10633
  %v10635 = vsel %vm3196, %v10518, 0.0
  %v10636 = vadd.f32 %v10634, %v10635
  %v10637 = vsel %vm3196, %v10519, 0.0
  %v10638 = vadd.f32 %v10636, %v10637
  %v10639 = vsel %vm3196, %v10520, 0.0
  %v10640 = vadd.f32 %v10638, %v10639
  %v10641 = vsel %vm3196, %v10521, 0.0
  %v10642 = vadd.f32 %v10640, %v10641
  %v10643 = vsel %vm3196, %v10522, 0.0
  %v10644 = vadd.f32 %v10642, %v10643
  %v10645 = vsel %vm3196, %v10523, 0.0
  %v10646 = vadd.f32 %v10644, %v10645
  %v10647 = vsel %vm3196, %v10524, 0.0
  %v10648 = vadd.f32 %v10646, %v10647
  %v10649 = vsel %vm3196, %v10525, 0.0
  %v10650 = vadd.f32 %v10648, %v10649
  %v10651 = vsel %vm3196, %v10526, 0.0
  %v10652 = vadd.f32 %v10650, %v10651
  %v10653 = vsel %vm3196, %v10527, 0.0
  %v10654 = vadd.f32 %v10652, %v10653
  %v10655 = vrot.slane %v10654, 4
  %v10656 = vadd.f32 %v10654, %v10655
  %v10657 = vrot.slane %v10656, 2
  %v10658 = vadd.f32 %v10656, %v10657
  %v10659 = vrot.slane %v10658, 1
  %v10660 = vadd.f32 %v10658, %v10659
  %v10661 = vmul.f32 %v10660, 0.001953125
  %v10662 = vld [vmem:[%s8] sm:$0x1]
  %v10663 = vadd.f32 %v10661, 1e-05
  %v10664 = vrsqrt.pop %v10663
  %v10665 = vmul.f32 %v10662, %v10664
  %v10666 = vld [vmem:[%s9] sm:$0x1]
  %v10667 = vmul.f32 %v10399, %v10665
  %v10668 = vsub.f32 %v10666, %v10667
  %v10670 = vlaneseq
  %v10671 = vshrl.u32 %v10670, 7
  %v10672 = vsub.s32 0, %v10671
  %v10673 = vrot.slane %v10665, %v10672
  %v10675 = vmul.f32 %v10012, %v10673
  %v10676 = vmul.f32 %v10015, %v10673
  %v10677 = vmul.f32 %v10020, %v10673
  %v10678 = vmul.f32 %v10023, %v10673
  %v10679 = vmul.f32 %v10028, %v10673
  %v10680 = vmul.f32 %v10031, %v10673
  %v10681 = vmul.f32 %v10036, %v10673
  %v10682 = vmul.f32 %v10039, %v10673
  %v10683 = vmul.f32 %v10044, %v10673
  %v10684 = vmul.f32 %v10047, %v10673
  %v10685 = vmul.f32 %v10052, %v10673
  %v10686 = vmul.f32 %v10055, %v10673
  %v10687 = vmul.f32 %v10060, %v10673
  %v10688 = vmul.f32 %v10063, %v10673
  %v10689 = vmul.f32 %v10068, %v10673
  %v10690 = vmul.f32 %v10071, %v10673
  %v10691 = vmul.f32 %v10076, %v10673
  %v10692 = vmul.f32 %v10079, %v10673
  %v10693 = vmul.f32 %v10084, %v10673
  %v10694 = vmul.f32 %v10087, %v10673
  %v10695 = vmul.f32 %v10092, %v10673
  %v10696 = vmul.f32 %v10095, %v10673
  %v10697 = vmul.f32 %v10100, %v10673
  %v10698 = vmul.f32 %v10103, %v10673
  %v10699 = vmul.f32 %v10108, %v10673
  %v10700 = vmul.f32 %v10111, %v10673
  %v10701 = vmul.f32 %v10116, %v10673
  %v10702 = vmul.f32 %v10119, %v10673
  %v10703 = vmul.f32 %v10124, %v10673
  %v10704 = vmul.f32 %v10127, %v10673
  %v10705 = vmul.f32 %v10132, %v10673
  %v10706 = vmul.f32 %v10135, %v10673
  %v10707 = vmul.f32 %v10140, %v10673
  %v10708 = vmul.f32 %v10143, %v10673
  %v10709 = vmul.f32 %v10148, %v10673
  %v10710 = vmul.f32 %v10151, %v10673
  %v10711 = vmul.f32 %v10156, %v10673
  %v10712 = vmul.f32 %v10159, %v10673
  %v10713 = vmul.f32 %v10164, %v10673
  %v10714 = vmul.f32 %v10167, %v10673
  %v10715 = vmul.f32 %v10172, %v10673
  %v10716 = vmul.f32 %v10175, %v10673
  %v10717 = vmul.f32 %v10180, %v10673
  %v10718 = vmul.f32 %v10183, %v10673
  %v10719 = vmul.f32 %v10188, %v10673
  %v10720 = vmul.f32 %v10191, %v10673
  %v10721 = vmul.f32 %v10196, %v10673
  %v10722 = vmul.f32 %v10199, %v10673
  %v10723 = vmul.f32 %v10204, %v10673
  %v10724 = vmul.f32 %v10207, %v10673
  %v10725 = vmul.f32 %v10212, %v10673
  %v10726 = vmul.f32 %v10215, %v10673
  %v10727 = vmul.f32 %v10220, %v10673
  %v10728 = vmul.f32 %v10223, %v10673
  %v10729 = vmul.f32 %v10228, %v10673
  %v10730 = vmul.f32 %v10231, %v10673
  %v10731 = vmul.f32 %v10236, %v10673
  %v10732 = vmul.f32 %v10239, %v10673
  %v10733 = vmul.f32 %v10244, %v10673
  %v10734 = vmul.f32 %v10247, %v10673
  %v10735 = vmul.f32 %v10252, %v10673
  %v10736 = vmul.f32 %v10255, %v10673
  %v10737 = vmul.f32 %v10260, %v10673
  %v10738 = vmul.f32 %v10263, %v10673
  %v10740 = vlaneseq
  %v10741 = vshrl.u32 %v10740, 7
  %v10742 = vsub.s32 0, %v10741
  %v10743 = vrot.slane %v10668, %v10742
  %v10745 = vadd.f32 %v10675, %v10743
  %v10746 = vadd.f32 %v10676, %v10743
  %v10747 = vadd.f32 %v10677, %v10743
  %v10748 = vadd.f32 %v10678, %v10743
  %v10749 = vadd.f32 %v10679, %v10743
  %v10750 = vadd.f32 %v10680, %v10743
  %v10751 = vadd.f32 %v10681, %v10743
  %v10752 = vadd.f32 %v10682, %v10743
  %v10753 = vadd.f32 %v10683, %v10743
  %v10754 = vadd.f32 %v10684, %v10743
  %v10755 = vadd.f32 %v10685, %v10743
  %v10756 = vadd.f32 %v10686, %v10743
  %v10757 = vadd.f32 %v10687, %v10743
  %v10758 = vadd.f32 %v10688, %v10743
  %v10759 = vadd.f32 %v10689, %v10743
  %v10760 = vadd.f32 %v10690, %v10743
  %v10761 = vadd.f32 %v10691, %v10743
  %v10762 = vadd.f32 %v10692, %v10743
  %v10763 = vadd.f32 %v10693, %v10743
  %v10764 = vadd.f32 %v10694, %v10743
  %v10765 = vadd.f32 %v10695, %v10743
  %v10766 = vadd.f32 %v10696, %v10743
  %v10767 = vadd.f32 %v10697, %v10743
  %v10768 = vadd.f32 %v10698, %v10743
  %v10769 = vadd.f32 %v10699, %v10743
  %v10770 = vadd.f32 %v10700, %v10743
  %v10771 = vadd.f32 %v10701, %v10743
  %v10772 = vadd.f32 %v10702, %v10743
  %v10773 = vadd.f32 %v10703, %v10743
  %v10774 = vadd.f32 %v10704, %v10743
  %v10775 = vadd.f32 %v10705, %v10743
  %v10776 = vadd.f32 %v10706, %v10743
  %v10777 = vadd.f32 %v10707, %v10743
  %v10778 = vadd.f32 %v10708, %v10743
  %v10779 = vadd.f32 %v10709, %v10743
  %v10780 = vadd.f32 %v10710, %v10743
  %v10781 = vadd.f32 %v10711, %v10743
  %v10782 = vadd.f32 %v10712, %v10743
  %v10783 = vadd.f32 %v10713, %v10743
  %v10784 = vadd.f32 %v10714, %v10743
  %v10785 = vadd.f32 %v10715, %v10743
  %v10786 = vadd.f32 %v10716, %v10743
  %v10787 = vadd.f32 %v10717, %v10743
  %v10788 = vadd.f32 %v10718, %v10743
  %v10789 = vadd.f32 %v10719, %v10743
  %v10790 = vadd.f32 %v10720, %v10743
  %v10791 = vadd.f32 %v10721, %v10743
  %v10792 = vadd.f32 %v10722, %v10743
  %v10793 = vadd.f32 %v10723, %v10743
  %v10794 = vadd.f32 %v10724, %v10743
  %v10795 = vadd.f32 %v10725, %v10743
  %v10796 = vadd.f32 %v10726, %v10743
  %v10797 = vadd.f32 %v10727, %v10743
  %v10798 = vadd.f32 %v10728, %v10743
  %v10799 = vadd.f32 %v10729, %v10743
  %v10800 = vadd.f32 %v10730, %v10743
  %v10801 = vadd.f32 %v10731, %v10743
  %v10802 = vadd.f32 %v10732, %v10743
  %v10803 = vadd.f32 %v10733, %v10743
  %v10804 = vadd.f32 %v10734, %v10743
  %v10805 = vadd.f32 %v10735, %v10743
  %v10806 = vadd.f32 %v10736, %v10743
  %v10807 = vadd.f32 %v10737, %v10743
  %v10808 = vadd.f32 %v10738, %v10743
  %v10809 = vmax.f32 %v10745, 0.0
  %v10810 = vmax.f32 %v10746, 0.0
  %v10811 = vmax.f32 %v10747, 0.0
  %v10812 = vmax.f32 %v10748, 0.0
  %v10813 = vmax.f32 %v10749, 0.0
  %v10814 = vmax.f32 %v10750, 0.0
  %v10815 = vmax.f32 %v10751, 0.0
  %v10816 = vmax.f32 %v10752, 0.0
  %v10817 = vmax.f32 %v10753, 0.0
  %v10818 = vmax.f32 %v10754, 0.0
  %v10819 = vmax.f32 %v10755, 0.0
  %v10820 = vmax.f32 %v10756, 0.0
  %v10821 = vmax.f32 %v10757, 0.0
  %v10822 = vmax.f32 %v10758, 0.0
  %v10823 = vmax.f32 %v10759, 0.0
  %v10824 = vmax.f32 %v10760, 0.0
  %v10825 = vmax.f32 %v10761, 0.0
  %v10826 = vmax.f32 %v10762, 0.0
  %v10827 = vmax.f32 %v10763, 0.0
  %v10828 = vmax.f32 %v10764, 0.0
  %v10829 = vmax.f32 %v10765, 0.0
  %v10830 = vmax.f32 %v10766, 0.0
  %v10831 = vmax.f32 %v10767, 0.0
  %v10832 = vmax.f32 %v10768, 0.0
  %v10833 = vmax.f32 %v10769, 0.0
  %v10834 = vmax.f32 %v10770, 0.0
  %v10835 = vmax.f32 %v10771, 0.0
  %v10836 = vmax.f32 %v10772, 0.0
  %v10837 = vmax.f32 %v10773, 0.0
  %v10838 = vmax.f32 %v10774, 0.0
  %v10839 = vmax.f32 %v10775, 0.0
  %v10840 = vmax.f32 %v10776, 0.0
  %v10841 = vmax.f32 %v10777, 0.0
  %v10842 = vmax.f32 %v10778, 0.0
  %v10843 = vmax.f32 %v10779, 0.0
  %v10844 = vmax.f32 %v10780, 0.0
  %v10845 = vmax.f32 %v10781, 0.0
  %v10846 = vmax.f32 %v10782, 0.0
  %v10847 = vmax.f32 %v10783, 0.0
  %v10848 = vmax.f32 %v10784, 0.0
  %v10849 = vmax.f32 %v10785, 0.0
  %v10850 = vmax.f32 %v10786, 0.0
  %v10851 = vmax.f32 %v10787, 0.0
  %v10852 = vmax.f32 %v10788, 0.0
  %v10853 = vmax.f32 %v10789, 0.0
  %v10854 = vmax.f32 %v10790, 0.0
  %v10855 = vmax.f32 %v10791, 0.0
  %v10856 = vmax.f32 %v10792, 0.0
  %v10857 = vmax.f32 %v10793, 0.0
  %v10858 = vmax.f32 %v10794, 0.0
  %v10859 = vmax.f32 %v10795, 0.0
  %v10860 = vmax.f32 %v10796, 0.0
  %v10861 = vmax.f32 %v10797, 0.0
  %v10862 = vmax.f32 %v10798, 0.0
  %v10863 = vmax.f32 %v10799, 0.0
  %v10864 = vmax.f32 %v10800, 0.0
  %v10865 = vmax.f32 %v10801, 0.0
  %v10866 = vmax.f32 %v10802, 0.0
  %v10867 = vmax.f32 %v10803, 0.0
  %v10868 = vmax.f32 %v10804, 0.0
  %v10869 = vmax.f32 %v10805, 0.0
  %v10870 = vmax.f32 %v10806, 0.0
  %v10871 = vmax.f32 %v10807, 0.0
  %v10872 = vmax.f32 %v10808, 0.0
  %10873 = vst.msk [vmem:[%s10] sm:$0xff] %vm3196, %v10809
  %10874 = vst.msk [vmem:[%s10 + $0x8] sm:$0xff] %vm3196, %v10810
  %10875 = vst.msk [vmem:[%s10 + $0x10] sm:$0xff] %vm3196, %v10811
  %10876 = vst.msk [vmem:[%s10 + $0x18] sm:$0xff] %vm3196, %v10812
  %10877 = vst.msk [vmem:[%s10 + $0x20] sm:$0xff] %vm3196, %v10813
  %10878 = vst.msk [vmem:[%s10 + $0x28] sm:$0xff] %vm3196, %v10814
  %10879 = vst.msk [vmem:[%s10 + $0x30] sm:$0xff] %vm3196, %v10815
  %10880 = vst.msk [vmem:[%s10 + $0x38] sm:$0xff] %vm3196, %v10816
  %10881 = vst.msk [vmem:[%s10 + $0x40] sm:$0xff] %vm3196, %v10817
  %10882 = vst.msk [vmem:[%s10 + $0x48] sm:$0xff] %vm3196, %v10818
  %10883 = vst.msk [vmem:[%s10 + $0x50] sm:$0xff] %vm3196, %v10819
  %10884 = vst.msk [vmem:[%s10 + $0x58] sm:$0xff] %vm3196, %v10820
  %10885 = vst.msk [vmem:[%s10 + $0x60] sm:$0xff] %vm3196, %v10821
  %10886 = vst.msk [vmem:[%s10 + $0x68] sm:$0xff] %vm3196, %v10822
  %10887 = vst.msk [vmem:[%s10 + $0x70] sm:$0xff] %vm3196, %v10823
  %10888 = vst.msk [vmem:[%s10 + $0x78] sm:$0xff] %vm3196, %v10824
  %10889 = vst.msk [vmem:[%s10 + $0x80] sm:$0xff] %vm3196, %v10825
  %10890 = vst.msk [vmem:[%s10 + $0x88] sm:$0xff] %vm3196, %v10826
  %10891 = vst.msk [vmem:[%s10 + $0x90] sm:$0xff] %vm3196, %v10827
  %10892 = vst.msk [vmem:[%s10 + $0x98] sm:$0xff] %vm3196, %v10828
  %10893 = vst.msk [vmem:[%s10 + $0xa0] sm:$0xff] %vm3196, %v10829
  %10894 = vst.msk [vmem:[%s10 + $0xa8] sm:$0xff] %vm3196, %v10830
  %10895 = vst.msk [vmem:[%s10 + $0xb0] sm:$0xff] %vm3196, %v10831
  %10896 = vst.msk [vmem:[%s10 + $0xb8] sm:$0xff] %vm3196, %v10832
  %10897 = vst.msk [vmem:[%s10 + $0xc0] sm:$0xff] %vm3196, %v10833
  %10898 = vst.msk [vmem:[%s10 + $0xc8] sm:$0xff] %vm3196, %v10834
  %10899 = vst.msk [vmem:[%s10 + $0xd0] sm:$0xff] %vm3196, %v10835
  %10900 = vst.msk [vmem:[%s10 + $0xd8] sm:$0xff] %vm3196, %v10836
  %10901 = vst.msk [vmem:[%s10 + $0xe0] sm:$0xff] %vm3196, %v10837
  %10902 = vst.msk [vmem:[%s10 + $0xe8] sm:$0xff] %vm3196, %v10838
  %10903 = vst.msk [vmem:[%s10 + $0xf0] sm:$0xff] %vm3196, %v10839
  %10904 = vst.msk [vmem:[%s10 + $0xf8] sm:$0xff] %vm3196, %v10840
  %10905 = vst.msk [vmem:[%s10 + $0x100] sm:$0xff] %vm3196, %v10841
  %10906 = vst.msk [vmem:[%s10 + $0x108] sm:$0xff] %vm3196, %v10842
  %10907 = vst.msk [vmem:[%s10 + $0x110] sm:$0xff] %vm3196, %v10843
  %10908 = vst.msk [vmem:[%s10 + $0x118] sm:$0xff] %vm3196, %v10844
  %10909 = vst.msk [vmem:[%s10 + $0x120] sm:$0xff] %vm3196, %v10845
  %10910 = vst.msk [vmem:[%s10 + $0x128] sm:$0xff] %vm3196, %v10846
  %10911 = vst.msk [vmem:[%s10 + $0x130] sm:$0xff] %vm3196, %v10847
  %10912 = vst.msk [vmem:[%s10 + $0x138] sm:$0xff] %vm3196, %v10848
  %10913 = vst.msk [vmem:[%s10 + $0x140] sm:$0xff] %vm3196, %v10849
  %10914 = vst.msk [vmem:[%s10 + $0x148] sm:$0xff] %vm3196, %v10850
  %10915 = vst.msk [vmem:[%s10 + $0x150] sm:$0xff] %vm3196, %v10851
  %10916 = vst.msk [vmem:[%s10 + $0x158] sm:$0xff] %vm3196, %v10852
  %10917 = vst.msk [vmem:[%s10 + $0x160] sm:$0xff] %vm3196, %v10853
  %10918 = vst.msk [vmem:[%s10 + $0x168] sm:$0xff] %vm3196, %v10854
  %10919 = vst.msk [vmem:[%s10 + $0x170] sm:$0xff] %vm3196, %v10855
  %10920 = vst.msk [vmem:[%s10 + $0x178] sm:$0xff] %vm3196, %v10856
  %10921 = vst.msk [vmem:[%s10 + $0x180] sm:$0xff] %vm3196, %v10857
  %10922 = vst.msk [vmem:[%s10 + $0x188] sm:$0xff] %vm3196, %v10858
  %10923 = vst.msk [vmem:[%s10 + $0x190] sm:$0xff] %vm3196, %v10859
  %10924 = vst.msk [vmem:[%s10 + $0x198] sm:$0xff] %vm3196, %v10860
  %10925 = vst.msk [vmem:[%s10 + $0x1a0] sm:$0xff] %vm3196, %v10861
  %10926 = vst.msk [vmem:[%s10 + $0x1a8] sm:$0xff] %vm3196, %v10862
  %10927 = vst.msk [vmem:[%s10 + $0x1b0] sm:$0xff] %vm3196, %v10863
  %10928 = vst.msk [vmem:[%s10 + $0x1b8] sm:$0xff] %vm3196, %v10864
  %10929 = vst.msk [vmem:[%s10 + $0x1c0] sm:$0xff] %vm3196, %v10865
  %10930 = vst.msk [vmem:[%s10 + $0x1c8] sm:$0xff] %vm3196, %v10866
  %10931 = vst.msk [vmem:[%s10 + $0x1d0] sm:$0xff] %vm3196, %v10867
  %10932 = vst.msk [vmem:[%s10 + $0x1d8] sm:$0xff] %vm3196, %v10868
  %10933 = vst.msk [vmem:[%s10 + $0x1e0] sm:$0xff] %vm3196, %v10869
  %10934 = vst.msk [vmem:[%s10 + $0x1e8] sm:$0xff] %vm3196, %v10870
  %10935 = vst.msk [vmem:[%s10 + $0x1f0] sm:$0xff] %vm3196, %v10871
  %10936 = vst.msk [vmem:[%s10 + $0x1f8] sm:$0xff] %vm3196, %v10872
  // Predicated region
  $region42: #{decoder_block_forward.1} parent=0 // pred_check
    _
  $region43: #{decoder_block_forward.1} parent=0 // pred_check_branch
    %10938 = sbr.rel (0) target = $region45
  $region44: #{decoder_block_forward.1} parent=0 // pred_region
    _
  $region45: #{decoder_block_forward.1} parent=0 // pred_fallthru
    _
  // Predicated region
  $region46: #{decoder_block_forward.1} parent=0 // pred_check
    _
  $region47: #{decoder_block_forward.1} parent=0 // pred_check_branch
    %10940 = sbr.rel (0) target = $region49
  $region48: #{decoder_block_forward.1} parent=0 // pred_region
    _
  $region49: #{decoder_block_forward.1} parent=0 // pred_fallthru
    _

</llo_original>
